<compile_context>
chip_gen: v7x
topology: tpu7x:2x2x1
jax: 0.10.0
libtpu: 0.0.40
codegen_flags: <defaults>
</compile_context>

<pallas_src>
import math

import jax
import jax.numpy as jnp
from jax import lax
from jax.experimental import pallas as pl
from jax.experimental.pallas import tpu as pltpu


def _hattention_kernel(x_ref, w_ref, mask_cm_ref, mask_mc_ref, seg_ref, segT_ref,
                       o_ref, attn_ref):
    """One grid step = GB attention groups.

    x_ref:       (GB, H, C)        input tokens of these groups
    w_ref:       (C, 3C)           fused QKV weight (x @ w), q-columns pre-scaled
    mask_cm_ref: (C, nh*H)         1.0 iff channel c belongs to the head of score col m
    mask_mc_ref: (nh*H, C)         transpose of the above
    seg_ref:     (nh*H, nh)        1.0 iff score col m belongs to head n
    segT_ref:    (nh, nh*H)        transpose of the above
    o_ref:       (GB, H, C)        attention output (pre-NCHW-permute)
    attn_ref:    (GB, H, nh*H)     lane-dense softmax maps: attn[g, i, n*H + j]
    """
    GB, H, C = x_ref.shape
    num_heads = seg_ref.shape[1]
    nhH = num_heads * H
    f32 = jnp.float32

    # ---- fused QKV projection on the MXU: (GB*H, C) @ (C, 3C) -> (GB*H, 3C) ----
    x2d = x_ref[...].reshape(GB * H, C)
    qkv = jnp.dot(x2d, w_ref[...], preferred_element_type=f32)
    qkv = qkv.reshape(GB, H, 3 * C)

    q = qkv[:, :, 0:C]               # already scaled (scale folded into the weight)
    k = qkv[:, :, C:2 * C]           # (GB, H, C)
    v = qkv[:, :, 2 * C:3 * C]       # (GB, H, C)

    # Transpose the *small* k ((H, C) per group) so the score matmul is MXU-native;
    # 8x less data through the XLU than transposing the expanded (nh*H, C) operand.
    kT = jnp.swapaxes(k, 1, 2)                                                # (GB, C, H)

    # Block-diagonal head expansion, built directly in lane-dense layout
    # (tile along the existing minor axis + multiply by a precomputed dense mask,
    #  no (…, nh, H) -> (…, nh*H) relayout):
    #   k_bd_T[g, c, n*H + j] = k[g, j, c] * [c in head n]
    #   v_bd  [g, n*H + j, c] = v[g, j, c] * [c in head n]
    k_bd_T = jnp.tile(kT, (1, 1, num_heads)) * mask_cm_ref[...][None, :, :]   # (GB, C, nhH)
    v_bd = jnp.tile(v, (1, num_heads, 1)) * mask_mc_ref[...][None, :, :]      # (GB, nhH, C)

    # ---- per-head scores, lane-dense: s[g, i, n*H + j] = scale * <q_n(i), k_n(j)> ----
    s = jnp.einsum('gic,gcm->gim', q, k_bd_T, preferred_element_type=f32)     # (GB, H, nhH)

    # ---- lane-dense softmax ----
    # One row max over all nh*H lanes: it upper-bounds every head's max and is the
    # same constant in each head's numerator and denominator, so the per-head softmax
    # is unchanged (a head sitting ~88 below the row max would underflow; irrelevant
    # at these activation ranges, and the denominator is clamped to stay finite).
    e = jnp.exp(s - jnp.max(s, axis=-1, keepdims=True))                       # (GB, H, nhH)

    # Per-head denominators via segment-indicator matmuls (stays 128-lane dense; the
    # tiny matmuls ride the otherwise idle MXU slot instead of 16-lane VPU reductions).
    e2 = e.reshape(GB * H, nhH)
    denom = jnp.dot(e2, seg_ref[...], preferred_element_type=f32)             # (GB*H, nh)
    denom = jnp.maximum(denom, jnp.finfo(f32).tiny)
    recip = 1.0 / denom                                                       # exact, tiny tensor
    recip_dense = jnp.dot(recip, segT_ref[...], preferred_element_type=f32)   # (GB*H, nhH)
    p = (e2 * recip_dense).reshape(GB, H, nhH)

    attn_ref[...] = p.astype(attn_ref.dtype)     # unmasked full-128-lane stores

    # ---- attention output (+ head concat) in one MXU-native batched matmul ----
    # TODO(synk): production option for v6e/v7x -- cast p / v_bd (and x2d / w) to bf16
    # with preferred_element_type=f32; kept f32 here to match the reference bit-tightly.
    o = jnp.einsum('gim,gmc->gic', p, v_bd, preferred_element_type=f32)       # (GB, H, C)
    o_ref[...] = o.astype(o_ref.dtype)


def hattention_forward(x, w_qkv, num_heads, group_block=16):
    """Pallas implementation of HAttention.forward.

    x:      (B, C, H, W) float32  (NCHW, like the PyTorch module)
    w_qkv:  (3C, C) float32       (nn.Linear(dim, 3*dim, bias=False).weight)
    returns (x_out (B, C, H, W), attn (B, W, nh, H, H))
    """
    B, C, H, W = x.shape
    assert C % num_heads == 0
    head_dim = C // num_heads
    scale = head_dim ** (-0.5)
    G = B * W
    nhH = num_heads * H

    # ---- layout glue (XLA side) ----
    # TODO(synk): the NCHW -> (G, H, C) transpose (and the inverse on the output) is a
    # full HBM pass outside the kernel; if the surrounding model can produce/consume
    # (B, W, H, C) directly these two extra passes over x/out disappear.
    xg = jnp.transpose(x, (0, 3, 2, 1)).reshape(G, H, C)

    # Linear(x) = x @ W.T; fold the q scale into the first C output columns so the
    # kernel never multiplies q (done once on the tiny weight, not per grid step).
    wT = jnp.transpose(w_qkv).astype(jnp.float32)                             # (C, 3C)
    col_scale = jnp.concatenate(
        [jnp.full((C,), scale, jnp.float32), jnp.ones((2 * C,), jnp.float32)])
    wT = wT * col_scale[None, :]

    # ---- head / segment indicator constants (hoisted out of the kernel body) ----
    c_head = jnp.arange(C, dtype=jnp.int32) // head_dim          # head of channel c
    m_head = jnp.arange(nhH, dtype=jnp.int32) // H               # head of score column m
    n_idx = jnp.arange(num_heads, dtype=jnp.int32)
    mask_cm = (c_head[:, None] == m_head[None, :]).astype(jnp.float32)        # (C, nhH)
    mask_mc = jnp.transpose(mask_cm)                                          # (nhH, C)
    seg = (m_head[:, None] == n_idx[None, :]).astype(jnp.float32)             # (nhH, nh)
    segT = jnp.transpose(seg)                                                 # (nh, nhH)

    # ---- group-block / grid selection (pad G up to a multiple of GB; keep >= 2 steps
    # when possible so both v7x TensorCores are used) ----
    GB = max(1, min(group_block, G))
    n_steps = -(-G // GB)
    if n_steps < 2 and G > 1:
        GB = -(-G // 2)
        n_steps = -(-G // GB)
    G_pad = n_steps * GB
    if G_pad != G:
        xg = jnp.concatenate([xg, jnp.zeros((G_pad - G, H, C), xg.dtype)], axis=0)

    cost = pl.CostEstimate(
        flops=2 * G_pad * H * (C * 3 * C + C * nhH + 2 * nhH * num_heads + nhH * C),
        transcendentals=G_pad * H * nhH,
        bytes_accessed=4 * (G_pad * H * (2 * C + nhH) + 3 * C * C
                            + 2 * C * nhH + 2 * nhH * num_heads),
    )

    out_pad, attn_pad = pl.pallas_call(
        _hattention_kernel,
        out_shape=(
            jax.ShapeDtypeStruct((G_pad, H, C), x.dtype),
            jax.ShapeDtypeStruct((G_pad, H, nhH), jnp.float32),
        ),
        grid_spec=pltpu.PrefetchScalarGridSpec(
            num_scalar_prefetch=0,
            grid=(n_steps,),
            in_specs=[
                pl.BlockSpec((GB, H, C), lambda g: (g, 0, 0)),
                pl.BlockSpec((C, 3 * C), lambda g: (0, 0)),
                pl.BlockSpec((C, nhH), lambda g: (0, 0)),
                pl.BlockSpec((nhH, C), lambda g: (0, 0)),
                pl.BlockSpec((nhH, num_heads), lambda g: (0, 0)),
                pl.BlockSpec((num_heads, nhH), lambda g: (0, 0)),
            ],
            out_specs=[
                pl.BlockSpec((GB, H, C), lambda g: (g, 0, 0)),
                pl.BlockSpec((GB, H, nhH), lambda g: (g, 0, 0)),
            ],
        ),
        compiler_params=pltpu.CompilerParams(
            dimension_semantics=("parallel",),
            vmem_limit_bytes=32 * 1024 * 1024,   # per-block footprint is ~1 MiB; safe on v5e/v6e/v7x
        ),
        cost_estimate=cost,
    )(xg, wT, mask_cm, mask_mc, seg, segT)

    out = out_pad[:G]
    attn_dense = attn_pad[:G]

    # glue: (G, H, C) -> NCHW, and lane-dense attn (G, H, nh*H) -> (B, W, nh, H, H)
    x_out = jnp.transpose(out.reshape(B, W, H, C), (0, 3, 2, 1))
    attn = jnp.transpose(attn_dense.reshape(B, W, H, num_heads, H), (0, 1, 3, 2, 4))
    return x_out, attn


def hattention_reference(x, w_qkv, num_heads):
    """Pure-JAX reference mirroring the PyTorch forward exactly (full-f32 matmuls)."""
    B, C, H, W = x.shape
    head_dim = C // num_heads
    scale = head_dim ** (-0.5)
    hi = lax.Precision.HIGHEST
    xg = jnp.transpose(x, (0, 3, 2, 1)).reshape(-1, H, C)                     # (B*W, H, C)
    qkv = jnp.einsum('ghc,oc->gho', xg, w_qkv, precision=hi)                  # (B*W, H, 3C)
    qkv = qkv.reshape(B, W, H, 3, num_heads, head_dim)
    qkv = jnp.transpose(qkv, (3, 0, 1, 4, 2, 5))                              # (3, B, W, nh, H, hd)
    q, k, v = qkv[0], qkv[1], qkv[2]
    attn = jnp.einsum('bwnid,bwnjd->bwnij', q, k, precision=hi) * scale       # (B, W, nh, H, H)
    attn = jax.nn.softmax(attn, axis=-1)
    out = jnp.einsum('bwnij,bwnjd->bwnid', attn, v, precision=hi)             # (B, W, nh, H, hd)
    out = jnp.swapaxes(out, 2, 3).reshape(B, W, H, C)
    out = jnp.transpose(out, (0, 3, 2, 1))                                    # (B, C, H, W)
    return out, attn


if __name__ == "__main__":
    B, C, H, W = 2, 32, 16, 16
    num_heads = 8

    key = jax.random.PRNGKey(0)
    kx, kw = jax.random.split(key)
    x = jax.random.normal(kx, (B, C, H, W), dtype=jnp.float32)
    # deterministic QKV weight, shape (3C, C) like nn.Linear(dim, 3*dim).weight
    bound = 1.0 / math.sqrt(C)
    w_qkv = jax.random.uniform(kw, (3 * C, C), minval=-bound, maxval=bound,
                               dtype=jnp.float32)

    out, attn = hattention_forward(x, w_qkv, num_heads)
    out = jax.block_until_ready(out)
    attn = jax.block_until_ready(attn)

    ref_out, ref_attn = hattention_reference(x, w_qkv, num_heads)
    ref_out = jax.block_until_ready(ref_out)

    assert out.shape == (B, C, H, W)
    assert attn.shape == (B, W, num_heads, H, H)

    # On the Mosaic path both sides are full-f32 and agree to ~1e-6; the tolerance is
    # kept at 2e-2 only to also cover execution paths (e.g. interpret mode dispatching
    # the kernel's jnp ops through XLA:TPU) where default matmul precision may demote
    # f32 contractions to bf16.  The reference uses Precision.HIGHEST explicitly.
    out_err = float(jnp.max(jnp.abs(out - ref_out)))
    attn_err = float(jnp.max(jnp.abs(attn - ref_attn)))
    assert jnp.allclose(out, ref_out, atol=2e-2, rtol=2e-2), f"out max|err|={out_err}"
    assert jnp.allclose(attn, ref_attn, atol=2e-2, rtol=2e-2), f"attn max|err|={attn_err}"

    print("KERNEL_OK")
</pallas_src>

<mosaic_0001>
module attributes {stable_mosaic.version = 11 : i64} {
  func.func @_hattention_kernel(%arg0: i32, %arg1: memref<16x16x32xf32, #tpu.memory_space<vmem>>, %arg2: memref<32x96xf32, #tpu.memory_space<vmem>>, %arg3: memref<32x128xf32, #tpu.memory_space<vmem>>, %arg4: memref<128x32xf32, #tpu.memory_space<vmem>>, %arg5: memref<128x8xf32, #tpu.memory_space<vmem>>, %arg6: memref<8x128xf32, #tpu.memory_space<vmem>>, %arg7: memref<16x16x32xf32, #tpu.memory_space<vmem>>, %arg8: memref<16x16x128xf32, #tpu.memory_space<vmem>>) attributes {dimension_semantics = [#tpu.dimension_semantics<parallel>], iteration_bounds = array<i64: 2>, scalar_prefetch = 0 : i64, scratch_operands = 0 : i64, tpu.core_type = #tpu.core_type<tc>, window_params = [{transform_indices = @transform_0, window_bounds = array<i64: 16, 16, 32>}, {pipeline_mode = #tpu.pipeline_mode<synchronous>, transform_indices = @transform_1, window_bounds = array<i64: 32, 96>}, {pipeline_mode = #tpu.pipeline_mode<synchronous>, transform_indices = @transform_2, window_bounds = array<i64: 32, 128>}, {pipeline_mode = #tpu.pipeline_mode<synchronous>, transform_indices = @transform_3, window_bounds = array<i64: 128, 32>}, {pipeline_mode = #tpu.pipeline_mode<synchronous>, transform_indices = @transform_4, window_bounds = array<i64: 128, 8>}, {pipeline_mode = #tpu.pipeline_mode<synchronous>, transform_indices = @transform_5, window_bounds = array<i64: 8, 128>}, {transform_indices = @transform_6, window_bounds = array<i64: 16, 16, 32>}, {transform_indices = @transform_7, window_bounds = array<i64: 16, 16, 128>}]} {
    %c0 = arith.constant 0 : index
    %c0_0 = arith.constant 0 : index
    %c0_1 = arith.constant 0 : index
    %0 = vector.load %arg1[%c0, %c0_0, %c0_1] : memref<16x16x32xf32, #tpu.memory_space<vmem>>, vector<16x16x32xf32>
    %1 = vector.shape_cast %0 : vector<16x16x32xf32> to vector<256x32xf32>
    %c0_2 = arith.constant 0 : index
    %c0_3 = arith.constant 0 : index
    %2 = vector.load %arg2[%c0_2, %c0_3] : memref<32x96xf32, #tpu.memory_space<vmem>>, vector<32x96xf32>
    %cst = arith.constant dense<0.000000e+00> : vector<256x96xf32>
    %3 = tpu.matmul %1, %2, %cst {dimension_numbers = #tpu.dot_dimension_numbers<[1], [0], [0], [1], [0, 0, 1, 1], [], []>} : vector<256x32xf32>, vector<32x96xf32>, vector<256x96xf32> -> vector<256x96xf32>
    %4 = vector.shape_cast %3 : vector<256x96xf32> to vector<16x16x96xf32>
    %5 = vector.extract_strided_slice %4 {offsets = [0, 0, 0], sizes = [16, 16, 32], strides = [1, 1, 1]} : vector<16x16x96xf32> to vector<16x16x32xf32>
    %6 = vector.extract_strided_slice %4 {offsets = [0, 0, 32], sizes = [16, 16, 32], strides = [1, 1, 1]} : vector<16x16x96xf32> to vector<16x16x32xf32>
    %7 = vector.extract_strided_slice %4 {offsets = [0, 0, 64], sizes = [16, 16, 32], strides = [1, 1, 1]} : vector<16x16x96xf32> to vector<16x16x32xf32>
    %8 = tpu.transpose %6, [0, 2, 1] : vector<16x16x32xf32> -> vector<16x32x16xf32>
    %9 = tpu.concatenate %8, %8, %8, %8, %8, %8, %8, %8 in 2 : vector<16x32x16xf32>, vector<16x32x16xf32>, vector<16x32x16xf32>, vector<16x32x16xf32>, vector<16x32x16xf32>, vector<16x32x16xf32>, vector<16x32x16xf32>, vector<16x32x16xf32> -> vector<16x32x128xf32>
    %c0_4 = arith.constant 0 : index
    %c0_5 = arith.constant 0 : index
    %10 = vector.load %arg3[%c0_4, %c0_5] : memref<32x128xf32, #tpu.memory_space<vmem>>, vector<32x128xf32>
    %11 = vector.shape_cast %10 : vector<32x128xf32> to vector<1x32x128xf32>
    %12 = vector.broadcast %11 : vector<1x32x128xf32> to vector<16x32x128xf32>
    %13 = arith.mulf %9, %12 : vector<16x32x128xf32>
    %14 = tpu.concatenate %7, %7, %7, %7, %7, %7, %7, %7 in 1 : vector<16x16x32xf32>, vector<16x16x32xf32>, vector<16x16x32xf32>, vector<16x16x32xf32>, vector<16x16x32xf32>, vector<16x16x32xf32>, vector<16x16x32xf32>, vector<16x16x32xf32> -> vector<16x128x32xf32>
    %c0_6 = arith.constant 0 : index
    %c0_7 = arith.constant 0 : index
    %15 = vector.load %arg4[%c0_6, %c0_7] : memref<128x32xf32, #tpu.memory_space<vmem>>, vector<128x32xf32>
    %16 = vector.shape_cast %15 : vector<128x32xf32> to vector<1x128x32xf32>
    %17 = vector.broadcast %16 : vector<1x128x32xf32> to vector<16x128x32xf32>
    %18 = arith.mulf %14, %17 : vector<16x128x32xf32>
    "tpu.trace_start"() <{level = 10 : i32, message = "gic,gcm->gim"}> : () -> ()
    %cst_8 = arith.constant dense<0.000000e+00> : vector<16x16x128xf32>
    %19 = tpu.matmul %5, %13, %cst_8 {dimension_numbers = #tpu.dot_dimension_numbers<[2], [1], [1], [2], [0, 0, 0, 1, 1, 2], [0], [0]>} : vector<16x16x32xf32>, vector<16x32x128xf32>, vector<16x16x128xf32> -> vector<16x16x128xf32>
    "tpu.trace_stop"() : () -> ()
    %cst_9 = arith.constant dense<0xFF800000> : vector<16x16xf32>
    %20 = vector.multi_reduction <maximumf>, %19, %cst_9 [2] : vector<16x16x128xf32> to vector<16x16xf32>
    %21 = vector.shape_cast %20 : vector<16x16xf32> to vector<16x16x1xf32>
    %22 = vector.broadcast %21 : vector<16x16x1xf32> to vector<16x16x128xf32>
    %23 = arith.subf %19, %22 : vector<16x16x128xf32>
    %24 = math.exp %23 : vector<16x16x128xf32>
    %25 = vector.shape_cast %24 : vector<16x16x128xf32> to vector<256x128xf32>
    %c0_10 = arith.constant 0 : index
    %c0_11 = arith.constant 0 : index
    %26 = vector.load %arg5[%c0_10, %c0_11] : memref<128x8xf32, #tpu.memory_space<vmem>>, vector<128x8xf32>
    %cst_12 = arith.constant dense<0.000000e+00> : vector<256x8xf32>
    %27 = tpu.matmul %25, %26, %cst_12 {dimension_numbers = #tpu.dot_dimension_numbers<[1], [0], [0], [1], [0, 0, 1, 1], [], []>} : vector<256x128xf32>, vector<128x8xf32>, vector<256x8xf32> -> vector<256x8xf32>
    %cst_13 = arith.constant 1.17549435E-38 : f32
    %28 = vector.broadcast %cst_13 : f32 to vector<256x8xf32>
    %29 = arith.maximumf %27, %28 : vector<256x8xf32>
    %cst_14 = arith.constant 1.000000e+00 : f32
    %30 = vector.broadcast %cst_14 : f32 to vector<256x8xf32>
    %31 = arith.divf %30, %29 : vector<256x8xf32>
    %c0_15 = arith.constant 0 : index
    %c0_16 = arith.constant 0 : index
    %32 = vector.load %arg6[%c0_15, %c0_16] : memref<8x128xf32, #tpu.memory_space<vmem>>, vector<8x128xf32>
    %cst_17 = arith.constant dense<0.000000e+00> : vector<256x128xf32>
    %33 = tpu.matmul %31, %32, %cst_17 {dimension_numbers = #tpu.dot_dimension_numbers<[1], [0], [0], [1], [0, 0, 1, 1], [], []>} : vector<256x8xf32>, vector<8x128xf32>, vector<256x128xf32> -> vector<256x128xf32>
    %34 = arith.mulf %25, %33 : vector<256x128xf32>
    %35 = vector.shape_cast %34 : vector<256x128xf32> to vector<16x16x128xf32>
    %c0_18 = arith.constant 0 : index
    %c0_19 = arith.constant 0 : index
    %c0_20 = arith.constant 0 : index
    %36 = vector.load %arg8[%c0_18, %c0_19, %c0_20] : memref<16x16x128xf32, #tpu.memory_space<vmem>>, vector<16x16x128xf32>
    tpu.vector_store %arg8[%c0_18, %c0_19, %c0_20], %35 {strides = array<i32>} : memref<16x16x128xf32, #tpu.memory_space<vmem>>, vector<16x16x128xf32>,
    "tpu.trace_start"() <{level = 10 : i32, message = "gim,gmc->gic"}> : () -> ()
    %cst_21 = arith.constant dense<0.000000e+00> : vector<16x16x32xf32>
    %37 = tpu.matmul %35, %18, %cst_21 {dimension_numbers = #tpu.dot_dimension_numbers<[2], [1], [1], [2], [0, 0, 0, 1, 1, 2], [0], [0]>} : vector<16x16x128xf32>, vector<16x128x32xf32>, vector<16x16x32xf32> -> vector<16x16x32xf32>
    "tpu.trace_stop"() : () -> ()
    %c0_22 = arith.constant 0 : index
    %c0_23 = arith.constant 0 : index
    %c0_24 = arith.constant 0 : index
    %38 = vector.load %arg7[%c0_22, %c0_23, %c0_24] : memref<16x16x32xf32, #tpu.memory_space<vmem>>, vector<16x16x32xf32>
    tpu.vector_store %arg7[%c0_22, %c0_23, %c0_24], %37 {strides = array<i32>} : memref<16x16x32xf32, #tpu.memory_space<vmem>>, vector<16x16x32xf32>,
    return
  }
  func.func @transform_0(%arg0: i32) -> (i32, i32, i32) {
    %c0_i32 = arith.constant 0 : i32
    %c0_i32_0 = arith.constant 0 : i32
    %c0_i32_1 = arith.constant 0 : i32
    return %arg0, %c0_i32, %c0_i32_0 : i32, i32, i32
  }
  func.func @transform_1(%arg0: i32) -> (i32, i32) {
    %c0_i32 = arith.constant 0 : i32
    %c0_i32_0 = arith.constant 0 : i32
    %c0_i32_1 = arith.constant 0 : i32
    return %c0_i32, %c0_i32_0 : i32, i32
  }
  func.func @transform_2(%arg0: i32) -> (i32, i32) {
    %c0_i32 = arith.constant 0 : i32
    %c0_i32_0 = arith.constant 0 : i32
    %c0_i32_1 = arith.constant 0 : i32
    return %c0_i32, %c0_i32_0 : i32, i32
  }
  func.func @transform_3(%arg0: i32) -> (i32, i32) {
    %c0_i32 = arith.constant 0 : i32
    %c0_i32_0 = arith.constant 0 : i32
    %c0_i32_1 = arith.constant 0 : i32
    return %c0_i32, %c0_i32_0 : i32, i32
  }
  func.func @transform_4(%arg0: i32) -> (i32, i32) {
    %c0_i32 = arith.constant 0 : i32
    %c0_i32_0 = arith.constant 0 : i32
    %c0_i32_1 = arith.constant 0 : i32
    return %c0_i32, %c0_i32_0 : i32, i32
  }
  func.func @transform_5(%arg0: i32) -> (i32, i32) {
    %c0_i32 = arith.constant 0 : i32
    %c0_i32_0 = arith.constant 0 : i32
    %c0_i32_1 = arith.constant 0 : i32
    return %c0_i32, %c0_i32_0 : i32, i32
  }
  func.func @transform_6(%arg0: i32) -> (i32, i32, i32) {
    %c0_i32 = arith.constant 0 : i32
    %c0_i32_0 = arith.constant 0 : i32
    %c0_i32_1 = arith.constant 0 : i32
    return %arg0, %c0_i32, %c0_i32_0 : i32, i32, i32
  }
  func.func @transform_7(%arg0: i32) -> (i32, i32, i32) {
    %c0_i32 = arith.constant 0 : i32
    %c0_i32_0 = arith.constant 0 : i32
    %c0_i32_1 = arith.constant 0 : i32
    return %arg0, %c0_i32, %c0_i32_0 : i32, i32, i32
  }
}

</mosaic_0001>

<llo_original>
// kernel: tpu_custom_call.1
$region0: #{tpu_custom_call.1}
  #allocation0 [shape = 'u32[]', space=smem, size = 0x4, offset = 0x4, fixed_abs, tag = 'smem constant byte address 0x4 - core index']
  #allocation1 [shape = 'u32[144,128]{1,0:T(1,128)}', space=vmem, size = 0x12000, scoped, tag = 'internal scratch']
  %s0 = inlined_call_operand.hbm [shape: f32[32,16,32], index: 0, kind: input, shape index: {}]
  %s1 = inlined_call_operand.vmem [shape: f32[32,96], index: 1, kind: input, shape index: {}]
  %s2 = inlined_call_operand.vmem [shape: f32[32,128], index: 2, kind: input, shape index: {}]
  %s3 = inlined_call_operand.vmem [shape: f32[128,32], index: 3, kind: input, shape index: {}]
  %s4 = inlined_call_operand.vmem [shape: f32[128,8], index: 4, kind: input, shape index: {}]
  %s5 = inlined_call_operand.vmem [shape: f32[8,128], index: 5, kind: input, shape index: {}]
  %s6 = inlined_call_operand.hbm [shape: f32[32,16,32], index: 6, kind: output, shape index: {0}]
  %s7 = inlined_call_operand.hbm [shape: f32[32,16,128], index: 7, kind: output, shape index: {1}]
  %8 = xla_tuple %s6, %s7
  %s9 = sld [smem:[#allocation0]]
  $region69: #{tpu_custom_call.1} parent=0
    _
  %s11 = ssub.s32 1, %s9
  %s12 = scalar_select 0, %s11, %s9
  $region1: #{tpu_custom_call.1} parent=0
    #allocation2 [shape = 'u8[262144]{0}', space=vmem, size = 0x40000, scoped, tag = 'input window, operand 0']
    #allocation3 [shape = 's32[2]{0}', space=sflag, size = 0x8, scoped, tag = 'scoped memory for tpu_custom_call.1']
    #allocation4 [shape = 's32[2]{0}', space=sflag, size = 0x8, scoped, tag = 'scoped memory for tpu_custom_call.1']
    #allocation5 [shape = 'u8[262144]{0}', space=vmem, size = 0x40000, scoped, tag = 'output window, operand 0']
    #allocation6 [shape = 'u8[262144]{0}', space=vmem, size = 0x40000, scoped, tag = 'output window, operand 1']
    #allocation7 [shape = 's32[2]{0}', space=sflag, size = 0x8, scoped, tag = 'scoped memory for tpu_custom_call.1']
    %13 = vsyncpa [#allocation3], 0
    %s14 = scalar_lea.sflag [#allocation3], 1
    %15 = vsyncpa %s14, 0
    %16 = vsyncpa [#allocation4], 0
    %s17 = scalar_lea.sflag [#allocation4], 1
    %18 = vsyncpa %s17, 0
    %19 = vsyncpa [#allocation7], 0
    %s20 = scalar_lea.sflag [#allocation7], 1
    %21 = vsyncpa %s20, 0
    loop: start=0, step=1, limit=4
    $region2: #{tpu_custom_call.1} parent=1 // loop_pre_header
      _
    $region3: #{tpu_custom_call.1} parent=1 // loop_header
      %s23 = sphi 0, %s27
      %p24 = scmp.ge.s32.totalorder %s23, 4
      %s33 = sphi 0, %s35
      %s36 = sphi 0, %s33
      %s37 = sphi 0, %s36
      %s53 = sphi 0, %s37
      %s57 = sphi 0, %s57
      %s59 = sphi 0, %s57
      %s60 = sphi 0, %s59
      %s74 = sphi 0, %s60
      %s78 = sphi 0, %s78
      %s80 = sphi 0, %s78
      %s81 = sphi 0, %s80
      %s95 = sphi 0, %s81
      %s99 = sphi 0, %s99
      %s101 = sphi 0, %s99
      %s102 = sphi 0, %s101
      %s116 = sphi 0, %s102
      %s120 = sphi 0, %s120
      %s122 = sphi 0, %s120
      %s123 = sphi 0, %s122
      %s137 = sphi 0, %s123
      %s141 = sphi 0, %s141
      %s143 = sphi 0, %s141
      %s144 = sphi 0, %s143
      %s158 = sphi 0, %s144
      %s164 = sphi 0, %s166
      %s167 = sphi 0, %s164
      %s168 = sphi 0, %s167
      %s184 = sphi 0, %s168
      %s190 = sphi 0, %s192
      %s193 = sphi 0, %s190
      %s194 = sphi 0, %s193
      %s210 = sphi 0, %s194
    $region4: #{tpu_custom_call.1} parent=1 // loop_header_branch
      %26 = sbr.rel (%p24) target = $region8
    $region5: #{tpu_custom_call.1} parent=1 // loop_body
      %s28 = ssub.s32 %s23, 1
      %s29 = ssub.s32 %s23, 2
      %s30 = sadd.s32 %s23, 1
      %s31 = ssub.s32 %s23, %s30
      %p32 = scmp.eq.s32.totalorder %s31, 0
      %s34 = sadd.s32 %s33, 1
      %s35 = scalar_select %p32, %s33, %s34
      %p38 = pneg %p32
      %p39 = scmp.eq.s32.totalorder %s23, 1
      %p40 = por %p38, %p39
      %p41 = scmp.ne.s32.totalorder %s33, %s36
      %p42 = scmp.eq.s32.totalorder %s23, 0
      %p43 = por %p41, %p42
      %p44 = scmp.ne.s32.totalorder %s33, %s36
      %p45 = scmp.eq.s32.totalorder %s28, 1
      %p46 = por %p44, %p45
      %p47 = scmp.ne.s32.totalorder %s36, %s37
      %p48 = scmp.eq.s32.totalorder %s28, 0
      %p49 = por %p47, %p48
      %p50 = scmp.ne.s32.totalorder %s36, %s37
      %p51 = scmp.eq.s32.totalorder %s29, 1
      %p52 = por %p50, %p51
      %p54 = scmp.ne.s32.totalorder %s37, %s53
      %p55 = scmp.eq.s32.totalorder %s29, 0
      %p56 = por %p54, %p55
      %s58 = sadd.s32 %s57, 1
      %p61 = scmp.eq.s32.totalorder %s23, 1
      %p62 = scmp.ne.s32.totalorder %s57, %s59
      %p63 = scmp.eq.s32.totalorder %s23, 0
      %p64 = por %p62, %p63
      %p65 = scmp.ne.s32.totalorder %s57, %s59
      %p66 = scmp.eq.s32.totalorder %s28, 1
      %p67 = por %p65, %p66
      %p68 = scmp.ne.s32.totalorder %s59, %s60
      %p69 = scmp.eq.s32.totalorder %s28, 0
      %p70 = por %p68, %p69
      %p71 = scmp.ne.s32.totalorder %s59, %s60
      %p72 = scmp.eq.s32.totalorder %s29, 1
      %p73 = por %p71, %p72
      %p75 = scmp.ne.s32.totalorder %s60, %s74
      %p76 = scmp.eq.s32.totalorder %s29, 0
      %p77 = por %p75, %p76
      %s79 = sadd.s32 %s78, 1
      %p82 = scmp.eq.s32.totalorder %s23, 1
      %p83 = scmp.ne.s32.totalorder %s78, %s80
      %p84 = scmp.eq.s32.totalorder %s23, 0
      %p85 = por %p83, %p84
      %p86 = scmp.ne.s32.totalorder %s78, %s80
      %p87 = scmp.eq.s32.totalorder %s28, 1
      %p88 = por %p86, %p87
      %p89 = scmp.ne.s32.totalorder %s80, %s81
      %p90 = scmp.eq.s32.totalorder %s28, 0
      %p91 = por %p89, %p90
      %p92 = scmp.ne.s32.totalorder %s80, %s81
      %p93 = scmp.eq.s32.totalorder %s29, 1
      %p94 = por %p92, %p93
      %p96 = scmp.ne.s32.totalorder %s81, %s95
      %p97 = scmp.eq.s32.totalorder %s29, 0
      %p98 = por %p96, %p97
      %s100 = sadd.s32 %s99, 1
      %p103 = scmp.eq.s32.totalorder %s23, 1
      %p104 = scmp.ne.s32.totalorder %s99, %s101
      %p105 = scmp.eq.s32.totalorder %s23, 0
      %p106 = por %p104, %p105
      %p107 = scmp.ne.s32.totalorder %s99, %s101
      %p108 = scmp.eq.s32.totalorder %s28, 1
      %p109 = por %p107, %p108
      %p110 = scmp.ne.s32.totalorder %s101, %s102
      %p111 = scmp.eq.s32.totalorder %s28, 0
      %p112 = por %p110, %p111
      %p113 = scmp.ne.s32.totalorder %s101, %s102
      %p114 = scmp.eq.s32.totalorder %s29, 1
      %p115 = por %p113, %p114
      %p117 = scmp.ne.s32.totalorder %s102, %s116
      %p118 = scmp.eq.s32.totalorder %s29, 0
      %p119 = por %p117, %p118
      %s121 = sadd.s32 %s120, 1
      %p124 = scmp.eq.s32.totalorder %s23, 1
      %p125 = scmp.ne.s32.totalorder %s120, %s122
      %p126 = scmp.eq.s32.totalorder %s23, 0
      %p127 = por %p125, %p126
      %p128 = scmp.ne.s32.totalorder %s120, %s122
      %p129 = scmp.eq.s32.totalorder %s28, 1
      %p130 = por %p128, %p129
      %p131 = scmp.ne.s32.totalorder %s122, %s123
      %p132 = scmp.eq.s32.totalorder %s28, 0
      %p133 = por %p131, %p132
      %p134 = scmp.ne.s32.totalorder %s122, %s123
      %p135 = scmp.eq.s32.totalorder %s29, 1
      %p136 = por %p134, %p135
      %p138 = scmp.ne.s32.totalorder %s123, %s137
      %p139 = scmp.eq.s32.totalorder %s29, 0
      %p140 = por %p138, %p139
      %s142 = sadd.s32 %s141, 1
      %p145 = scmp.eq.s32.totalorder %s23, 1
      %p146 = scmp.ne.s32.totalorder %s141, %s143
      %p147 = scmp.eq.s32.totalorder %s23, 0
      %p148 = por %p146, %p147
      %p149 = scmp.ne.s32.totalorder %s141, %s143
      %p150 = scmp.eq.s32.totalorder %s28, 1
      %p151 = por %p149, %p150
      %p152 = scmp.ne.s32.totalorder %s143, %s144
      %p153 = scmp.eq.s32.totalorder %s28, 0
      %p154 = por %p152, %p153
      %p155 = scmp.ne.s32.totalorder %s143, %s144
      %p156 = scmp.eq.s32.totalorder %s29, 1
      %p157 = por %p155, %p156
      %p159 = scmp.ne.s32.totalorder %s144, %s158
      %p160 = scmp.eq.s32.totalorder %s29, 0
      %p161 = por %p159, %p160
      %s162 = ssub.s32 %s23, %s30
      %p163 = scmp.eq.s32.totalorder %s162, 0
      %s165 = sadd.s32 %s164, 1
      %s166 = scalar_select %p163, %s164, %s165
      %p169 = pneg %p163
      %p170 = scmp.eq.s32.totalorder %s23, 1
      %p171 = por %p169, %p170
      %p172 = scmp.ne.s32.totalorder %s164, %s167
      %p173 = scmp.eq.s32.totalorder %s23, 0
      %p174 = por %p172, %p173
      %p175 = scmp.ne.s32.totalorder %s164, %s167
      %p176 = scmp.eq.s32.totalorder %s28, 1
      %p177 = por %p175, %p176
      %p178 = scmp.ne.s32.totalorder %s167, %s168
      %p179 = scmp.eq.s32.totalorder %s28, 0
      %p180 = por %p178, %p179
      %p181 = scmp.ne.s32.totalorder %s167, %s168
      %p182 = scmp.eq.s32.totalorder %s29, 1
      %p183 = por %p181, %p182
      %p185 = scmp.ne.s32.totalorder %s168, %s184
      %p186 = scmp.eq.s32.totalorder %s29, 0
      %p187 = por %p185, %p186
      %s188 = ssub.s32 %s23, %s30
      %p189 = scmp.eq.s32.totalorder %s188, 0
      %s191 = sadd.s32 %s190, 1
      %s192 = scalar_select %p189, %s190, %s191
      %p195 = pneg %p189
      %p196 = scmp.eq.s32.totalorder %s23, 1
      %p197 = por %p195, %p196
      %p198 = scmp.ne.s32.totalorder %s190, %s193
      %p199 = scmp.eq.s32.totalorder %s23, 0
      %p200 = por %p198, %p199
      %p201 = scmp.ne.s32.totalorder %s190, %s193
      %p202 = scmp.eq.s32.totalorder %s28, 1
      %p203 = por %p201, %p202
      %p204 = scmp.ne.s32.totalorder %s193, %s194
      %p205 = scmp.eq.s32.totalorder %s28, 0
      %p206 = por %p204, %p205
      %p207 = scmp.ne.s32.totalorder %s193, %s194
      %p208 = scmp.eq.s32.totalorder %s29, 1
      %p209 = por %p207, %p208
      %p211 = scmp.ne.s32.totalorder %s194, %s210
      %p212 = scmp.eq.s32.totalorder %s29, 0
      %p213 = por %p211, %p212
      %p214 = scmp.le.s32.totalorder 1, %s23
      %p215 = scmp.lt.s32.totalorder %s23, 3
      %p216 = pnand %p214, %p215
      %p217 = pneg %p216
      // Predicated region
      $region9: #{tpu_custom_call.1} parent=5 // pred_check
        _
      $region10: #{tpu_custom_call.1} parent=5 // pred_check_branch
        %219 = sbr.rel (%p216) target = $region12
      $region11: #{tpu_custom_call.1} parent=5 // pred_region
        %s220 = ssub.s32 %s23, 1
        // Predicated region
        $region13: #{tpu_custom_call.1} parent=11 // pred_check
          %p221 = pneg %p70
        $region14: #{tpu_custom_call.1} parent=11 // pred_check_branch
          %223 = sbr.rel (%p221) target = $region16
        $region15: #{tpu_custom_call.1} parent=11 // pred_region
          _
        $region16: #{tpu_custom_call.1} parent=11 // pred_fallthru
          _
        // Predicated region
        $region17: #{tpu_custom_call.1} parent=11 // pred_check
          %p224 = pneg %p91
        $region18: #{tpu_custom_call.1} parent=11 // pred_check_branch
          %226 = sbr.rel (%p224) target = $region20
        $region19: #{tpu_custom_call.1} parent=11 // pred_region
          _
        $region20: #{tpu_custom_call.1} parent=11 // pred_fallthru
          _
        // Predicated region
        $region21: #{tpu_custom_call.1} parent=11 // pred_check
          %p227 = pneg %p112
        $region22: #{tpu_custom_call.1} parent=11 // pred_check_branch
          %229 = sbr.rel (%p227) target = $region24
        $region23: #{tpu_custom_call.1} parent=11 // pred_region
          _
        $region24: #{tpu_custom_call.1} parent=11 // pred_fallthru
          _
        // Predicated region
        $region25: #{tpu_custom_call.1} parent=11 // pred_check
          %p230 = pneg %p133
        $region26: #{tpu_custom_call.1} parent=11 // pred_check_branch
          %232 = sbr.rel (%p230) target = $region28
        $region27: #{tpu_custom_call.1} parent=11 // pred_region
          _
        $region28: #{tpu_custom_call.1} parent=11 // pred_fallthru
          _
        // Predicated region
        $region29: #{tpu_custom_call.1} parent=11 // pred_check
          %p233 = pneg %p154
        $region30: #{tpu_custom_call.1} parent=11 // pred_check_branch
          %235 = sbr.rel (%p233) target = $region32
        $region31: #{tpu_custom_call.1} parent=11 // pred_region
          _
        $region32: #{tpu_custom_call.1} parent=11 // pred_fallthru
          _
      $region12: #{tpu_custom_call.1} parent=5 // pred_fallthru
        _
      %p236 = scmp.lt.s32.totalorder %s23, 2
      // Predicated region
      $region33: #{tpu_custom_call.1} parent=5 // pred_check
        %p237 = pneg %p236
      $region34: #{tpu_custom_call.1} parent=5 // pred_check_branch
        %239 = sbr.rel (%p237) target = $region36
      $region35: #{tpu_custom_call.1} parent=5 // pred_region
        // Predicated region
        $region37: #{tpu_custom_call.1} parent=35 // pred_check
          %p240 = pneg %p43
        $region38: #{tpu_custom_call.1} parent=35 // pred_check_branch
          %242 = sbr.rel (%p240) target = $region40
        $region39: #{tpu_custom_call.1} parent=35 // pred_region
          %s243 = sand.u32 %s33, 1
          %s244 = scalar_lea.sflag [#allocation3], %s243
          %s245 = sand.u32 %s33, 1
          %s246 = smul.addr %s245, 256
          %s247 = scalar_lea.vmem [#allocation2], %s246
          %s248 = smul.u32 16, %s23
          %s250 = ssub.s32 4096, 4096
          %251 = vsyncadd %s244, %s250
          %s252 = smul.addr %s248, 2
          %s253 = smul.addr %s252, 128
          %s254 = scalar_lea.hbm %s0, %s253
          %s255 = sshll.u32 %s247, 4
          %s256 = int_to_ptr.vmem [resolvable:$true] %s255
          %261 = dma.hbm_to_vmem [thread:$0]  %s254, 4096, %s256, %s244, 128, 128, 8
        $region40: #{tpu_custom_call.1} parent=35 // pred_fallthru
          _
      $region36: #{tpu_custom_call.1} parent=5 // pred_fallthru
        _
      %p262 = scmp.le.s32.totalorder 1, %s23
      %p263 = scmp.lt.s32.totalorder %s23, 3
      %p264 = pnand %p262, %p263
      %p265 = pneg %p264
      // Predicated region
      $region41: #{tpu_custom_call.1} parent=5 // pred_check
        _
      $region42: #{tpu_custom_call.1} parent=5 // pred_check_branch
        %267 = sbr.rel (%p264) target = $region44
      $region43: #{tpu_custom_call.1} parent=5 // pred_region
        %s268 = ssub.s32 %s23, 1
        %s269 = sand.u32 %s36, 1
        %s270 = scalar_lea.sflag [#allocation3], %s269
        %s271 = sand.u32 %s36, 1
        %s272 = smul.addr %s271, 256
        %s273 = scalar_lea.vmem [#allocation2], %s272
        // Predicated region
        $region45: #{tpu_custom_call.1} parent=43 // pred_check
          %p274 = pneg %p49
        $region46: #{tpu_custom_call.1} parent=43 // pred_check_branch
          %276 = sbr.rel (%p274) target = $region48
        $region47: #{tpu_custom_call.1} parent=43 // pred_region
          %277 = dma.done %s270, 4096
        $region48: #{tpu_custom_call.1} parent=43 // pred_fallthru
          _
        %s278 = sand.u32 %s36, 1
        %s279 = scalar_lea.sflag [#allocation3], %s278
        %s280 = sand.u32 %s36, 1
        %s281 = smul.addr %s280, 256
        %s282 = scalar_lea.vmem [#allocation2], %s281
        %p283 = pneg %p49
        %p284 = pneg %p46
        %p285 = pneg %p70
        %p286 = pneg %p67
        %p287 = pneg %p91
        %p288 = pneg %p88
        %p289 = pneg %p112
        %p290 = pneg %p109
        %p291 = pneg %p133
        %p292 = pneg %p130
        %p293 = pneg %p154
        %p294 = pneg %p151
        %p295 = pneg %p180
        %p296 = pneg %p177
        %s297 = sand.u32 %s167, 1
        %s298 = scalar_lea.sflag [#allocation4], %s297
        %s299 = sand.u32 %s167, 1
        %s300 = smul.addr %s299, 256
        %s301 = scalar_lea.vmem [#allocation5], %s300
        %p302 = pneg %p206
        %p303 = pneg %p203
        %s304 = sand.u32 %s193, 1
        %s305 = scalar_lea.sflag [#allocation7], %s304
        %s306 = sand.u32 %s193, 1
        %s307 = smul.addr %s306, 256
        %s308 = scalar_lea.vmem [#allocation6], %s307
        %s309 = smul.u32 16, %s28
        %s310 = smul.u32 16, %s28
        %s311 = smul.u32 16, %s28
        %v312 = vld [vmem:[%s273] sm:$0xff]
        %v313 = vld [vmem:[%s273 + $0x8] sm:$0xff]
        %v314 = vld [vmem:[%s273 + $0x10] sm:$0xff]
        %v315 = vld [vmem:[%s273 + $0x18] sm:$0xff]
        %v316 = vld [vmem:[%s273 + $0x20] sm:$0xff]
        %v317 = vld [vmem:[%s273 + $0x28] sm:$0xff]
        %v318 = vld [vmem:[%s273 + $0x30] sm:$0xff]
        %v319 = vld [vmem:[%s273 + $0x38] sm:$0xff]
        %v320 = vld [vmem:[%s273 + $0x40] sm:$0xff]
        %v321 = vld [vmem:[%s273 + $0x48] sm:$0xff]
        %v322 = vld [vmem:[%s273 + $0x50] sm:$0xff]
        %v323 = vld [vmem:[%s273 + $0x58] sm:$0xff]
        %v324 = vld [vmem:[%s273 + $0x60] sm:$0xff]
        %v325 = vld [vmem:[%s273 + $0x68] sm:$0xff]
        %v326 = vld [vmem:[%s273 + $0x70] sm:$0xff]
        %v327 = vld [vmem:[%s273 + $0x78] sm:$0xff]
        %v328 = vld [vmem:[%s273 + $0x80] sm:$0xff]
        %v329 = vld [vmem:[%s273 + $0x88] sm:$0xff]
        %v330 = vld [vmem:[%s273 + $0x90] sm:$0xff]
        %v331 = vld [vmem:[%s273 + $0x98] sm:$0xff]
        %v332 = vld [vmem:[%s273 + $0xa0] sm:$0xff]
        %v333 = vld [vmem:[%s273 + $0xa8] sm:$0xff]
        %v334 = vld [vmem:[%s273 + $0xb0] sm:$0xff]
        %v335 = vld [vmem:[%s273 + $0xb8] sm:$0xff]
        %v336 = vld [vmem:[%s273 + $0xc0] sm:$0xff]
        %v337 = vld [vmem:[%s273 + $0xc8] sm:$0xff]
        %v338 = vld [vmem:[%s273 + $0xd0] sm:$0xff]
        %v339 = vld [vmem:[%s273 + $0xd8] sm:$0xff]
        %v340 = vld [vmem:[%s273 + $0xe0] sm:$0xff]
        %v341 = vld [vmem:[%s273 + $0xe8] sm:$0xff]
        %v342 = vld [vmem:[%s273 + $0xf0] sm:$0xff]
        %v343 = vld [vmem:[%s273 + $0xf8] sm:$0xff]
        %v344 = vld [vmem:[%s1] sm:$0xff]
        %v345 = vld [vmem:[%s1 + $0x8] sm:$0xff]
        %v346 = vld [vmem:[%s1 + $0x10] sm:$0xff]
        %v347 = vld [vmem:[%s1 + $0x18] sm:$0xff]
        %vm348 = vcmask 261120
        %v350 = vsel %vm348, %v312, 0
        %v353 = vsel %vm348, %v313, 0
        %v356 = vsel %vm348, %v314, 0
        %v359 = vsel %vm348, %v315, 0
        %v362 = vsel %vm348, %v316, 0
        %v365 = vsel %vm348, %v317, 0
        %v368 = vsel %vm348, %v318, 0
        %v371 = vsel %vm348, %v319, 0
        %v374 = vsel %vm348, %v320, 0
        %v377 = vsel %vm348, %v321, 0
        %v380 = vsel %vm348, %v322, 0
        %v383 = vsel %vm348, %v323, 0
        %v386 = vsel %vm348, %v324, 0
        %v389 = vsel %vm348, %v325, 0
        %v392 = vsel %vm348, %v326, 0
        %v395 = vsel %vm348, %v327, 0
        %v398 = vsel %vm348, %v328, 0
        %v401 = vsel %vm348, %v329, 0
        %v404 = vsel %vm348, %v330, 0
        %v407 = vsel %vm348, %v331, 0
        %v410 = vsel %vm348, %v332, 0
        %v413 = vsel %vm348, %v333, 0
        %v416 = vsel %vm348, %v334, 0
        %v419 = vsel %vm348, %v335, 0
        %v422 = vsel %vm348, %v336, 0
        %v425 = vsel %vm348, %v337, 0
        %v428 = vsel %vm348, %v338, 0
        %v431 = vsel %vm348, %v339, 0
        %v434 = vsel %vm348, %v340, 0
        %v437 = vsel %vm348, %v341, 0
        %v440 = vsel %vm348, %v342, 0
        %v443 = vsel %vm348, %v343, 0
        %445 = vmatprep.subr.mxu0 0.0
        %446 = vmatpush1.msra.mxu0 %v344
        %447 = vmatprep.subr.mxu0 0.0
        %448 = vmatpush1.msra.mxu0 %v345
        %449 = vmatprep.subr.mxu0 0.0
        %450 = vmatpush1.msra.mxu0 %v346
        %451 = vmatprep.subr.mxu0 0.0
        %452 = vmatpush1.msra.mxu0 %v347
        %453 = vmatprep.subr.mxu0 0.0
        %454 = vmatpush1.msra.mxu0 0.0
        %455 = vmatprep.subr.mxu0 0.0
        %456 = vmatpush1.msra.mxu0 0.0
        %457 = vmatprep.subr.mxu0 0.0
        %458 = vmatpush1.msra.mxu0 0.0
        %459 = vmatprep.subr.mxu0 0.0
        %460 = vmatpush1.msra.mxu0 0.0
        %461 = vmatprep.subr.mxu0 0.0
        %462 = vmatpush1.msra.mxu0 0.0
        %463 = vmatprep.subr.mxu0 0.0
        %464 = vmatpush1.msra.mxu0 0.0
        %465 = vmatprep.subr.mxu0 0.0
        %466 = vmatpush1.msra.mxu0 0.0
        %467 = vmatprep.subr.mxu0 0.0
        %468 = vmatpush1.msra.mxu0 0.0
        %469 = vmatprep.subr.mxu0 0.0
        %470 = vmatpush1.msra.mxu0 0.0
        %471 = vmatprep.subr.mxu0 0.0
        %472 = vmatpush1.msra.mxu0 0.0
        %473 = vmatprep.subr.mxu0 0.0
        %474 = vmatpush1.msra.mxu0 0.0
        %475 = vmatprep.subr.mxu0 0.0
        %476 = vmatpush1.msra.mxu0 0.0
        %477 = vmatprep.subr.mxu0 0.0
        %478 = vmatpush1.msra.mxu0 0.0
        %479 = vmatprep.subr.mxu0 0.0
        %480 = vmatpush1.msra.mxu0 0.0
        %481 = vmatprep.subr.mxu0 0.0
        %482 = vmatpush1.msra.mxu0 0.0
        %483 = vmatprep.subr.mxu0 0.0
        %484 = vmatpush1.msra.mxu0 0.0
        %485 = vmatprep.subr.mxu0 0.0
        %486 = vmatpush1.msra.mxu0 0.0
        %487 = vmatprep.subr.mxu0 0.0
        %488 = vmatpush1.msra.mxu0 0.0
        %489 = vmatprep.subr.mxu0 0.0
        %490 = vmatpush1.msra.mxu0 0.0
        %491 = vmatprep.subr.mxu0 0.0
        %492 = vmatpush1.msra.mxu0 0.0
        %493 = vmatprep.subr.mxu0 0.0
        %494 = vmatpush1.msra.mxu0 0.0
        %495 = vmatprep.subr.mxu0 0.0
        %496 = vmatpush1.msra.mxu0 0.0
        %497 = vmatprep.subr.mxu0 0.0
        %498 = vmatpush1.msra.mxu0 0.0
        %499 = vmatprep.subr.mxu0 0.0
        %500 = vmatpush1.msra.mxu0 0.0
        %501 = vmatprep.subr.mxu0 0.0
        %502 = vmatpush1.msra.mxu0 0.0
        %503 = vmatprep.subr.mxu0 0.0
        %504 = vmatpush1.msra.mxu0 0.0
        %505 = vmatprep.subr.mxu0 0.0
        %506 = vmatpush1.msra.mxu0 0.0
        %507 = vmatprep.subr.mxu0 0.0
        %508 = vmatpush1.msra.mxu0 0.0
        %509 = vmatprep.mubr.f32.mxu0 0.0
        %510 = vmatmul.mubr.f32.gmra.mrb[0].mxu0 %v350
        %v511 = vpop.f32.mrb[0].mxu0
        %v512 = vadd.f32 0.0, %v511
        %v513 = vpop.f32.mrb[0].mxu0
        %514 = vmatprep.mubr.f32.mxu0 0.0
        %515 = vmatmul.mubr.f32.gmra.mrb[0].mxu0 %v353
        %v516 = vpop.f32.mrb[0].mxu0
        %v517 = vadd.f32 0.0, %v516
        %v518 = vpop.f32.mrb[0].mxu0
        %519 = vmatprep.mubr.f32.mxu0 0.0
        %520 = vmatmul.mubr.f32.gmra.mrb[0].mxu0 %v356
        %v521 = vpop.f32.mrb[0].mxu0
        %v522 = vadd.f32 0.0, %v521
        %v523 = vpop.f32.mrb[0].mxu0
        %524 = vmatprep.mubr.f32.mxu0 0.0
        %525 = vmatmul.mubr.f32.gmra.mrb[0].mxu0 %v359
        %v526 = vpop.f32.mrb[0].mxu0
        %v527 = vadd.f32 0.0, %v526
        %v528 = vpop.f32.mrb[0].mxu0
        %529 = vmatprep.mubr.f32.mxu0 0.0
        %530 = vmatmul.mubr.f32.gmra.mrb[0].mxu0 %v362
        %v531 = vpop.f32.mrb[0].mxu0
        %v532 = vadd.f32 0.0, %v531
        %v533 = vpop.f32.mrb[0].mxu0
        %534 = vmatprep.mubr.f32.mxu0 0.0
        %535 = vmatmul.mubr.f32.gmra.mrb[0].mxu0 %v365
        %v536 = vpop.f32.mrb[0].mxu0
        %v537 = vadd.f32 0.0, %v536
        %v538 = vpop.f32.mrb[0].mxu0
        %539 = vmatprep.mubr.f32.mxu0 0.0
        %540 = vmatmul.mubr.f32.gmra.mrb[0].mxu0 %v368
        %v541 = vpop.f32.mrb[0].mxu0
        %v542 = vadd.f32 0.0, %v541
        %v543 = vpop.f32.mrb[0].mxu0
        %544 = vmatprep.mubr.f32.mxu0 0.0
        %545 = vmatmul.mubr.f32.gmra.mrb[0].mxu0 %v371
        %v546 = vpop.f32.mrb[0].mxu0
        %v547 = vadd.f32 0.0, %v546
        %v548 = vpop.f32.mrb[0].mxu0
        %549 = vmatprep.mubr.f32.mxu0 0.0
        %550 = vmatmul.mubr.f32.gmra.mrb[0].mxu0 %v374
        %v551 = vpop.f32.mrb[0].mxu0
        %v552 = vadd.f32 0.0, %v551
        %v553 = vpop.f32.mrb[0].mxu0
        %554 = vmatprep.mubr.f32.mxu0 0.0
        %555 = vmatmul.mubr.f32.gmra.mrb[0].mxu0 %v377
        %v556 = vpop.f32.mrb[0].mxu0
        %v557 = vadd.f32 0.0, %v556
        %v558 = vpop.f32.mrb[0].mxu0
        %559 = vmatprep.mubr.f32.mxu0 0.0
        %560 = vmatmul.mubr.f32.gmra.mrb[0].mxu0 %v380
        %v561 = vpop.f32.mrb[0].mxu0
        %v562 = vadd.f32 0.0, %v561
        %v563 = vpop.f32.mrb[0].mxu0
        %564 = vmatprep.mubr.f32.mxu0 0.0
        %565 = vmatmul.mubr.f32.gmra.mrb[0].mxu0 %v383
        %v566 = vpop.f32.mrb[0].mxu0
        %v567 = vadd.f32 0.0, %v566
        %v568 = vpop.f32.mrb[0].mxu0
        %569 = vmatprep.mubr.f32.mxu0 0.0
        %570 = vmatmul.mubr.f32.gmra.mrb[0].mxu0 %v386
        %v571 = vpop.f32.mrb[0].mxu0
        %v572 = vadd.f32 0.0, %v571
        %v573 = vpop.f32.mrb[0].mxu0
        %574 = vmatprep.mubr.f32.mxu0 0.0
        %575 = vmatmul.mubr.f32.gmra.mrb[0].mxu0 %v389
        %v576 = vpop.f32.mrb[0].mxu0
        %v577 = vadd.f32 0.0, %v576
        %v578 = vpop.f32.mrb[0].mxu0
        %579 = vmatprep.mubr.f32.mxu0 0.0
        %580 = vmatmul.mubr.f32.gmra.mrb[0].mxu0 %v392
        %v581 = vpop.f32.mrb[0].mxu0
        %v582 = vadd.f32 0.0, %v581
        %v583 = vpop.f32.mrb[0].mxu0
        %584 = vmatprep.mubr.f32.mxu0 0.0
        %585 = vmatmul.mubr.f32.gmra.mrb[0].mxu0 %v395
        %v586 = vpop.f32.mrb[0].mxu0
        %v587 = vadd.f32 0.0, %v586
        %v588 = vpop.f32.mrb[0].mxu0
        %589 = vmatprep.mubr.f32.mxu0 0.0
        %590 = vmatmul.mubr.f32.gmra.mrb[0].mxu0 %v398
        %v591 = vpop.f32.mrb[0].mxu0
        %v592 = vadd.f32 0.0, %v591
        %v593 = vpop.f32.mrb[0].mxu0
        %594 = vmatprep.mubr.f32.mxu0 0.0
        %595 = vmatmul.mubr.f32.gmra.mrb[0].mxu0 %v401
        %v596 = vpop.f32.mrb[0].mxu0
        %v597 = vadd.f32 0.0, %v596
        %v598 = vpop.f32.mrb[0].mxu0
        %599 = vmatprep.mubr.f32.mxu0 0.0
        %600 = vmatmul.mubr.f32.gmra.mrb[0].mxu0 %v404
        %v601 = vpop.f32.mrb[0].mxu0
        %v602 = vadd.f32 0.0, %v601
        %v603 = vpop.f32.mrb[0].mxu0
        %604 = vmatprep.mubr.f32.mxu0 0.0
        %605 = vmatmul.mubr.f32.gmra.mrb[0].mxu0 %v407
        %v606 = vpop.f32.mrb[0].mxu0
        %v607 = vadd.f32 0.0, %v606
        %v608 = vpop.f32.mrb[0].mxu0
        %609 = vmatprep.mubr.f32.mxu0 0.0
        %610 = vmatmul.mubr.f32.gmra.mrb[0].mxu0 %v410
        %v611 = vpop.f32.mrb[0].mxu0
        %v612 = vadd.f32 0.0, %v611
        %v613 = vpop.f32.mrb[0].mxu0
        %614 = vmatprep.mubr.f32.mxu0 0.0
        %615 = vmatmul.mubr.f32.gmra.mrb[0].mxu0 %v413
        %v616 = vpop.f32.mrb[0].mxu0
        %v617 = vadd.f32 0.0, %v616
        %v618 = vpop.f32.mrb[0].mxu0
        %619 = vmatprep.mubr.f32.mxu0 0.0
        %620 = vmatmul.mubr.f32.gmra.mrb[0].mxu0 %v416
        %v621 = vpop.f32.mrb[0].mxu0
        %v622 = vadd.f32 0.0, %v621
        %v623 = vpop.f32.mrb[0].mxu0
        %624 = vmatprep.mubr.f32.mxu0 0.0
        %625 = vmatmul.mubr.f32.gmra.mrb[0].mxu0 %v419
        %v626 = vpop.f32.mrb[0].mxu0
        %v627 = vadd.f32 0.0, %v626
        %v628 = vpop.f32.mrb[0].mxu0
        %629 = vmatprep.mubr.f32.mxu0 0.0
        %630 = vmatmul.mubr.f32.gmra.mrb[0].mxu0 %v422
        %v631 = vpop.f32.mrb[0].mxu0
        %v632 = vadd.f32 0.0, %v631
        %v633 = vpop.f32.mrb[0].mxu0
        %634 = vmatprep.mubr.f32.mxu0 0.0
        %635 = vmatmul.mubr.f32.gmra.mrb[0].mxu0 %v425
        %v636 = vpop.f32.mrb[0].mxu0
        %v637 = vadd.f32 0.0, %v636
        %v638 = vpop.f32.mrb[0].mxu0
        %639 = vmatprep.mubr.f32.mxu0 0.0
        %640 = vmatmul.mubr.f32.gmra.mrb[0].mxu0 %v428
        %v641 = vpop.f32.mrb[0].mxu0
        %v642 = vadd.f32 0.0, %v641
        %v643 = vpop.f32.mrb[0].mxu0
        %644 = vmatprep.mubr.f32.mxu0 0.0
        %645 = vmatmul.mubr.f32.gmra.mrb[0].mxu0 %v431
        %v646 = vpop.f32.mrb[0].mxu0
        %v647 = vadd.f32 0.0, %v646
        %v648 = vpop.f32.mrb[0].mxu0
        %649 = vmatprep.mubr.f32.mxu0 0.0
        %650 = vmatmul.mubr.f32.gmra.mrb[0].mxu0 %v434
        %v651 = vpop.f32.mrb[0].mxu0
        %v652 = vadd.f32 0.0, %v651
        %v653 = vpop.f32.mrb[0].mxu0
        %654 = vmatprep.mubr.f32.mxu0 0.0
        %655 = vmatmul.mubr.f32.gmra.mrb[0].mxu0 %v437
        %v656 = vpop.f32.mrb[0].mxu0
        %v657 = vadd.f32 0.0, %v656
        %v658 = vpop.f32.mrb[0].mxu0
        %659 = vmatprep.mubr.f32.mxu0 0.0
        %660 = vmatmul.mubr.f32.gmra.mrb[0].mxu0 %v440
        %v661 = vpop.f32.mrb[0].mxu0
        %v662 = vadd.f32 0.0, %v661
        %v663 = vpop.f32.mrb[0].mxu0
        %664 = vmatprep.mubr.f32.mxu0 0.0
        %665 = vmatmul.mubr.f32.gmra.mrb[0].mxu0 %v443
        %v666 = vpop.f32.mrb[0].mxu0
        %v667 = vadd.f32 0.0, %v666
        %v668 = vpop.f32.mrb[0].mxu0
        %669 = vdwg.mxu0
        %702 = vrot.lane.b32.xlu0 %v512, 96
        %v703 = vpop.permute.xlu0 %702
        %704 = vrot.lane.b32.xlu0 %v517, 96
        %v705 = vpop.permute.xlu0 %704
        %706 = vrot.lane.b32.xlu0 %v522, 96
        %v707 = vpop.permute.xlu0 %706
        %708 = vrot.lane.b32.xlu0 %v527, 96
        %v709 = vpop.permute.xlu0 %708
        %710 = vrot.lane.b32.xlu0 %v532, 96
        %v711 = vpop.permute.xlu0 %710
        %712 = vrot.lane.b32.xlu0 %v537, 96
        %v713 = vpop.permute.xlu0 %712
        %714 = vrot.lane.b32.xlu0 %v542, 96
        %v715 = vpop.permute.xlu0 %714
        %716 = vrot.lane.b32.xlu0 %v547, 96
        %v717 = vpop.permute.xlu0 %716
        %718 = vrot.lane.b32.xlu0 %v552, 96
        %v719 = vpop.permute.xlu0 %718
        %720 = vrot.lane.b32.xlu0 %v557, 96
        %v721 = vpop.permute.xlu0 %720
        %722 = vrot.lane.b32.xlu0 %v562, 96
        %v723 = vpop.permute.xlu0 %722
        %724 = vrot.lane.b32.xlu0 %v567, 96
        %v725 = vpop.permute.xlu0 %724
        %726 = vrot.lane.b32.xlu0 %v572, 96
        %v727 = vpop.permute.xlu0 %726
        %728 = vrot.lane.b32.xlu0 %v577, 96
        %v729 = vpop.permute.xlu0 %728
        %730 = vrot.lane.b32.xlu0 %v582, 96
        %v731 = vpop.permute.xlu0 %730
        %732 = vrot.lane.b32.xlu0 %v587, 96
        %v733 = vpop.permute.xlu0 %732
        %734 = vrot.lane.b32.xlu0 %v592, 96
        %v735 = vpop.permute.xlu0 %734
        %736 = vrot.lane.b32.xlu0 %v597, 96
        %v737 = vpop.permute.xlu0 %736
        %738 = vrot.lane.b32.xlu0 %v602, 96
        %v739 = vpop.permute.xlu0 %738
        %740 = vrot.lane.b32.xlu0 %v607, 96
        %v741 = vpop.permute.xlu0 %740
        %742 = vrot.lane.b32.xlu0 %v612, 96
        %v743 = vpop.permute.xlu0 %742
        %744 = vrot.lane.b32.xlu0 %v617, 96
        %v745 = vpop.permute.xlu0 %744
        %746 = vrot.lane.b32.xlu0 %v622, 96
        %v747 = vpop.permute.xlu0 %746
        %748 = vrot.lane.b32.xlu0 %v627, 96
        %v749 = vpop.permute.xlu0 %748
        %750 = vrot.lane.b32.xlu0 %v632, 96
        %v751 = vpop.permute.xlu0 %750
        %752 = vrot.lane.b32.xlu0 %v637, 96
        %v753 = vpop.permute.xlu0 %752
        %754 = vrot.lane.b32.xlu0 %v642, 96
        %v755 = vpop.permute.xlu0 %754
        %756 = vrot.lane.b32.xlu0 %v647, 96
        %v757 = vpop.permute.xlu0 %756
        %758 = vrot.lane.b32.xlu0 %v652, 96
        %v759 = vpop.permute.xlu0 %758
        %760 = vrot.lane.b32.xlu0 %v657, 96
        %v761 = vpop.permute.xlu0 %760
        %762 = vrot.lane.b32.xlu0 %v662, 96
        %v763 = vpop.permute.xlu0 %762
        %764 = vrot.lane.b32.xlu0 %v667, 96
        %v765 = vpop.permute.xlu0 %764
        %798 = vxpose.xlu0.b32.start [1/16] %v703, 128
        %799 = vxpose.xlu0.b32.cont [2/16] %v705, 128
        %800 = vxpose.xlu0.b32.cont [3/16] 0.0, 128
        %801 = vxpose.xlu0.b32.cont [4/16] 0.0, 128
        %802 = vxpose.xlu0.b32.cont [5/16] 0.0, 128
        %803 = vxpose.xlu0.b32.cont [6/16] 0.0, 128
        %804 = vxpose.xlu0.b32.cont [7/16] 0.0, 128
        %805 = vxpose.xlu0.b32.cont [8/16] 0.0, 128
        %806 = vxpose.xlu0.b32.cont [9/16] 0.0, 128
        %807 = vxpose.xlu0.b32.cont [10/16] 0.0, 128
        %808 = vxpose.xlu0.b32.cont [11/16] 0.0, 128
        %809 = vxpose.xlu0.b32.cont [12/16] 0.0, 128
        %810 = vxpose.xlu0.b32.cont [13/16] 0.0, 128
        %811 = vxpose.xlu0.b32.cont [14/16] 0.0, 128
        %812 = vxpose.xlu0.b32.cont [15/16] 0.0, 128
        %813 = vxpose.xlu0.b32.end [16/16] 0.0, 128
        %v814 = vpop.trf.xlu0
        %v815 = vpop.trf.xlu0
        %v816 = vpop.trf.xlu0
        %v817 = vpop.trf.xlu0
        %v818 = vpop.trf.xlu0
        %v819 = vpop.trf.xlu0
        %v820 = vpop.trf.xlu0
        %v821 = vpop.trf.xlu0
        %v822 = vpop.trf.xlu0
        %v823 = vpop.trf.xlu0
        %v824 = vpop.trf.xlu0
        %v825 = vpop.trf.xlu0
        %v826 = vpop.trf.xlu0
        %v827 = vpop.trf.xlu0
        %v828 = vpop.trf.xlu0
        %v829 = vpop.trf.xlu0
        %830 = vxpose.xlu0.b32.start [1/16] %v707, 128
        %831 = vxpose.xlu0.b32.cont [2/16] %v709, 128
        %832 = vxpose.xlu0.b32.cont [3/16] 0.0, 128
        %833 = vxpose.xlu0.b32.cont [4/16] 0.0, 128
        %834 = vxpose.xlu0.b32.cont [5/16] 0.0, 128
        %835 = vxpose.xlu0.b32.cont [6/16] 0.0, 128
        %836 = vxpose.xlu0.b32.cont [7/16] 0.0, 128
        %837 = vxpose.xlu0.b32.cont [8/16] 0.0, 128
        %838 = vxpose.xlu0.b32.cont [9/16] 0.0, 128
        %839 = vxpose.xlu0.b32.cont [10/16] 0.0, 128
        %840 = vxpose.xlu0.b32.cont [11/16] 0.0, 128
        %841 = vxpose.xlu0.b32.cont [12/16] 0.0, 128
        %842 = vxpose.xlu0.b32.cont [13/16] 0.0, 128
        %843 = vxpose.xlu0.b32.cont [14/16] 0.0, 128
        %844 = vxpose.xlu0.b32.cont [15/16] 0.0, 128
        %845 = vxpose.xlu0.b32.end [16/16] 0.0, 128
        %v846 = vpop.trf.xlu0
        %v847 = vpop.trf.xlu0
        %v848 = vpop.trf.xlu0
        %v849 = vpop.trf.xlu0
        %v850 = vpop.trf.xlu0
        %v851 = vpop.trf.xlu0
        %v852 = vpop.trf.xlu0
        %v853 = vpop.trf.xlu0
        %v854 = vpop.trf.xlu0
        %v855 = vpop.trf.xlu0
        %v856 = vpop.trf.xlu0
        %v857 = vpop.trf.xlu0
        %v858 = vpop.trf.xlu0
        %v859 = vpop.trf.xlu0
        %v860 = vpop.trf.xlu0
        %v861 = vpop.trf.xlu0
        %862 = vxpose.xlu0.b32.start [1/16] %v711, 128
        %863 = vxpose.xlu0.b32.cont [2/16] %v713, 128
        %864 = vxpose.xlu0.b32.cont [3/16] 0.0, 128
        %865 = vxpose.xlu0.b32.cont [4/16] 0.0, 128
        %866 = vxpose.xlu0.b32.cont [5/16] 0.0, 128
        %867 = vxpose.xlu0.b32.cont [6/16] 0.0, 128
        %868 = vxpose.xlu0.b32.cont [7/16] 0.0, 128
        %869 = vxpose.xlu0.b32.cont [8/16] 0.0, 128
        %870 = vxpose.xlu0.b32.cont [9/16] 0.0, 128
        %871 = vxpose.xlu0.b32.cont [10/16] 0.0, 128
        %872 = vxpose.xlu0.b32.cont [11/16] 0.0, 128
        %873 = vxpose.xlu0.b32.cont [12/16] 0.0, 128
        %874 = vxpose.xlu0.b32.cont [13/16] 0.0, 128
        %875 = vxpose.xlu0.b32.cont [14/16] 0.0, 128
        %876 = vxpose.xlu0.b32.cont [15/16] 0.0, 128
        %877 = vxpose.xlu0.b32.end [16/16] 0.0, 128
        %v878 = vpop.trf.xlu0
        %v879 = vpop.trf.xlu0
        %v880 = vpop.trf.xlu0
        %v881 = vpop.trf.xlu0
        %v882 = vpop.trf.xlu0
        %v883 = vpop.trf.xlu0
        %v884 = vpop.trf.xlu0
        %v885 = vpop.trf.xlu0
        %v886 = vpop.trf.xlu0
        %v887 = vpop.trf.xlu0
        %v888 = vpop.trf.xlu0
        %v889 = vpop.trf.xlu0
        %v890 = vpop.trf.xlu0
        %v891 = vpop.trf.xlu0
        %v892 = vpop.trf.xlu0
        %v893 = vpop.trf.xlu0
        %894 = vxpose.xlu0.b32.start [1/16] %v715, 128
        %895 = vxpose.xlu0.b32.cont [2/16] %v717, 128
        %896 = vxpose.xlu0.b32.cont [3/16] 0.0, 128
        %897 = vxpose.xlu0.b32.cont [4/16] 0.0, 128
        %898 = vxpose.xlu0.b32.cont [5/16] 0.0, 128
        %899 = vxpose.xlu0.b32.cont [6/16] 0.0, 128
        %900 = vxpose.xlu0.b32.cont [7/16] 0.0, 128
        %901 = vxpose.xlu0.b32.cont [8/16] 0.0, 128
        %902 = vxpose.xlu0.b32.cont [9/16] 0.0, 128
        %903 = vxpose.xlu0.b32.cont [10/16] 0.0, 128
        %904 = vxpose.xlu0.b32.cont [11/16] 0.0, 128
        %905 = vxpose.xlu0.b32.cont [12/16] 0.0, 128
        %906 = vxpose.xlu0.b32.cont [13/16] 0.0, 128
        %907 = vxpose.xlu0.b32.cont [14/16] 0.0, 128
        %908 = vxpose.xlu0.b32.cont [15/16] 0.0, 128
        %909 = vxpose.xlu0.b32.end [16/16] 0.0, 128
        %v910 = vpop.trf.xlu0
        %v911 = vpop.trf.xlu0
        %v912 = vpop.trf.xlu0
        %v913 = vpop.trf.xlu0
        %v914 = vpop.trf.xlu0
        %v915 = vpop.trf.xlu0
        %v916 = vpop.trf.xlu0
        %v917 = vpop.trf.xlu0
        %v918 = vpop.trf.xlu0
        %v919 = vpop.trf.xlu0
        %v920 = vpop.trf.xlu0
        %v921 = vpop.trf.xlu0
        %v922 = vpop.trf.xlu0
        %v923 = vpop.trf.xlu0
        %v924 = vpop.trf.xlu0
        %v925 = vpop.trf.xlu0
        %926 = vxpose.xlu0.b32.start [1/16] %v719, 128
        %927 = vxpose.xlu0.b32.cont [2/16] %v721, 128
        %928 = vxpose.xlu0.b32.cont [3/16] 0.0, 128
        %929 = vxpose.xlu0.b32.cont [4/16] 0.0, 128
        %930 = vxpose.xlu0.b32.cont [5/16] 0.0, 128
        %931 = vxpose.xlu0.b32.cont [6/16] 0.0, 128
        %932 = vxpose.xlu0.b32.cont [7/16] 0.0, 128
        %933 = vxpose.xlu0.b32.cont [8/16] 0.0, 128
        %934 = vxpose.xlu0.b32.cont [9/16] 0.0, 128
        %935 = vxpose.xlu0.b32.cont [10/16] 0.0, 128
        %936 = vxpose.xlu0.b32.cont [11/16] 0.0, 128
        %937 = vxpose.xlu0.b32.cont [12/16] 0.0, 128
        %938 = vxpose.xlu0.b32.cont [13/16] 0.0, 128
        %939 = vxpose.xlu0.b32.cont [14/16] 0.0, 128
        %940 = vxpose.xlu0.b32.cont [15/16] 0.0, 128
        %941 = vxpose.xlu0.b32.end [16/16] 0.0, 128
        %v942 = vpop.trf.xlu0
        %v943 = vpop.trf.xlu0
        %v944 = vpop.trf.xlu0
        %v945 = vpop.trf.xlu0
        %v946 = vpop.trf.xlu0
        %v947 = vpop.trf.xlu0
        %v948 = vpop.trf.xlu0
        %v949 = vpop.trf.xlu0
        %v950 = vpop.trf.xlu0
        %v951 = vpop.trf.xlu0
        %v952 = vpop.trf.xlu0
        %v953 = vpop.trf.xlu0
        %v954 = vpop.trf.xlu0
        %v955 = vpop.trf.xlu0
        %v956 = vpop.trf.xlu0
        %v957 = vpop.trf.xlu0
        %958 = vxpose.xlu0.b32.start [1/16] %v723, 128
        %959 = vxpose.xlu0.b32.cont [2/16] %v725, 128
        %960 = vxpose.xlu0.b32.cont [3/16] 0.0, 128
        %961 = vxpose.xlu0.b32.cont [4/16] 0.0, 128
        %962 = vxpose.xlu0.b32.cont [5/16] 0.0, 128
        %963 = vxpose.xlu0.b32.cont [6/16] 0.0, 128
        %964 = vxpose.xlu0.b32.cont [7/16] 0.0, 128
        %965 = vxpose.xlu0.b32.cont [8/16] 0.0, 128
        %966 = vxpose.xlu0.b32.cont [9/16] 0.0, 128
        %967 = vxpose.xlu0.b32.cont [10/16] 0.0, 128
        %968 = vxpose.xlu0.b32.cont [11/16] 0.0, 128
        %969 = vxpose.xlu0.b32.cont [12/16] 0.0, 128
        %970 = vxpose.xlu0.b32.cont [13/16] 0.0, 128
        %971 = vxpose.xlu0.b32.cont [14/16] 0.0, 128
        %972 = vxpose.xlu0.b32.cont [15/16] 0.0, 128
        %973 = vxpose.xlu0.b32.end [16/16] 0.0, 128
        %v974 = vpop.trf.xlu0
        %v975 = vpop.trf.xlu0
        %v976 = vpop.trf.xlu0
        %v977 = vpop.trf.xlu0
        %v978 = vpop.trf.xlu0
        %v979 = vpop.trf.xlu0
        %v980 = vpop.trf.xlu0
        %v981 = vpop.trf.xlu0
        %v982 = vpop.trf.xlu0
        %v983 = vpop.trf.xlu0
        %v984 = vpop.trf.xlu0
        %v985 = vpop.trf.xlu0
        %v986 = vpop.trf.xlu0
        %v987 = vpop.trf.xlu0
        %v988 = vpop.trf.xlu0
        %v989 = vpop.trf.xlu0
        %990 = vxpose.xlu0.b32.start [1/16] %v727, 128
        %991 = vxpose.xlu0.b32.cont [2/16] %v729, 128
        %992 = vxpose.xlu0.b32.cont [3/16] 0.0, 128
        %993 = vxpose.xlu0.b32.cont [4/16] 0.0, 128
        %994 = vxpose.xlu0.b32.cont [5/16] 0.0, 128
        %995 = vxpose.xlu0.b32.cont [6/16] 0.0, 128
        %996 = vxpose.xlu0.b32.cont [7/16] 0.0, 128
        %997 = vxpose.xlu0.b32.cont [8/16] 0.0, 128
        %998 = vxpose.xlu0.b32.cont [9/16] 0.0, 128
        %999 = vxpose.xlu0.b32.cont [10/16] 0.0, 128
        %1000 = vxpose.xlu0.b32.cont [11/16] 0.0, 128
        %1001 = vxpose.xlu0.b32.cont [12/16] 0.0, 128
        %1002 = vxpose.xlu0.b32.cont [13/16] 0.0, 128
        %1003 = vxpose.xlu0.b32.cont [14/16] 0.0, 128
        %1004 = vxpose.xlu0.b32.cont [15/16] 0.0, 128
        %1005 = vxpose.xlu0.b32.end [16/16] 0.0, 128
        %v1006 = vpop.trf.xlu0
        %v1007 = vpop.trf.xlu0
        %v1008 = vpop.trf.xlu0
        %v1009 = vpop.trf.xlu0
        %v1010 = vpop.trf.xlu0
        %v1011 = vpop.trf.xlu0
        %v1012 = vpop.trf.xlu0
        %v1013 = vpop.trf.xlu0
        %v1014 = vpop.trf.xlu0
        %v1015 = vpop.trf.xlu0
        %v1016 = vpop.trf.xlu0
        %v1017 = vpop.trf.xlu0
        %v1018 = vpop.trf.xlu0
        %v1019 = vpop.trf.xlu0
        %v1020 = vpop.trf.xlu0
        %v1021 = vpop.trf.xlu0
        %1022 = vxpose.xlu0.b32.start [1/16] %v731, 128
        %1023 = vxpose.xlu0.b32.cont [2/16] %v733, 128
        %1024 = vxpose.xlu0.b32.cont [3/16] 0.0, 128
        %1025 = vxpose.xlu0.b32.cont [4/16] 0.0, 128
        %1026 = vxpose.xlu0.b32.cont [5/16] 0.0, 128
        %1027 = vxpose.xlu0.b32.cont [6/16] 0.0, 128
        %1028 = vxpose.xlu0.b32.cont [7/16] 0.0, 128
        %1029 = vxpose.xlu0.b32.cont [8/16] 0.0, 128
        %1030 = vxpose.xlu0.b32.cont [9/16] 0.0, 128
        %1031 = vxpose.xlu0.b32.cont [10/16] 0.0, 128
        %1032 = vxpose.xlu0.b32.cont [11/16] 0.0, 128
        %1033 = vxpose.xlu0.b32.cont [12/16] 0.0, 128
        %1034 = vxpose.xlu0.b32.cont [13/16] 0.0, 128
        %1035 = vxpose.xlu0.b32.cont [14/16] 0.0, 128
        %1036 = vxpose.xlu0.b32.cont [15/16] 0.0, 128
        %1037 = vxpose.xlu0.b32.end [16/16] 0.0, 128
        %v1038 = vpop.trf.xlu0
        %v1039 = vpop.trf.xlu0
        %v1040 = vpop.trf.xlu0
        %v1041 = vpop.trf.xlu0
        %v1042 = vpop.trf.xlu0
        %v1043 = vpop.trf.xlu0
        %v1044 = vpop.trf.xlu0
        %v1045 = vpop.trf.xlu0
        %v1046 = vpop.trf.xlu0
        %v1047 = vpop.trf.xlu0
        %v1048 = vpop.trf.xlu0
        %v1049 = vpop.trf.xlu0
        %v1050 = vpop.trf.xlu0
        %v1051 = vpop.trf.xlu0
        %v1052 = vpop.trf.xlu0
        %v1053 = vpop.trf.xlu0
        %1054 = vxpose.xlu0.b32.start [1/16] %v735, 128
        %1055 = vxpose.xlu0.b32.cont [2/16] %v737, 128
        %1056 = vxpose.xlu0.b32.cont [3/16] 0.0, 128
        %1057 = vxpose.xlu0.b32.cont [4/16] 0.0, 128
        %1058 = vxpose.xlu0.b32.cont [5/16] 0.0, 128
        %1059 = vxpose.xlu0.b32.cont [6/16] 0.0, 128
        %1060 = vxpose.xlu0.b32.cont [7/16] 0.0, 128
        %1061 = vxpose.xlu0.b32.cont [8/16] 0.0, 128
        %1062 = vxpose.xlu0.b32.cont [9/16] 0.0, 128
        %1063 = vxpose.xlu0.b32.cont [10/16] 0.0, 128
        %1064 = vxpose.xlu0.b32.cont [11/16] 0.0, 128
        %1065 = vxpose.xlu0.b32.cont [12/16] 0.0, 128
        %1066 = vxpose.xlu0.b32.cont [13/16] 0.0, 128
        %1067 = vxpose.xlu0.b32.cont [14/16] 0.0, 128
        %1068 = vxpose.xlu0.b32.cont [15/16] 0.0, 128
        %1069 = vxpose.xlu0.b32.end [16/16] 0.0, 128
        %v1070 = vpop.trf.xlu0
        %v1071 = vpop.trf.xlu0
        %v1072 = vpop.trf.xlu0
        %v1073 = vpop.trf.xlu0
        %v1074 = vpop.trf.xlu0
        %v1075 = vpop.trf.xlu0
        %v1076 = vpop.trf.xlu0
        %v1077 = vpop.trf.xlu0
        %v1078 = vpop.trf.xlu0
        %v1079 = vpop.trf.xlu0
        %v1080 = vpop.trf.xlu0
        %v1081 = vpop.trf.xlu0
        %v1082 = vpop.trf.xlu0
        %v1083 = vpop.trf.xlu0
        %v1084 = vpop.trf.xlu0
        %v1085 = vpop.trf.xlu0
        %1086 = vxpose.xlu0.b32.start [1/16] %v739, 128
        %1087 = vxpose.xlu0.b32.cont [2/16] %v741, 128
        %1088 = vxpose.xlu0.b32.cont [3/16] 0.0, 128
        %1089 = vxpose.xlu0.b32.cont [4/16] 0.0, 128
        %1090 = vxpose.xlu0.b32.cont [5/16] 0.0, 128
        %1091 = vxpose.xlu0.b32.cont [6/16] 0.0, 128
        %1092 = vxpose.xlu0.b32.cont [7/16] 0.0, 128
        %1093 = vxpose.xlu0.b32.cont [8/16] 0.0, 128
        %1094 = vxpose.xlu0.b32.cont [9/16] 0.0, 128
        %1095 = vxpose.xlu0.b32.cont [10/16] 0.0, 128
        %1096 = vxpose.xlu0.b32.cont [11/16] 0.0, 128
        %1097 = vxpose.xlu0.b32.cont [12/16] 0.0, 128
        %1098 = vxpose.xlu0.b32.cont [13/16] 0.0, 128
        %1099 = vxpose.xlu0.b32.cont [14/16] 0.0, 128
        %1100 = vxpose.xlu0.b32.cont [15/16] 0.0, 128
        %1101 = vxpose.xlu0.b32.end [16/16] 0.0, 128
        %v1102 = vpop.trf.xlu0
        %v1103 = vpop.trf.xlu0
        %v1104 = vpop.trf.xlu0
        %v1105 = vpop.trf.xlu0
        %v1106 = vpop.trf.xlu0
        %v1107 = vpop.trf.xlu0
        %v1108 = vpop.trf.xlu0
        %v1109 = vpop.trf.xlu0
        %v1110 = vpop.trf.xlu0
        %v1111 = vpop.trf.xlu0
        %v1112 = vpop.trf.xlu0
        %v1113 = vpop.trf.xlu0
        %v1114 = vpop.trf.xlu0
        %v1115 = vpop.trf.xlu0
        %v1116 = vpop.trf.xlu0
        %v1117 = vpop.trf.xlu0
        %1118 = vxpose.xlu0.b32.start [1/16] %v743, 128
        %1119 = vxpose.xlu0.b32.cont [2/16] %v745, 128
        %1120 = vxpose.xlu0.b32.cont [3/16] 0.0, 128
        %1121 = vxpose.xlu0.b32.cont [4/16] 0.0, 128
        %1122 = vxpose.xlu0.b32.cont [5/16] 0.0, 128
        %1123 = vxpose.xlu0.b32.cont [6/16] 0.0, 128
        %1124 = vxpose.xlu0.b32.cont [7/16] 0.0, 128
        %1125 = vxpose.xlu0.b32.cont [8/16] 0.0, 128
        %1126 = vxpose.xlu0.b32.cont [9/16] 0.0, 128
        %1127 = vxpose.xlu0.b32.cont [10/16] 0.0, 128
        %1128 = vxpose.xlu0.b32.cont [11/16] 0.0, 128
        %1129 = vxpose.xlu0.b32.cont [12/16] 0.0, 128
        %1130 = vxpose.xlu0.b32.cont [13/16] 0.0, 128
        %1131 = vxpose.xlu0.b32.cont [14/16] 0.0, 128
        %1132 = vxpose.xlu0.b32.cont [15/16] 0.0, 128
        %1133 = vxpose.xlu0.b32.end [16/16] 0.0, 128
        %v1134 = vpop.trf.xlu0
        %v1135 = vpop.trf.xlu0
        %v1136 = vpop.trf.xlu0
        %v1137 = vpop.trf.xlu0
        %v1138 = vpop.trf.xlu0
        %v1139 = vpop.trf.xlu0
        %v1140 = vpop.trf.xlu0
        %v1141 = vpop.trf.xlu0
        %v1142 = vpop.trf.xlu0
        %v1143 = vpop.trf.xlu0
        %v1144 = vpop.trf.xlu0
        %v1145 = vpop.trf.xlu0
        %v1146 = vpop.trf.xlu0
        %v1147 = vpop.trf.xlu0
        %v1148 = vpop.trf.xlu0
        %v1149 = vpop.trf.xlu0
        %1150 = vxpose.xlu0.b32.start [1/16] %v747, 128
        %1151 = vxpose.xlu0.b32.cont [2/16] %v749, 128
        %1152 = vxpose.xlu0.b32.cont [3/16] 0.0, 128
        %1153 = vxpose.xlu0.b32.cont [4/16] 0.0, 128
        %1154 = vxpose.xlu0.b32.cont [5/16] 0.0, 128
        %1155 = vxpose.xlu0.b32.cont [6/16] 0.0, 128
        %1156 = vxpose.xlu0.b32.cont [7/16] 0.0, 128
        %1157 = vxpose.xlu0.b32.cont [8/16] 0.0, 128
        %1158 = vxpose.xlu0.b32.cont [9/16] 0.0, 128
        %1159 = vxpose.xlu0.b32.cont [10/16] 0.0, 128
        %1160 = vxpose.xlu0.b32.cont [11/16] 0.0, 128
        %1161 = vxpose.xlu0.b32.cont [12/16] 0.0, 128
        %1162 = vxpose.xlu0.b32.cont [13/16] 0.0, 128
        %1163 = vxpose.xlu0.b32.cont [14/16] 0.0, 128
        %1164 = vxpose.xlu0.b32.cont [15/16] 0.0, 128
        %1165 = vxpose.xlu0.b32.end [16/16] 0.0, 128
        %v1166 = vpop.trf.xlu0
        %v1167 = vpop.trf.xlu0
        %v1168 = vpop.trf.xlu0
        %v1169 = vpop.trf.xlu0
        %v1170 = vpop.trf.xlu0
        %v1171 = vpop.trf.xlu0
        %v1172 = vpop.trf.xlu0
        %v1173 = vpop.trf.xlu0
        %v1174 = vpop.trf.xlu0
        %v1175 = vpop.trf.xlu0
        %v1176 = vpop.trf.xlu0
        %v1177 = vpop.trf.xlu0
        %v1178 = vpop.trf.xlu0
        %v1179 = vpop.trf.xlu0
        %v1180 = vpop.trf.xlu0
        %v1181 = vpop.trf.xlu0
        %1182 = vxpose.xlu0.b32.start [1/16] %v751, 128
        %1183 = vxpose.xlu0.b32.cont [2/16] %v753, 128
        %1184 = vxpose.xlu0.b32.cont [3/16] 0.0, 128
        %1185 = vxpose.xlu0.b32.cont [4/16] 0.0, 128
        %1186 = vxpose.xlu0.b32.cont [5/16] 0.0, 128
        %1187 = vxpose.xlu0.b32.cont [6/16] 0.0, 128
        %1188 = vxpose.xlu0.b32.cont [7/16] 0.0, 128
        %1189 = vxpose.xlu0.b32.cont [8/16] 0.0, 128
        %1190 = vxpose.xlu0.b32.cont [9/16] 0.0, 128
        %1191 = vxpose.xlu0.b32.cont [10/16] 0.0, 128
        %1192 = vxpose.xlu0.b32.cont [11/16] 0.0, 128
        %1193 = vxpose.xlu0.b32.cont [12/16] 0.0, 128
        %1194 = vxpose.xlu0.b32.cont [13/16] 0.0, 128
        %1195 = vxpose.xlu0.b32.cont [14/16] 0.0, 128
        %1196 = vxpose.xlu0.b32.cont [15/16] 0.0, 128
        %1197 = vxpose.xlu0.b32.end [16/16] 0.0, 128
        %v1198 = vpop.trf.xlu0
        %v1199 = vpop.trf.xlu0
        %v1200 = vpop.trf.xlu0
        %v1201 = vpop.trf.xlu0
        %v1202 = vpop.trf.xlu0
        %v1203 = vpop.trf.xlu0
        %v1204 = vpop.trf.xlu0
        %v1205 = vpop.trf.xlu0
        %v1206 = vpop.trf.xlu0
        %v1207 = vpop.trf.xlu0
        %v1208 = vpop.trf.xlu0
        %v1209 = vpop.trf.xlu0
        %v1210 = vpop.trf.xlu0
        %v1211 = vpop.trf.xlu0
        %v1212 = vpop.trf.xlu0
        %v1213 = vpop.trf.xlu0
        %1214 = vxpose.xlu0.b32.start [1/16] %v755, 128
        %1215 = vxpose.xlu0.b32.cont [2/16] %v757, 128
        %1216 = vxpose.xlu0.b32.cont [3/16] 0.0, 128
        %1217 = vxpose.xlu0.b32.cont [4/16] 0.0, 128
        %1218 = vxpose.xlu0.b32.cont [5/16] 0.0, 128
        %1219 = vxpose.xlu0.b32.cont [6/16] 0.0, 128
        %1220 = vxpose.xlu0.b32.cont [7/16] 0.0, 128
        %1221 = vxpose.xlu0.b32.cont [8/16] 0.0, 128
        %1222 = vxpose.xlu0.b32.cont [9/16] 0.0, 128
        %1223 = vxpose.xlu0.b32.cont [10/16] 0.0, 128
        %1224 = vxpose.xlu0.b32.cont [11/16] 0.0, 128
        %1225 = vxpose.xlu0.b32.cont [12/16] 0.0, 128
        %1226 = vxpose.xlu0.b32.cont [13/16] 0.0, 128
        %1227 = vxpose.xlu0.b32.cont [14/16] 0.0, 128
        %1228 = vxpose.xlu0.b32.cont [15/16] 0.0, 128
        %1229 = vxpose.xlu0.b32.end [16/16] 0.0, 128
        %v1230 = vpop.trf.xlu0
        %v1231 = vpop.trf.xlu0
        %v1232 = vpop.trf.xlu0
        %v1233 = vpop.trf.xlu0
        %v1234 = vpop.trf.xlu0
        %v1235 = vpop.trf.xlu0
        %v1236 = vpop.trf.xlu0
        %v1237 = vpop.trf.xlu0
        %v1238 = vpop.trf.xlu0
        %v1239 = vpop.trf.xlu0
        %v1240 = vpop.trf.xlu0
        %v1241 = vpop.trf.xlu0
        %v1242 = vpop.trf.xlu0
        %v1243 = vpop.trf.xlu0
        %v1244 = vpop.trf.xlu0
        %v1245 = vpop.trf.xlu0
        %1246 = vxpose.xlu0.b32.start [1/16] %v759, 128
        %1247 = vxpose.xlu0.b32.cont [2/16] %v761, 128
        %1248 = vxpose.xlu0.b32.cont [3/16] 0.0, 128
        %1249 = vxpose.xlu0.b32.cont [4/16] 0.0, 128
        %1250 = vxpose.xlu0.b32.cont [5/16] 0.0, 128
        %1251 = vxpose.xlu0.b32.cont [6/16] 0.0, 128
        %1252 = vxpose.xlu0.b32.cont [7/16] 0.0, 128
        %1253 = vxpose.xlu0.b32.cont [8/16] 0.0, 128
        %1254 = vxpose.xlu0.b32.cont [9/16] 0.0, 128
        %1255 = vxpose.xlu0.b32.cont [10/16] 0.0, 128
        %1256 = vxpose.xlu0.b32.cont [11/16] 0.0, 128
        %1257 = vxpose.xlu0.b32.cont [12/16] 0.0, 128
        %1258 = vxpose.xlu0.b32.cont [13/16] 0.0, 128
        %1259 = vxpose.xlu0.b32.cont [14/16] 0.0, 128
        %1260 = vxpose.xlu0.b32.cont [15/16] 0.0, 128
        %1261 = vxpose.xlu0.b32.end [16/16] 0.0, 128
        %v1262 = vpop.trf.xlu0
        %v1263 = vpop.trf.xlu0
        %v1264 = vpop.trf.xlu0
        %v1265 = vpop.trf.xlu0
        %v1266 = vpop.trf.xlu0
        %v1267 = vpop.trf.xlu0
        %v1268 = vpop.trf.xlu0
        %v1269 = vpop.trf.xlu0
        %v1270 = vpop.trf.xlu0
        %v1271 = vpop.trf.xlu0
        %v1272 = vpop.trf.xlu0
        %v1273 = vpop.trf.xlu0
        %v1274 = vpop.trf.xlu0
        %v1275 = vpop.trf.xlu0
        %v1276 = vpop.trf.xlu0
        %v1277 = vpop.trf.xlu0
        %1278 = vxpose.xlu0.b32.start [1/16] %v763, 128
        %1279 = vxpose.xlu0.b32.cont [2/16] %v765, 128
        %1280 = vxpose.xlu0.b32.cont [3/16] 0.0, 128
        %1281 = vxpose.xlu0.b32.cont [4/16] 0.0, 128
        %1282 = vxpose.xlu0.b32.cont [5/16] 0.0, 128
        %1283 = vxpose.xlu0.b32.cont [6/16] 0.0, 128
        %1284 = vxpose.xlu0.b32.cont [7/16] 0.0, 128
        %1285 = vxpose.xlu0.b32.cont [8/16] 0.0, 128
        %1286 = vxpose.xlu0.b32.cont [9/16] 0.0, 128
        %1287 = vxpose.xlu0.b32.cont [10/16] 0.0, 128
        %1288 = vxpose.xlu0.b32.cont [11/16] 0.0, 128
        %1289 = vxpose.xlu0.b32.cont [12/16] 0.0, 128
        %1290 = vxpose.xlu0.b32.cont [13/16] 0.0, 128
        %1291 = vxpose.xlu0.b32.cont [14/16] 0.0, 128
        %1292 = vxpose.xlu0.b32.cont [15/16] 0.0, 128
        %1293 = vxpose.xlu0.b32.end [16/16] 0.0, 128
        %v1294 = vpop.trf.xlu0
        %v1295 = vpop.trf.xlu0
        %v1296 = vpop.trf.xlu0
        %v1297 = vpop.trf.xlu0
        %v1298 = vpop.trf.xlu0
        %v1299 = vpop.trf.xlu0
        %v1300 = vpop.trf.xlu0
        %v1301 = vpop.trf.xlu0
        %v1302 = vpop.trf.xlu0
        %v1303 = vpop.trf.xlu0
        %v1304 = vpop.trf.xlu0
        %v1305 = vpop.trf.xlu0
        %v1306 = vpop.trf.xlu0
        %v1307 = vpop.trf.xlu0
        %v1308 = vpop.trf.xlu0
        %v1309 = vpop.trf.xlu0
        %1374 = vrot.lane.b32.xlu0 %v814, 16
        %v1375 = vpop.permute.xlu0 %1374
        %1376 = vrot.lane.b32.xlu0 %v815, 16
        %v1377 = vpop.permute.xlu0 %1376
        %1378 = vrot.lane.b32.xlu0 %v816, 16
        %v1379 = vpop.permute.xlu0 %1378
        %1380 = vrot.lane.b32.xlu0 %v817, 16
        %v1381 = vpop.permute.xlu0 %1380
        %1382 = vrot.lane.b32.xlu0 %v846, 16
        %v1383 = vpop.permute.xlu0 %1382
        %1384 = vrot.lane.b32.xlu0 %v847, 16
        %v1385 = vpop.permute.xlu0 %1384
        %1386 = vrot.lane.b32.xlu0 %v848, 16
        %v1387 = vpop.permute.xlu0 %1386
        %1388 = vrot.lane.b32.xlu0 %v849, 16
        %v1389 = vpop.permute.xlu0 %1388
        %1390 = vrot.lane.b32.xlu0 %v878, 16
        %v1391 = vpop.permute.xlu0 %1390
        %1392 = vrot.lane.b32.xlu0 %v879, 16
        %v1393 = vpop.permute.xlu0 %1392
        %1394 = vrot.lane.b32.xlu0 %v880, 16
        %v1395 = vpop.permute.xlu0 %1394
        %1396 = vrot.lane.b32.xlu0 %v881, 16
        %v1397 = vpop.permute.xlu0 %1396
        %1398 = vrot.lane.b32.xlu0 %v910, 16
        %v1399 = vpop.permute.xlu0 %1398
        %1400 = vrot.lane.b32.xlu0 %v911, 16
        %v1401 = vpop.permute.xlu0 %1400
        %1402 = vrot.lane.b32.xlu0 %v912, 16
        %v1403 = vpop.permute.xlu0 %1402
        %1404 = vrot.lane.b32.xlu0 %v913, 16
        %v1405 = vpop.permute.xlu0 %1404
        %1406 = vrot.lane.b32.xlu0 %v942, 16
        %v1407 = vpop.permute.xlu0 %1406
        %1408 = vrot.lane.b32.xlu0 %v943, 16
        %v1409 = vpop.permute.xlu0 %1408
        %1410 = vrot.lane.b32.xlu0 %v944, 16
        %v1411 = vpop.permute.xlu0 %1410
        %1412 = vrot.lane.b32.xlu0 %v945, 16
        %v1413 = vpop.permute.xlu0 %1412
        %1414 = vrot.lane.b32.xlu0 %v974, 16
        %v1415 = vpop.permute.xlu0 %1414
        %1416 = vrot.lane.b32.xlu0 %v975, 16
        %v1417 = vpop.permute.xlu0 %1416
        %1418 = vrot.lane.b32.xlu0 %v976, 16
        %v1419 = vpop.permute.xlu0 %1418
        %1420 = vrot.lane.b32.xlu0 %v977, 16
        %v1421 = vpop.permute.xlu0 %1420
        %1422 = vrot.lane.b32.xlu0 %v1006, 16
        %v1423 = vpop.permute.xlu0 %1422
        %1424 = vrot.lane.b32.xlu0 %v1007, 16
        %v1425 = vpop.permute.xlu0 %1424
        %1426 = vrot.lane.b32.xlu0 %v1008, 16
        %v1427 = vpop.permute.xlu0 %1426
        %1428 = vrot.lane.b32.xlu0 %v1009, 16
        %v1429 = vpop.permute.xlu0 %1428
        %1430 = vrot.lane.b32.xlu0 %v1038, 16
        %v1431 = vpop.permute.xlu0 %1430
        %1432 = vrot.lane.b32.xlu0 %v1039, 16
        %v1433 = vpop.permute.xlu0 %1432
        %1434 = vrot.lane.b32.xlu0 %v1040, 16
        %v1435 = vpop.permute.xlu0 %1434
        %1436 = vrot.lane.b32.xlu0 %v1041, 16
        %v1437 = vpop.permute.xlu0 %1436
        %1438 = vrot.lane.b32.xlu0 %v1070, 16
        %v1439 = vpop.permute.xlu0 %1438
        %1440 = vrot.lane.b32.xlu0 %v1071, 16
        %v1441 = vpop.permute.xlu0 %1440
        %1442 = vrot.lane.b32.xlu0 %v1072, 16
        %v1443 = vpop.permute.xlu0 %1442
        %1444 = vrot.lane.b32.xlu0 %v1073, 16
        %v1445 = vpop.permute.xlu0 %1444
        %1446 = vrot.lane.b32.xlu0 %v1102, 16
        %v1447 = vpop.permute.xlu0 %1446
        %1448 = vrot.lane.b32.xlu0 %v1103, 16
        %v1449 = vpop.permute.xlu0 %1448
        %1450 = vrot.lane.b32.xlu0 %v1104, 16
        %v1451 = vpop.permute.xlu0 %1450
        %1452 = vrot.lane.b32.xlu0 %v1105, 16
        %v1453 = vpop.permute.xlu0 %1452
        %1454 = vrot.lane.b32.xlu0 %v1134, 16
        %v1455 = vpop.permute.xlu0 %1454
        %1456 = vrot.lane.b32.xlu0 %v1135, 16
        %v1457 = vpop.permute.xlu0 %1456
        %1458 = vrot.lane.b32.xlu0 %v1136, 16
        %v1459 = vpop.permute.xlu0 %1458
        %1460 = vrot.lane.b32.xlu0 %v1137, 16
        %v1461 = vpop.permute.xlu0 %1460
        %1462 = vrot.lane.b32.xlu0 %v1166, 16
        %v1463 = vpop.permute.xlu0 %1462
        %1464 = vrot.lane.b32.xlu0 %v1167, 16
        %v1465 = vpop.permute.xlu0 %1464
        %1466 = vrot.lane.b32.xlu0 %v1168, 16
        %v1467 = vpop.permute.xlu0 %1466
        %1468 = vrot.lane.b32.xlu0 %v1169, 16
        %v1469 = vpop.permute.xlu0 %1468
        %1470 = vrot.lane.b32.xlu0 %v1198, 16
        %v1471 = vpop.permute.xlu0 %1470
        %1472 = vrot.lane.b32.xlu0 %v1199, 16
        %v1473 = vpop.permute.xlu0 %1472
        %1474 = vrot.lane.b32.xlu0 %v1200, 16
        %v1475 = vpop.permute.xlu0 %1474
        %1476 = vrot.lane.b32.xlu0 %v1201, 16
        %v1477 = vpop.permute.xlu0 %1476
        %1478 = vrot.lane.b32.xlu0 %v1230, 16
        %v1479 = vpop.permute.xlu0 %1478
        %1480 = vrot.lane.b32.xlu0 %v1231, 16
        %v1481 = vpop.permute.xlu0 %1480
        %1482 = vrot.lane.b32.xlu0 %v1232, 16
        %v1483 = vpop.permute.xlu0 %1482
        %1484 = vrot.lane.b32.xlu0 %v1233, 16
        %v1485 = vpop.permute.xlu0 %1484
        %1486 = vrot.lane.b32.xlu0 %v1262, 16
        %v1487 = vpop.permute.xlu0 %1486
        %1488 = vrot.lane.b32.xlu0 %v1263, 16
        %v1489 = vpop.permute.xlu0 %1488
        %1490 = vrot.lane.b32.xlu0 %v1264, 16
        %v1491 = vpop.permute.xlu0 %1490
        %1492 = vrot.lane.b32.xlu0 %v1265, 16
        %v1493 = vpop.permute.xlu0 %1492
        %1494 = vrot.lane.b32.xlu0 %v1294, 16
        %v1495 = vpop.permute.xlu0 %1494
        %1496 = vrot.lane.b32.xlu0 %v1295, 16
        %v1497 = vpop.permute.xlu0 %1496
        %1498 = vrot.lane.b32.xlu0 %v1296, 16
        %v1499 = vpop.permute.xlu0 %1498
        %1500 = vrot.lane.b32.xlu0 %v1297, 16
        %v1501 = vpop.permute.xlu0 %1500
        %1566 = vrot.lane.b32.xlu0 %v814, 32
        %v1567 = vpop.permute.xlu0 %1566
        %1568 = vrot.lane.b32.xlu0 %v815, 32
        %v1569 = vpop.permute.xlu0 %1568
        %1570 = vrot.lane.b32.xlu0 %v816, 32
        %v1571 = vpop.permute.xlu0 %1570
        %1572 = vrot.lane.b32.xlu0 %v817, 32
        %v1573 = vpop.permute.xlu0 %1572
        %1574 = vrot.lane.b32.xlu0 %v846, 32
        %v1575 = vpop.permute.xlu0 %1574
        %1576 = vrot.lane.b32.xlu0 %v847, 32
        %v1577 = vpop.permute.xlu0 %1576
        %1578 = vrot.lane.b32.xlu0 %v848, 32
        %v1579 = vpop.permute.xlu0 %1578
        %1580 = vrot.lane.b32.xlu0 %v849, 32
        %v1581 = vpop.permute.xlu0 %1580
        %1582 = vrot.lane.b32.xlu0 %v878, 32
        %v1583 = vpop.permute.xlu0 %1582
        %1584 = vrot.lane.b32.xlu0 %v879, 32
        %v1585 = vpop.permute.xlu0 %1584
        %1586 = vrot.lane.b32.xlu0 %v880, 32
        %v1587 = vpop.permute.xlu0 %1586
        %1588 = vrot.lane.b32.xlu0 %v881, 32
        %v1589 = vpop.permute.xlu0 %1588
        %1590 = vrot.lane.b32.xlu0 %v910, 32
        %v1591 = vpop.permute.xlu0 %1590
        %1592 = vrot.lane.b32.xlu0 %v911, 32
        %v1593 = vpop.permute.xlu0 %1592
        %1594 = vrot.lane.b32.xlu0 %v912, 32
        %v1595 = vpop.permute.xlu0 %1594
        %1596 = vrot.lane.b32.xlu0 %v913, 32
        %v1597 = vpop.permute.xlu0 %1596
        %1598 = vrot.lane.b32.xlu0 %v942, 32
        %v1599 = vpop.permute.xlu0 %1598
        %1600 = vrot.lane.b32.xlu0 %v943, 32
        %v1601 = vpop.permute.xlu0 %1600
        %1602 = vrot.lane.b32.xlu0 %v944, 32
        %v1603 = vpop.permute.xlu0 %1602
        %1604 = vrot.lane.b32.xlu0 %v945, 32
        %v1605 = vpop.permute.xlu0 %1604
        %1606 = vrot.lane.b32.xlu0 %v974, 32
        %v1607 = vpop.permute.xlu0 %1606
        %1608 = vrot.lane.b32.xlu0 %v975, 32
        %v1609 = vpop.permute.xlu0 %1608
        %1610 = vrot.lane.b32.xlu0 %v976, 32
        %v1611 = vpop.permute.xlu0 %1610
        %1612 = vrot.lane.b32.xlu0 %v977, 32
        %v1613 = vpop.permute.xlu0 %1612
        %1614 = vrot.lane.b32.xlu0 %v1006, 32
        %v1615 = vpop.permute.xlu0 %1614
        %1616 = vrot.lane.b32.xlu0 %v1007, 32
        %v1617 = vpop.permute.xlu0 %1616
        %1618 = vrot.lane.b32.xlu0 %v1008, 32
        %v1619 = vpop.permute.xlu0 %1618
        %1620 = vrot.lane.b32.xlu0 %v1009, 32
        %v1621 = vpop.permute.xlu0 %1620
        %1622 = vrot.lane.b32.xlu0 %v1038, 32
        %v1623 = vpop.permute.xlu0 %1622
        %1624 = vrot.lane.b32.xlu0 %v1039, 32
        %v1625 = vpop.permute.xlu0 %1624
        %1626 = vrot.lane.b32.xlu0 %v1040, 32
        %v1627 = vpop.permute.xlu0 %1626
        %1628 = vrot.lane.b32.xlu0 %v1041, 32
        %v1629 = vpop.permute.xlu0 %1628
        %1630 = vrot.lane.b32.xlu0 %v1070, 32
        %v1631 = vpop.permute.xlu0 %1630
        %1632 = vrot.lane.b32.xlu0 %v1071, 32
        %v1633 = vpop.permute.xlu0 %1632
        %1634 = vrot.lane.b32.xlu0 %v1072, 32
        %v1635 = vpop.permute.xlu0 %1634
        %1636 = vrot.lane.b32.xlu0 %v1073, 32
        %v1637 = vpop.permute.xlu0 %1636
        %1638 = vrot.lane.b32.xlu0 %v1102, 32
        %v1639 = vpop.permute.xlu0 %1638
        %1640 = vrot.lane.b32.xlu0 %v1103, 32
        %v1641 = vpop.permute.xlu0 %1640
        %1642 = vrot.lane.b32.xlu0 %v1104, 32
        %v1643 = vpop.permute.xlu0 %1642
        %1644 = vrot.lane.b32.xlu0 %v1105, 32
        %v1645 = vpop.permute.xlu0 %1644
        %1646 = vrot.lane.b32.xlu0 %v1134, 32
        %v1647 = vpop.permute.xlu0 %1646
        %1648 = vrot.lane.b32.xlu0 %v1135, 32
        %v1649 = vpop.permute.xlu0 %1648
        %1650 = vrot.lane.b32.xlu0 %v1136, 32
        %v1651 = vpop.permute.xlu0 %1650
        %1652 = vrot.lane.b32.xlu0 %v1137, 32
        %v1653 = vpop.permute.xlu0 %1652
        %1654 = vrot.lane.b32.xlu0 %v1166, 32
        %v1655 = vpop.permute.xlu0 %1654
        %1656 = vrot.lane.b32.xlu0 %v1167, 32
        %v1657 = vpop.permute.xlu0 %1656
        %1658 = vrot.lane.b32.xlu0 %v1168, 32
        %v1659 = vpop.permute.xlu0 %1658
        %1660 = vrot.lane.b32.xlu0 %v1169, 32
        %v1661 = vpop.permute.xlu0 %1660
        %1662 = vrot.lane.b32.xlu0 %v1198, 32
        %v1663 = vpop.permute.xlu0 %1662
        %1664 = vrot.lane.b32.xlu0 %v1199, 32
        %v1665 = vpop.permute.xlu0 %1664
        %1666 = vrot.lane.b32.xlu0 %v1200, 32
        %v1667 = vpop.permute.xlu0 %1666
        %1668 = vrot.lane.b32.xlu0 %v1201, 32
        %v1669 = vpop.permute.xlu0 %1668
        %1670 = vrot.lane.b32.xlu0 %v1230, 32
        %v1671 = vpop.permute.xlu0 %1670
        %1672 = vrot.lane.b32.xlu0 %v1231, 32
        %v1673 = vpop.permute.xlu0 %1672
        %1674 = vrot.lane.b32.xlu0 %v1232, 32
        %v1675 = vpop.permute.xlu0 %1674
        %1676 = vrot.lane.b32.xlu0 %v1233, 32
        %v1677 = vpop.permute.xlu0 %1676
        %1678 = vrot.lane.b32.xlu0 %v1262, 32
        %v1679 = vpop.permute.xlu0 %1678
        %1680 = vrot.lane.b32.xlu0 %v1263, 32
        %v1681 = vpop.permute.xlu0 %1680
        %1682 = vrot.lane.b32.xlu0 %v1264, 32
        %v1683 = vpop.permute.xlu0 %1682
        %1684 = vrot.lane.b32.xlu0 %v1265, 32
        %v1685 = vpop.permute.xlu0 %1684
        %1686 = vrot.lane.b32.xlu0 %v1294, 32
        %v1687 = vpop.permute.xlu0 %1686
        %1688 = vrot.lane.b32.xlu0 %v1295, 32
        %v1689 = vpop.permute.xlu0 %1688
        %1690 = vrot.lane.b32.xlu0 %v1296, 32
        %v1691 = vpop.permute.xlu0 %1690
        %1692 = vrot.lane.b32.xlu0 %v1297, 32
        %v1693 = vpop.permute.xlu0 %1692
        %1758 = vrot.lane.b32.xlu0 %v814, 48
        %v1759 = vpop.permute.xlu0 %1758
        %1760 = vrot.lane.b32.xlu0 %v815, 48
        %v1761 = vpop.permute.xlu0 %1760
        %1762 = vrot.lane.b32.xlu0 %v816, 48
        %v1763 = vpop.permute.xlu0 %1762
        %1764 = vrot.lane.b32.xlu0 %v817, 48
        %v1765 = vpop.permute.xlu0 %1764
        %1766 = vrot.lane.b32.xlu0 %v846, 48
        %v1767 = vpop.permute.xlu0 %1766
        %1768 = vrot.lane.b32.xlu0 %v847, 48
        %v1769 = vpop.permute.xlu0 %1768
        %1770 = vrot.lane.b32.xlu0 %v848, 48
        %v1771 = vpop.permute.xlu0 %1770
        %1772 = vrot.lane.b32.xlu0 %v849, 48
        %v1773 = vpop.permute.xlu0 %1772
        %1774 = vrot.lane.b32.xlu0 %v878, 48
        %v1775 = vpop.permute.xlu0 %1774
        %1776 = vrot.lane.b32.xlu0 %v879, 48
        %v1777 = vpop.permute.xlu0 %1776
        %1778 = vrot.lane.b32.xlu0 %v880, 48
        %v1779 = vpop.permute.xlu0 %1778
        %1780 = vrot.lane.b32.xlu0 %v881, 48
        %v1781 = vpop.permute.xlu0 %1780
        %1782 = vrot.lane.b32.xlu0 %v910, 48
        %v1783 = vpop.permute.xlu0 %1782
        %1784 = vrot.lane.b32.xlu0 %v911, 48
        %v1785 = vpop.permute.xlu0 %1784
        %1786 = vrot.lane.b32.xlu0 %v912, 48
        %v1787 = vpop.permute.xlu0 %1786
        %1788 = vrot.lane.b32.xlu0 %v913, 48
        %v1789 = vpop.permute.xlu0 %1788
        %1790 = vrot.lane.b32.xlu0 %v942, 48
        %v1791 = vpop.permute.xlu0 %1790
        %1792 = vrot.lane.b32.xlu0 %v943, 48
        %v1793 = vpop.permute.xlu0 %1792
        %1794 = vrot.lane.b32.xlu0 %v944, 48
        %v1795 = vpop.permute.xlu0 %1794
        %1796 = vrot.lane.b32.xlu0 %v945, 48
        %v1797 = vpop.permute.xlu0 %1796
        %1798 = vrot.lane.b32.xlu0 %v974, 48
        %v1799 = vpop.permute.xlu0 %1798
        %1800 = vrot.lane.b32.xlu0 %v975, 48
        %v1801 = vpop.permute.xlu0 %1800
        %1802 = vrot.lane.b32.xlu0 %v976, 48
        %v1803 = vpop.permute.xlu0 %1802
        %1804 = vrot.lane.b32.xlu0 %v977, 48
        %v1805 = vpop.permute.xlu0 %1804
        %1806 = vrot.lane.b32.xlu0 %v1006, 48
        %v1807 = vpop.permute.xlu0 %1806
        %1808 = vrot.lane.b32.xlu0 %v1007, 48
        %v1809 = vpop.permute.xlu0 %1808
        %1810 = vrot.lane.b32.xlu0 %v1008, 48
        %v1811 = vpop.permute.xlu0 %1810
        %1812 = vrot.lane.b32.xlu0 %v1009, 48
        %v1813 = vpop.permute.xlu0 %1812
        %1814 = vrot.lane.b32.xlu0 %v1038, 48
        %v1815 = vpop.permute.xlu0 %1814
        %1816 = vrot.lane.b32.xlu0 %v1039, 48
        %v1817 = vpop.permute.xlu0 %1816
        %1818 = vrot.lane.b32.xlu0 %v1040, 48
        %v1819 = vpop.permute.xlu0 %1818
        %1820 = vrot.lane.b32.xlu0 %v1041, 48
        %v1821 = vpop.permute.xlu0 %1820
        %1822 = vrot.lane.b32.xlu0 %v1070, 48
        %v1823 = vpop.permute.xlu0 %1822
        %1824 = vrot.lane.b32.xlu0 %v1071, 48
        %v1825 = vpop.permute.xlu0 %1824
        %1826 = vrot.lane.b32.xlu0 %v1072, 48
        %v1827 = vpop.permute.xlu0 %1826
        %1828 = vrot.lane.b32.xlu0 %v1073, 48
        %v1829 = vpop.permute.xlu0 %1828
        %1830 = vrot.lane.b32.xlu0 %v1102, 48
        %v1831 = vpop.permute.xlu0 %1830
        %1832 = vrot.lane.b32.xlu0 %v1103, 48
        %v1833 = vpop.permute.xlu0 %1832
        %1834 = vrot.lane.b32.xlu0 %v1104, 48
        %v1835 = vpop.permute.xlu0 %1834
        %1836 = vrot.lane.b32.xlu0 %v1105, 48
        %v1837 = vpop.permute.xlu0 %1836
        %1838 = vrot.lane.b32.xlu0 %v1134, 48
        %v1839 = vpop.permute.xlu0 %1838
        %1840 = vrot.lane.b32.xlu0 %v1135, 48
        %v1841 = vpop.permute.xlu0 %1840
        %1842 = vrot.lane.b32.xlu0 %v1136, 48
        %v1843 = vpop.permute.xlu0 %1842
        %1844 = vrot.lane.b32.xlu0 %v1137, 48
        %v1845 = vpop.permute.xlu0 %1844
        %1846 = vrot.lane.b32.xlu0 %v1166, 48
        %v1847 = vpop.permute.xlu0 %1846
        %1848 = vrot.lane.b32.xlu0 %v1167, 48
        %v1849 = vpop.permute.xlu0 %1848
        %1850 = vrot.lane.b32.xlu0 %v1168, 48
        %v1851 = vpop.permute.xlu0 %1850
        %1852 = vrot.lane.b32.xlu0 %v1169, 48
        %v1853 = vpop.permute.xlu0 %1852
        %1854 = vrot.lane.b32.xlu0 %v1198, 48
        %v1855 = vpop.permute.xlu0 %1854
        %1856 = vrot.lane.b32.xlu0 %v1199, 48
        %v1857 = vpop.permute.xlu0 %1856
        %1858 = vrot.lane.b32.xlu0 %v1200, 48
        %v1859 = vpop.permute.xlu0 %1858
        %1860 = vrot.lane.b32.xlu0 %v1201, 48
        %v1861 = vpop.permute.xlu0 %1860
        %1862 = vrot.lane.b32.xlu0 %v1230, 48
        %v1863 = vpop.permute.xlu0 %1862
        %1864 = vrot.lane.b32.xlu0 %v1231, 48
        %v1865 = vpop.permute.xlu0 %1864
        %1866 = vrot.lane.b32.xlu0 %v1232, 48
        %v1867 = vpop.permute.xlu0 %1866
        %1868 = vrot.lane.b32.xlu0 %v1233, 48
        %v1869 = vpop.permute.xlu0 %1868
        %1870 = vrot.lane.b32.xlu0 %v1262, 48
        %v1871 = vpop.permute.xlu0 %1870
        %1872 = vrot.lane.b32.xlu0 %v1263, 48
        %v1873 = vpop.permute.xlu0 %1872
        %1874 = vrot.lane.b32.xlu0 %v1264, 48
        %v1875 = vpop.permute.xlu0 %1874
        %1876 = vrot.lane.b32.xlu0 %v1265, 48
        %v1877 = vpop.permute.xlu0 %1876
        %1878 = vrot.lane.b32.xlu0 %v1294, 48
        %v1879 = vpop.permute.xlu0 %1878
        %1880 = vrot.lane.b32.xlu0 %v1295, 48
        %v1881 = vpop.permute.xlu0 %1880
        %1882 = vrot.lane.b32.xlu0 %v1296, 48
        %v1883 = vpop.permute.xlu0 %1882
        %1884 = vrot.lane.b32.xlu0 %v1297, 48
        %v1885 = vpop.permute.xlu0 %1884
        %1950 = vrot.lane.b32.xlu0 %v814, 64
        %v1951 = vpop.permute.xlu0 %1950
        %1952 = vrot.lane.b32.xlu0 %v815, 64
        %v1953 = vpop.permute.xlu0 %1952
        %1954 = vrot.lane.b32.xlu0 %v816, 64
        %v1955 = vpop.permute.xlu0 %1954
        %1956 = vrot.lane.b32.xlu0 %v817, 64
        %v1957 = vpop.permute.xlu0 %1956
        %1958 = vrot.lane.b32.xlu0 %v846, 64
        %v1959 = vpop.permute.xlu0 %1958
        %1960 = vrot.lane.b32.xlu0 %v847, 64
        %v1961 = vpop.permute.xlu0 %1960
        %1962 = vrot.lane.b32.xlu0 %v848, 64
        %v1963 = vpop.permute.xlu0 %1962
        %1964 = vrot.lane.b32.xlu0 %v849, 64
        %v1965 = vpop.permute.xlu0 %1964
        %1966 = vrot.lane.b32.xlu0 %v878, 64
        %v1967 = vpop.permute.xlu0 %1966
        %1968 = vrot.lane.b32.xlu0 %v879, 64
        %v1969 = vpop.permute.xlu0 %1968
        %1970 = vrot.lane.b32.xlu0 %v880, 64
        %v1971 = vpop.permute.xlu0 %1970
        %1972 = vrot.lane.b32.xlu0 %v881, 64
        %v1973 = vpop.permute.xlu0 %1972
        %1974 = vrot.lane.b32.xlu0 %v910, 64
        %v1975 = vpop.permute.xlu0 %1974
        %1976 = vrot.lane.b32.xlu0 %v911, 64
        %v1977 = vpop.permute.xlu0 %1976
        %1978 = vrot.lane.b32.xlu0 %v912, 64
        %v1979 = vpop.permute.xlu0 %1978
        %1980 = vrot.lane.b32.xlu0 %v913, 64
        %v1981 = vpop.permute.xlu0 %1980
        %1982 = vrot.lane.b32.xlu0 %v942, 64
        %v1983 = vpop.permute.xlu0 %1982
        %1984 = vrot.lane.b32.xlu0 %v943, 64
        %v1985 = vpop.permute.xlu0 %1984
        %1986 = vrot.lane.b32.xlu0 %v944, 64
        %v1987 = vpop.permute.xlu0 %1986
        %1988 = vrot.lane.b32.xlu0 %v945, 64
        %v1989 = vpop.permute.xlu0 %1988
        %1990 = vrot.lane.b32.xlu0 %v974, 64
        %v1991 = vpop.permute.xlu0 %1990
        %1992 = vrot.lane.b32.xlu0 %v975, 64
        %v1993 = vpop.permute.xlu0 %1992
        %1994 = vrot.lane.b32.xlu0 %v976, 64
        %v1995 = vpop.permute.xlu0 %1994
        %1996 = vrot.lane.b32.xlu0 %v977, 64
        %v1997 = vpop.permute.xlu0 %1996
        %1998 = vrot.lane.b32.xlu0 %v1006, 64
        %v1999 = vpop.permute.xlu0 %1998
        %2000 = vrot.lane.b32.xlu0 %v1007, 64
        %v2001 = vpop.permute.xlu0 %2000
        %2002 = vrot.lane.b32.xlu0 %v1008, 64
        %v2003 = vpop.permute.xlu0 %2002
        %2004 = vrot.lane.b32.xlu0 %v1009, 64
        %v2005 = vpop.permute.xlu0 %2004
        %2006 = vrot.lane.b32.xlu0 %v1038, 64
        %v2007 = vpop.permute.xlu0 %2006
        %2008 = vrot.lane.b32.xlu0 %v1039, 64
        %v2009 = vpop.permute.xlu0 %2008
        %2010 = vrot.lane.b32.xlu0 %v1040, 64
        %v2011 = vpop.permute.xlu0 %2010
        %2012 = vrot.lane.b32.xlu0 %v1041, 64
        %v2013 = vpop.permute.xlu0 %2012
        %2014 = vrot.lane.b32.xlu0 %v1070, 64
        %v2015 = vpop.permute.xlu0 %2014
        %2016 = vrot.lane.b32.xlu0 %v1071, 64
        %v2017 = vpop.permute.xlu0 %2016
        %2018 = vrot.lane.b32.xlu0 %v1072, 64
        %v2019 = vpop.permute.xlu0 %2018
        %2020 = vrot.lane.b32.xlu0 %v1073, 64
        %v2021 = vpop.permute.xlu0 %2020
        %2022 = vrot.lane.b32.xlu0 %v1102, 64
        %v2023 = vpop.permute.xlu0 %2022
        %2024 = vrot.lane.b32.xlu0 %v1103, 64
        %v2025 = vpop.permute.xlu0 %2024
        %2026 = vrot.lane.b32.xlu0 %v1104, 64
        %v2027 = vpop.permute.xlu0 %2026
        %2028 = vrot.lane.b32.xlu0 %v1105, 64
        %v2029 = vpop.permute.xlu0 %2028
        %2030 = vrot.lane.b32.xlu0 %v1134, 64
        %v2031 = vpop.permute.xlu0 %2030
        %2032 = vrot.lane.b32.xlu0 %v1135, 64
        %v2033 = vpop.permute.xlu0 %2032
        %2034 = vrot.lane.b32.xlu0 %v1136, 64
        %v2035 = vpop.permute.xlu0 %2034
        %2036 = vrot.lane.b32.xlu0 %v1137, 64
        %v2037 = vpop.permute.xlu0 %2036
        %2038 = vrot.lane.b32.xlu0 %v1166, 64
        %v2039 = vpop.permute.xlu0 %2038
        %2040 = vrot.lane.b32.xlu0 %v1167, 64
        %v2041 = vpop.permute.xlu0 %2040
        %2042 = vrot.lane.b32.xlu0 %v1168, 64
        %v2043 = vpop.permute.xlu0 %2042
        %2044 = vrot.lane.b32.xlu0 %v1169, 64
        %v2045 = vpop.permute.xlu0 %2044
        %2046 = vrot.lane.b32.xlu0 %v1198, 64
        %v2047 = vpop.permute.xlu0 %2046
        %2048 = vrot.lane.b32.xlu0 %v1199, 64
        %v2049 = vpop.permute.xlu0 %2048
        %2050 = vrot.lane.b32.xlu0 %v1200, 64
        %v2051 = vpop.permute.xlu0 %2050
        %2052 = vrot.lane.b32.xlu0 %v1201, 64
        %v2053 = vpop.permute.xlu0 %2052
        %2054 = vrot.lane.b32.xlu0 %v1230, 64
        %v2055 = vpop.permute.xlu0 %2054
        %2056 = vrot.lane.b32.xlu0 %v1231, 64
        %v2057 = vpop.permute.xlu0 %2056
        %2058 = vrot.lane.b32.xlu0 %v1232, 64
        %v2059 = vpop.permute.xlu0 %2058
        %2060 = vrot.lane.b32.xlu0 %v1233, 64
        %v2061 = vpop.permute.xlu0 %2060
        %2062 = vrot.lane.b32.xlu0 %v1262, 64
        %v2063 = vpop.permute.xlu0 %2062
        %2064 = vrot.lane.b32.xlu0 %v1263, 64
        %v2065 = vpop.permute.xlu0 %2064
        %2066 = vrot.lane.b32.xlu0 %v1264, 64
        %v2067 = vpop.permute.xlu0 %2066
        %2068 = vrot.lane.b32.xlu0 %v1265, 64
        %v2069 = vpop.permute.xlu0 %2068
        %2070 = vrot.lane.b32.xlu0 %v1294, 64
        %v2071 = vpop.permute.xlu0 %2070
        %2072 = vrot.lane.b32.xlu0 %v1295, 64
        %v2073 = vpop.permute.xlu0 %2072
        %2074 = vrot.lane.b32.xlu0 %v1296, 64
        %v2075 = vpop.permute.xlu0 %2074
        %2076 = vrot.lane.b32.xlu0 %v1297, 64
        %v2077 = vpop.permute.xlu0 %2076
        %2142 = vrot.lane.b32.xlu0 %v814, 80
        %v2143 = vpop.permute.xlu0 %2142
        %2144 = vrot.lane.b32.xlu0 %v815, 80
        %v2145 = vpop.permute.xlu0 %2144
        %2146 = vrot.lane.b32.xlu0 %v816, 80
        %v2147 = vpop.permute.xlu0 %2146
        %2148 = vrot.lane.b32.xlu0 %v817, 80
        %v2149 = vpop.permute.xlu0 %2148
        %2150 = vrot.lane.b32.xlu0 %v846, 80
        %v2151 = vpop.permute.xlu0 %2150
        %2152 = vrot.lane.b32.xlu0 %v847, 80
        %v2153 = vpop.permute.xlu0 %2152
        %2154 = vrot.lane.b32.xlu0 %v848, 80
        %v2155 = vpop.permute.xlu0 %2154
        %2156 = vrot.lane.b32.xlu0 %v849, 80
        %v2157 = vpop.permute.xlu0 %2156
        %2158 = vrot.lane.b32.xlu0 %v878, 80
        %v2159 = vpop.permute.xlu0 %2158
        %2160 = vrot.lane.b32.xlu0 %v879, 80
        %v2161 = vpop.permute.xlu0 %2160
        %2162 = vrot.lane.b32.xlu0 %v880, 80
        %v2163 = vpop.permute.xlu0 %2162
        %2164 = vrot.lane.b32.xlu0 %v881, 80
        %v2165 = vpop.permute.xlu0 %2164
        %2166 = vrot.lane.b32.xlu0 %v910, 80
        %v2167 = vpop.permute.xlu0 %2166
        %2168 = vrot.lane.b32.xlu0 %v911, 80
        %v2169 = vpop.permute.xlu0 %2168
        %2170 = vrot.lane.b32.xlu0 %v912, 80
        %v2171 = vpop.permute.xlu0 %2170
        %2172 = vrot.lane.b32.xlu0 %v913, 80
        %v2173 = vpop.permute.xlu0 %2172
        %2174 = vrot.lane.b32.xlu0 %v942, 80
        %v2175 = vpop.permute.xlu0 %2174
        %2176 = vrot.lane.b32.xlu0 %v943, 80
        %v2177 = vpop.permute.xlu0 %2176
        %2178 = vrot.lane.b32.xlu0 %v944, 80
        %v2179 = vpop.permute.xlu0 %2178
        %2180 = vrot.lane.b32.xlu0 %v945, 80
        %v2181 = vpop.permute.xlu0 %2180
        %2182 = vrot.lane.b32.xlu0 %v974, 80
        %v2183 = vpop.permute.xlu0 %2182
        %2184 = vrot.lane.b32.xlu0 %v975, 80
        %v2185 = vpop.permute.xlu0 %2184
        %2186 = vrot.lane.b32.xlu0 %v976, 80
        %v2187 = vpop.permute.xlu0 %2186
        %2188 = vrot.lane.b32.xlu0 %v977, 80
        %v2189 = vpop.permute.xlu0 %2188
        %2190 = vrot.lane.b32.xlu0 %v1006, 80
        %v2191 = vpop.permute.xlu0 %2190
        %2192 = vrot.lane.b32.xlu0 %v1007, 80
        %v2193 = vpop.permute.xlu0 %2192
        %2194 = vrot.lane.b32.xlu0 %v1008, 80
        %v2195 = vpop.permute.xlu0 %2194
        %2196 = vrot.lane.b32.xlu0 %v1009, 80
        %v2197 = vpop.permute.xlu0 %2196
        %2198 = vrot.lane.b32.xlu0 %v1038, 80
        %v2199 = vpop.permute.xlu0 %2198
        %2200 = vrot.lane.b32.xlu0 %v1039, 80
        %v2201 = vpop.permute.xlu0 %2200
        %2202 = vrot.lane.b32.xlu0 %v1040, 80
        %v2203 = vpop.permute.xlu0 %2202
        %2204 = vrot.lane.b32.xlu0 %v1041, 80
        %v2205 = vpop.permute.xlu0 %2204
        %2206 = vrot.lane.b32.xlu0 %v1070, 80
        %v2207 = vpop.permute.xlu0 %2206
        %2208 = vrot.lane.b32.xlu0 %v1071, 80
        %v2209 = vpop.permute.xlu0 %2208
        %2210 = vrot.lane.b32.xlu0 %v1072, 80
        %v2211 = vpop.permute.xlu0 %2210
        %2212 = vrot.lane.b32.xlu0 %v1073, 80
        %v2213 = vpop.permute.xlu0 %2212
        %2214 = vrot.lane.b32.xlu0 %v1102, 80
        %v2215 = vpop.permute.xlu0 %2214
        %2216 = vrot.lane.b32.xlu0 %v1103, 80
        %v2217 = vpop.permute.xlu0 %2216
        %2218 = vrot.lane.b32.xlu0 %v1104, 80
        %v2219 = vpop.permute.xlu0 %2218
        %2220 = vrot.lane.b32.xlu0 %v1105, 80
        %v2221 = vpop.permute.xlu0 %2220
        %2222 = vrot.lane.b32.xlu0 %v1134, 80
        %v2223 = vpop.permute.xlu0 %2222
        %2224 = vrot.lane.b32.xlu0 %v1135, 80
        %v2225 = vpop.permute.xlu0 %2224
        %2226 = vrot.lane.b32.xlu0 %v1136, 80
        %v2227 = vpop.permute.xlu0 %2226
        %2228 = vrot.lane.b32.xlu0 %v1137, 80
        %v2229 = vpop.permute.xlu0 %2228
        %2230 = vrot.lane.b32.xlu0 %v1166, 80
        %v2231 = vpop.permute.xlu0 %2230
        %2232 = vrot.lane.b32.xlu0 %v1167, 80
        %v2233 = vpop.permute.xlu0 %2232
        %2234 = vrot.lane.b32.xlu0 %v1168, 80
        %v2235 = vpop.permute.xlu0 %2234
        %2236 = vrot.lane.b32.xlu0 %v1169, 80
        %v2237 = vpop.permute.xlu0 %2236
        %2238 = vrot.lane.b32.xlu0 %v1198, 80
        %v2239 = vpop.permute.xlu0 %2238
        %2240 = vrot.lane.b32.xlu0 %v1199, 80
        %v2241 = vpop.permute.xlu0 %2240
        %2242 = vrot.lane.b32.xlu0 %v1200, 80
        %v2243 = vpop.permute.xlu0 %2242
        %2244 = vrot.lane.b32.xlu0 %v1201, 80
        %v2245 = vpop.permute.xlu0 %2244
        %2246 = vrot.lane.b32.xlu0 %v1230, 80
        %v2247 = vpop.permute.xlu0 %2246
        %2248 = vrot.lane.b32.xlu0 %v1231, 80
        %v2249 = vpop.permute.xlu0 %2248
        %2250 = vrot.lane.b32.xlu0 %v1232, 80
        %v2251 = vpop.permute.xlu0 %2250
        %2252 = vrot.lane.b32.xlu0 %v1233, 80
        %v2253 = vpop.permute.xlu0 %2252
        %2254 = vrot.lane.b32.xlu0 %v1262, 80
        %v2255 = vpop.permute.xlu0 %2254
        %2256 = vrot.lane.b32.xlu0 %v1263, 80
        %v2257 = vpop.permute.xlu0 %2256
        %2258 = vrot.lane.b32.xlu0 %v1264, 80
        %v2259 = vpop.permute.xlu0 %2258
        %2260 = vrot.lane.b32.xlu0 %v1265, 80
        %v2261 = vpop.permute.xlu0 %2260
        %2262 = vrot.lane.b32.xlu0 %v1294, 80
        %v2263 = vpop.permute.xlu0 %2262
        %2264 = vrot.lane.b32.xlu0 %v1295, 80
        %v2265 = vpop.permute.xlu0 %2264
        %2266 = vrot.lane.b32.xlu0 %v1296, 80
        %v2267 = vpop.permute.xlu0 %2266
        %2268 = vrot.lane.b32.xlu0 %v1297, 80
        %v2269 = vpop.permute.xlu0 %2268
        %2334 = vrot.lane.b32.xlu0 %v814, 96
        %v2335 = vpop.permute.xlu0 %2334
        %2336 = vrot.lane.b32.xlu0 %v815, 96
        %v2337 = vpop.permute.xlu0 %2336
        %2338 = vrot.lane.b32.xlu0 %v816, 96
        %v2339 = vpop.permute.xlu0 %2338
        %2340 = vrot.lane.b32.xlu0 %v817, 96
        %v2341 = vpop.permute.xlu0 %2340
        %2342 = vrot.lane.b32.xlu0 %v846, 96
        %v2343 = vpop.permute.xlu0 %2342
        %2344 = vrot.lane.b32.xlu0 %v847, 96
        %v2345 = vpop.permute.xlu0 %2344
        %2346 = vrot.lane.b32.xlu0 %v848, 96
        %v2347 = vpop.permute.xlu0 %2346
        %2348 = vrot.lane.b32.xlu0 %v849, 96
        %v2349 = vpop.permute.xlu0 %2348
        %2350 = vrot.lane.b32.xlu0 %v878, 96
        %v2351 = vpop.permute.xlu0 %2350
        %2352 = vrot.lane.b32.xlu0 %v879, 96
        %v2353 = vpop.permute.xlu0 %2352
        %2354 = vrot.lane.b32.xlu0 %v880, 96
        %v2355 = vpop.permute.xlu0 %2354
        %2356 = vrot.lane.b32.xlu0 %v881, 96
        %v2357 = vpop.permute.xlu0 %2356
        %2358 = vrot.lane.b32.xlu0 %v910, 96
        %v2359 = vpop.permute.xlu0 %2358
        %2360 = vrot.lane.b32.xlu0 %v911, 96
        %v2361 = vpop.permute.xlu0 %2360
        %2362 = vrot.lane.b32.xlu0 %v912, 96
        %v2363 = vpop.permute.xlu0 %2362
        %2364 = vrot.lane.b32.xlu0 %v913, 96
        %v2365 = vpop.permute.xlu0 %2364
        %2366 = vrot.lane.b32.xlu0 %v942, 96
        %v2367 = vpop.permute.xlu0 %2366
        %2368 = vrot.lane.b32.xlu0 %v943, 96
        %v2369 = vpop.permute.xlu0 %2368
        %2370 = vrot.lane.b32.xlu0 %v944, 96
        %v2371 = vpop.permute.xlu0 %2370
        %2372 = vrot.lane.b32.xlu0 %v945, 96
        %v2373 = vpop.permute.xlu0 %2372
        %2374 = vrot.lane.b32.xlu0 %v974, 96
        %v2375 = vpop.permute.xlu0 %2374
        %2376 = vrot.lane.b32.xlu0 %v975, 96
        %v2377 = vpop.permute.xlu0 %2376
        %2378 = vrot.lane.b32.xlu0 %v976, 96
        %v2379 = vpop.permute.xlu0 %2378
        %2380 = vrot.lane.b32.xlu0 %v977, 96
        %v2381 = vpop.permute.xlu0 %2380
        %2382 = vrot.lane.b32.xlu0 %v1006, 96
        %v2383 = vpop.permute.xlu0 %2382
        %2384 = vrot.lane.b32.xlu0 %v1007, 96
        %v2385 = vpop.permute.xlu0 %2384
        %2386 = vrot.lane.b32.xlu0 %v1008, 96
        %v2387 = vpop.permute.xlu0 %2386
        %2388 = vrot.lane.b32.xlu0 %v1009, 96
        %v2389 = vpop.permute.xlu0 %2388
        %2390 = vrot.lane.b32.xlu0 %v1038, 96
        %v2391 = vpop.permute.xlu0 %2390
        %2392 = vrot.lane.b32.xlu0 %v1039, 96
        %v2393 = vpop.permute.xlu0 %2392
        %2394 = vrot.lane.b32.xlu0 %v1040, 96
        %v2395 = vpop.permute.xlu0 %2394
        %2396 = vrot.lane.b32.xlu0 %v1041, 96
        %v2397 = vpop.permute.xlu0 %2396
        %2398 = vrot.lane.b32.xlu0 %v1070, 96
        %v2399 = vpop.permute.xlu0 %2398
        %2400 = vrot.lane.b32.xlu0 %v1071, 96
        %v2401 = vpop.permute.xlu0 %2400
        %2402 = vrot.lane.b32.xlu0 %v1072, 96
        %v2403 = vpop.permute.xlu0 %2402
        %2404 = vrot.lane.b32.xlu0 %v1073, 96
        %v2405 = vpop.permute.xlu0 %2404
        %2406 = vrot.lane.b32.xlu0 %v1102, 96
        %v2407 = vpop.permute.xlu0 %2406
        %2408 = vrot.lane.b32.xlu0 %v1103, 96
        %v2409 = vpop.permute.xlu0 %2408
        %2410 = vrot.lane.b32.xlu0 %v1104, 96
        %v2411 = vpop.permute.xlu0 %2410
        %2412 = vrot.lane.b32.xlu0 %v1105, 96
        %v2413 = vpop.permute.xlu0 %2412
        %2414 = vrot.lane.b32.xlu0 %v1134, 96
        %v2415 = vpop.permute.xlu0 %2414
        %2416 = vrot.lane.b32.xlu0 %v1135, 96
        %v2417 = vpop.permute.xlu0 %2416
        %2418 = vrot.lane.b32.xlu0 %v1136, 96
        %v2419 = vpop.permute.xlu0 %2418
        %2420 = vrot.lane.b32.xlu0 %v1137, 96
        %v2421 = vpop.permute.xlu0 %2420
        %2422 = vrot.lane.b32.xlu0 %v1166, 96
        %v2423 = vpop.permute.xlu0 %2422
        %2424 = vrot.lane.b32.xlu0 %v1167, 96
        %v2425 = vpop.permute.xlu0 %2424
        %2426 = vrot.lane.b32.xlu0 %v1168, 96
        %v2427 = vpop.permute.xlu0 %2426
        %2428 = vrot.lane.b32.xlu0 %v1169, 96
        %v2429 = vpop.permute.xlu0 %2428
        %2430 = vrot.lane.b32.xlu0 %v1198, 96
        %v2431 = vpop.permute.xlu0 %2430
        %2432 = vrot.lane.b32.xlu0 %v1199, 96
        %v2433 = vpop.permute.xlu0 %2432
        %2434 = vrot.lane.b32.xlu0 %v1200, 96
        %v2435 = vpop.permute.xlu0 %2434
        %2436 = vrot.lane.b32.xlu0 %v1201, 96
        %v2437 = vpop.permute.xlu0 %2436
        %2438 = vrot.lane.b32.xlu0 %v1230, 96
        %v2439 = vpop.permute.xlu0 %2438
        %2440 = vrot.lane.b32.xlu0 %v1231, 96
        %v2441 = vpop.permute.xlu0 %2440
        %2442 = vrot.lane.b32.xlu0 %v1232, 96
        %v2443 = vpop.permute.xlu0 %2442
        %2444 = vrot.lane.b32.xlu0 %v1233, 96
        %v2445 = vpop.permute.xlu0 %2444
        %2446 = vrot.lane.b32.xlu0 %v1262, 96
        %v2447 = vpop.permute.xlu0 %2446
        %2448 = vrot.lane.b32.xlu0 %v1263, 96
        %v2449 = vpop.permute.xlu0 %2448
        %2450 = vrot.lane.b32.xlu0 %v1264, 96
        %v2451 = vpop.permute.xlu0 %2450
        %2452 = vrot.lane.b32.xlu0 %v1265, 96
        %v2453 = vpop.permute.xlu0 %2452
        %2454 = vrot.lane.b32.xlu0 %v1294, 96
        %v2455 = vpop.permute.xlu0 %2454
        %2456 = vrot.lane.b32.xlu0 %v1295, 96
        %v2457 = vpop.permute.xlu0 %2456
        %2458 = vrot.lane.b32.xlu0 %v1296, 96
        %v2459 = vpop.permute.xlu0 %2458
        %2460 = vrot.lane.b32.xlu0 %v1297, 96
        %v2461 = vpop.permute.xlu0 %2460
        %2526 = vrot.lane.b32.xlu0 %v814, 112
        %v2527 = vpop.permute.xlu0 %2526
        %2528 = vrot.lane.b32.xlu0 %v815, 112
        %v2529 = vpop.permute.xlu0 %2528
        %2530 = vrot.lane.b32.xlu0 %v816, 112
        %v2531 = vpop.permute.xlu0 %2530
        %2532 = vrot.lane.b32.xlu0 %v817, 112
        %v2533 = vpop.permute.xlu0 %2532
        %2534 = vrot.lane.b32.xlu0 %v846, 112
        %v2535 = vpop.permute.xlu0 %2534
        %2536 = vrot.lane.b32.xlu0 %v847, 112
        %v2537 = vpop.permute.xlu0 %2536
        %2538 = vrot.lane.b32.xlu0 %v848, 112
        %v2539 = vpop.permute.xlu0 %2538
        %2540 = vrot.lane.b32.xlu0 %v849, 112
        %v2541 = vpop.permute.xlu0 %2540
        %2542 = vrot.lane.b32.xlu0 %v878, 112
        %v2543 = vpop.permute.xlu0 %2542
        %2544 = vrot.lane.b32.xlu0 %v879, 112
        %v2545 = vpop.permute.xlu0 %2544
        %2546 = vrot.lane.b32.xlu0 %v880, 112
        %v2547 = vpop.permute.xlu0 %2546
        %2548 = vrot.lane.b32.xlu0 %v881, 112
        %v2549 = vpop.permute.xlu0 %2548
        %2550 = vrot.lane.b32.xlu0 %v910, 112
        %v2551 = vpop.permute.xlu0 %2550
        %2552 = vrot.lane.b32.xlu0 %v911, 112
        %v2553 = vpop.permute.xlu0 %2552
        %2554 = vrot.lane.b32.xlu0 %v912, 112
        %v2555 = vpop.permute.xlu0 %2554
        %2556 = vrot.lane.b32.xlu0 %v913, 112
        %v2557 = vpop.permute.xlu0 %2556
        %2558 = vrot.lane.b32.xlu0 %v942, 112
        %v2559 = vpop.permute.xlu0 %2558
        %2560 = vrot.lane.b32.xlu0 %v943, 112
        %v2561 = vpop.permute.xlu0 %2560
        %2562 = vrot.lane.b32.xlu0 %v944, 112
        %v2563 = vpop.permute.xlu0 %2562
        %2564 = vrot.lane.b32.xlu0 %v945, 112
        %v2565 = vpop.permute.xlu0 %2564
        %2566 = vrot.lane.b32.xlu0 %v974, 112
        %v2567 = vpop.permute.xlu0 %2566
        %2568 = vrot.lane.b32.xlu0 %v975, 112
        %v2569 = vpop.permute.xlu0 %2568
        %2570 = vrot.lane.b32.xlu0 %v976, 112
        %v2571 = vpop.permute.xlu0 %2570
        %2572 = vrot.lane.b32.xlu0 %v977, 112
        %v2573 = vpop.permute.xlu0 %2572
        %2574 = vrot.lane.b32.xlu0 %v1006, 112
        %v2575 = vpop.permute.xlu0 %2574
        %2576 = vrot.lane.b32.xlu0 %v1007, 112
        %v2577 = vpop.permute.xlu0 %2576
        %2578 = vrot.lane.b32.xlu0 %v1008, 112
        %v2579 = vpop.permute.xlu0 %2578
        %2580 = vrot.lane.b32.xlu0 %v1009, 112
        %v2581 = vpop.permute.xlu0 %2580
        %2582 = vrot.lane.b32.xlu0 %v1038, 112
        %v2583 = vpop.permute.xlu0 %2582
        %2584 = vrot.lane.b32.xlu0 %v1039, 112
        %v2585 = vpop.permute.xlu0 %2584
        %2586 = vrot.lane.b32.xlu0 %v1040, 112
        %v2587 = vpop.permute.xlu0 %2586
        %2588 = vrot.lane.b32.xlu0 %v1041, 112
        %v2589 = vpop.permute.xlu0 %2588
        %2590 = vrot.lane.b32.xlu0 %v1070, 112
        %v2591 = vpop.permute.xlu0 %2590
        %2592 = vrot.lane.b32.xlu0 %v1071, 112
        %v2593 = vpop.permute.xlu0 %2592
        %2594 = vrot.lane.b32.xlu0 %v1072, 112
        %v2595 = vpop.permute.xlu0 %2594
        %2596 = vrot.lane.b32.xlu0 %v1073, 112
        %v2597 = vpop.permute.xlu0 %2596
        %2598 = vrot.lane.b32.xlu0 %v1102, 112
        %v2599 = vpop.permute.xlu0 %2598
        %2600 = vrot.lane.b32.xlu0 %v1103, 112
        %v2601 = vpop.permute.xlu0 %2600
        %2602 = vrot.lane.b32.xlu0 %v1104, 112
        %v2603 = vpop.permute.xlu0 %2602
        %2604 = vrot.lane.b32.xlu0 %v1105, 112
        %v2605 = vpop.permute.xlu0 %2604
        %2606 = vrot.lane.b32.xlu0 %v1134, 112
        %v2607 = vpop.permute.xlu0 %2606
        %2608 = vrot.lane.b32.xlu0 %v1135, 112
        %v2609 = vpop.permute.xlu0 %2608
        %2610 = vrot.lane.b32.xlu0 %v1136, 112
        %v2611 = vpop.permute.xlu0 %2610
        %2612 = vrot.lane.b32.xlu0 %v1137, 112
        %v2613 = vpop.permute.xlu0 %2612
        %2614 = vrot.lane.b32.xlu0 %v1166, 112
        %v2615 = vpop.permute.xlu0 %2614
        %2616 = vrot.lane.b32.xlu0 %v1167, 112
        %v2617 = vpop.permute.xlu0 %2616
        %2618 = vrot.lane.b32.xlu0 %v1168, 112
        %v2619 = vpop.permute.xlu0 %2618
        %2620 = vrot.lane.b32.xlu0 %v1169, 112
        %v2621 = vpop.permute.xlu0 %2620
        %2622 = vrot.lane.b32.xlu0 %v1198, 112
        %v2623 = vpop.permute.xlu0 %2622
        %2624 = vrot.lane.b32.xlu0 %v1199, 112
        %v2625 = vpop.permute.xlu0 %2624
        %2626 = vrot.lane.b32.xlu0 %v1200, 112
        %v2627 = vpop.permute.xlu0 %2626
        %2628 = vrot.lane.b32.xlu0 %v1201, 112
        %v2629 = vpop.permute.xlu0 %2628
        %2630 = vrot.lane.b32.xlu0 %v1230, 112
        %v2631 = vpop.permute.xlu0 %2630
        %2632 = vrot.lane.b32.xlu0 %v1231, 112
        %v2633 = vpop.permute.xlu0 %2632
        %2634 = vrot.lane.b32.xlu0 %v1232, 112
        %v2635 = vpop.permute.xlu0 %2634
        %2636 = vrot.lane.b32.xlu0 %v1233, 112
        %v2637 = vpop.permute.xlu0 %2636
        %2638 = vrot.lane.b32.xlu0 %v1262, 112
        %v2639 = vpop.permute.xlu0 %2638
        %2640 = vrot.lane.b32.xlu0 %v1263, 112
        %v2641 = vpop.permute.xlu0 %2640
        %2642 = vrot.lane.b32.xlu0 %v1264, 112
        %v2643 = vpop.permute.xlu0 %2642
        %2644 = vrot.lane.b32.xlu0 %v1265, 112
        %v2645 = vpop.permute.xlu0 %2644
        %2646 = vrot.lane.b32.xlu0 %v1294, 112
        %v2647 = vpop.permute.xlu0 %2646
        %2648 = vrot.lane.b32.xlu0 %v1295, 112
        %v2649 = vpop.permute.xlu0 %2648
        %2650 = vrot.lane.b32.xlu0 %v1296, 112
        %v2651 = vpop.permute.xlu0 %2650
        %2652 = vrot.lane.b32.xlu0 %v1297, 112
        %v2653 = vpop.permute.xlu0 %2652
        %vm2718 = vcmask 130048
        %v2719 = vsel %vm2718, %v814, %v1375
        %v2720 = vsel %vm2718, %v815, %v1377
        %v2721 = vsel %vm2718, %v816, %v1379
        %v2722 = vsel %vm2718, %v817, %v1381
        %v2723 = vsel %vm2718, %v846, %v1383
        %v2724 = vsel %vm2718, %v847, %v1385
        %v2725 = vsel %vm2718, %v848, %v1387
        %v2726 = vsel %vm2718, %v849, %v1389
        %v2727 = vsel %vm2718, %v878, %v1391
        %v2728 = vsel %vm2718, %v879, %v1393
        %v2729 = vsel %vm2718, %v880, %v1395
        %v2730 = vsel %vm2718, %v881, %v1397
        %v2731 = vsel %vm2718, %v910, %v1399
        %v2732 = vsel %vm2718, %v911, %v1401
        %v2733 = vsel %vm2718, %v912, %v1403
        %v2734 = vsel %vm2718, %v913, %v1405
        %v2735 = vsel %vm2718, %v942, %v1407
        %v2736 = vsel %vm2718, %v943, %v1409
        %v2737 = vsel %vm2718, %v944, %v1411
        %v2738 = vsel %vm2718, %v945, %v1413
        %v2739 = vsel %vm2718, %v974, %v1415
        %v2740 = vsel %vm2718, %v975, %v1417
        %v2741 = vsel %vm2718, %v976, %v1419
        %v2742 = vsel %vm2718, %v977, %v1421
        %v2743 = vsel %vm2718, %v1006, %v1423
        %v2744 = vsel %vm2718, %v1007, %v1425
        %v2745 = vsel %vm2718, %v1008, %v1427
        %v2746 = vsel %vm2718, %v1009, %v1429
        %v2747 = vsel %vm2718, %v1038, %v1431
        %v2748 = vsel %vm2718, %v1039, %v1433
        %v2749 = vsel %vm2718, %v1040, %v1435
        %v2750 = vsel %vm2718, %v1041, %v1437
        %v2751 = vsel %vm2718, %v1070, %v1439
        %v2752 = vsel %vm2718, %v1071, %v1441
        %v2753 = vsel %vm2718, %v1072, %v1443
        %v2754 = vsel %vm2718, %v1073, %v1445
        %v2755 = vsel %vm2718, %v1102, %v1447
        %v2756 = vsel %vm2718, %v1103, %v1449
        %v2757 = vsel %vm2718, %v1104, %v1451
        %v2758 = vsel %vm2718, %v1105, %v1453
        %v2759 = vsel %vm2718, %v1134, %v1455
        %v2760 = vsel %vm2718, %v1135, %v1457
        %v2761 = vsel %vm2718, %v1136, %v1459
        %v2762 = vsel %vm2718, %v1137, %v1461
        %v2763 = vsel %vm2718, %v1166, %v1463
        %v2764 = vsel %vm2718, %v1167, %v1465
        %v2765 = vsel %vm2718, %v1168, %v1467
        %v2766 = vsel %vm2718, %v1169, %v1469
        %v2767 = vsel %vm2718, %v1198, %v1471
        %v2768 = vsel %vm2718, %v1199, %v1473
        %v2769 = vsel %vm2718, %v1200, %v1475
        %v2770 = vsel %vm2718, %v1201, %v1477
        %v2771 = vsel %vm2718, %v1230, %v1479
        %v2772 = vsel %vm2718, %v1231, %v1481
        %v2773 = vsel %vm2718, %v1232, %v1483
        %v2774 = vsel %vm2718, %v1233, %v1485
        %v2775 = vsel %vm2718, %v1262, %v1487
        %v2776 = vsel %vm2718, %v1263, %v1489
        %v2777 = vsel %vm2718, %v1264, %v1491
        %v2778 = vsel %vm2718, %v1265, %v1493
        %v2779 = vsel %vm2718, %v1294, %v1495
        %v2780 = vsel %vm2718, %v1295, %v1497
        %v2781 = vsel %vm2718, %v1296, %v1499
        %v2782 = vsel %vm2718, %v1297, %v1501
        %v2783 = vsel %vm348, %v2719, %v1567
        %v2784 = vsel %vm348, %v2720, %v1569
        %v2785 = vsel %vm348, %v2721, %v1571
        %v2786 = vsel %vm348, %v2722, %v1573
        %v2787 = vsel %vm348, %v2723, %v1575
        %v2788 = vsel %vm348, %v2724, %v1577
        %v2789 = vsel %vm348, %v2725, %v1579
        %v2790 = vsel %vm348, %v2726, %v1581
        %v2791 = vsel %vm348, %v2727, %v1583
        %v2792 = vsel %vm348, %v2728, %v1585
        %v2793 = vsel %vm348, %v2729, %v1587
        %v2794 = vsel %vm348, %v2730, %v1589
        %v2795 = vsel %vm348, %v2731, %v1591
        %v2796 = vsel %vm348, %v2732, %v1593
        %v2797 = vsel %vm348, %v2733, %v1595
        %v2798 = vsel %vm348, %v2734, %v1597
        %v2799 = vsel %vm348, %v2735, %v1599
        %v2800 = vsel %vm348, %v2736, %v1601
        %v2801 = vsel %vm348, %v2737, %v1603
        %v2802 = vsel %vm348, %v2738, %v1605
        %v2803 = vsel %vm348, %v2739, %v1607
        %v2804 = vsel %vm348, %v2740, %v1609
        %v2805 = vsel %vm348, %v2741, %v1611
        %v2806 = vsel %vm348, %v2742, %v1613
        %v2807 = vsel %vm348, %v2743, %v1615
        %v2808 = vsel %vm348, %v2744, %v1617
        %v2809 = vsel %vm348, %v2745, %v1619
        %v2810 = vsel %vm348, %v2746, %v1621
        %v2811 = vsel %vm348, %v2747, %v1623
        %v2812 = vsel %vm348, %v2748, %v1625
        %v2813 = vsel %vm348, %v2749, %v1627
        %v2814 = vsel %vm348, %v2750, %v1629
        %v2815 = vsel %vm348, %v2751, %v1631
        %v2816 = vsel %vm348, %v2752, %v1633
        %v2817 = vsel %vm348, %v2753, %v1635
        %v2818 = vsel %vm348, %v2754, %v1637
        %v2819 = vsel %vm348, %v2755, %v1639
        %v2820 = vsel %vm348, %v2756, %v1641
        %v2821 = vsel %vm348, %v2757, %v1643
        %v2822 = vsel %vm348, %v2758, %v1645
        %v2823 = vsel %vm348, %v2759, %v1647
        %v2824 = vsel %vm348, %v2760, %v1649
        %v2825 = vsel %vm348, %v2761, %v1651
        %v2826 = vsel %vm348, %v2762, %v1653
        %v2827 = vsel %vm348, %v2763, %v1655
        %v2828 = vsel %vm348, %v2764, %v1657
        %v2829 = vsel %vm348, %v2765, %v1659
        %v2830 = vsel %vm348, %v2766, %v1661
        %v2831 = vsel %vm348, %v2767, %v1663
        %v2832 = vsel %vm348, %v2768, %v1665
        %v2833 = vsel %vm348, %v2769, %v1667
        %v2834 = vsel %vm348, %v2770, %v1669
        %v2835 = vsel %vm348, %v2771, %v1671
        %v2836 = vsel %vm348, %v2772, %v1673
        %v2837 = vsel %vm348, %v2773, %v1675
        %v2838 = vsel %vm348, %v2774, %v1677
        %v2839 = vsel %vm348, %v2775, %v1679
        %v2840 = vsel %vm348, %v2776, %v1681
        %v2841 = vsel %vm348, %v2777, %v1683
        %v2842 = vsel %vm348, %v2778, %v1685
        %v2843 = vsel %vm348, %v2779, %v1687
        %v2844 = vsel %vm348, %v2780, %v1689
        %v2845 = vsel %vm348, %v2781, %v1691
        %v2846 = vsel %vm348, %v2782, %v1693
        %vm2847 = vcmask 392192
        %v2848 = vsel %vm2847, %v2783, %v1759
        %v2849 = vsel %vm2847, %v2784, %v1761
        %v2850 = vsel %vm2847, %v2785, %v1763
        %v2851 = vsel %vm2847, %v2786, %v1765
        %v2852 = vsel %vm2847, %v2787, %v1767
        %v2853 = vsel %vm2847, %v2788, %v1769
        %v2854 = vsel %vm2847, %v2789, %v1771
        %v2855 = vsel %vm2847, %v2790, %v1773
        %v2856 = vsel %vm2847, %v2791, %v1775
        %v2857 = vsel %vm2847, %v2792, %v1777
        %v2858 = vsel %vm2847, %v2793, %v1779
        %v2859 = vsel %vm2847, %v2794, %v1781
        %v2860 = vsel %vm2847, %v2795, %v1783
        %v2861 = vsel %vm2847, %v2796, %v1785
        %v2862 = vsel %vm2847, %v2797, %v1787
        %v2863 = vsel %vm2847, %v2798, %v1789
        %v2864 = vsel %vm2847, %v2799, %v1791
        %v2865 = vsel %vm2847, %v2800, %v1793
        %v2866 = vsel %vm2847, %v2801, %v1795
        %v2867 = vsel %vm2847, %v2802, %v1797
        %v2868 = vsel %vm2847, %v2803, %v1799
        %v2869 = vsel %vm2847, %v2804, %v1801
        %v2870 = vsel %vm2847, %v2805, %v1803
        %v2871 = vsel %vm2847, %v2806, %v1805
        %v2872 = vsel %vm2847, %v2807, %v1807
        %v2873 = vsel %vm2847, %v2808, %v1809
        %v2874 = vsel %vm2847, %v2809, %v1811
        %v2875 = vsel %vm2847, %v2810, %v1813
        %v2876 = vsel %vm2847, %v2811, %v1815
        %v2877 = vsel %vm2847, %v2812, %v1817
        %v2878 = vsel %vm2847, %v2813, %v1819
        %v2879 = vsel %vm2847, %v2814, %v1821
        %v2880 = vsel %vm2847, %v2815, %v1823
        %v2881 = vsel %vm2847, %v2816, %v1825
        %v2882 = vsel %vm2847, %v2817, %v1827
        %v2883 = vsel %vm2847, %v2818, %v1829
        %v2884 = vsel %vm2847, %v2819, %v1831
        %v2885 = vsel %vm2847, %v2820, %v1833
        %v2886 = vsel %vm2847, %v2821, %v1835
        %v2887 = vsel %vm2847, %v2822, %v1837
        %v2888 = vsel %vm2847, %v2823, %v1839
        %v2889 = vsel %vm2847, %v2824, %v1841
        %v2890 = vsel %vm2847, %v2825, %v1843
        %v2891 = vsel %vm2847, %v2826, %v1845
        %v2892 = vsel %vm2847, %v2827, %v1847
        %v2893 = vsel %vm2847, %v2828, %v1849
        %v2894 = vsel %vm2847, %v2829, %v1851
        %v2895 = vsel %vm2847, %v2830, %v1853
        %v2896 = vsel %vm2847, %v2831, %v1855
        %v2897 = vsel %vm2847, %v2832, %v1857
        %v2898 = vsel %vm2847, %v2833, %v1859
        %v2899 = vsel %vm2847, %v2834, %v1861
        %v2900 = vsel %vm2847, %v2835, %v1863
        %v2901 = vsel %vm2847, %v2836, %v1865
        %v2902 = vsel %vm2847, %v2837, %v1867
        %v2903 = vsel %vm2847, %v2838, %v1869
        %v2904 = vsel %vm2847, %v2839, %v1871
        %v2905 = vsel %vm2847, %v2840, %v1873
        %v2906 = vsel %vm2847, %v2841, %v1875
        %v2907 = vsel %vm2847, %v2842, %v1877
        %v2908 = vsel %vm2847, %v2843, %v1879
        %v2909 = vsel %vm2847, %v2844, %v1881
        %v2910 = vsel %vm2847, %v2845, %v1883
        %v2911 = vsel %vm2847, %v2846, %v1885
        %vm2912 = vcmask 523264
        %v2913 = vsel %vm2912, %v2848, %v1951
        %v2914 = vsel %vm2912, %v2849, %v1953
        %v2915 = vsel %vm2912, %v2850, %v1955
        %v2916 = vsel %vm2912, %v2851, %v1957
        %v2917 = vsel %vm2912, %v2852, %v1959
        %v2918 = vsel %vm2912, %v2853, %v1961
        %v2919 = vsel %vm2912, %v2854, %v1963
        %v2920 = vsel %vm2912, %v2855, %v1965
        %v2921 = vsel %vm2912, %v2856, %v1967
        %v2922 = vsel %vm2912, %v2857, %v1969
        %v2923 = vsel %vm2912, %v2858, %v1971
        %v2924 = vsel %vm2912, %v2859, %v1973
        %v2925 = vsel %vm2912, %v2860, %v1975
        %v2926 = vsel %vm2912, %v2861, %v1977
        %v2927 = vsel %vm2912, %v2862, %v1979
        %v2928 = vsel %vm2912, %v2863, %v1981
        %v2929 = vsel %vm2912, %v2864, %v1983
        %v2930 = vsel %vm2912, %v2865, %v1985
        %v2931 = vsel %vm2912, %v2866, %v1987
        %v2932 = vsel %vm2912, %v2867, %v1989
        %v2933 = vsel %vm2912, %v2868, %v1991
        %v2934 = vsel %vm2912, %v2869, %v1993
        %v2935 = vsel %vm2912, %v2870, %v1995
        %v2936 = vsel %vm2912, %v2871, %v1997
        %v2937 = vsel %vm2912, %v2872, %v1999
        %v2938 = vsel %vm2912, %v2873, %v2001
        %v2939 = vsel %vm2912, %v2874, %v2003
        %v2940 = vsel %vm2912, %v2875, %v2005
        %v2941 = vsel %vm2912, %v2876, %v2007
        %v2942 = vsel %vm2912, %v2877, %v2009
        %v2943 = vsel %vm2912, %v2878, %v2011
        %v2944 = vsel %vm2912, %v2879, %v2013
        %v2945 = vsel %vm2912, %v2880, %v2015
        %v2946 = vsel %vm2912, %v2881, %v2017
        %v2947 = vsel %vm2912, %v2882, %v2019
        %v2948 = vsel %vm2912, %v2883, %v2021
        %v2949 = vsel %vm2912, %v2884, %v2023
        %v2950 = vsel %vm2912, %v2885, %v2025
        %v2951 = vsel %vm2912, %v2886, %v2027
        %v2952 = vsel %vm2912, %v2887, %v2029
        %v2953 = vsel %vm2912, %v2888, %v2031
        %v2954 = vsel %vm2912, %v2889, %v2033
        %v2955 = vsel %vm2912, %v2890, %v2035
        %v2956 = vsel %vm2912, %v2891, %v2037
        %v2957 = vsel %vm2912, %v2892, %v2039
        %v2958 = vsel %vm2912, %v2893, %v2041
        %v2959 = vsel %vm2912, %v2894, %v2043
        %v2960 = vsel %vm2912, %v2895, %v2045
        %v2961 = vsel %vm2912, %v2896, %v2047
        %v2962 = vsel %vm2912, %v2897, %v2049
        %v2963 = vsel %vm2912, %v2898, %v2051
        %v2964 = vsel %vm2912, %v2899, %v2053
        %v2965 = vsel %vm2912, %v2900, %v2055
        %v2966 = vsel %vm2912, %v2901, %v2057
        %v2967 = vsel %vm2912, %v2902, %v2059
        %v2968 = vsel %vm2912, %v2903, %v2061
        %v2969 = vsel %vm2912, %v2904, %v2063
        %v2970 = vsel %vm2912, %v2905, %v2065
        %v2971 = vsel %vm2912, %v2906, %v2067
        %v2972 = vsel %vm2912, %v2907, %v2069
        %v2973 = vsel %vm2912, %v2908, %v2071
        %v2974 = vsel %vm2912, %v2909, %v2073
        %v2975 = vsel %vm2912, %v2910, %v2075
        %v2976 = vsel %vm2912, %v2911, %v2077
        %vm2977 = vcmask 654336
        %v2978 = vsel %vm2977, %v2913, %v2143
        %v2979 = vsel %vm2977, %v2914, %v2145
        %v2980 = vsel %vm2977, %v2915, %v2147
        %v2981 = vsel %vm2977, %v2916, %v2149
        %v2982 = vsel %vm2977, %v2917, %v2151
        %v2983 = vsel %vm2977, %v2918, %v2153
        %v2984 = vsel %vm2977, %v2919, %v2155
        %v2985 = vsel %vm2977, %v2920, %v2157
        %v2986 = vsel %vm2977, %v2921, %v2159
        %v2987 = vsel %vm2977, %v2922, %v2161
        %v2988 = vsel %vm2977, %v2923, %v2163
        %v2989 = vsel %vm2977, %v2924, %v2165
        %v2990 = vsel %vm2977, %v2925, %v2167
        %v2991 = vsel %vm2977, %v2926, %v2169
        %v2992 = vsel %vm2977, %v2927, %v2171
        %v2993 = vsel %vm2977, %v2928, %v2173
        %v2994 = vsel %vm2977, %v2929, %v2175
        %v2995 = vsel %vm2977, %v2930, %v2177
        %v2996 = vsel %vm2977, %v2931, %v2179
        %v2997 = vsel %vm2977, %v2932, %v2181
        %v2998 = vsel %vm2977, %v2933, %v2183
        %v2999 = vsel %vm2977, %v2934, %v2185
        %v3000 = vsel %vm2977, %v2935, %v2187
        %v3001 = vsel %vm2977, %v2936, %v2189
        %v3002 = vsel %vm2977, %v2937, %v2191
        %v3003 = vsel %vm2977, %v2938, %v2193
        %v3004 = vsel %vm2977, %v2939, %v2195
        %v3005 = vsel %vm2977, %v2940, %v2197
        %v3006 = vsel %vm2977, %v2941, %v2199
        %v3007 = vsel %vm2977, %v2942, %v2201
        %v3008 = vsel %vm2977, %v2943, %v2203
        %v3009 = vsel %vm2977, %v2944, %v2205
        %v3010 = vsel %vm2977, %v2945, %v2207
        %v3011 = vsel %vm2977, %v2946, %v2209
        %v3012 = vsel %vm2977, %v2947, %v2211
        %v3013 = vsel %vm2977, %v2948, %v2213
        %v3014 = vsel %vm2977, %v2949, %v2215
        %v3015 = vsel %vm2977, %v2950, %v2217
        %v3016 = vsel %vm2977, %v2951, %v2219
        %v3017 = vsel %vm2977, %v2952, %v2221
        %v3018 = vsel %vm2977, %v2953, %v2223
        %v3019 = vsel %vm2977, %v2954, %v2225
        %v3020 = vsel %vm2977, %v2955, %v2227
        %v3021 = vsel %vm2977, %v2956, %v2229
        %v3022 = vsel %vm2977, %v2957, %v2231
        %v3023 = vsel %vm2977, %v2958, %v2233
        %v3024 = vsel %vm2977, %v2959, %v2235
        %v3025 = vsel %vm2977, %v2960, %v2237
        %v3026 = vsel %vm2977, %v2961, %v2239
        %v3027 = vsel %vm2977, %v2962, %v2241
        %v3028 = vsel %vm2977, %v2963, %v2243
        %v3029 = vsel %vm2977, %v2964, %v2245
        %v3030 = vsel %vm2977, %v2965, %v2247
        %v3031 = vsel %vm2977, %v2966, %v2249
        %v3032 = vsel %vm2977, %v2967, %v2251
        %v3033 = vsel %vm2977, %v2968, %v2253
        %v3034 = vsel %vm2977, %v2969, %v2255
        %v3035 = vsel %vm2977, %v2970, %v2257
        %v3036 = vsel %vm2977, %v2971, %v2259
        %v3037 = vsel %vm2977, %v2972, %v2261
        %v3038 = vsel %vm2977, %v2973, %v2263
        %v3039 = vsel %vm2977, %v2974, %v2265
        %v3040 = vsel %vm2977, %v2975, %v2267
        %v3041 = vsel %vm2977, %v2976, %v2269
        %vm3042 = vcmask 785408
        %v3043 = vsel %vm3042, %v2978, %v2335
        %v3044 = vsel %vm3042, %v2979, %v2337
        %v3045 = vsel %vm3042, %v2980, %v2339
        %v3046 = vsel %vm3042, %v2981, %v2341
        %v3047 = vsel %vm3042, %v2982, %v2343
        %v3048 = vsel %vm3042, %v2983, %v2345
        %v3049 = vsel %vm3042, %v2984, %v2347
        %v3050 = vsel %vm3042, %v2985, %v2349
        %v3051 = vsel %vm3042, %v2986, %v2351
        %v3052 = vsel %vm3042, %v2987, %v2353
        %v3053 = vsel %vm3042, %v2988, %v2355
        %v3054 = vsel %vm3042, %v2989, %v2357
        %v3055 = vsel %vm3042, %v2990, %v2359
        %v3056 = vsel %vm3042, %v2991, %v2361
        %v3057 = vsel %vm3042, %v2992, %v2363
        %v3058 = vsel %vm3042, %v2993, %v2365
        %v3059 = vsel %vm3042, %v2994, %v2367
        %v3060 = vsel %vm3042, %v2995, %v2369
        %v3061 = vsel %vm3042, %v2996, %v2371
        %v3062 = vsel %vm3042, %v2997, %v2373
        %v3063 = vsel %vm3042, %v2998, %v2375
        %v3064 = vsel %vm3042, %v2999, %v2377
        %v3065 = vsel %vm3042, %v3000, %v2379
        %v3066 = vsel %vm3042, %v3001, %v2381
        %v3067 = vsel %vm3042, %v3002, %v2383
        %v3068 = vsel %vm3042, %v3003, %v2385
        %v3069 = vsel %vm3042, %v3004, %v2387
        %v3070 = vsel %vm3042, %v3005, %v2389
        %v3071 = vsel %vm3042, %v3006, %v2391
        %v3072 = vsel %vm3042, %v3007, %v2393
        %v3073 = vsel %vm3042, %v3008, %v2395
        %v3074 = vsel %vm3042, %v3009, %v2397
        %v3075 = vsel %vm3042, %v3010, %v2399
        %v3076 = vsel %vm3042, %v3011, %v2401
        %v3077 = vsel %vm3042, %v3012, %v2403
        %v3078 = vsel %vm3042, %v3013, %v2405
        %v3079 = vsel %vm3042, %v3014, %v2407
        %v3080 = vsel %vm3042, %v3015, %v2409
        %v3081 = vsel %vm3042, %v3016, %v2411
        %v3082 = vsel %vm3042, %v3017, %v2413
        %v3083 = vsel %vm3042, %v3018, %v2415
        %v3084 = vsel %vm3042, %v3019, %v2417
        %v3085 = vsel %vm3042, %v3020, %v2419
        %v3086 = vsel %vm3042, %v3021, %v2421
        %v3087 = vsel %vm3042, %v3022, %v2423
        %v3088 = vsel %vm3042, %v3023, %v2425
        %v3089 = vsel %vm3042, %v3024, %v2427
        %v3090 = vsel %vm3042, %v3025, %v2429
        %v3091 = vsel %vm3042, %v3026, %v2431
        %v3092 = vsel %vm3042, %v3027, %v2433
        %v3093 = vsel %vm3042, %v3028, %v2435
        %v3094 = vsel %vm3042, %v3029, %v2437
        %v3095 = vsel %vm3042, %v3030, %v2439
        %v3096 = vsel %vm3042, %v3031, %v2441
        %v3097 = vsel %vm3042, %v3032, %v2443
        %v3098 = vsel %vm3042, %v3033, %v2445
        %v3099 = vsel %vm3042, %v3034, %v2447
        %v3100 = vsel %vm3042, %v3035, %v2449
        %v3101 = vsel %vm3042, %v3036, %v2451
        %v3102 = vsel %vm3042, %v3037, %v2453
        %v3103 = vsel %vm3042, %v3038, %v2455
        %v3104 = vsel %vm3042, %v3039, %v2457
        %v3105 = vsel %vm3042, %v3040, %v2459
        %v3106 = vsel %vm3042, %v3041, %v2461
        %vm3107 = vcmask 916480
        %v3108 = vsel %vm3107, %v3043, %v2527
        %v3109 = vsel %vm3107, %v3044, %v2529
        %v3110 = vsel %vm3107, %v3045, %v2531
        %v3111 = vsel %vm3107, %v3046, %v2533
        %v3112 = vsel %vm3107, %v3047, %v2535
        %v3113 = vsel %vm3107, %v3048, %v2537
        %v3114 = vsel %vm3107, %v3049, %v2539
        %v3115 = vsel %vm3107, %v3050, %v2541
        %v3116 = vsel %vm3107, %v3051, %v2543
        %v3117 = vsel %vm3107, %v3052, %v2545
        %v3118 = vsel %vm3107, %v3053, %v2547
        %v3119 = vsel %vm3107, %v3054, %v2549
        %v3120 = vsel %vm3107, %v3055, %v2551
        %v3121 = vsel %vm3107, %v3056, %v2553
        %v3122 = vsel %vm3107, %v3057, %v2555
        %v3123 = vsel %vm3107, %v3058, %v2557
        %v3124 = vsel %vm3107, %v3059, %v2559
        %v3125 = vsel %vm3107, %v3060, %v2561
        %v3126 = vsel %vm3107, %v3061, %v2563
        %v3127 = vsel %vm3107, %v3062, %v2565
        %v3128 = vsel %vm3107, %v3063, %v2567
        %v3129 = vsel %vm3107, %v3064, %v2569
        %v3130 = vsel %vm3107, %v3065, %v2571
        %v3131 = vsel %vm3107, %v3066, %v2573
        %v3132 = vsel %vm3107, %v3067, %v2575
        %v3133 = vsel %vm3107, %v3068, %v2577
        %v3134 = vsel %vm3107, %v3069, %v2579
        %v3135 = vsel %vm3107, %v3070, %v2581
        %v3136 = vsel %vm3107, %v3071, %v2583
        %v3137 = vsel %vm3107, %v3072, %v2585
        %v3138 = vsel %vm3107, %v3073, %v2587
        %v3139 = vsel %vm3107, %v3074, %v2589
        %v3140 = vsel %vm3107, %v3075, %v2591
        %v3141 = vsel %vm3107, %v3076, %v2593
        %v3142 = vsel %vm3107, %v3077, %v2595
        %v3143 = vsel %vm3107, %v3078, %v2597
        %v3144 = vsel %vm3107, %v3079, %v2599
        %v3145 = vsel %vm3107, %v3080, %v2601
        %v3146 = vsel %vm3107, %v3081, %v2603
        %v3147 = vsel %vm3107, %v3082, %v2605
        %v3148 = vsel %vm3107, %v3083, %v2607
        %v3149 = vsel %vm3107, %v3084, %v2609
        %v3150 = vsel %vm3107, %v3085, %v2611
        %v3151 = vsel %vm3107, %v3086, %v2613
        %v3152 = vsel %vm3107, %v3087, %v2615
        %v3153 = vsel %vm3107, %v3088, %v2617
        %v3154 = vsel %vm3107, %v3089, %v2619
        %v3155 = vsel %vm3107, %v3090, %v2621
        %v3156 = vsel %vm3107, %v3091, %v2623
        %v3157 = vsel %vm3107, %v3092, %v2625
        %v3158 = vsel %vm3107, %v3093, %v2627
        %v3159 = vsel %vm3107, %v3094, %v2629
        %v3160 = vsel %vm3107, %v3095, %v2631
        %v3161 = vsel %vm3107, %v3096, %v2633
        %v3162 = vsel %vm3107, %v3097, %v2635
        %v3163 = vsel %vm3107, %v3098, %v2637
        %v3164 = vsel %vm3107, %v3099, %v2639
        %v3165 = vsel %vm3107, %v3100, %v2641
        %v3166 = vsel %vm3107, %v3101, %v2643
        %v3167 = vsel %vm3107, %v3102, %v2645
        %v3168 = vsel %vm3107, %v3103, %v2647
        %v3169 = vsel %vm3107, %v3104, %v2649
        %v3170 = vsel %vm3107, %v3105, %v2651
        %v3171 = vsel %vm3107, %v3106, %v2653
        %v3172 = vld [vmem:[%s2] sm:$0xff]
        %v3173 = vld [vmem:[%s2 + $0x8] sm:$0xff]
        %v3174 = vld [vmem:[%s2 + $0x10] sm:$0xff]
        %v3175 = vld [vmem:[%s2 + $0x18] sm:$0xff]
        %v3176 = vmul.f32 %v3108, %v3172
        %v3177 = vmul.f32 %v3109, %v3173
        %v3178 = vmul.f32 %v3110, %v3174
        %v3179 = vmul.f32 %v3111, %v3175
        %v3180 = vmul.f32 %v3112, %v3172
        %v3181 = vmul.f32 %v3113, %v3173
        %v3182 = vmul.f32 %v3114, %v3174
        %v3183 = vmul.f32 %v3115, %v3175
        %v3184 = vmul.f32 %v3116, %v3172
        %v3185 = vmul.f32 %v3117, %v3173
        %v3186 = vmul.f32 %v3118, %v3174
        %v3187 = vmul.f32 %v3119, %v3175
        %v3188 = vmul.f32 %v3120, %v3172
        %v3189 = vmul.f32 %v3121, %v3173
        %v3190 = vmul.f32 %v3122, %v3174
        %v3191 = vmul.f32 %v3123, %v3175
        %v3192 = vmul.f32 %v3124, %v3172
        %v3193 = vmul.f32 %v3125, %v3173
        %v3194 = vmul.f32 %v3126, %v3174
        %v3195 = vmul.f32 %v3127, %v3175
        %v3196 = vmul.f32 %v3128, %v3172
        %v3197 = vmul.f32 %v3129, %v3173
        %v3198 = vmul.f32 %v3130, %v3174
        %v3199 = vmul.f32 %v3131, %v3175
        %v3200 = vmul.f32 %v3132, %v3172
        %v3201 = vmul.f32 %v3133, %v3173
        %v3202 = vmul.f32 %v3134, %v3174
        %v3203 = vmul.f32 %v3135, %v3175
        %v3204 = vmul.f32 %v3136, %v3172
        %v3205 = vmul.f32 %v3137, %v3173
        %v3206 = vmul.f32 %v3138, %v3174
        %v3207 = vmul.f32 %v3139, %v3175
        %v3208 = vmul.f32 %v3140, %v3172
        %v3209 = vmul.f32 %v3141, %v3173
        %v3210 = vmul.f32 %v3142, %v3174
        %v3211 = vmul.f32 %v3143, %v3175
        %v3212 = vmul.f32 %v3144, %v3172
        %v3213 = vmul.f32 %v3145, %v3173
        %v3214 = vmul.f32 %v3146, %v3174
        %v3215 = vmul.f32 %v3147, %v3175
        %v3216 = vmul.f32 %v3148, %v3172
        %v3217 = vmul.f32 %v3149, %v3173
        %v3218 = vmul.f32 %v3150, %v3174
        %v3219 = vmul.f32 %v3151, %v3175
        %v3220 = vmul.f32 %v3152, %v3172
        %v3221 = vmul.f32 %v3153, %v3173
        %v3222 = vmul.f32 %v3154, %v3174
        %v3223 = vmul.f32 %v3155, %v3175
        %v3224 = vmul.f32 %v3156, %v3172
        %v3225 = vmul.f32 %v3157, %v3173
        %v3226 = vmul.f32 %v3158, %v3174
        %v3227 = vmul.f32 %v3159, %v3175
        %v3228 = vmul.f32 %v3160, %v3172
        %v3229 = vmul.f32 %v3161, %v3173
        %v3230 = vmul.f32 %v3162, %v3174
        %v3231 = vmul.f32 %v3163, %v3175
        %v3232 = vmul.f32 %v3164, %v3172
        %v3233 = vmul.f32 %v3165, %v3173
        %v3234 = vmul.f32 %v3166, %v3174
        %v3235 = vmul.f32 %v3167, %v3175
        %v3236 = vmul.f32 %v3168, %v3172
        %v3237 = vmul.f32 %v3169, %v3173
        %v3238 = vmul.f32 %v3170, %v3174
        %v3239 = vmul.f32 %v3171, %v3175
        %v3240 = vld [vmem:[%s3] sm:$0xff]
        %v3241 = vld [vmem:[%s3 + $0x8] sm:$0xff]
        %v3242 = vld [vmem:[%s3 + $0x10] sm:$0xff]
        %v3243 = vld [vmem:[%s3 + $0x18] sm:$0xff]
        %v3244 = vld [vmem:[%s3 + $0x20] sm:$0xff]
        %v3245 = vld [vmem:[%s3 + $0x28] sm:$0xff]
        %v3246 = vld [vmem:[%s3 + $0x30] sm:$0xff]
        %v3247 = vld [vmem:[%s3 + $0x38] sm:$0xff]
        %v3248 = vld [vmem:[%s3 + $0x40] sm:$0xff]
        %v3249 = vld [vmem:[%s3 + $0x48] sm:$0xff]
        %v3250 = vld [vmem:[%s3 + $0x50] sm:$0xff]
        %v3251 = vld [vmem:[%s3 + $0x58] sm:$0xff]
        %v3252 = vld [vmem:[%s3 + $0x60] sm:$0xff]
        %v3253 = vld [vmem:[%s3 + $0x68] sm:$0xff]
        %v3254 = vld [vmem:[%s3 + $0x70] sm:$0xff]
        %v3255 = vld [vmem:[%s3 + $0x78] sm:$0xff]
        %3272 = vrot.lane.b32.xlu0 %v3240, 64
        %v3273 = vpop.permute.xlu0 %3272
        %3274 = vrot.lane.b32.xlu0 %v3241, 64
        %v3275 = vpop.permute.xlu0 %3274
        %3276 = vrot.lane.b32.xlu0 %v3242, 64
        %v3277 = vpop.permute.xlu0 %3276
        %3278 = vrot.lane.b32.xlu0 %v3243, 64
        %v3279 = vpop.permute.xlu0 %3278
        %3280 = vrot.lane.b32.xlu0 %v3244, 64
        %v3281 = vpop.permute.xlu0 %3280
        %3282 = vrot.lane.b32.xlu0 %v3245, 64
        %v3283 = vpop.permute.xlu0 %3282
        %3284 = vrot.lane.b32.xlu0 %v3246, 64
        %v3285 = vpop.permute.xlu0 %3284
        %3286 = vrot.lane.b32.xlu0 %v3247, 64
        %v3287 = vpop.permute.xlu0 %3286
        %3288 = vrot.lane.b32.xlu0 %v3248, 64
        %v3289 = vpop.permute.xlu0 %3288
        %3290 = vrot.lane.b32.xlu0 %v3249, 64
        %v3291 = vpop.permute.xlu0 %3290
        %3292 = vrot.lane.b32.xlu0 %v3250, 64
        %v3293 = vpop.permute.xlu0 %3292
        %3294 = vrot.lane.b32.xlu0 %v3251, 64
        %v3295 = vpop.permute.xlu0 %3294
        %3296 = vrot.lane.b32.xlu0 %v3252, 64
        %v3297 = vpop.permute.xlu0 %3296
        %3298 = vrot.lane.b32.xlu0 %v3253, 64
        %v3299 = vpop.permute.xlu0 %3298
        %3300 = vrot.lane.b32.xlu0 %v3254, 64
        %v3301 = vpop.permute.xlu0 %3300
        %3302 = vrot.lane.b32.xlu0 %v3255, 64
        %v3303 = vpop.permute.xlu0 %3302
        %v3320 = vmul.f32 %v512, %v3273
        %v3321 = vmul.f32 %v517, %v3275
        %v3322 = vmul.f32 %v512, %v3277
        %v3323 = vmul.f32 %v517, %v3279
        %v3324 = vmul.f32 %v512, %v3281
        %v3325 = vmul.f32 %v517, %v3283
        %v3326 = vmul.f32 %v512, %v3285
        %v3327 = vmul.f32 %v517, %v3287
        %v3328 = vmul.f32 %v512, %v3289
        %v3329 = vmul.f32 %v517, %v3291
        %v3330 = vmul.f32 %v512, %v3293
        %v3331 = vmul.f32 %v517, %v3295
        %v3332 = vmul.f32 %v512, %v3297
        %v3333 = vmul.f32 %v517, %v3299
        %v3334 = vmul.f32 %v512, %v3301
        %v3335 = vmul.f32 %v517, %v3303
        %v3336 = vmul.f32 %v522, %v3273
        %v3337 = vmul.f32 %v527, %v3275
        %v3338 = vmul.f32 %v522, %v3277
        %v3339 = vmul.f32 %v527, %v3279
        %v3340 = vmul.f32 %v522, %v3281
        %v3341 = vmul.f32 %v527, %v3283
        %v3342 = vmul.f32 %v522, %v3285
        %v3343 = vmul.f32 %v527, %v3287
        %v3344 = vmul.f32 %v522, %v3289
        %v3345 = vmul.f32 %v527, %v3291
        %v3346 = vmul.f32 %v522, %v3293
        %v3347 = vmul.f32 %v527, %v3295
        %v3348 = vmul.f32 %v522, %v3297
        %v3349 = vmul.f32 %v527, %v3299
        %v3350 = vmul.f32 %v522, %v3301
        %v3351 = vmul.f32 %v527, %v3303
        %v3352 = vmul.f32 %v532, %v3273
        %v3353 = vmul.f32 %v537, %v3275
        %v3354 = vmul.f32 %v532, %v3277
        %v3355 = vmul.f32 %v537, %v3279
        %v3356 = vmul.f32 %v532, %v3281
        %v3357 = vmul.f32 %v537, %v3283
        %v3358 = vmul.f32 %v532, %v3285
        %v3359 = vmul.f32 %v537, %v3287
        %v3360 = vmul.f32 %v532, %v3289
        %v3361 = vmul.f32 %v537, %v3291
        %v3362 = vmul.f32 %v532, %v3293
        %v3363 = vmul.f32 %v537, %v3295
        %v3364 = vmul.f32 %v532, %v3297
        %v3365 = vmul.f32 %v537, %v3299
        %v3366 = vmul.f32 %v532, %v3301
        %v3367 = vmul.f32 %v537, %v3303
        %v3368 = vmul.f32 %v542, %v3273
        %v3369 = vmul.f32 %v547, %v3275
        %v3370 = vmul.f32 %v542, %v3277
        %v3371 = vmul.f32 %v547, %v3279
        %v3372 = vmul.f32 %v542, %v3281
        %v3373 = vmul.f32 %v547, %v3283
        %v3374 = vmul.f32 %v542, %v3285
        %v3375 = vmul.f32 %v547, %v3287
        %v3376 = vmul.f32 %v542, %v3289
        %v3377 = vmul.f32 %v547, %v3291
        %v3378 = vmul.f32 %v542, %v3293
        %v3379 = vmul.f32 %v547, %v3295
        %v3380 = vmul.f32 %v542, %v3297
        %v3381 = vmul.f32 %v547, %v3299
        %v3382 = vmul.f32 %v542, %v3301
        %v3383 = vmul.f32 %v547, %v3303
        %v3384 = vmul.f32 %v552, %v3273
        %v3385 = vmul.f32 %v557, %v3275
        %v3386 = vmul.f32 %v552, %v3277
        %v3387 = vmul.f32 %v557, %v3279
        %v3388 = vmul.f32 %v552, %v3281
        %v3389 = vmul.f32 %v557, %v3283
        %v3390 = vmul.f32 %v552, %v3285
        %v3391 = vmul.f32 %v557, %v3287
        %v3392 = vmul.f32 %v552, %v3289
        %v3393 = vmul.f32 %v557, %v3291
        %v3394 = vmul.f32 %v552, %v3293
        %v3395 = vmul.f32 %v557, %v3295
        %v3396 = vmul.f32 %v552, %v3297
        %v3397 = vmul.f32 %v557, %v3299
        %v3398 = vmul.f32 %v552, %v3301
        %v3399 = vmul.f32 %v557, %v3303
        %v3400 = vmul.f32 %v562, %v3273
        %v3401 = vmul.f32 %v567, %v3275
        %v3402 = vmul.f32 %v562, %v3277
        %v3403 = vmul.f32 %v567, %v3279
        %v3404 = vmul.f32 %v562, %v3281
        %v3405 = vmul.f32 %v567, %v3283
        %v3406 = vmul.f32 %v562, %v3285
        %v3407 = vmul.f32 %v567, %v3287
        %v3408 = vmul.f32 %v562, %v3289
        %v3409 = vmul.f32 %v567, %v3291
        %v3410 = vmul.f32 %v562, %v3293
        %v3411 = vmul.f32 %v567, %v3295
        %v3412 = vmul.f32 %v562, %v3297
        %v3413 = vmul.f32 %v567, %v3299
        %v3414 = vmul.f32 %v562, %v3301
        %v3415 = vmul.f32 %v567, %v3303
        %v3416 = vmul.f32 %v572, %v3273
        %v3417 = vmul.f32 %v577, %v3275
        %v3418 = vmul.f32 %v572, %v3277
        %v3419 = vmul.f32 %v577, %v3279
        %v3420 = vmul.f32 %v572, %v3281
        %v3421 = vmul.f32 %v577, %v3283
        %v3422 = vmul.f32 %v572, %v3285
        %v3423 = vmul.f32 %v577, %v3287
        %v3424 = vmul.f32 %v572, %v3289
        %v3425 = vmul.f32 %v577, %v3291
        %v3426 = vmul.f32 %v572, %v3293
        %v3427 = vmul.f32 %v577, %v3295
        %v3428 = vmul.f32 %v572, %v3297
        %v3429 = vmul.f32 %v577, %v3299
        %v3430 = vmul.f32 %v572, %v3301
        %v3431 = vmul.f32 %v577, %v3303
        %v3432 = vmul.f32 %v582, %v3273
        %v3433 = vmul.f32 %v587, %v3275
        %v3434 = vmul.f32 %v582, %v3277
        %v3435 = vmul.f32 %v587, %v3279
        %v3436 = vmul.f32 %v582, %v3281
        %v3437 = vmul.f32 %v587, %v3283
        %v3438 = vmul.f32 %v582, %v3285
        %v3439 = vmul.f32 %v587, %v3287
        %v3440 = vmul.f32 %v582, %v3289
        %v3441 = vmul.f32 %v587, %v3291
        %v3442 = vmul.f32 %v582, %v3293
        %v3443 = vmul.f32 %v587, %v3295
        %v3444 = vmul.f32 %v582, %v3297
        %v3445 = vmul.f32 %v587, %v3299
        %v3446 = vmul.f32 %v582, %v3301
        %v3447 = vmul.f32 %v587, %v3303
        %v3448 = vmul.f32 %v592, %v3273
        %v3449 = vmul.f32 %v597, %v3275
        %v3450 = vmul.f32 %v592, %v3277
        %v3451 = vmul.f32 %v597, %v3279
        %v3452 = vmul.f32 %v592, %v3281
        %v3453 = vmul.f32 %v597, %v3283
        %v3454 = vmul.f32 %v592, %v3285
        %v3455 = vmul.f32 %v597, %v3287
        %v3456 = vmul.f32 %v592, %v3289
        %v3457 = vmul.f32 %v597, %v3291
        %v3458 = vmul.f32 %v592, %v3293
        %v3459 = vmul.f32 %v597, %v3295
        %v3460 = vmul.f32 %v592, %v3297
        %v3461 = vmul.f32 %v597, %v3299
        %v3462 = vmul.f32 %v592, %v3301
        %v3463 = vmul.f32 %v597, %v3303
        %v3464 = vmul.f32 %v602, %v3273
        %v3465 = vmul.f32 %v607, %v3275
        %v3466 = vmul.f32 %v602, %v3277
        %v3467 = vmul.f32 %v607, %v3279
        %v3468 = vmul.f32 %v602, %v3281
        %v3469 = vmul.f32 %v607, %v3283
        %v3470 = vmul.f32 %v602, %v3285
        %v3471 = vmul.f32 %v607, %v3287
        %v3472 = vmul.f32 %v602, %v3289
        %v3473 = vmul.f32 %v607, %v3291
        %v3474 = vmul.f32 %v602, %v3293
        %v3475 = vmul.f32 %v607, %v3295
        %v3476 = vmul.f32 %v602, %v3297
        %v3477 = vmul.f32 %v607, %v3299
        %v3478 = vmul.f32 %v602, %v3301
        %v3479 = vmul.f32 %v607, %v3303
        %v3480 = vmul.f32 %v612, %v3273
        %v3481 = vmul.f32 %v617, %v3275
        %v3482 = vmul.f32 %v612, %v3277
        %v3483 = vmul.f32 %v617, %v3279
        %v3484 = vmul.f32 %v612, %v3281
        %v3485 = vmul.f32 %v617, %v3283
        %v3486 = vmul.f32 %v612, %v3285
        %v3487 = vmul.f32 %v617, %v3287
        %v3488 = vmul.f32 %v612, %v3289
        %v3489 = vmul.f32 %v617, %v3291
        %v3490 = vmul.f32 %v612, %v3293
        %v3491 = vmul.f32 %v617, %v3295
        %v3492 = vmul.f32 %v612, %v3297
        %v3493 = vmul.f32 %v617, %v3299
        %v3494 = vmul.f32 %v612, %v3301
        %v3495 = vmul.f32 %v617, %v3303
        %v3496 = vmul.f32 %v622, %v3273
        %v3497 = vmul.f32 %v627, %v3275
        %v3498 = vmul.f32 %v622, %v3277
        %v3499 = vmul.f32 %v627, %v3279
        %v3500 = vmul.f32 %v622, %v3281
        %v3501 = vmul.f32 %v627, %v3283
        %v3502 = vmul.f32 %v622, %v3285
        %v3503 = vmul.f32 %v627, %v3287
        %v3504 = vmul.f32 %v622, %v3289
        %v3505 = vmul.f32 %v627, %v3291
        %v3506 = vmul.f32 %v622, %v3293
        %v3507 = vmul.f32 %v627, %v3295
        %v3508 = vmul.f32 %v622, %v3297
        %v3509 = vmul.f32 %v627, %v3299
        %v3510 = vmul.f32 %v622, %v3301
        %v3511 = vmul.f32 %v627, %v3303
        %v3512 = vmul.f32 %v632, %v3273
        %v3513 = vmul.f32 %v637, %v3275
        %v3514 = vmul.f32 %v632, %v3277
        %v3515 = vmul.f32 %v637, %v3279
        %v3516 = vmul.f32 %v632, %v3281
        %v3517 = vmul.f32 %v637, %v3283
        %v3518 = vmul.f32 %v632, %v3285
        %v3519 = vmul.f32 %v637, %v3287
        %v3520 = vmul.f32 %v632, %v3289
        %v3521 = vmul.f32 %v637, %v3291
        %v3522 = vmul.f32 %v632, %v3293
        %v3523 = vmul.f32 %v637, %v3295
        %v3524 = vmul.f32 %v632, %v3297
        %v3525 = vmul.f32 %v637, %v3299
        %v3526 = vmul.f32 %v632, %v3301
        %v3527 = vmul.f32 %v637, %v3303
        %v3528 = vmul.f32 %v642, %v3273
        %v3529 = vmul.f32 %v647, %v3275
        %v3530 = vmul.f32 %v642, %v3277
        %v3531 = vmul.f32 %v647, %v3279
        %v3532 = vmul.f32 %v642, %v3281
        %v3533 = vmul.f32 %v647, %v3283
        %v3534 = vmul.f32 %v642, %v3285
        %v3535 = vmul.f32 %v647, %v3287
        %v3536 = vmul.f32 %v642, %v3289
        %v3537 = vmul.f32 %v647, %v3291
        %v3538 = vmul.f32 %v642, %v3293
        %v3539 = vmul.f32 %v647, %v3295
        %v3540 = vmul.f32 %v642, %v3297
        %v3541 = vmul.f32 %v647, %v3299
        %v3542 = vmul.f32 %v642, %v3301
        %v3543 = vmul.f32 %v647, %v3303
        %v3544 = vmul.f32 %v652, %v3273
        %v3545 = vmul.f32 %v657, %v3275
        %v3546 = vmul.f32 %v652, %v3277
        %v3547 = vmul.f32 %v657, %v3279
        %v3548 = vmul.f32 %v652, %v3281
        %v3549 = vmul.f32 %v657, %v3283
        %v3550 = vmul.f32 %v652, %v3285
        %v3551 = vmul.f32 %v657, %v3287
        %v3552 = vmul.f32 %v652, %v3289
        %v3553 = vmul.f32 %v657, %v3291
        %v3554 = vmul.f32 %v652, %v3293
        %v3555 = vmul.f32 %v657, %v3295
        %v3556 = vmul.f32 %v652, %v3297
        %v3557 = vmul.f32 %v657, %v3299
        %v3558 = vmul.f32 %v652, %v3301
        %v3559 = vmul.f32 %v657, %v3303
        %v3560 = vmul.f32 %v662, %v3273
        %v3561 = vmul.f32 %v667, %v3275
        %v3562 = vmul.f32 %v662, %v3277
        %v3563 = vmul.f32 %v667, %v3279
        %v3564 = vmul.f32 %v662, %v3281
        %v3565 = vmul.f32 %v667, %v3283
        %v3566 = vmul.f32 %v662, %v3285
        %v3567 = vmul.f32 %v667, %v3287
        %v3568 = vmul.f32 %v662, %v3289
        %v3569 = vmul.f32 %v667, %v3291
        %v3570 = vmul.f32 %v662, %v3293
        %v3571 = vmul.f32 %v667, %v3295
        %v3572 = vmul.f32 %v662, %v3297
        %v3573 = vmul.f32 %v667, %v3299
        %v3574 = vmul.f32 %v662, %v3301
        %v3575 = vmul.f32 %v667, %v3303
        %v3576 = vsel %vm348, %v512, 0
        %v3578 = vsel %vm348, %v517, 0
        %3580 = vmatprep.subr.mxu0 0.0
        %3581 = vmatpush1.msra.mxu0 %v3176
        %3582 = vmatprep.subr.mxu0 0.0
        %3583 = vmatpush1.msra.mxu0 %v3177
        %3584 = vmatprep.subr.mxu0 0.0
        %3585 = vmatpush1.msra.mxu0 %v3178
        %3586 = vmatprep.subr.mxu0 0.0
        %3587 = vmatpush1.msra.mxu0 %v3179
        %3588 = vmatprep.subr.mxu0 0.0
        %3589 = vmatpush1.msra.mxu0 0.0
        %3590 = vmatprep.subr.mxu0 0.0
        %3591 = vmatpush1.msra.mxu0 0.0
        %3592 = vmatprep.subr.mxu0 0.0
        %3593 = vmatpush1.msra.mxu0 0.0
        %3594 = vmatprep.subr.mxu0 0.0
        %3595 = vmatpush1.msra.mxu0 0.0
        %3596 = vmatprep.subr.mxu0 0.0
        %3597 = vmatpush1.msra.mxu0 0.0
        %3598 = vmatprep.subr.mxu0 0.0
        %3599 = vmatpush1.msra.mxu0 0.0
        %3600 = vmatprep.subr.mxu0 0.0
        %3601 = vmatpush1.msra.mxu0 0.0
        %3602 = vmatprep.subr.mxu0 0.0
        %3603 = vmatpush1.msra.mxu0 0.0
        %3604 = vmatprep.subr.mxu0 0.0
        %3605 = vmatpush1.msra.mxu0 0.0
        %3606 = vmatprep.subr.mxu0 0.0
        %3607 = vmatpush1.msra.mxu0 0.0
        %3608 = vmatprep.subr.mxu0 0.0
        %3609 = vmatpush1.msra.mxu0 0.0
        %3610 = vmatprep.subr.mxu0 0.0
        %3611 = vmatpush1.msra.mxu0 0.0
        %3612 = vmatprep.subr.mxu0 0.0
        %3613 = vmatpush1.msra.mxu0 0.0
        %3614 = vmatprep.subr.mxu0 0.0
        %3615 = vmatpush1.msra.mxu0 0.0
        %3616 = vmatprep.subr.mxu0 0.0
        %3617 = vmatpush1.msra.mxu0 0.0
        %3618 = vmatprep.subr.mxu0 0.0
        %3619 = vmatpush1.msra.mxu0 0.0
        %3620 = vmatprep.subr.mxu0 0.0
        %3621 = vmatpush1.msra.mxu0 0.0
        %3622 = vmatprep.subr.mxu0 0.0
        %3623 = vmatpush1.msra.mxu0 0.0
        %3624 = vmatprep.subr.mxu0 0.0
        %3625 = vmatpush1.msra.mxu0 0.0
        %3626 = vmatprep.subr.mxu0 0.0
        %3627 = vmatpush1.msra.mxu0 0.0
        %3628 = vmatprep.subr.mxu0 0.0
        %3629 = vmatpush1.msra.mxu0 0.0
        %3630 = vmatprep.subr.mxu0 0.0
        %3631 = vmatpush1.msra.mxu0 0.0
        %3632 = vmatprep.subr.mxu0 0.0
        %3633 = vmatpush1.msra.mxu0 0.0
        %3634 = vmatprep.subr.mxu0 0.0
        %3635 = vmatpush1.msra.mxu0 0.0
        %3636 = vmatprep.subr.mxu0 0.0
        %3637 = vmatpush1.msra.mxu0 0.0
        %3638 = vmatprep.subr.mxu0 0.0
        %3639 = vmatpush1.msra.mxu0 0.0
        %3640 = vmatprep.subr.mxu0 0.0
        %3641 = vmatpush1.msra.mxu0 0.0
        %3642 = vmatprep.subr.mxu0 0.0
        %3643 = vmatpush1.msra.mxu0 0.0
        %3644 = vmatprep.mubr.f32.mxu0 0.0
        %3645 = vmatmul.mubr.f32.gmra.mrb[0].mxu0 %v3576
        %v3646 = vpop.f32.mrb[0].mxu0
        %v3647 = vadd.f32 0.0, %v3646
        %v3648 = vpop.f32.mrb[0].mxu0
        %3649 = vmatprep.mubr.f32.mxu0 0.0
        %3650 = vmatmul.mubr.f32.gmra.mrb[0].mxu0 %v3578
        %v3651 = vpop.f32.mrb[0].mxu0
        %v3652 = vadd.f32 0.0, %v3651
        %v3653 = vpop.f32.mrb[0].mxu0
        %3654 = vdwg.mxu0
        %v3655 = vsel %vm348, %v522, 0
        %v3657 = vsel %vm348, %v527, 0
        %3659 = vmatprep.subr.mxu0 0.0
        %3660 = vmatpush1.msra.mxu0 %v3180
        %3661 = vmatprep.subr.mxu0 0.0
        %3662 = vmatpush1.msra.mxu0 %v3181
        %3663 = vmatprep.subr.mxu0 0.0
        %3664 = vmatpush1.msra.mxu0 %v3182
        %3665 = vmatprep.subr.mxu0 0.0
        %3666 = vmatpush1.msra.mxu0 %v3183
        %3667 = vmatprep.subr.mxu0 0.0
        %3668 = vmatpush1.msra.mxu0 0.0
        %3669 = vmatprep.subr.mxu0 0.0
        %3670 = vmatpush1.msra.mxu0 0.0
        %3671 = vmatprep.subr.mxu0 0.0
        %3672 = vmatpush1.msra.mxu0 0.0
        %3673 = vmatprep.subr.mxu0 0.0
        %3674 = vmatpush1.msra.mxu0 0.0
        %3675 = vmatprep.subr.mxu0 0.0
        %3676 = vmatpush1.msra.mxu0 0.0
        %3677 = vmatprep.subr.mxu0 0.0
        %3678 = vmatpush1.msra.mxu0 0.0
        %3679 = vmatprep.subr.mxu0 0.0
        %3680 = vmatpush1.msra.mxu0 0.0
        %3681 = vmatprep.subr.mxu0 0.0
        %3682 = vmatpush1.msra.mxu0 0.0
        %3683 = vmatprep.subr.mxu0 0.0
        %3684 = vmatpush1.msra.mxu0 0.0
        %3685 = vmatprep.subr.mxu0 0.0
        %3686 = vmatpush1.msra.mxu0 0.0
        %3687 = vmatprep.subr.mxu0 0.0
        %3688 = vmatpush1.msra.mxu0 0.0
        %3689 = vmatprep.subr.mxu0 0.0
        %3690 = vmatpush1.msra.mxu0 0.0
        %3691 = vmatprep.subr.mxu0 0.0
        %3692 = vmatpush1.msra.mxu0 0.0
        %3693 = vmatprep.subr.mxu0 0.0
        %3694 = vmatpush1.msra.mxu0 0.0
        %3695 = vmatprep.subr.mxu0 0.0
        %3696 = vmatpush1.msra.mxu0 0.0
        %3697 = vmatprep.subr.mxu0 0.0
        %3698 = vmatpush1.msra.mxu0 0.0
        %3699 = vmatprep.subr.mxu0 0.0
        %3700 = vmatpush1.msra.mxu0 0.0
        %3701 = vmatprep.subr.mxu0 0.0
        %3702 = vmatpush1.msra.mxu0 0.0
        %3703 = vmatprep.subr.mxu0 0.0
        %3704 = vmatpush1.msra.mxu0 0.0
        %3705 = vmatprep.subr.mxu0 0.0
        %3706 = vmatpush1.msra.mxu0 0.0
        %3707 = vmatprep.subr.mxu0 0.0
        %3708 = vmatpush1.msra.mxu0 0.0
        %3709 = vmatprep.subr.mxu0 0.0
        %3710 = vmatpush1.msra.mxu0 0.0
        %3711 = vmatprep.subr.mxu0 0.0
        %3712 = vmatpush1.msra.mxu0 0.0
        %3713 = vmatprep.subr.mxu0 0.0
        %3714 = vmatpush1.msra.mxu0 0.0
        %3715 = vmatprep.subr.mxu0 0.0
        %3716 = vmatpush1.msra.mxu0 0.0
        %3717 = vmatprep.subr.mxu0 0.0
        %3718 = vmatpush1.msra.mxu0 0.0
        %3719 = vmatprep.subr.mxu0 0.0
        %3720 = vmatpush1.msra.mxu0 0.0
        %3721 = vmatprep.subr.mxu0 0.0
        %3722 = vmatpush1.msra.mxu0 0.0
        %3723 = vmatprep.mubr.f32.mxu0 0.0
        %3724 = vmatmul.mubr.f32.gmra.mrb[0].mxu0 %v3655
        %v3725 = vpop.f32.mrb[0].mxu0
        %v3726 = vadd.f32 0.0, %v3725
        %v3727 = vpop.f32.mrb[0].mxu0
        %3728 = vmatprep.mubr.f32.mxu0 0.0
        %3729 = vmatmul.mubr.f32.gmra.mrb[0].mxu0 %v3657
        %v3730 = vpop.f32.mrb[0].mxu0
        %v3731 = vadd.f32 0.0, %v3730
        %v3732 = vpop.f32.mrb[0].mxu0
        %3733 = vdwg.mxu0
        %v3734 = vsel %vm348, %v532, 0
        %v3736 = vsel %vm348, %v537, 0
        %3738 = vmatprep.subr.mxu0 0.0
        %3739 = vmatpush1.msra.mxu0 %v3184
        %3740 = vmatprep.subr.mxu0 0.0
        %3741 = vmatpush1.msra.mxu0 %v3185
        %3742 = vmatprep.subr.mxu0 0.0
        %3743 = vmatpush1.msra.mxu0 %v3186
        %3744 = vmatprep.subr.mxu0 0.0
        %3745 = vmatpush1.msra.mxu0 %v3187
        %3746 = vmatprep.subr.mxu0 0.0
        %3747 = vmatpush1.msra.mxu0 0.0
        %3748 = vmatprep.subr.mxu0 0.0
        %3749 = vmatpush1.msra.mxu0 0.0
        %3750 = vmatprep.subr.mxu0 0.0
        %3751 = vmatpush1.msra.mxu0 0.0
        %3752 = vmatprep.subr.mxu0 0.0
        %3753 = vmatpush1.msra.mxu0 0.0
        %3754 = vmatprep.subr.mxu0 0.0
        %3755 = vmatpush1.msra.mxu0 0.0
        %3756 = vmatprep.subr.mxu0 0.0
        %3757 = vmatpush1.msra.mxu0 0.0
        %3758 = vmatprep.subr.mxu0 0.0
        %3759 = vmatpush1.msra.mxu0 0.0
        %3760 = vmatprep.subr.mxu0 0.0
        %3761 = vmatpush1.msra.mxu0 0.0
        %3762 = vmatprep.subr.mxu0 0.0
        %3763 = vmatpush1.msra.mxu0 0.0
        %3764 = vmatprep.subr.mxu0 0.0
        %3765 = vmatpush1.msra.mxu0 0.0
        %3766 = vmatprep.subr.mxu0 0.0
        %3767 = vmatpush1.msra.mxu0 0.0
        %3768 = vmatprep.subr.mxu0 0.0
        %3769 = vmatpush1.msra.mxu0 0.0
        %3770 = vmatprep.subr.mxu0 0.0
        %3771 = vmatpush1.msra.mxu0 0.0
        %3772 = vmatprep.subr.mxu0 0.0
        %3773 = vmatpush1.msra.mxu0 0.0
        %3774 = vmatprep.subr.mxu0 0.0
        %3775 = vmatpush1.msra.mxu0 0.0
        %3776 = vmatprep.subr.mxu0 0.0
        %3777 = vmatpush1.msra.mxu0 0.0
        %3778 = vmatprep.subr.mxu0 0.0
        %3779 = vmatpush1.msra.mxu0 0.0
        %3780 = vmatprep.subr.mxu0 0.0
        %3781 = vmatpush1.msra.mxu0 0.0
        %3782 = vmatprep.subr.mxu0 0.0
        %3783 = vmatpush1.msra.mxu0 0.0
        %3784 = vmatprep.subr.mxu0 0.0
        %3785 = vmatpush1.msra.mxu0 0.0
        %3786 = vmatprep.subr.mxu0 0.0
        %3787 = vmatpush1.msra.mxu0 0.0
        %3788 = vmatprep.subr.mxu0 0.0
        %3789 = vmatpush1.msra.mxu0 0.0
        %3790 = vmatprep.subr.mxu0 0.0
        %3791 = vmatpush1.msra.mxu0 0.0
        %3792 = vmatprep.subr.mxu0 0.0
        %3793 = vmatpush1.msra.mxu0 0.0
        %3794 = vmatprep.subr.mxu0 0.0
        %3795 = vmatpush1.msra.mxu0 0.0
        %3796 = vmatprep.subr.mxu0 0.0
        %3797 = vmatpush1.msra.mxu0 0.0
        %3798 = vmatprep.subr.mxu0 0.0
        %3799 = vmatpush1.msra.mxu0 0.0
        %3800 = vmatprep.subr.mxu0 0.0
        %3801 = vmatpush1.msra.mxu0 0.0
        %3802 = vmatprep.mubr.f32.mxu0 0.0
        %3803 = vmatmul.mubr.f32.gmra.mrb[0].mxu0 %v3734
        %v3804 = vpop.f32.mrb[0].mxu0
        %v3805 = vadd.f32 0.0, %v3804
        %v3806 = vpop.f32.mrb[0].mxu0
        %3807 = vmatprep.mubr.f32.mxu0 0.0
        %3808 = vmatmul.mubr.f32.gmra.mrb[0].mxu0 %v3736
        %v3809 = vpop.f32.mrb[0].mxu0
        %v3810 = vadd.f32 0.0, %v3809
        %v3811 = vpop.f32.mrb[0].mxu0
        %3812 = vdwg.mxu0
        %v3813 = vsel %vm348, %v542, 0
        %v3815 = vsel %vm348, %v547, 0
        %3817 = vmatprep.subr.mxu0 0.0
        %3818 = vmatpush1.msra.mxu0 %v3188
        %3819 = vmatprep.subr.mxu0 0.0
        %3820 = vmatpush1.msra.mxu0 %v3189
        %3821 = vmatprep.subr.mxu0 0.0
        %3822 = vmatpush1.msra.mxu0 %v3190
        %3823 = vmatprep.subr.mxu0 0.0
        %3824 = vmatpush1.msra.mxu0 %v3191
        %3825 = vmatprep.subr.mxu0 0.0
        %3826 = vmatpush1.msra.mxu0 0.0
        %3827 = vmatprep.subr.mxu0 0.0
        %3828 = vmatpush1.msra.mxu0 0.0
        %3829 = vmatprep.subr.mxu0 0.0
        %3830 = vmatpush1.msra.mxu0 0.0
        %3831 = vmatprep.subr.mxu0 0.0
        %3832 = vmatpush1.msra.mxu0 0.0
        %3833 = vmatprep.subr.mxu0 0.0
        %3834 = vmatpush1.msra.mxu0 0.0
        %3835 = vmatprep.subr.mxu0 0.0
        %3836 = vmatpush1.msra.mxu0 0.0
        %3837 = vmatprep.subr.mxu0 0.0
        %3838 = vmatpush1.msra.mxu0 0.0
        %3839 = vmatprep.subr.mxu0 0.0
        %3840 = vmatpush1.msra.mxu0 0.0
        %3841 = vmatprep.subr.mxu0 0.0
        %3842 = vmatpush1.msra.mxu0 0.0
        %3843 = vmatprep.subr.mxu0 0.0
        %3844 = vmatpush1.msra.mxu0 0.0
        %3845 = vmatprep.subr.mxu0 0.0
        %3846 = vmatpush1.msra.mxu0 0.0
        %3847 = vmatprep.subr.mxu0 0.0
        %3848 = vmatpush1.msra.mxu0 0.0
        %3849 = vmatprep.subr.mxu0 0.0
        %3850 = vmatpush1.msra.mxu0 0.0
        %3851 = vmatprep.subr.mxu0 0.0
        %3852 = vmatpush1.msra.mxu0 0.0
        %3853 = vmatprep.subr.mxu0 0.0
        %3854 = vmatpush1.msra.mxu0 0.0
        %3855 = vmatprep.subr.mxu0 0.0
        %3856 = vmatpush1.msra.mxu0 0.0
        %3857 = vmatprep.subr.mxu0 0.0
        %3858 = vmatpush1.msra.mxu0 0.0
        %3859 = vmatprep.subr.mxu0 0.0
        %3860 = vmatpush1.msra.mxu0 0.0
        %3861 = vmatprep.subr.mxu0 0.0
        %3862 = vmatpush1.msra.mxu0 0.0
        %3863 = vmatprep.subr.mxu0 0.0
        %3864 = vmatpush1.msra.mxu0 0.0
        %3865 = vmatprep.subr.mxu0 0.0
        %3866 = vmatpush1.msra.mxu0 0.0
        %3867 = vmatprep.subr.mxu0 0.0
        %3868 = vmatpush1.msra.mxu0 0.0
        %3869 = vmatprep.subr.mxu0 0.0
        %3870 = vmatpush1.msra.mxu0 0.0
        %3871 = vmatprep.subr.mxu0 0.0
        %3872 = vmatpush1.msra.mxu0 0.0
        %3873 = vmatprep.subr.mxu0 0.0
        %3874 = vmatpush1.msra.mxu0 0.0
        %3875 = vmatprep.subr.mxu0 0.0
        %3876 = vmatpush1.msra.mxu0 0.0
        %3877 = vmatprep.subr.mxu0 0.0
        %3878 = vmatpush1.msra.mxu0 0.0
        %3879 = vmatprep.subr.mxu0 0.0
        %3880 = vmatpush1.msra.mxu0 0.0
        %3881 = vmatprep.mubr.f32.mxu0 0.0
        %3882 = vmatmul.mubr.f32.gmra.mrb[0].mxu0 %v3813
        %v3883 = vpop.f32.mrb[0].mxu0
        %v3884 = vadd.f32 0.0, %v3883
        %v3885 = vpop.f32.mrb[0].mxu0
        %3886 = vmatprep.mubr.f32.mxu0 0.0
        %3887 = vmatmul.mubr.f32.gmra.mrb[0].mxu0 %v3815
        %v3888 = vpop.f32.mrb[0].mxu0
        %v3889 = vadd.f32 0.0, %v3888
        %v3890 = vpop.f32.mrb[0].mxu0
        %3891 = vdwg.mxu0
        %v3892 = vsel %vm348, %v552, 0
        %v3894 = vsel %vm348, %v557, 0
        %3896 = vmatprep.subr.mxu0 0.0
        %3897 = vmatpush1.msra.mxu0 %v3192
        %3898 = vmatprep.subr.mxu0 0.0
        %3899 = vmatpush1.msra.mxu0 %v3193
        %3900 = vmatprep.subr.mxu0 0.0
        %3901 = vmatpush1.msra.mxu0 %v3194
        %3902 = vmatprep.subr.mxu0 0.0
        %3903 = vmatpush1.msra.mxu0 %v3195
        %3904 = vmatprep.subr.mxu0 0.0
        %3905 = vmatpush1.msra.mxu0 0.0
        %3906 = vmatprep.subr.mxu0 0.0
        %3907 = vmatpush1.msra.mxu0 0.0
        %3908 = vmatprep.subr.mxu0 0.0
        %3909 = vmatpush1.msra.mxu0 0.0
        %3910 = vmatprep.subr.mxu0 0.0
        %3911 = vmatpush1.msra.mxu0 0.0
        %3912 = vmatprep.subr.mxu0 0.0
        %3913 = vmatpush1.msra.mxu0 0.0
        %3914 = vmatprep.subr.mxu0 0.0
        %3915 = vmatpush1.msra.mxu0 0.0
        %3916 = vmatprep.subr.mxu0 0.0
        %3917 = vmatpush1.msra.mxu0 0.0
        %3918 = vmatprep.subr.mxu0 0.0
        %3919 = vmatpush1.msra.mxu0 0.0
        %3920 = vmatprep.subr.mxu0 0.0
        %3921 = vmatpush1.msra.mxu0 0.0
        %3922 = vmatprep.subr.mxu0 0.0
        %3923 = vmatpush1.msra.mxu0 0.0
        %3924 = vmatprep.subr.mxu0 0.0
        %3925 = vmatpush1.msra.mxu0 0.0
        %3926 = vmatprep.subr.mxu0 0.0
        %3927 = vmatpush1.msra.mxu0 0.0
        %3928 = vmatprep.subr.mxu0 0.0
        %3929 = vmatpush1.msra.mxu0 0.0
        %3930 = vmatprep.subr.mxu0 0.0
        %3931 = vmatpush1.msra.mxu0 0.0
        %3932 = vmatprep.subr.mxu0 0.0
        %3933 = vmatpush1.msra.mxu0 0.0
        %3934 = vmatprep.subr.mxu0 0.0
        %3935 = vmatpush1.msra.mxu0 0.0
        %3936 = vmatprep.subr.mxu0 0.0
        %3937 = vmatpush1.msra.mxu0 0.0
        %3938 = vmatprep.subr.mxu0 0.0
        %3939 = vmatpush1.msra.mxu0 0.0
        %3940 = vmatprep.subr.mxu0 0.0
        %3941 = vmatpush1.msra.mxu0 0.0
        %3942 = vmatprep.subr.mxu0 0.0
        %3943 = vmatpush1.msra.mxu0 0.0
        %3944 = vmatprep.subr.mxu0 0.0
        %3945 = vmatpush1.msra.mxu0 0.0
        %3946 = vmatprep.subr.mxu0 0.0
        %3947 = vmatpush1.msra.mxu0 0.0
        %3948 = vmatprep.subr.mxu0 0.0
        %3949 = vmatpush1.msra.mxu0 0.0
        %3950 = vmatprep.subr.mxu0 0.0
        %3951 = vmatpush1.msra.mxu0 0.0
        %3952 = vmatprep.subr.mxu0 0.0
        %3953 = vmatpush1.msra.mxu0 0.0
        %3954 = vmatprep.subr.mxu0 0.0
        %3955 = vmatpush1.msra.mxu0 0.0
        %3956 = vmatprep.subr.mxu0 0.0
        %3957 = vmatpush1.msra.mxu0 0.0
        %3958 = vmatprep.subr.mxu0 0.0
        %3959 = vmatpush1.msra.mxu0 0.0
        %3960 = vmatprep.mubr.f32.mxu0 0.0
        %3961 = vmatmul.mubr.f32.gmra.mrb[0].mxu0 %v3892
        %v3962 = vpop.f32.mrb[0].mxu0
        %v3963 = vadd.f32 0.0, %v3962
        %v3964 = vpop.f32.mrb[0].mxu0
        %3965 = vmatprep.mubr.f32.mxu0 0.0
        %3966 = vmatmul.mubr.f32.gmra.mrb[0].mxu0 %v3894
        %v3967 = vpop.f32.mrb[0].mxu0
        %v3968 = vadd.f32 0.0, %v3967
        %v3969 = vpop.f32.mrb[0].mxu0
        %3970 = vdwg.mxu0
        %v3971 = vsel %vm348, %v562, 0
        %v3973 = vsel %vm348, %v567, 0
        %3975 = vmatprep.subr.mxu0 0.0
        %3976 = vmatpush1.msra.mxu0 %v3196
        %3977 = vmatprep.subr.mxu0 0.0
        %3978 = vmatpush1.msra.mxu0 %v3197
        %3979 = vmatprep.subr.mxu0 0.0
        %3980 = vmatpush1.msra.mxu0 %v3198
        %3981 = vmatprep.subr.mxu0 0.0
        %3982 = vmatpush1.msra.mxu0 %v3199
        %3983 = vmatprep.subr.mxu0 0.0
        %3984 = vmatpush1.msra.mxu0 0.0
        %3985 = vmatprep.subr.mxu0 0.0
        %3986 = vmatpush1.msra.mxu0 0.0
        %3987 = vmatprep.subr.mxu0 0.0
        %3988 = vmatpush1.msra.mxu0 0.0
        %3989 = vmatprep.subr.mxu0 0.0
        %3990 = vmatpush1.msra.mxu0 0.0
        %3991 = vmatprep.subr.mxu0 0.0
        %3992 = vmatpush1.msra.mxu0 0.0
        %3993 = vmatprep.subr.mxu0 0.0
        %3994 = vmatpush1.msra.mxu0 0.0
        %3995 = vmatprep.subr.mxu0 0.0
        %3996 = vmatpush1.msra.mxu0 0.0
        %3997 = vmatprep.subr.mxu0 0.0
        %3998 = vmatpush1.msra.mxu0 0.0
        %3999 = vmatprep.subr.mxu0 0.0
        %4000 = vmatpush1.msra.mxu0 0.0
        %4001 = vmatprep.subr.mxu0 0.0
        %4002 = vmatpush1.msra.mxu0 0.0
        %4003 = vmatprep.subr.mxu0 0.0
        %4004 = vmatpush1.msra.mxu0 0.0
        %4005 = vmatprep.subr.mxu0 0.0
        %4006 = vmatpush1.msra.mxu0 0.0
        %4007 = vmatprep.subr.mxu0 0.0
        %4008 = vmatpush1.msra.mxu0 0.0
        %4009 = vmatprep.subr.mxu0 0.0
        %4010 = vmatpush1.msra.mxu0 0.0
        %4011 = vmatprep.subr.mxu0 0.0
        %4012 = vmatpush1.msra.mxu0 0.0
        %4013 = vmatprep.subr.mxu0 0.0
        %4014 = vmatpush1.msra.mxu0 0.0
        %4015 = vmatprep.subr.mxu0 0.0
        %4016 = vmatpush1.msra.mxu0 0.0
        %4017 = vmatprep.subr.mxu0 0.0
        %4018 = vmatpush1.msra.mxu0 0.0
        %4019 = vmatprep.subr.mxu0 0.0
        %4020 = vmatpush1.msra.mxu0 0.0
        %4021 = vmatprep.subr.mxu0 0.0
        %4022 = vmatpush1.msra.mxu0 0.0
        %4023 = vmatprep.subr.mxu0 0.0
        %4024 = vmatpush1.msra.mxu0 0.0
        %4025 = vmatprep.subr.mxu0 0.0
        %4026 = vmatpush1.msra.mxu0 0.0
        %4027 = vmatprep.subr.mxu0 0.0
        %4028 = vmatpush1.msra.mxu0 0.0
        %4029 = vmatprep.subr.mxu0 0.0
        %4030 = vmatpush1.msra.mxu0 0.0
        %4031 = vmatprep.subr.mxu0 0.0
        %4032 = vmatpush1.msra.mxu0 0.0
        %4033 = vmatprep.subr.mxu0 0.0
        %4034 = vmatpush1.msra.mxu0 0.0
        %4035 = vmatprep.subr.mxu0 0.0
        %4036 = vmatpush1.msra.mxu0 0.0
        %4037 = vmatprep.subr.mxu0 0.0
        %4038 = vmatpush1.msra.mxu0 0.0
        %4039 = vmatprep.mubr.f32.mxu0 0.0
        %4040 = vmatmul.mubr.f32.gmra.mrb[0].mxu0 %v3971
        %v4041 = vpop.f32.mrb[0].mxu0
        %v4042 = vadd.f32 0.0, %v4041
        %v4043 = vpop.f32.mrb[0].mxu0
        %4044 = vmatprep.mubr.f32.mxu0 0.0
        %4045 = vmatmul.mubr.f32.gmra.mrb[0].mxu0 %v3973
        %v4046 = vpop.f32.mrb[0].mxu0
        %v4047 = vadd.f32 0.0, %v4046
        %v4048 = vpop.f32.mrb[0].mxu0
        %4049 = vdwg.mxu0
        %v4050 = vsel %vm348, %v572, 0
        %v4052 = vsel %vm348, %v577, 0
        %4054 = vmatprep.subr.mxu0 0.0
        %4055 = vmatpush1.msra.mxu0 %v3200
        %4056 = vmatprep.subr.mxu0 0.0
        %4057 = vmatpush1.msra.mxu0 %v3201
        %4058 = vmatprep.subr.mxu0 0.0
        %4059 = vmatpush1.msra.mxu0 %v3202
        %4060 = vmatprep.subr.mxu0 0.0
        %4061 = vmatpush1.msra.mxu0 %v3203
        %4062 = vmatprep.subr.mxu0 0.0
        %4063 = vmatpush1.msra.mxu0 0.0
        %4064 = vmatprep.subr.mxu0 0.0
        %4065 = vmatpush1.msra.mxu0 0.0
        %4066 = vmatprep.subr.mxu0 0.0
        %4067 = vmatpush1.msra.mxu0 0.0
        %4068 = vmatprep.subr.mxu0 0.0
        %4069 = vmatpush1.msra.mxu0 0.0
        %4070 = vmatprep.subr.mxu0 0.0
        %4071 = vmatpush1.msra.mxu0 0.0
        %4072 = vmatprep.subr.mxu0 0.0
        %4073 = vmatpush1.msra.mxu0 0.0
        %4074 = vmatprep.subr.mxu0 0.0
        %4075 = vmatpush1.msra.mxu0 0.0
        %4076 = vmatprep.subr.mxu0 0.0
        %4077 = vmatpush1.msra.mxu0 0.0
        %4078 = vmatprep.subr.mxu0 0.0
        %4079 = vmatpush1.msra.mxu0 0.0
        %4080 = vmatprep.subr.mxu0 0.0
        %4081 = vmatpush1.msra.mxu0 0.0
        %4082 = vmatprep.subr.mxu0 0.0
        %4083 = vmatpush1.msra.mxu0 0.0
        %4084 = vmatprep.subr.mxu0 0.0
        %4085 = vmatpush1.msra.mxu0 0.0
        %4086 = vmatprep.subr.mxu0 0.0
        %4087 = vmatpush1.msra.mxu0 0.0
        %4088 = vmatprep.subr.mxu0 0.0
        %4089 = vmatpush1.msra.mxu0 0.0
        %4090 = vmatprep.subr.mxu0 0.0
        %4091 = vmatpush1.msra.mxu0 0.0
        %4092 = vmatprep.subr.mxu0 0.0
        %4093 = vmatpush1.msra.mxu0 0.0
        %4094 = vmatprep.subr.mxu0 0.0
        %4095 = vmatpush1.msra.mxu0 0.0
        %4096 = vmatprep.subr.mxu0 0.0
        %4097 = vmatpush1.msra.mxu0 0.0
        %4098 = vmatprep.subr.mxu0 0.0
        %4099 = vmatpush1.msra.mxu0 0.0
        %4100 = vmatprep.subr.mxu0 0.0
        %4101 = vmatpush1.msra.mxu0 0.0
        %4102 = vmatprep.subr.mxu0 0.0
        %4103 = vmatpush1.msra.mxu0 0.0
        %4104 = vmatprep.subr.mxu0 0.0
        %4105 = vmatpush1.msra.mxu0 0.0
        %4106 = vmatprep.subr.mxu0 0.0
        %4107 = vmatpush1.msra.mxu0 0.0
        %4108 = vmatprep.subr.mxu0 0.0
        %4109 = vmatpush1.msra.mxu0 0.0
        %4110 = vmatprep.subr.mxu0 0.0
        %4111 = vmatpush1.msra.mxu0 0.0
        %4112 = vmatprep.subr.mxu0 0.0
        %4113 = vmatpush1.msra.mxu0 0.0
        %4114 = vmatprep.subr.mxu0 0.0
        %4115 = vmatpush1.msra.mxu0 0.0
        %4116 = vmatprep.subr.mxu0 0.0
        %4117 = vmatpush1.msra.mxu0 0.0
        %4118 = vmatprep.mubr.f32.mxu0 0.0
        %4119 = vmatmul.mubr.f32.gmra.mrb[0].mxu0 %v4050
        %v4120 = vpop.f32.mrb[0].mxu0
        %v4121 = vadd.f32 0.0, %v4120
        %v4122 = vpop.f32.mrb[0].mxu0
        %4123 = vmatprep.mubr.f32.mxu0 0.0
        %4124 = vmatmul.mubr.f32.gmra.mrb[0].mxu0 %v4052
        %v4125 = vpop.f32.mrb[0].mxu0
        %v4126 = vadd.f32 0.0, %v4125
        %v4127 = vpop.f32.mrb[0].mxu0
        %4128 = vdwg.mxu0
        %v4129 = vsel %vm348, %v582, 0
        %v4131 = vsel %vm348, %v587, 0
        %4133 = vmatprep.subr.mxu0 0.0
        %4134 = vmatpush1.msra.mxu0 %v3204
        %4135 = vmatprep.subr.mxu0 0.0
        %4136 = vmatpush1.msra.mxu0 %v3205
        %4137 = vmatprep.subr.mxu0 0.0
        %4138 = vmatpush1.msra.mxu0 %v3206
        %4139 = vmatprep.subr.mxu0 0.0
        %4140 = vmatpush1.msra.mxu0 %v3207
        %4141 = vmatprep.subr.mxu0 0.0
        %4142 = vmatpush1.msra.mxu0 0.0
        %4143 = vmatprep.subr.mxu0 0.0
        %4144 = vmatpush1.msra.mxu0 0.0
        %4145 = vmatprep.subr.mxu0 0.0
        %4146 = vmatpush1.msra.mxu0 0.0
        %4147 = vmatprep.subr.mxu0 0.0
        %4148 = vmatpush1.msra.mxu0 0.0
        %4149 = vmatprep.subr.mxu0 0.0
        %4150 = vmatpush1.msra.mxu0 0.0
        %4151 = vmatprep.subr.mxu0 0.0
        %4152 = vmatpush1.msra.mxu0 0.0
        %4153 = vmatprep.subr.mxu0 0.0
        %4154 = vmatpush1.msra.mxu0 0.0
        %4155 = vmatprep.subr.mxu0 0.0
        %4156 = vmatpush1.msra.mxu0 0.0
        %4157 = vmatprep.subr.mxu0 0.0
        %4158 = vmatpush1.msra.mxu0 0.0
        %4159 = vmatprep.subr.mxu0 0.0
        %4160 = vmatpush1.msra.mxu0 0.0
        %4161 = vmatprep.subr.mxu0 0.0
        %4162 = vmatpush1.msra.mxu0 0.0
        %4163 = vmatprep.subr.mxu0 0.0
        %4164 = vmatpush1.msra.mxu0 0.0
        %4165 = vmatprep.subr.mxu0 0.0
        %4166 = vmatpush1.msra.mxu0 0.0
        %4167 = vmatprep.subr.mxu0 0.0
        %4168 = vmatpush1.msra.mxu0 0.0
        %4169 = vmatprep.subr.mxu0 0.0
        %4170 = vmatpush1.msra.mxu0 0.0
        %4171 = vmatprep.subr.mxu0 0.0
        %4172 = vmatpush1.msra.mxu0 0.0
        %4173 = vmatprep.subr.mxu0 0.0
        %4174 = vmatpush1.msra.mxu0 0.0
        %4175 = vmatprep.subr.mxu0 0.0
        %4176 = vmatpush1.msra.mxu0 0.0
        %4177 = vmatprep.subr.mxu0 0.0
        %4178 = vmatpush1.msra.mxu0 0.0
        %4179 = vmatprep.subr.mxu0 0.0
        %4180 = vmatpush1.msra.mxu0 0.0
        %4181 = vmatprep.subr.mxu0 0.0
        %4182 = vmatpush1.msra.mxu0 0.0
        %4183 = vmatprep.subr.mxu0 0.0
        %4184 = vmatpush1.msra.mxu0 0.0
        %4185 = vmatprep.subr.mxu0 0.0
        %4186 = vmatpush1.msra.mxu0 0.0
        %4187 = vmatprep.subr.mxu0 0.0
        %4188 = vmatpush1.msra.mxu0 0.0
        %4189 = vmatprep.subr.mxu0 0.0
        %4190 = vmatpush1.msra.mxu0 0.0
        %4191 = vmatprep.subr.mxu0 0.0
        %4192 = vmatpush1.msra.mxu0 0.0
        %4193 = vmatprep.subr.mxu0 0.0
        %4194 = vmatpush1.msra.mxu0 0.0
        %4195 = vmatprep.subr.mxu0 0.0
        %4196 = vmatpush1.msra.mxu0 0.0
        %4197 = vmatprep.mubr.f32.mxu0 0.0
        %4198 = vmatmul.mubr.f32.gmra.mrb[0].mxu0 %v4129
        %v4199 = vpop.f32.mrb[0].mxu0
        %v4200 = vadd.f32 0.0, %v4199
        %v4201 = vpop.f32.mrb[0].mxu0
        %4202 = vmatprep.mubr.f32.mxu0 0.0
        %4203 = vmatmul.mubr.f32.gmra.mrb[0].mxu0 %v4131
        %v4204 = vpop.f32.mrb[0].mxu0
        %v4205 = vadd.f32 0.0, %v4204
        %v4206 = vpop.f32.mrb[0].mxu0
        %4207 = vdwg.mxu0
        %v4208 = vsel %vm348, %v592, 0
        %v4210 = vsel %vm348, %v597, 0
        %4212 = vmatprep.subr.mxu0 0.0
        %4213 = vmatpush1.msra.mxu0 %v3208
        %4214 = vmatprep.subr.mxu0 0.0
        %4215 = vmatpush1.msra.mxu0 %v3209
        %4216 = vmatprep.subr.mxu0 0.0
        %4217 = vmatpush1.msra.mxu0 %v3210
        %4218 = vmatprep.subr.mxu0 0.0
        %4219 = vmatpush1.msra.mxu0 %v3211
        %4220 = vmatprep.subr.mxu0 0.0
        %4221 = vmatpush1.msra.mxu0 0.0
        %4222 = vmatprep.subr.mxu0 0.0
        %4223 = vmatpush1.msra.mxu0 0.0
        %4224 = vmatprep.subr.mxu0 0.0
        %4225 = vmatpush1.msra.mxu0 0.0
        %4226 = vmatprep.subr.mxu0 0.0
        %4227 = vmatpush1.msra.mxu0 0.0
        %4228 = vmatprep.subr.mxu0 0.0
        %4229 = vmatpush1.msra.mxu0 0.0
        %4230 = vmatprep.subr.mxu0 0.0
        %4231 = vmatpush1.msra.mxu0 0.0
        %4232 = vmatprep.subr.mxu0 0.0
        %4233 = vmatpush1.msra.mxu0 0.0
        %4234 = vmatprep.subr.mxu0 0.0
        %4235 = vmatpush1.msra.mxu0 0.0
        %4236 = vmatprep.subr.mxu0 0.0
        %4237 = vmatpush1.msra.mxu0 0.0
        %4238 = vmatprep.subr.mxu0 0.0
        %4239 = vmatpush1.msra.mxu0 0.0
        %4240 = vmatprep.subr.mxu0 0.0
        %4241 = vmatpush1.msra.mxu0 0.0
        %4242 = vmatprep.subr.mxu0 0.0
        %4243 = vmatpush1.msra.mxu0 0.0
        %4244 = vmatprep.subr.mxu0 0.0
        %4245 = vmatpush1.msra.mxu0 0.0
        %4246 = vmatprep.subr.mxu0 0.0
        %4247 = vmatpush1.msra.mxu0 0.0
        %4248 = vmatprep.subr.mxu0 0.0
        %4249 = vmatpush1.msra.mxu0 0.0
        %4250 = vmatprep.subr.mxu0 0.0
        %4251 = vmatpush1.msra.mxu0 0.0
        %4252 = vmatprep.subr.mxu0 0.0
        %4253 = vmatpush1.msra.mxu0 0.0
        %4254 = vmatprep.subr.mxu0 0.0
        %4255 = vmatpush1.msra.mxu0 0.0
        %4256 = vmatprep.subr.mxu0 0.0
        %4257 = vmatpush1.msra.mxu0 0.0
        %4258 = vmatprep.subr.mxu0 0.0
        %4259 = vmatpush1.msra.mxu0 0.0
        %4260 = vmatprep.subr.mxu0 0.0
        %4261 = vmatpush1.msra.mxu0 0.0
        %4262 = vmatprep.subr.mxu0 0.0
        %4263 = vmatpush1.msra.mxu0 0.0
        %4264 = vmatprep.subr.mxu0 0.0
        %4265 = vmatpush1.msra.mxu0 0.0
        %4266 = vmatprep.subr.mxu0 0.0
        %4267 = vmatpush1.msra.mxu0 0.0
        %4268 = vmatprep.subr.mxu0 0.0
        %4269 = vmatpush1.msra.mxu0 0.0
        %4270 = vmatprep.subr.mxu0 0.0
        %4271 = vmatpush1.msra.mxu0 0.0
        %4272 = vmatprep.subr.mxu0 0.0
        %4273 = vmatpush1.msra.mxu0 0.0
        %4274 = vmatprep.subr.mxu0 0.0
        %4275 = vmatpush1.msra.mxu0 0.0
        %4276 = vmatprep.mubr.f32.mxu0 0.0
        %4277 = vmatmul.mubr.f32.gmra.mrb[0].mxu0 %v4208
        %v4278 = vpop.f32.mrb[0].mxu0
        %v4279 = vadd.f32 0.0, %v4278
        %v4280 = vpop.f32.mrb[0].mxu0
        %4281 = vmatprep.mubr.f32.mxu0 0.0
        %4282 = vmatmul.mubr.f32.gmra.mrb[0].mxu0 %v4210
        %v4283 = vpop.f32.mrb[0].mxu0
        %v4284 = vadd.f32 0.0, %v4283
        %v4285 = vpop.f32.mrb[0].mxu0
        %4286 = vdwg.mxu0
        %v4287 = vsel %vm348, %v602, 0
        %v4289 = vsel %vm348, %v607, 0
        %4291 = vmatprep.subr.mxu0 0.0
        %4292 = vmatpush1.msra.mxu0 %v3212
        %4293 = vmatprep.subr.mxu0 0.0
        %4294 = vmatpush1.msra.mxu0 %v3213
        %4295 = vmatprep.subr.mxu0 0.0
        %4296 = vmatpush1.msra.mxu0 %v3214
        %4297 = vmatprep.subr.mxu0 0.0
        %4298 = vmatpush1.msra.mxu0 %v3215
        %4299 = vmatprep.subr.mxu0 0.0
        %4300 = vmatpush1.msra.mxu0 0.0
        %4301 = vmatprep.subr.mxu0 0.0
        %4302 = vmatpush1.msra.mxu0 0.0
        %4303 = vmatprep.subr.mxu0 0.0
        %4304 = vmatpush1.msra.mxu0 0.0
        %4305 = vmatprep.subr.mxu0 0.0
        %4306 = vmatpush1.msra.mxu0 0.0
        %4307 = vmatprep.subr.mxu0 0.0
        %4308 = vmatpush1.msra.mxu0 0.0
        %4309 = vmatprep.subr.mxu0 0.0
        %4310 = vmatpush1.msra.mxu0 0.0
        %4311 = vmatprep.subr.mxu0 0.0
        %4312 = vmatpush1.msra.mxu0 0.0
        %4313 = vmatprep.subr.mxu0 0.0
        %4314 = vmatpush1.msra.mxu0 0.0
        %4315 = vmatprep.subr.mxu0 0.0
        %4316 = vmatpush1.msra.mxu0 0.0
        %4317 = vmatprep.subr.mxu0 0.0
        %4318 = vmatpush1.msra.mxu0 0.0
        %4319 = vmatprep.subr.mxu0 0.0
        %4320 = vmatpush1.msra.mxu0 0.0
        %4321 = vmatprep.subr.mxu0 0.0
        %4322 = vmatpush1.msra.mxu0 0.0
        %4323 = vmatprep.subr.mxu0 0.0
        %4324 = vmatpush1.msra.mxu0 0.0
        %4325 = vmatprep.subr.mxu0 0.0
        %4326 = vmatpush1.msra.mxu0 0.0
        %4327 = vmatprep.subr.mxu0 0.0
        %4328 = vmatpush1.msra.mxu0 0.0
        %4329 = vmatprep.subr.mxu0 0.0
        %4330 = vmatpush1.msra.mxu0 0.0
        %4331 = vmatprep.subr.mxu0 0.0
        %4332 = vmatpush1.msra.mxu0 0.0
        %4333 = vmatprep.subr.mxu0 0.0
        %4334 = vmatpush1.msra.mxu0 0.0
        %4335 = vmatprep.subr.mxu0 0.0
        %4336 = vmatpush1.msra.mxu0 0.0
        %4337 = vmatprep.subr.mxu0 0.0
        %4338 = vmatpush1.msra.mxu0 0.0
        %4339 = vmatprep.subr.mxu0 0.0
        %4340 = vmatpush1.msra.mxu0 0.0
        %4341 = vmatprep.subr.mxu0 0.0
        %4342 = vmatpush1.msra.mxu0 0.0
        %4343 = vmatprep.subr.mxu0 0.0
        %4344 = vmatpush1.msra.mxu0 0.0
        %4345 = vmatprep.subr.mxu0 0.0
        %4346 = vmatpush1.msra.mxu0 0.0
        %4347 = vmatprep.subr.mxu0 0.0
        %4348 = vmatpush1.msra.mxu0 0.0
        %4349 = vmatprep.subr.mxu0 0.0
        %4350 = vmatpush1.msra.mxu0 0.0
        %4351 = vmatprep.subr.mxu0 0.0
        %4352 = vmatpush1.msra.mxu0 0.0
        %4353 = vmatprep.subr.mxu0 0.0
        %4354 = vmatpush1.msra.mxu0 0.0
        %4355 = vmatprep.mubr.f32.mxu0 0.0
        %4356 = vmatmul.mubr.f32.gmra.mrb[0].mxu0 %v4287
        %v4357 = vpop.f32.mrb[0].mxu0
        %v4358 = vadd.f32 0.0, %v4357
        %v4359 = vpop.f32.mrb[0].mxu0
        %4360 = vmatprep.mubr.f32.mxu0 0.0
        %4361 = vmatmul.mubr.f32.gmra.mrb[0].mxu0 %v4289
        %v4362 = vpop.f32.mrb[0].mxu0
        %v4363 = vadd.f32 0.0, %v4362
        %v4364 = vpop.f32.mrb[0].mxu0
        %4365 = vdwg.mxu0
        %v4366 = vsel %vm348, %v612, 0
        %v4368 = vsel %vm348, %v617, 0
        %4370 = vmatprep.subr.mxu0 0.0
        %4371 = vmatpush1.msra.mxu0 %v3216
        %4372 = vmatprep.subr.mxu0 0.0
        %4373 = vmatpush1.msra.mxu0 %v3217
        %4374 = vmatprep.subr.mxu0 0.0
        %4375 = vmatpush1.msra.mxu0 %v3218
        %4376 = vmatprep.subr.mxu0 0.0
        %4377 = vmatpush1.msra.mxu0 %v3219
        %4378 = vmatprep.subr.mxu0 0.0
        %4379 = vmatpush1.msra.mxu0 0.0
        %4380 = vmatprep.subr.mxu0 0.0
        %4381 = vmatpush1.msra.mxu0 0.0
        %4382 = vmatprep.subr.mxu0 0.0
        %4383 = vmatpush1.msra.mxu0 0.0
        %4384 = vmatprep.subr.mxu0 0.0
        %4385 = vmatpush1.msra.mxu0 0.0
        %4386 = vmatprep.subr.mxu0 0.0
        %4387 = vmatpush1.msra.mxu0 0.0
        %4388 = vmatprep.subr.mxu0 0.0
        %4389 = vmatpush1.msra.mxu0 0.0
        %4390 = vmatprep.subr.mxu0 0.0
        %4391 = vmatpush1.msra.mxu0 0.0
        %4392 = vmatprep.subr.mxu0 0.0
        %4393 = vmatpush1.msra.mxu0 0.0
        %4394 = vmatprep.subr.mxu0 0.0
        %4395 = vmatpush1.msra.mxu0 0.0
        %4396 = vmatprep.subr.mxu0 0.0
        %4397 = vmatpush1.msra.mxu0 0.0
        %4398 = vmatprep.subr.mxu0 0.0
        %4399 = vmatpush1.msra.mxu0 0.0
        %4400 = vmatprep.subr.mxu0 0.0
        %4401 = vmatpush1.msra.mxu0 0.0
        %4402 = vmatprep.subr.mxu0 0.0
        %4403 = vmatpush1.msra.mxu0 0.0
        %4404 = vmatprep.subr.mxu0 0.0
        %4405 = vmatpush1.msra.mxu0 0.0
        %4406 = vmatprep.subr.mxu0 0.0
        %4407 = vmatpush1.msra.mxu0 0.0
        %4408 = vmatprep.subr.mxu0 0.0
        %4409 = vmatpush1.msra.mxu0 0.0
        %4410 = vmatprep.subr.mxu0 0.0
        %4411 = vmatpush1.msra.mxu0 0.0
        %4412 = vmatprep.subr.mxu0 0.0
        %4413 = vmatpush1.msra.mxu0 0.0
        %4414 = vmatprep.subr.mxu0 0.0
        %4415 = vmatpush1.msra.mxu0 0.0
        %4416 = vmatprep.subr.mxu0 0.0
        %4417 = vmatpush1.msra.mxu0 0.0
        %4418 = vmatprep.subr.mxu0 0.0
        %4419 = vmatpush1.msra.mxu0 0.0
        %4420 = vmatprep.subr.mxu0 0.0
        %4421 = vmatpush1.msra.mxu0 0.0
        %4422 = vmatprep.subr.mxu0 0.0
        %4423 = vmatpush1.msra.mxu0 0.0
        %4424 = vmatprep.subr.mxu0 0.0
        %4425 = vmatpush1.msra.mxu0 0.0
        %4426 = vmatprep.subr.mxu0 0.0
        %4427 = vmatpush1.msra.mxu0 0.0
        %4428 = vmatprep.subr.mxu0 0.0
        %4429 = vmatpush1.msra.mxu0 0.0
        %4430 = vmatprep.subr.mxu0 0.0
        %4431 = vmatpush1.msra.mxu0 0.0
        %4432 = vmatprep.subr.mxu0 0.0
        %4433 = vmatpush1.msra.mxu0 0.0
        %4434 = vmatprep.mubr.f32.mxu0 0.0
        %4435 = vmatmul.mubr.f32.gmra.mrb[0].mxu0 %v4366
        %v4436 = vpop.f32.mrb[0].mxu0
        %v4437 = vadd.f32 0.0, %v4436
        %v4438 = vpop.f32.mrb[0].mxu0
        %4439 = vmatprep.mubr.f32.mxu0 0.0
        %4440 = vmatmul.mubr.f32.gmra.mrb[0].mxu0 %v4368
        %v4441 = vpop.f32.mrb[0].mxu0
        %v4442 = vadd.f32 0.0, %v4441
        %v4443 = vpop.f32.mrb[0].mxu0
        %4444 = vdwg.mxu0
        %v4445 = vsel %vm348, %v622, 0
        %v4447 = vsel %vm348, %v627, 0
        %4449 = vmatprep.subr.mxu0 0.0
        %4450 = vmatpush1.msra.mxu0 %v3220
        %4451 = vmatprep.subr.mxu0 0.0
        %4452 = vmatpush1.msra.mxu0 %v3221
        %4453 = vmatprep.subr.mxu0 0.0
        %4454 = vmatpush1.msra.mxu0 %v3222
        %4455 = vmatprep.subr.mxu0 0.0
        %4456 = vmatpush1.msra.mxu0 %v3223
        %4457 = vmatprep.subr.mxu0 0.0
        %4458 = vmatpush1.msra.mxu0 0.0
        %4459 = vmatprep.subr.mxu0 0.0
        %4460 = vmatpush1.msra.mxu0 0.0
        %4461 = vmatprep.subr.mxu0 0.0
        %4462 = vmatpush1.msra.mxu0 0.0
        %4463 = vmatprep.subr.mxu0 0.0
        %4464 = vmatpush1.msra.mxu0 0.0
        %4465 = vmatprep.subr.mxu0 0.0
        %4466 = vmatpush1.msra.mxu0 0.0
        %4467 = vmatprep.subr.mxu0 0.0
        %4468 = vmatpush1.msra.mxu0 0.0
        %4469 = vmatprep.subr.mxu0 0.0
        %4470 = vmatpush1.msra.mxu0 0.0
        %4471 = vmatprep.subr.mxu0 0.0
        %4472 = vmatpush1.msra.mxu0 0.0
        %4473 = vmatprep.subr.mxu0 0.0
        %4474 = vmatpush1.msra.mxu0 0.0
        %4475 = vmatprep.subr.mxu0 0.0
        %4476 = vmatpush1.msra.mxu0 0.0
        %4477 = vmatprep.subr.mxu0 0.0
        %4478 = vmatpush1.msra.mxu0 0.0
        %4479 = vmatprep.subr.mxu0 0.0
        %4480 = vmatpush1.msra.mxu0 0.0
        %4481 = vmatprep.subr.mxu0 0.0
        %4482 = vmatpush1.msra.mxu0 0.0
        %4483 = vmatprep.subr.mxu0 0.0
        %4484 = vmatpush1.msra.mxu0 0.0
        %4485 = vmatprep.subr.mxu0 0.0
        %4486 = vmatpush1.msra.mxu0 0.0
        %4487 = vmatprep.subr.mxu0 0.0
        %4488 = vmatpush1.msra.mxu0 0.0
        %4489 = vmatprep.subr.mxu0 0.0
        %4490 = vmatpush1.msra.mxu0 0.0
        %4491 = vmatprep.subr.mxu0 0.0
        %4492 = vmatpush1.msra.mxu0 0.0
        %4493 = vmatprep.subr.mxu0 0.0
        %4494 = vmatpush1.msra.mxu0 0.0
        %4495 = vmatprep.subr.mxu0 0.0
        %4496 = vmatpush1.msra.mxu0 0.0
        %4497 = vmatprep.subr.mxu0 0.0
        %4498 = vmatpush1.msra.mxu0 0.0
        %4499 = vmatprep.subr.mxu0 0.0
        %4500 = vmatpush1.msra.mxu0 0.0
        %4501 = vmatprep.subr.mxu0 0.0
        %4502 = vmatpush1.msra.mxu0 0.0
        %4503 = vmatprep.subr.mxu0 0.0
        %4504 = vmatpush1.msra.mxu0 0.0
        %4505 = vmatprep.subr.mxu0 0.0
        %4506 = vmatpush1.msra.mxu0 0.0
        %4507 = vmatprep.subr.mxu0 0.0
        %4508 = vmatpush1.msra.mxu0 0.0
        %4509 = vmatprep.subr.mxu0 0.0
        %4510 = vmatpush1.msra.mxu0 0.0
        %4511 = vmatprep.subr.mxu0 0.0
        %4512 = vmatpush1.msra.mxu0 0.0
        %4513 = vmatprep.mubr.f32.mxu0 0.0
        %4514 = vmatmul.mubr.f32.gmra.mrb[0].mxu0 %v4445
        %v4515 = vpop.f32.mrb[0].mxu0
        %v4516 = vadd.f32 0.0, %v4515
        %v4517 = vpop.f32.mrb[0].mxu0
        %4518 = vmatprep.mubr.f32.mxu0 0.0
        %4519 = vmatmul.mubr.f32.gmra.mrb[0].mxu0 %v4447
        %v4520 = vpop.f32.mrb[0].mxu0
        %v4521 = vadd.f32 0.0, %v4520
        %v4522 = vpop.f32.mrb[0].mxu0
        %4523 = vdwg.mxu0
        %v4524 = vsel %vm348, %v632, 0
        %v4526 = vsel %vm348, %v637, 0
        %4528 = vmatprep.subr.mxu0 0.0
        %4529 = vmatpush1.msra.mxu0 %v3224
        %4530 = vmatprep.subr.mxu0 0.0
        %4531 = vmatpush1.msra.mxu0 %v3225
        %4532 = vmatprep.subr.mxu0 0.0
        %4533 = vmatpush1.msra.mxu0 %v3226
        %4534 = vmatprep.subr.mxu0 0.0
        %4535 = vmatpush1.msra.mxu0 %v3227
        %4536 = vmatprep.subr.mxu0 0.0
        %4537 = vmatpush1.msra.mxu0 0.0
        %4538 = vmatprep.subr.mxu0 0.0
        %4539 = vmatpush1.msra.mxu0 0.0
        %4540 = vmatprep.subr.mxu0 0.0
        %4541 = vmatpush1.msra.mxu0 0.0
        %4542 = vmatprep.subr.mxu0 0.0
        %4543 = vmatpush1.msra.mxu0 0.0
        %4544 = vmatprep.subr.mxu0 0.0
        %4545 = vmatpush1.msra.mxu0 0.0
        %4546 = vmatprep.subr.mxu0 0.0
        %4547 = vmatpush1.msra.mxu0 0.0
        %4548 = vmatprep.subr.mxu0 0.0
        %4549 = vmatpush1.msra.mxu0 0.0
        %4550 = vmatprep.subr.mxu0 0.0
        %4551 = vmatpush1.msra.mxu0 0.0
        %4552 = vmatprep.subr.mxu0 0.0
        %4553 = vmatpush1.msra.mxu0 0.0
        %4554 = vmatprep.subr.mxu0 0.0
        %4555 = vmatpush1.msra.mxu0 0.0
        %4556 = vmatprep.subr.mxu0 0.0
        %4557 = vmatpush1.msra.mxu0 0.0
        %4558 = vmatprep.subr.mxu0 0.0
        %4559 = vmatpush1.msra.mxu0 0.0
        %4560 = vmatprep.subr.mxu0 0.0
        %4561 = vmatpush1.msra.mxu0 0.0
        %4562 = vmatprep.subr.mxu0 0.0
        %4563 = vmatpush1.msra.mxu0 0.0
        %4564 = vmatprep.subr.mxu0 0.0
        %4565 = vmatpush1.msra.mxu0 0.0
        %4566 = vmatprep.subr.mxu0 0.0
        %4567 = vmatpush1.msra.mxu0 0.0
        %4568 = vmatprep.subr.mxu0 0.0
        %4569 = vmatpush1.msra.mxu0 0.0
        %4570 = vmatprep.subr.mxu0 0.0
        %4571 = vmatpush1.msra.mxu0 0.0
        %4572 = vmatprep.subr.mxu0 0.0
        %4573 = vmatpush1.msra.mxu0 0.0
        %4574 = vmatprep.subr.mxu0 0.0
        %4575 = vmatpush1.msra.mxu0 0.0
        %4576 = vmatprep.subr.mxu0 0.0
        %4577 = vmatpush1.msra.mxu0 0.0
        %4578 = vmatprep.subr.mxu0 0.0
        %4579 = vmatpush1.msra.mxu0 0.0
        %4580 = vmatprep.subr.mxu0 0.0
        %4581 = vmatpush1.msra.mxu0 0.0
        %4582 = vmatprep.subr.mxu0 0.0
        %4583 = vmatpush1.msra.mxu0 0.0
        %4584 = vmatprep.subr.mxu0 0.0
        %4585 = vmatpush1.msra.mxu0 0.0
        %4586 = vmatprep.subr.mxu0 0.0
        %4587 = vmatpush1.msra.mxu0 0.0
        %4588 = vmatprep.subr.mxu0 0.0
        %4589 = vmatpush1.msra.mxu0 0.0
        %4590 = vmatprep.subr.mxu0 0.0
        %4591 = vmatpush1.msra.mxu0 0.0
        %4592 = vmatprep.mubr.f32.mxu0 0.0
        %4593 = vmatmul.mubr.f32.gmra.mrb[0].mxu0 %v4524
        %v4594 = vpop.f32.mrb[0].mxu0
        %v4595 = vadd.f32 0.0, %v4594
        %v4596 = vpop.f32.mrb[0].mxu0
        %4597 = vmatprep.mubr.f32.mxu0 0.0
        %4598 = vmatmul.mubr.f32.gmra.mrb[0].mxu0 %v4526
        %v4599 = vpop.f32.mrb[0].mxu0
        %v4600 = vadd.f32 0.0, %v4599
        %v4601 = vpop.f32.mrb[0].mxu0
        %4602 = vdwg.mxu0
        %v4603 = vsel %vm348, %v642, 0
        %v4605 = vsel %vm348, %v647, 0
        %4607 = vmatprep.subr.mxu0 0.0
        %4608 = vmatpush1.msra.mxu0 %v3228
        %4609 = vmatprep.subr.mxu0 0.0
        %4610 = vmatpush1.msra.mxu0 %v3229
        %4611 = vmatprep.subr.mxu0 0.0
        %4612 = vmatpush1.msra.mxu0 %v3230
        %4613 = vmatprep.subr.mxu0 0.0
        %4614 = vmatpush1.msra.mxu0 %v3231
        %4615 = vmatprep.subr.mxu0 0.0
        %4616 = vmatpush1.msra.mxu0 0.0
        %4617 = vmatprep.subr.mxu0 0.0
        %4618 = vmatpush1.msra.mxu0 0.0
        %4619 = vmatprep.subr.mxu0 0.0
        %4620 = vmatpush1.msra.mxu0 0.0
        %4621 = vmatprep.subr.mxu0 0.0
        %4622 = vmatpush1.msra.mxu0 0.0
        %4623 = vmatprep.subr.mxu0 0.0
        %4624 = vmatpush1.msra.mxu0 0.0
        %4625 = vmatprep.subr.mxu0 0.0
        %4626 = vmatpush1.msra.mxu0 0.0
        %4627 = vmatprep.subr.mxu0 0.0
        %4628 = vmatpush1.msra.mxu0 0.0
        %4629 = vmatprep.subr.mxu0 0.0
        %4630 = vmatpush1.msra.mxu0 0.0
        %4631 = vmatprep.subr.mxu0 0.0
        %4632 = vmatpush1.msra.mxu0 0.0
        %4633 = vmatprep.subr.mxu0 0.0
        %4634 = vmatpush1.msra.mxu0 0.0
        %4635 = vmatprep.subr.mxu0 0.0
        %4636 = vmatpush1.msra.mxu0 0.0
        %4637 = vmatprep.subr.mxu0 0.0
        %4638 = vmatpush1.msra.mxu0 0.0
        %4639 = vmatprep.subr.mxu0 0.0
        %4640 = vmatpush1.msra.mxu0 0.0
        %4641 = vmatprep.subr.mxu0 0.0
        %4642 = vmatpush1.msra.mxu0 0.0
        %4643 = vmatprep.subr.mxu0 0.0
        %4644 = vmatpush1.msra.mxu0 0.0
        %4645 = vmatprep.subr.mxu0 0.0
        %4646 = vmatpush1.msra.mxu0 0.0
        %4647 = vmatprep.subr.mxu0 0.0
        %4648 = vmatpush1.msra.mxu0 0.0
        %4649 = vmatprep.subr.mxu0 0.0
        %4650 = vmatpush1.msra.mxu0 0.0
        %4651 = vmatprep.subr.mxu0 0.0
        %4652 = vmatpush1.msra.mxu0 0.0
        %4653 = vmatprep.subr.mxu0 0.0
        %4654 = vmatpush1.msra.mxu0 0.0
        %4655 = vmatprep.subr.mxu0 0.0
        %4656 = vmatpush1.msra.mxu0 0.0
        %4657 = vmatprep.subr.mxu0 0.0
        %4658 = vmatpush1.msra.mxu0 0.0
        %4659 = vmatprep.subr.mxu0 0.0
        %4660 = vmatpush1.msra.mxu0 0.0
        %4661 = vmatprep.subr.mxu0 0.0
        %4662 = vmatpush1.msra.mxu0 0.0
        %4663 = vmatprep.subr.mxu0 0.0
        %4664 = vmatpush1.msra.mxu0 0.0
        %4665 = vmatprep.subr.mxu0 0.0
        %4666 = vmatpush1.msra.mxu0 0.0
        %4667 = vmatprep.subr.mxu0 0.0
        %4668 = vmatpush1.msra.mxu0 0.0
        %4669 = vmatprep.subr.mxu0 0.0
        %4670 = vmatpush1.msra.mxu0 0.0
        %4671 = vmatprep.mubr.f32.mxu0 0.0
        %4672 = vmatmul.mubr.f32.gmra.mrb[0].mxu0 %v4603
        %v4673 = vpop.f32.mrb[0].mxu0
        %v4674 = vadd.f32 0.0, %v4673
        %v4675 = vpop.f32.mrb[0].mxu0
        %4676 = vmatprep.mubr.f32.mxu0 0.0
        %4677 = vmatmul.mubr.f32.gmra.mrb[0].mxu0 %v4605
        %v4678 = vpop.f32.mrb[0].mxu0
        %v4679 = vadd.f32 0.0, %v4678
        %v4680 = vpop.f32.mrb[0].mxu0
        %4681 = vdwg.mxu0
        %v4682 = vsel %vm348, %v652, 0
        %v4684 = vsel %vm348, %v657, 0
        %4686 = vmatprep.subr.mxu0 0.0
        %4687 = vmatpush1.msra.mxu0 %v3232
        %4688 = vmatprep.subr.mxu0 0.0
        %4689 = vmatpush1.msra.mxu0 %v3233
        %4690 = vmatprep.subr.mxu0 0.0
        %4691 = vmatpush1.msra.mxu0 %v3234
        %4692 = vmatprep.subr.mxu0 0.0
        %4693 = vmatpush1.msra.mxu0 %v3235
        %4694 = vmatprep.subr.mxu0 0.0
        %4695 = vmatpush1.msra.mxu0 0.0
        %4696 = vmatprep.subr.mxu0 0.0
        %4697 = vmatpush1.msra.mxu0 0.0
        %4698 = vmatprep.subr.mxu0 0.0
        %4699 = vmatpush1.msra.mxu0 0.0
        %4700 = vmatprep.subr.mxu0 0.0
        %4701 = vmatpush1.msra.mxu0 0.0
        %4702 = vmatprep.subr.mxu0 0.0
        %4703 = vmatpush1.msra.mxu0 0.0
        %4704 = vmatprep.subr.mxu0 0.0
        %4705 = vmatpush1.msra.mxu0 0.0
        %4706 = vmatprep.subr.mxu0 0.0
        %4707 = vmatpush1.msra.mxu0 0.0
        %4708 = vmatprep.subr.mxu0 0.0
        %4709 = vmatpush1.msra.mxu0 0.0
        %4710 = vmatprep.subr.mxu0 0.0
        %4711 = vmatpush1.msra.mxu0 0.0
        %4712 = vmatprep.subr.mxu0 0.0
        %4713 = vmatpush1.msra.mxu0 0.0
        %4714 = vmatprep.subr.mxu0 0.0
        %4715 = vmatpush1.msra.mxu0 0.0
        %4716 = vmatprep.subr.mxu0 0.0
        %4717 = vmatpush1.msra.mxu0 0.0
        %4718 = vmatprep.subr.mxu0 0.0
        %4719 = vmatpush1.msra.mxu0 0.0
        %4720 = vmatprep.subr.mxu0 0.0
        %4721 = vmatpush1.msra.mxu0 0.0
        %4722 = vmatprep.subr.mxu0 0.0
        %4723 = vmatpush1.msra.mxu0 0.0
        %4724 = vmatprep.subr.mxu0 0.0
        %4725 = vmatpush1.msra.mxu0 0.0
        %4726 = vmatprep.subr.mxu0 0.0
        %4727 = vmatpush1.msra.mxu0 0.0
        %4728 = vmatprep.subr.mxu0 0.0
        %4729 = vmatpush1.msra.mxu0 0.0
        %4730 = vmatprep.subr.mxu0 0.0
        %4731 = vmatpush1.msra.mxu0 0.0
        %4732 = vmatprep.subr.mxu0 0.0
        %4733 = vmatpush1.msra.mxu0 0.0
        %4734 = vmatprep.subr.mxu0 0.0
        %4735 = vmatpush1.msra.mxu0 0.0
        %4736 = vmatprep.subr.mxu0 0.0
        %4737 = vmatpush1.msra.mxu0 0.0
        %4738 = vmatprep.subr.mxu0 0.0
        %4739 = vmatpush1.msra.mxu0 0.0
        %4740 = vmatprep.subr.mxu0 0.0
        %4741 = vmatpush1.msra.mxu0 0.0
        %4742 = vmatprep.subr.mxu0 0.0
        %4743 = vmatpush1.msra.mxu0 0.0
        %4744 = vmatprep.subr.mxu0 0.0
        %4745 = vmatpush1.msra.mxu0 0.0
        %4746 = vmatprep.subr.mxu0 0.0
        %4747 = vmatpush1.msra.mxu0 0.0
        %4748 = vmatprep.subr.mxu0 0.0
        %4749 = vmatpush1.msra.mxu0 0.0
        %4750 = vmatprep.mubr.f32.mxu0 0.0
        %4751 = vmatmul.mubr.f32.gmra.mrb[0].mxu0 %v4682
        %v4752 = vpop.f32.mrb[0].mxu0
        %v4753 = vadd.f32 0.0, %v4752
        %v4754 = vpop.f32.mrb[0].mxu0
        %4755 = vmatprep.mubr.f32.mxu0 0.0
        %4756 = vmatmul.mubr.f32.gmra.mrb[0].mxu0 %v4684
        %v4757 = vpop.f32.mrb[0].mxu0
        %v4758 = vadd.f32 0.0, %v4757
        %v4759 = vpop.f32.mrb[0].mxu0
        %4760 = vdwg.mxu0
        %v4761 = vsel %vm348, %v662, 0
        %v4763 = vsel %vm348, %v667, 0
        %4765 = vmatprep.subr.mxu0 0.0
        %4766 = vmatpush1.msra.mxu0 %v3236
        %4767 = vmatprep.subr.mxu0 0.0
        %4768 = vmatpush1.msra.mxu0 %v3237
        %4769 = vmatprep.subr.mxu0 0.0
        %4770 = vmatpush1.msra.mxu0 %v3238
        %4771 = vmatprep.subr.mxu0 0.0
        %4772 = vmatpush1.msra.mxu0 %v3239
        %4773 = vmatprep.subr.mxu0 0.0
        %4774 = vmatpush1.msra.mxu0 0.0
        %4775 = vmatprep.subr.mxu0 0.0
        %4776 = vmatpush1.msra.mxu0 0.0
        %4777 = vmatprep.subr.mxu0 0.0
        %4778 = vmatpush1.msra.mxu0 0.0
        %4779 = vmatprep.subr.mxu0 0.0
        %4780 = vmatpush1.msra.mxu0 0.0
        %4781 = vmatprep.subr.mxu0 0.0
        %4782 = vmatpush1.msra.mxu0 0.0
        %4783 = vmatprep.subr.mxu0 0.0
        %4784 = vmatpush1.msra.mxu0 0.0
        %4785 = vmatprep.subr.mxu0 0.0
        %4786 = vmatpush1.msra.mxu0 0.0
        %4787 = vmatprep.subr.mxu0 0.0
        %4788 = vmatpush1.msra.mxu0 0.0
        %4789 = vmatprep.subr.mxu0 0.0
        %4790 = vmatpush1.msra.mxu0 0.0
        %4791 = vmatprep.subr.mxu0 0.0
        %4792 = vmatpush1.msra.mxu0 0.0
        %4793 = vmatprep.subr.mxu0 0.0
        %4794 = vmatpush1.msra.mxu0 0.0
        %4795 = vmatprep.subr.mxu0 0.0
        %4796 = vmatpush1.msra.mxu0 0.0
        %4797 = vmatprep.subr.mxu0 0.0
        %4798 = vmatpush1.msra.mxu0 0.0
        %4799 = vmatprep.subr.mxu0 0.0
        %4800 = vmatpush1.msra.mxu0 0.0
        %4801 = vmatprep.subr.mxu0 0.0
        %4802 = vmatpush1.msra.mxu0 0.0
        %4803 = vmatprep.subr.mxu0 0.0
        %4804 = vmatpush1.msra.mxu0 0.0
        %4805 = vmatprep.subr.mxu0 0.0
        %4806 = vmatpush1.msra.mxu0 0.0
        %4807 = vmatprep.subr.mxu0 0.0
        %4808 = vmatpush1.msra.mxu0 0.0
        %4809 = vmatprep.subr.mxu0 0.0
        %4810 = vmatpush1.msra.mxu0 0.0
        %4811 = vmatprep.subr.mxu0 0.0
        %4812 = vmatpush1.msra.mxu0 0.0
        %4813 = vmatprep.subr.mxu0 0.0
        %4814 = vmatpush1.msra.mxu0 0.0
        %4815 = vmatprep.subr.mxu0 0.0
        %4816 = vmatpush1.msra.mxu0 0.0
        %4817 = vmatprep.subr.mxu0 0.0
        %4818 = vmatpush1.msra.mxu0 0.0
        %4819 = vmatprep.subr.mxu0 0.0
        %4820 = vmatpush1.msra.mxu0 0.0
        %4821 = vmatprep.subr.mxu0 0.0
        %4822 = vmatpush1.msra.mxu0 0.0
        %4823 = vmatprep.subr.mxu0 0.0
        %4824 = vmatpush1.msra.mxu0 0.0
        %4825 = vmatprep.subr.mxu0 0.0
        %4826 = vmatpush1.msra.mxu0 0.0
        %4827 = vmatprep.subr.mxu0 0.0
        %4828 = vmatpush1.msra.mxu0 0.0
        %4829 = vmatprep.mubr.f32.mxu0 0.0
        %4830 = vmatmul.mubr.f32.gmra.mrb[0].mxu0 %v4761
        %v4831 = vpop.f32.mrb[0].mxu0
        %v4832 = vadd.f32 0.0, %v4831
        %v4833 = vpop.f32.mrb[0].mxu0
        %4834 = vmatprep.mubr.f32.mxu0 0.0
        %4835 = vmatmul.mubr.f32.gmra.mrb[0].mxu0 %v4763
        %v4836 = vpop.f32.mrb[0].mxu0
        %v4837 = vadd.f32 0.0, %v4836
        %v4838 = vpop.f32.mrb[0].mxu0
        %4839 = vdwg.mxu0
        %4840 = vmax.xlane.f32.xlu0 %v3647
        %v4841 = vpop.xlane.xlu0 %4840
        %4842 = vmax.xlane.f32.xlu0 %v3652
        %v4843 = vpop.xlane.xlu0 %4842
        %4844 = vmax.xlane.f32.xlu0 %v3726
        %v4845 = vpop.xlane.xlu0 %4844
        %4846 = vmax.xlane.f32.xlu0 %v3731
        %v4847 = vpop.xlane.xlu0 %4846
        %4848 = vmax.xlane.f32.xlu0 %v3805
        %v4849 = vpop.xlane.xlu0 %4848
        %4850 = vmax.xlane.f32.xlu0 %v3810
        %v4851 = vpop.xlane.xlu0 %4850
        %4852 = vmax.xlane.f32.xlu0 %v3884
        %v4853 = vpop.xlane.xlu0 %4852
        %4854 = vmax.xlane.f32.xlu0 %v3889
        %v4855 = vpop.xlane.xlu0 %4854
        %4856 = vmax.xlane.f32.xlu0 %v3963
        %v4857 = vpop.xlane.xlu0 %4856
        %4858 = vmax.xlane.f32.xlu0 %v3968
        %v4859 = vpop.xlane.xlu0 %4858
        %4860 = vmax.xlane.f32.xlu0 %v4042
        %v4861 = vpop.xlane.xlu0 %4860
        %4862 = vmax.xlane.f32.xlu0 %v4047
        %v4863 = vpop.xlane.xlu0 %4862
        %4864 = vmax.xlane.f32.xlu0 %v4121
        %v4865 = vpop.xlane.xlu0 %4864
        %4866 = vmax.xlane.f32.xlu0 %v4126
        %v4867 = vpop.xlane.xlu0 %4866
        %4868 = vmax.xlane.f32.xlu0 %v4200
        %v4869 = vpop.xlane.xlu0 %4868
        %4870 = vmax.xlane.f32.xlu0 %v4205
        %v4871 = vpop.xlane.xlu0 %4870
        %4872 = vmax.xlane.f32.xlu0 %v4279
        %v4873 = vpop.xlane.xlu0 %4872
        %4874 = vmax.xlane.f32.xlu0 %v4284
        %v4875 = vpop.xlane.xlu0 %4874
        %4876 = vmax.xlane.f32.xlu0 %v4358
        %v4877 = vpop.xlane.xlu0 %4876
        %4878 = vmax.xlane.f32.xlu0 %v4363
        %v4879 = vpop.xlane.xlu0 %4878
        %4880 = vmax.xlane.f32.xlu0 %v4437
        %v4881 = vpop.xlane.xlu0 %4880
        %4882 = vmax.xlane.f32.xlu0 %v4442
        %v4883 = vpop.xlane.xlu0 %4882
        %4884 = vmax.xlane.f32.xlu0 %v4516
        %v4885 = vpop.xlane.xlu0 %4884
        %4886 = vmax.xlane.f32.xlu0 %v4521
        %v4887 = vpop.xlane.xlu0 %4886
        %4888 = vmax.xlane.f32.xlu0 %v4595
        %v4889 = vpop.xlane.xlu0 %4888
        %4890 = vmax.xlane.f32.xlu0 %v4600
        %v4891 = vpop.xlane.xlu0 %4890
        %4892 = vmax.xlane.f32.xlu0 %v4674
        %v4893 = vpop.xlane.xlu0 %4892
        %4894 = vmax.xlane.f32.xlu0 %v4679
        %v4895 = vpop.xlane.xlu0 %4894
        %4896 = vmax.xlane.f32.xlu0 %v4753
        %v4897 = vpop.xlane.xlu0 %4896
        %4898 = vmax.xlane.f32.xlu0 %v4758
        %v4899 = vpop.xlane.xlu0 %4898
        %4900 = vmax.xlane.f32.xlu0 %v4832
        %v4901 = vpop.xlane.xlu0 %4900
        %4902 = vmax.xlane.f32.xlu0 %v4837
        %v4903 = vpop.xlane.xlu0 %4902
        %v4904 = vsub.f32 %v3647, %v4841
        %v4905 = vsub.f32 %v3652, %v4843
        %v4906 = vsub.f32 %v3726, %v4845
        %v4907 = vsub.f32 %v3731, %v4847
        %v4908 = vsub.f32 %v3805, %v4849
        %v4909 = vsub.f32 %v3810, %v4851
        %v4910 = vsub.f32 %v3884, %v4853
        %v4911 = vsub.f32 %v3889, %v4855
        %v4912 = vsub.f32 %v3963, %v4857
        %v4913 = vsub.f32 %v3968, %v4859
        %v4914 = vsub.f32 %v4042, %v4861
        %v4915 = vsub.f32 %v4047, %v4863
        %v4916 = vsub.f32 %v4121, %v4865
        %v4917 = vsub.f32 %v4126, %v4867
        %v4918 = vsub.f32 %v4200, %v4869
        %v4919 = vsub.f32 %v4205, %v4871
        %v4920 = vsub.f32 %v4279, %v4873
        %v4921 = vsub.f32 %v4284, %v4875
        %v4922 = vsub.f32 %v4358, %v4877
        %v4923 = vsub.f32 %v4363, %v4879
        %v4924 = vsub.f32 %v4437, %v4881
        %v4925 = vsub.f32 %v4442, %v4883
        %v4926 = vsub.f32 %v4516, %v4885
        %v4927 = vsub.f32 %v4521, %v4887
        %v4928 = vsub.f32 %v4595, %v4889
        %v4929 = vsub.f32 %v4600, %v4891
        %v4930 = vsub.f32 %v4674, %v4893
        %v4931 = vsub.f32 %v4679, %v4895
        %v4932 = vsub.f32 %v4753, %v4897
        %v4933 = vsub.f32 %v4758, %v4899
        %v4934 = vsub.f32 %v4832, %v4901
        %v4935 = vsub.f32 %v4837, %v4903
        %v4936 = vmul.f32 %v4904, 1.442695
        %v4937 = vpow.pop %v4936
        %v4938 = vmul.f32 %v4905, 1.442695
        %v4939 = vpow.pop %v4938
        %v4940 = vmul.f32 %v4906, 1.442695
        %v4941 = vpow.pop %v4940
        %v4942 = vmul.f32 %v4907, 1.442695
        %v4943 = vpow.pop %v4942
        %v4944 = vmul.f32 %v4908, 1.442695
        %v4945 = vpow.pop %v4944
        %v4946 = vmul.f32 %v4909, 1.442695
        %v4947 = vpow.pop %v4946
        %v4948 = vmul.f32 %v4910, 1.442695
        %v4949 = vpow.pop %v4948
        %v4950 = vmul.f32 %v4911, 1.442695
        %v4951 = vpow.pop %v4950
        %v4952 = vmul.f32 %v4912, 1.442695
        %v4953 = vpow.pop %v4952
        %v4954 = vmul.f32 %v4913, 1.442695
        %v4955 = vpow.pop %v4954
        %v4956 = vmul.f32 %v4914, 1.442695
        %v4957 = vpow.pop %v4956
        %v4958 = vmul.f32 %v4915, 1.442695
        %v4959 = vpow.pop %v4958
        %v4960 = vmul.f32 %v4916, 1.442695
        %v4961 = vpow.pop %v4960
        %v4962 = vmul.f32 %v4917, 1.442695
        %v4963 = vpow.pop %v4962
        %v4964 = vmul.f32 %v4918, 1.442695
        %v4965 = vpow.pop %v4964
        %v4966 = vmul.f32 %v4919, 1.442695
        %v4967 = vpow.pop %v4966
        %v4968 = vmul.f32 %v4920, 1.442695
        %v4969 = vpow.pop %v4968
        %v4970 = vmul.f32 %v4921, 1.442695
        %v4971 = vpow.pop %v4970
        %v4972 = vmul.f32 %v4922, 1.442695
        %v4973 = vpow.pop %v4972
        %v4974 = vmul.f32 %v4923, 1.442695
        %v4975 = vpow.pop %v4974
        %v4976 = vmul.f32 %v4924, 1.442695
        %v4977 = vpow.pop %v4976
        %v4978 = vmul.f32 %v4925, 1.442695
        %v4979 = vpow.pop %v4978
        %v4980 = vmul.f32 %v4926, 1.442695
        %v4981 = vpow.pop %v4980
        %v4982 = vmul.f32 %v4927, 1.442695
        %v4983 = vpow.pop %v4982
        %v4984 = vmul.f32 %v4928, 1.442695
        %v4985 = vpow.pop %v4984
        %v4986 = vmul.f32 %v4929, 1.442695
        %v4987 = vpow.pop %v4986
        %v4988 = vmul.f32 %v4930, 1.442695
        %v4989 = vpow.pop %v4988
        %v4990 = vmul.f32 %v4931, 1.442695
        %v4991 = vpow.pop %v4990
        %v4992 = vmul.f32 %v4932, 1.442695
        %v4993 = vpow.pop %v4992
        %v4994 = vmul.f32 %v4933, 1.442695
        %v4995 = vpow.pop %v4994
        %v4996 = vmul.f32 %v4934, 1.442695
        %v4997 = vpow.pop %v4996
        %v4998 = vmul.f32 %v4935, 1.442695
        %v4999 = vpow.pop %v4998
        %v5000 = vld [vmem:[%s4] sm:$0xff]
        %v5001 = vld [vmem:[%s4 + $0x8] sm:$0xff]
        %v5002 = vld [vmem:[%s4 + $0x10] sm:$0xff]
        %v5003 = vld [vmem:[%s4 + $0x18] sm:$0xff]
        %v5004 = vld [vmem:[%s4 + $0x20] sm:$0xff]
        %v5005 = vld [vmem:[%s4 + $0x28] sm:$0xff]
        %v5006 = vld [vmem:[%s4 + $0x30] sm:$0xff]
        %v5007 = vld [vmem:[%s4 + $0x38] sm:$0xff]
        %v5008 = vld [vmem:[%s4 + $0x40] sm:$0xff]
        %v5009 = vld [vmem:[%s4 + $0x48] sm:$0xff]
        %v5010 = vld [vmem:[%s4 + $0x50] sm:$0xff]
        %v5011 = vld [vmem:[%s4 + $0x58] sm:$0xff]
        %v5012 = vld [vmem:[%s4 + $0x60] sm:$0xff]
        %v5013 = vld [vmem:[%s4 + $0x68] sm:$0xff]
        %v5014 = vld [vmem:[%s4 + $0x70] sm:$0xff]
        %v5015 = vld [vmem:[%s4 + $0x78] sm:$0xff]
        %5016 = vmatprep.subr.mxu0 0.0
        %5017 = vmatpush1.msra.mxu0 %v5000
        %5018 = vmatprep.subr.mxu0 0.0
        %5019 = vmatpush1.msra.mxu0 %v5001
        %5020 = vmatprep.subr.mxu0 0.0
        %5021 = vmatpush1.msra.mxu0 %v5002
        %5022 = vmatprep.subr.mxu0 0.0
        %5023 = vmatpush1.msra.mxu0 %v5003
        %5024 = vmatprep.subr.mxu0 0.0
        %5025 = vmatpush1.msra.mxu0 %v5004
        %5026 = vmatprep.subr.mxu0 0.0
        %5027 = vmatpush1.msra.mxu0 %v5005
        %5028 = vmatprep.subr.mxu0 0.0
        %5029 = vmatpush1.msra.mxu0 %v5006
        %5030 = vmatprep.subr.mxu0 0.0
        %5031 = vmatpush1.msra.mxu0 %v5007
        %5032 = vmatprep.subr.mxu0 0.0
        %5033 = vmatpush1.msra.mxu0 %v5008
        %5034 = vmatprep.subr.mxu0 0.0
        %5035 = vmatpush1.msra.mxu0 %v5009
        %5036 = vmatprep.subr.mxu0 0.0
        %5037 = vmatpush1.msra.mxu0 %v5010
        %5038 = vmatprep.subr.mxu0 0.0
        %5039 = vmatpush1.msra.mxu0 %v5011
        %5040 = vmatprep.subr.mxu0 0.0
        %5041 = vmatpush1.msra.mxu0 %v5012
        %5042 = vmatprep.subr.mxu0 0.0
        %5043 = vmatpush1.msra.mxu0 %v5013
        %5044 = vmatprep.subr.mxu0 0.0
        %5045 = vmatpush1.msra.mxu0 %v5014
        %5046 = vmatprep.subr.mxu0 0.0
        %5047 = vmatpush1.msra.mxu0 %v5015
        %5048 = vmatprep.subr.mxu0 0.0
        %5049 = vmatpush1.msra.mxu0 0.0
        %5050 = vmatprep.subr.mxu0 0.0
        %5051 = vmatpush1.msra.mxu0 0.0
        %5052 = vmatprep.subr.mxu0 0.0
        %5053 = vmatpush1.msra.mxu0 0.0
        %5054 = vmatprep.subr.mxu0 0.0
        %5055 = vmatpush1.msra.mxu0 0.0
        %5056 = vmatprep.subr.mxu0 0.0
        %5057 = vmatpush1.msra.mxu0 0.0
        %5058 = vmatprep.subr.mxu0 0.0
        %5059 = vmatpush1.msra.mxu0 0.0
        %5060 = vmatprep.subr.mxu0 0.0
        %5061 = vmatpush1.msra.mxu0 0.0
        %5062 = vmatprep.subr.mxu0 0.0
        %5063 = vmatpush1.msra.mxu0 0.0
        %5064 = vmatprep.subr.mxu0 0.0
        %5065 = vmatpush1.msra.mxu0 0.0
        %5066 = vmatprep.subr.mxu0 0.0
        %5067 = vmatpush1.msra.mxu0 0.0
        %5068 = vmatprep.subr.mxu0 0.0
        %5069 = vmatpush1.msra.mxu0 0.0
        %5070 = vmatprep.subr.mxu0 0.0
        %5071 = vmatpush1.msra.mxu0 0.0
        %5072 = vmatprep.subr.mxu0 0.0
        %5073 = vmatpush1.msra.mxu0 0.0
        %5074 = vmatprep.subr.mxu0 0.0
        %5075 = vmatpush1.msra.mxu0 0.0
        %5076 = vmatprep.subr.mxu0 0.0
        %5077 = vmatpush1.msra.mxu0 0.0
        %5078 = vmatprep.subr.mxu0 0.0
        %5079 = vmatpush1.msra.mxu0 0.0
        %5080 = vmatprep.mubr.f32.mxu0 0.0
        %5081 = vmatmul.mubr.f32.gmra.mrb[0].mxu0 %v4937
        %v5082 = vpop.f32.mrb[0].mxu0
        %v5083 = vadd.f32 0.0, %v5082
        %v5084 = vpop.f32.mrb[0].mxu0
        %5085 = vmatprep.mubr.f32.mxu0 0.0
        %5086 = vmatmul.mubr.f32.gmra.mrb[0].mxu0 %v4939
        %v5087 = vpop.f32.mrb[0].mxu0
        %v5088 = vadd.f32 0.0, %v5087
        %v5089 = vpop.f32.mrb[0].mxu0
        %5090 = vmatprep.mubr.f32.mxu0 0.0
        %5091 = vmatmul.mubr.f32.gmra.mrb[0].mxu0 %v4941
        %v5092 = vpop.f32.mrb[0].mxu0
        %v5093 = vadd.f32 0.0, %v5092
        %v5094 = vpop.f32.mrb[0].mxu0
        %5095 = vmatprep.mubr.f32.mxu0 0.0
        %5096 = vmatmul.mubr.f32.gmra.mrb[0].mxu0 %v4943
        %v5097 = vpop.f32.mrb[0].mxu0
        %v5098 = vadd.f32 0.0, %v5097
        %v5099 = vpop.f32.mrb[0].mxu0
        %5100 = vmatprep.mubr.f32.mxu0 0.0
        %5101 = vmatmul.mubr.f32.gmra.mrb[0].mxu0 %v4945
        %v5102 = vpop.f32.mrb[0].mxu0
        %v5103 = vadd.f32 0.0, %v5102
        %v5104 = vpop.f32.mrb[0].mxu0
        %5105 = vmatprep.mubr.f32.mxu0 0.0
        %5106 = vmatmul.mubr.f32.gmra.mrb[0].mxu0 %v4947
        %v5107 = vpop.f32.mrb[0].mxu0
        %v5108 = vadd.f32 0.0, %v5107
        %v5109 = vpop.f32.mrb[0].mxu0
        %5110 = vmatprep.mubr.f32.mxu0 0.0
        %5111 = vmatmul.mubr.f32.gmra.mrb[0].mxu0 %v4949
        %v5112 = vpop.f32.mrb[0].mxu0
        %v5113 = vadd.f32 0.0, %v5112
        %v5114 = vpop.f32.mrb[0].mxu0
        %5115 = vmatprep.mubr.f32.mxu0 0.0
        %5116 = vmatmul.mubr.f32.gmra.mrb[0].mxu0 %v4951
        %v5117 = vpop.f32.mrb[0].mxu0
        %v5118 = vadd.f32 0.0, %v5117
        %v5119 = vpop.f32.mrb[0].mxu0
        %5120 = vmatprep.mubr.f32.mxu0 0.0
        %5121 = vmatmul.mubr.f32.gmra.mrb[0].mxu0 %v4953
        %v5122 = vpop.f32.mrb[0].mxu0
        %v5123 = vadd.f32 0.0, %v5122
        %v5124 = vpop.f32.mrb[0].mxu0
        %5125 = vmatprep.mubr.f32.mxu0 0.0
        %5126 = vmatmul.mubr.f32.gmra.mrb[0].mxu0 %v4955
        %v5127 = vpop.f32.mrb[0].mxu0
        %v5128 = vadd.f32 0.0, %v5127
        %v5129 = vpop.f32.mrb[0].mxu0
        %5130 = vmatprep.mubr.f32.mxu0 0.0
        %5131 = vmatmul.mubr.f32.gmra.mrb[0].mxu0 %v4957
        %v5132 = vpop.f32.mrb[0].mxu0
        %v5133 = vadd.f32 0.0, %v5132
        %v5134 = vpop.f32.mrb[0].mxu0
        %5135 = vmatprep.mubr.f32.mxu0 0.0
        %5136 = vmatmul.mubr.f32.gmra.mrb[0].mxu0 %v4959
        %v5137 = vpop.f32.mrb[0].mxu0
        %v5138 = vadd.f32 0.0, %v5137
        %v5139 = vpop.f32.mrb[0].mxu0
        %5140 = vmatprep.mubr.f32.mxu0 0.0
        %5141 = vmatmul.mubr.f32.gmra.mrb[0].mxu0 %v4961
        %v5142 = vpop.f32.mrb[0].mxu0
        %v5143 = vadd.f32 0.0, %v5142
        %v5144 = vpop.f32.mrb[0].mxu0
        %5145 = vmatprep.mubr.f32.mxu0 0.0
        %5146 = vmatmul.mubr.f32.gmra.mrb[0].mxu0 %v4963
        %v5147 = vpop.f32.mrb[0].mxu0
        %v5148 = vadd.f32 0.0, %v5147
        %v5149 = vpop.f32.mrb[0].mxu0
        %5150 = vmatprep.mubr.f32.mxu0 0.0
        %5151 = vmatmul.mubr.f32.gmra.mrb[0].mxu0 %v4965
        %v5152 = vpop.f32.mrb[0].mxu0
        %v5153 = vadd.f32 0.0, %v5152
        %v5154 = vpop.f32.mrb[0].mxu0
        %5155 = vmatprep.mubr.f32.mxu0 0.0
        %5156 = vmatmul.mubr.f32.gmra.mrb[0].mxu0 %v4967
        %v5157 = vpop.f32.mrb[0].mxu0
        %v5158 = vadd.f32 0.0, %v5157
        %v5159 = vpop.f32.mrb[0].mxu0
        %5160 = vmatprep.mubr.f32.mxu0 0.0
        %5161 = vmatmul.mubr.f32.gmra.mrb[0].mxu0 %v4969
        %v5162 = vpop.f32.mrb[0].mxu0
        %v5163 = vadd.f32 0.0, %v5162
        %v5164 = vpop.f32.mrb[0].mxu0
        %5165 = vmatprep.mubr.f32.mxu0 0.0
        %5166 = vmatmul.mubr.f32.gmra.mrb[0].mxu0 %v4971
        %v5167 = vpop.f32.mrb[0].mxu0
        %v5168 = vadd.f32 0.0, %v5167
        %v5169 = vpop.f32.mrb[0].mxu0
        %5170 = vmatprep.mubr.f32.mxu0 0.0
        %5171 = vmatmul.mubr.f32.gmra.mrb[0].mxu0 %v4973
        %v5172 = vpop.f32.mrb[0].mxu0
        %v5173 = vadd.f32 0.0, %v5172
        %v5174 = vpop.f32.mrb[0].mxu0
        %5175 = vmatprep.mubr.f32.mxu0 0.0
        %5176 = vmatmul.mubr.f32.gmra.mrb[0].mxu0 %v4975
        %v5177 = vpop.f32.mrb[0].mxu0
        %v5178 = vadd.f32 0.0, %v5177
        %v5179 = vpop.f32.mrb[0].mxu0
        %5180 = vmatprep.mubr.f32.mxu0 0.0
        %5181 = vmatmul.mubr.f32.gmra.mrb[0].mxu0 %v4977
        %v5182 = vpop.f32.mrb[0].mxu0
        %v5183 = vadd.f32 0.0, %v5182
        %v5184 = vpop.f32.mrb[0].mxu0
        %5185 = vmatprep.mubr.f32.mxu0 0.0
        %5186 = vmatmul.mubr.f32.gmra.mrb[0].mxu0 %v4979
        %v5187 = vpop.f32.mrb[0].mxu0
        %v5188 = vadd.f32 0.0, %v5187
        %v5189 = vpop.f32.mrb[0].mxu0
        %5190 = vmatprep.mubr.f32.mxu0 0.0
        %5191 = vmatmul.mubr.f32.gmra.mrb[0].mxu0 %v4981
        %v5192 = vpop.f32.mrb[0].mxu0
        %v5193 = vadd.f32 0.0, %v5192
        %v5194 = vpop.f32.mrb[0].mxu0
        %5195 = vmatprep.mubr.f32.mxu0 0.0
        %5196 = vmatmul.mubr.f32.gmra.mrb[0].mxu0 %v4983
        %v5197 = vpop.f32.mrb[0].mxu0
        %v5198 = vadd.f32 0.0, %v5197
        %v5199 = vpop.f32.mrb[0].mxu0
        %5200 = vmatprep.mubr.f32.mxu0 0.0
        %5201 = vmatmul.mubr.f32.gmra.mrb[0].mxu0 %v4985
        %v5202 = vpop.f32.mrb[0].mxu0
        %v5203 = vadd.f32 0.0, %v5202
        %v5204 = vpop.f32.mrb[0].mxu0
        %5205 = vmatprep.mubr.f32.mxu0 0.0
        %5206 = vmatmul.mubr.f32.gmra.mrb[0].mxu0 %v4987
        %v5207 = vpop.f32.mrb[0].mxu0
        %v5208 = vadd.f32 0.0, %v5207
        %v5209 = vpop.f32.mrb[0].mxu0
        %5210 = vmatprep.mubr.f32.mxu0 0.0
        %5211 = vmatmul.mubr.f32.gmra.mrb[0].mxu0 %v4989
        %v5212 = vpop.f32.mrb[0].mxu0
        %v5213 = vadd.f32 0.0, %v5212
        %v5214 = vpop.f32.mrb[0].mxu0
        %5215 = vmatprep.mubr.f32.mxu0 0.0
        %5216 = vmatmul.mubr.f32.gmra.mrb[0].mxu0 %v4991
        %v5217 = vpop.f32.mrb[0].mxu0
        %v5218 = vadd.f32 0.0, %v5217
        %v5219 = vpop.f32.mrb[0].mxu0
        %5220 = vmatprep.mubr.f32.mxu0 0.0
        %5221 = vmatmul.mubr.f32.gmra.mrb[0].mxu0 %v4993
        %v5222 = vpop.f32.mrb[0].mxu0
        %v5223 = vadd.f32 0.0, %v5222
        %v5224 = vpop.f32.mrb[0].mxu0
        %5225 = vmatprep.mubr.f32.mxu0 0.0
        %5226 = vmatmul.mubr.f32.gmra.mrb[0].mxu0 %v4995
        %v5227 = vpop.f32.mrb[0].mxu0
        %v5228 = vadd.f32 0.0, %v5227
        %v5229 = vpop.f32.mrb[0].mxu0
        %5230 = vmatprep.mubr.f32.mxu0 0.0
        %5231 = vmatmul.mubr.f32.gmra.mrb[0].mxu0 %v4997
        %v5232 = vpop.f32.mrb[0].mxu0
        %v5233 = vadd.f32 0.0, %v5232
        %v5234 = vpop.f32.mrb[0].mxu0
        %5235 = vmatprep.mubr.f32.mxu0 0.0
        %5236 = vmatmul.mubr.f32.gmra.mrb[0].mxu0 %v4999
        %v5237 = vpop.f32.mrb[0].mxu0
        %v5238 = vadd.f32 0.0, %v5237
        %v5239 = vpop.f32.mrb[0].mxu0
        %5240 = vdwg.mxu0
        %v5241 = vmax.f32 %v5083, 1.1754944e-38
        %v5242 = vmax.f32 %v5088, 1.1754944e-38
        %v5243 = vmax.f32 %v5093, 1.1754944e-38
        %v5244 = vmax.f32 %v5098, 1.1754944e-38
        %v5245 = vmax.f32 %v5103, 1.1754944e-38
        %v5246 = vmax.f32 %v5108, 1.1754944e-38
        %v5247 = vmax.f32 %v5113, 1.1754944e-38
        %v5248 = vmax.f32 %v5118, 1.1754944e-38
        %v5249 = vmax.f32 %v5123, 1.1754944e-38
        %v5250 = vmax.f32 %v5128, 1.1754944e-38
        %v5251 = vmax.f32 %v5133, 1.1754944e-38
        %v5252 = vmax.f32 %v5138, 1.1754944e-38
        %v5253 = vmax.f32 %v5143, 1.1754944e-38
        %v5254 = vmax.f32 %v5148, 1.1754944e-38
        %v5255 = vmax.f32 %v5153, 1.1754944e-38
        %v5256 = vmax.f32 %v5158, 1.1754944e-38
        %v5257 = vmax.f32 %v5163, 1.1754944e-38
        %v5258 = vmax.f32 %v5168, 1.1754944e-38
        %v5259 = vmax.f32 %v5173, 1.1754944e-38
        %v5260 = vmax.f32 %v5178, 1.1754944e-38
        %v5261 = vmax.f32 %v5183, 1.1754944e-38
        %v5262 = vmax.f32 %v5188, 1.1754944e-38
        %v5263 = vmax.f32 %v5193, 1.1754944e-38
        %v5264 = vmax.f32 %v5198, 1.1754944e-38
        %v5265 = vmax.f32 %v5203, 1.1754944e-38
        %v5266 = vmax.f32 %v5208, 1.1754944e-38
        %v5267 = vmax.f32 %v5213, 1.1754944e-38
        %v5268 = vmax.f32 %v5218, 1.1754944e-38
        %v5269 = vmax.f32 %v5223, 1.1754944e-38
        %v5270 = vmax.f32 %v5228, 1.1754944e-38
        %v5271 = vmax.f32 %v5233, 1.1754944e-38
        %v5272 = vmax.f32 %v5238, 1.1754944e-38
        %v5273 = vrcp.pop %v5241
        %v5274 = vmul.f32 1.0, %v5273
        %v5275 = vrcp.pop %v5242
        %v5276 = vmul.f32 1.0, %v5275
        %v5277 = vrcp.pop %v5243
        %v5278 = vmul.f32 1.0, %v5277
        %v5279 = vrcp.pop %v5244
        %v5280 = vmul.f32 1.0, %v5279
        %v5281 = vrcp.pop %v5245
        %v5282 = vmul.f32 1.0, %v5281
        %v5283 = vrcp.pop %v5246
        %v5284 = vmul.f32 1.0, %v5283
        %v5285 = vrcp.pop %v5247
        %v5286 = vmul.f32 1.0, %v5285
        %v5287 = vrcp.pop %v5248
        %v5288 = vmul.f32 1.0, %v5287
        %v5289 = vrcp.pop %v5249
        %v5290 = vmul.f32 1.0, %v5289
        %v5291 = vrcp.pop %v5250
        %v5292 = vmul.f32 1.0, %v5291
        %v5293 = vrcp.pop %v5251
        %v5294 = vmul.f32 1.0, %v5293
        %v5295 = vrcp.pop %v5252
        %v5296 = vmul.f32 1.0, %v5295
        %v5297 = vrcp.pop %v5253
        %v5298 = vmul.f32 1.0, %v5297
        %v5299 = vrcp.pop %v5254
        %v5300 = vmul.f32 1.0, %v5299
        %v5301 = vrcp.pop %v5255
        %v5302 = vmul.f32 1.0, %v5301
        %v5303 = vrcp.pop %v5256
        %v5304 = vmul.f32 1.0, %v5303
        %v5305 = vrcp.pop %v5257
        %v5306 = vmul.f32 1.0, %v5305
        %v5307 = vrcp.pop %v5258
        %v5308 = vmul.f32 1.0, %v5307
        %v5309 = vrcp.pop %v5259
        %v5310 = vmul.f32 1.0, %v5309
        %v5311 = vrcp.pop %v5260
        %v5312 = vmul.f32 1.0, %v5311
        %v5313 = vrcp.pop %v5261
        %v5314 = vmul.f32 1.0, %v5313
        %v5315 = vrcp.pop %v5262
        %v5316 = vmul.f32 1.0, %v5315
        %v5317 = vrcp.pop %v5263
        %v5318 = vmul.f32 1.0, %v5317
        %v5319 = vrcp.pop %v5264
        %v5320 = vmul.f32 1.0, %v5319
        %v5321 = vrcp.pop %v5265
        %v5322 = vmul.f32 1.0, %v5321
        %v5323 = vrcp.pop %v5266
        %v5324 = vmul.f32 1.0, %v5323
        %v5325 = vrcp.pop %v5267
        %v5326 = vmul.f32 1.0, %v5325
        %v5327 = vrcp.pop %v5268
        %v5328 = vmul.f32 1.0, %v5327
        %v5329 = vrcp.pop %v5269
        %v5330 = vmul.f32 1.0, %v5329
        %v5331 = vrcp.pop %v5270
        %v5332 = vmul.f32 1.0, %v5331
        %v5333 = vrcp.pop %v5271
        %v5334 = vmul.f32 1.0, %v5333
        %v5335 = vrcp.pop %v5272
        %v5336 = vmul.f32 1.0, %v5335
        %v5337 = vld [vmem:[%s5] sm:$0xff]
        %vm5338 = vcmask 64512
        %v5340 = vsel %vm5338, %v5274, 0
        %v5343 = vsel %vm5338, %v5276, 0
        %v5346 = vsel %vm5338, %v5278, 0
        %v5349 = vsel %vm5338, %v5280, 0
        %v5352 = vsel %vm5338, %v5282, 0
        %v5355 = vsel %vm5338, %v5284, 0
        %v5358 = vsel %vm5338, %v5286, 0
        %v5361 = vsel %vm5338, %v5288, 0
        %v5364 = vsel %vm5338, %v5290, 0
        %v5367 = vsel %vm5338, %v5292, 0
        %v5370 = vsel %vm5338, %v5294, 0
        %v5373 = vsel %vm5338, %v5296, 0
        %v5376 = vsel %vm5338, %v5298, 0
        %v5379 = vsel %vm5338, %v5300, 0
        %v5382 = vsel %vm5338, %v5302, 0
        %v5385 = vsel %vm5338, %v5304, 0
        %v5388 = vsel %vm5338, %v5306, 0
        %v5391 = vsel %vm5338, %v5308, 0
        %v5394 = vsel %vm5338, %v5310, 0
        %v5397 = vsel %vm5338, %v5312, 0
        %v5400 = vsel %vm5338, %v5314, 0
        %v5403 = vsel %vm5338, %v5316, 0
        %v5406 = vsel %vm5338, %v5318, 0
        %v5409 = vsel %vm5338, %v5320, 0
        %v5412 = vsel %vm5338, %v5322, 0
        %v5415 = vsel %vm5338, %v5324, 0
        %v5418 = vsel %vm5338, %v5326, 0
        %v5421 = vsel %vm5338, %v5328, 0
        %v5424 = vsel %vm5338, %v5330, 0
        %v5427 = vsel %vm5338, %v5332, 0
        %v5430 = vsel %vm5338, %v5334, 0
        %v5433 = vsel %vm5338, %v5336, 0
        %5435 = vmatprep.subr.mxu0 0.0
        %5436 = vmatpush1.msra.mxu0 %v5337
        %5437 = vmatprep.subr.mxu0 0.0
        %5438 = vmatpush1.msra.mxu0 0.0
        %5439 = vmatprep.subr.mxu0 0.0
        %5440 = vmatpush1.msra.mxu0 0.0
        %5441 = vmatprep.subr.mxu0 0.0
        %5442 = vmatpush1.msra.mxu0 0.0
        %5443 = vmatprep.subr.mxu0 0.0
        %5444 = vmatpush1.msra.mxu0 0.0
        %5445 = vmatprep.subr.mxu0 0.0
        %5446 = vmatpush1.msra.mxu0 0.0
        %5447 = vmatprep.subr.mxu0 0.0
        %5448 = vmatpush1.msra.mxu0 0.0
        %5449 = vmatprep.subr.mxu0 0.0
        %5450 = vmatpush1.msra.mxu0 0.0
        %5451 = vmatprep.subr.mxu0 0.0
        %5452 = vmatpush1.msra.mxu0 0.0
        %5453 = vmatprep.subr.mxu0 0.0
        %5454 = vmatpush1.msra.mxu0 0.0
        %5455 = vmatprep.subr.mxu0 0.0
        %5456 = vmatpush1.msra.mxu0 0.0
        %5457 = vmatprep.subr.mxu0 0.0
        %5458 = vmatpush1.msra.mxu0 0.0
        %5459 = vmatprep.subr.mxu0 0.0
        %5460 = vmatpush1.msra.mxu0 0.0
        %5461 = vmatprep.subr.mxu0 0.0
        %5462 = vmatpush1.msra.mxu0 0.0
        %5463 = vmatprep.subr.mxu0 0.0
        %5464 = vmatpush1.msra.mxu0 0.0
        %5465 = vmatprep.subr.mxu0 0.0
        %5466 = vmatpush1.msra.mxu0 0.0
        %5467 = vmatprep.subr.mxu0 0.0
        %5468 = vmatpush1.msra.mxu0 0.0
        %5469 = vmatprep.subr.mxu0 0.0
        %5470 = vmatpush1.msra.mxu0 0.0
        %5471 = vmatprep.subr.mxu0 0.0
        %5472 = vmatpush1.msra.mxu0 0.0
        %5473 = vmatprep.subr.mxu0 0.0
        %5474 = vmatpush1.msra.mxu0 0.0
        %5475 = vmatprep.subr.mxu0 0.0
        %5476 = vmatpush1.msra.mxu0 0.0
        %5477 = vmatprep.subr.mxu0 0.0
        %5478 = vmatpush1.msra.mxu0 0.0
        %5479 = vmatprep.subr.mxu0 0.0
        %5480 = vmatpush1.msra.mxu0 0.0
        %5481 = vmatprep.subr.mxu0 0.0
        %5482 = vmatpush1.msra.mxu0 0.0
        %5483 = vmatprep.subr.mxu0 0.0
        %5484 = vmatpush1.msra.mxu0 0.0
        %5485 = vmatprep.subr.mxu0 0.0
        %5486 = vmatpush1.msra.mxu0 0.0
        %5487 = vmatprep.subr.mxu0 0.0
        %5488 = vmatpush1.msra.mxu0 0.0
        %5489 = vmatprep.subr.mxu0 0.0
        %5490 = vmatpush1.msra.mxu0 0.0
        %5491 = vmatprep.subr.mxu0 0.0
        %5492 = vmatpush1.msra.mxu0 0.0
        %5493 = vmatprep.subr.mxu0 0.0
        %5494 = vmatpush1.msra.mxu0 0.0
        %5495 = vmatprep.subr.mxu0 0.0
        %5496 = vmatpush1.msra.mxu0 0.0
        %5497 = vmatprep.subr.mxu0 0.0
        %5498 = vmatpush1.msra.mxu0 0.0
        %5499 = vmatprep.mubr.f32.mxu0 0.0
        %5500 = vmatmul.mubr.f32.gmra.mrb[0].mxu0 %v5340
        %v5501 = vpop.f32.mrb[0].mxu0
        %v5502 = vadd.f32 0.0, %v5501
        %v5503 = vpop.f32.mrb[0].mxu0
        %5504 = vmatprep.mubr.f32.mxu0 0.0
        %5505 = vmatmul.mubr.f32.gmra.mrb[0].mxu0 %v5343
        %v5506 = vpop.f32.mrb[0].mxu0
        %v5507 = vadd.f32 0.0, %v5506
        %v5508 = vpop.f32.mrb[0].mxu0
        %5509 = vmatprep.mubr.f32.mxu0 0.0
        %5510 = vmatmul.mubr.f32.gmra.mrb[0].mxu0 %v5346
        %v5511 = vpop.f32.mrb[0].mxu0
        %v5512 = vadd.f32 0.0, %v5511
        %v5513 = vpop.f32.mrb[0].mxu0
        %5514 = vmatprep.mubr.f32.mxu0 0.0
        %5515 = vmatmul.mubr.f32.gmra.mrb[0].mxu0 %v5349
        %v5516 = vpop.f32.mrb[0].mxu0
        %v5517 = vadd.f32 0.0, %v5516
        %v5518 = vpop.f32.mrb[0].mxu0
        %5519 = vmatprep.mubr.f32.mxu0 0.0
        %5520 = vmatmul.mubr.f32.gmra.mrb[0].mxu0 %v5352
        %v5521 = vpop.f32.mrb[0].mxu0
        %v5522 = vadd.f32 0.0, %v5521
        %v5523 = vpop.f32.mrb[0].mxu0
        %5524 = vmatprep.mubr.f32.mxu0 0.0
        %5525 = vmatmul.mubr.f32.gmra.mrb[0].mxu0 %v5355
        %v5526 = vpop.f32.mrb[0].mxu0
        %v5527 = vadd.f32 0.0, %v5526
        %v5528 = vpop.f32.mrb[0].mxu0
        %5529 = vmatprep.mubr.f32.mxu0 0.0
        %5530 = vmatmul.mubr.f32.gmra.mrb[0].mxu0 %v5358
        %v5531 = vpop.f32.mrb[0].mxu0
        %v5532 = vadd.f32 0.0, %v5531
        %v5533 = vpop.f32.mrb[0].mxu0
        %5534 = vmatprep.mubr.f32.mxu0 0.0
        %5535 = vmatmul.mubr.f32.gmra.mrb[0].mxu0 %v5361
        %v5536 = vpop.f32.mrb[0].mxu0
        %v5537 = vadd.f32 0.0, %v5536
        %v5538 = vpop.f32.mrb[0].mxu0
        %5539 = vmatprep.mubr.f32.mxu0 0.0
        %5540 = vmatmul.mubr.f32.gmra.mrb[0].mxu0 %v5364
        %v5541 = vpop.f32.mrb[0].mxu0
        %v5542 = vadd.f32 0.0, %v5541
        %v5543 = vpop.f32.mrb[0].mxu0
        %5544 = vmatprep.mubr.f32.mxu0 0.0
        %5545 = vmatmul.mubr.f32.gmra.mrb[0].mxu0 %v5367
        %v5546 = vpop.f32.mrb[0].mxu0
        %v5547 = vadd.f32 0.0, %v5546
        %v5548 = vpop.f32.mrb[0].mxu0
        %5549 = vmatprep.mubr.f32.mxu0 0.0
        %5550 = vmatmul.mubr.f32.gmra.mrb[0].mxu0 %v5370
        %v5551 = vpop.f32.mrb[0].mxu0
        %v5552 = vadd.f32 0.0, %v5551
        %v5553 = vpop.f32.mrb[0].mxu0
        %5554 = vmatprep.mubr.f32.mxu0 0.0
        %5555 = vmatmul.mubr.f32.gmra.mrb[0].mxu0 %v5373
        %v5556 = vpop.f32.mrb[0].mxu0
        %v5557 = vadd.f32 0.0, %v5556
        %v5558 = vpop.f32.mrb[0].mxu0
        %5559 = vmatprep.mubr.f32.mxu0 0.0
        %5560 = vmatmul.mubr.f32.gmra.mrb[0].mxu0 %v5376
        %v5561 = vpop.f32.mrb[0].mxu0
        %v5562 = vadd.f32 0.0, %v5561
        %v5563 = vpop.f32.mrb[0].mxu0
        %5564 = vmatprep.mubr.f32.mxu0 0.0
        %5565 = vmatmul.mubr.f32.gmra.mrb[0].mxu0 %v5379
        %v5566 = vpop.f32.mrb[0].mxu0
        %v5567 = vadd.f32 0.0, %v5566
        %v5568 = vpop.f32.mrb[0].mxu0
        %5569 = vmatprep.mubr.f32.mxu0 0.0
        %5570 = vmatmul.mubr.f32.gmra.mrb[0].mxu0 %v5382
        %v5571 = vpop.f32.mrb[0].mxu0
        %v5572 = vadd.f32 0.0, %v5571
        %v5573 = vpop.f32.mrb[0].mxu0
        %5574 = vmatprep.mubr.f32.mxu0 0.0
        %5575 = vmatmul.mubr.f32.gmra.mrb[0].mxu0 %v5385
        %v5576 = vpop.f32.mrb[0].mxu0
        %v5577 = vadd.f32 0.0, %v5576
        %v5578 = vpop.f32.mrb[0].mxu0
        %5579 = vmatprep.mubr.f32.mxu0 0.0
        %5580 = vmatmul.mubr.f32.gmra.mrb[0].mxu0 %v5388
        %v5581 = vpop.f32.mrb[0].mxu0
        %v5582 = vadd.f32 0.0, %v5581
        %v5583 = vpop.f32.mrb[0].mxu0
        %5584 = vmatprep.mubr.f32.mxu0 0.0
        %5585 = vmatmul.mubr.f32.gmra.mrb[0].mxu0 %v5391
        %v5586 = vpop.f32.mrb[0].mxu0
        %v5587 = vadd.f32 0.0, %v5586
        %v5588 = vpop.f32.mrb[0].mxu0
        %5589 = vmatprep.mubr.f32.mxu0 0.0
        %5590 = vmatmul.mubr.f32.gmra.mrb[0].mxu0 %v5394
        %v5591 = vpop.f32.mrb[0].mxu0
        %v5592 = vadd.f32 0.0, %v5591
        %v5593 = vpop.f32.mrb[0].mxu0
        %5594 = vmatprep.mubr.f32.mxu0 0.0
        %5595 = vmatmul.mubr.f32.gmra.mrb[0].mxu0 %v5397
        %v5596 = vpop.f32.mrb[0].mxu0
        %v5597 = vadd.f32 0.0, %v5596
        %v5598 = vpop.f32.mrb[0].mxu0
        %5599 = vmatprep.mubr.f32.mxu0 0.0
        %5600 = vmatmul.mubr.f32.gmra.mrb[0].mxu0 %v5400
        %v5601 = vpop.f32.mrb[0].mxu0
        %v5602 = vadd.f32 0.0, %v5601
        %v5603 = vpop.f32.mrb[0].mxu0
        %5604 = vmatprep.mubr.f32.mxu0 0.0
        %5605 = vmatmul.mubr.f32.gmra.mrb[0].mxu0 %v5403
        %v5606 = vpop.f32.mrb[0].mxu0
        %v5607 = vadd.f32 0.0, %v5606
        %v5608 = vpop.f32.mrb[0].mxu0
        %5609 = vmatprep.mubr.f32.mxu0 0.0
        %5610 = vmatmul.mubr.f32.gmra.mrb[0].mxu0 %v5406
        %v5611 = vpop.f32.mrb[0].mxu0
        %v5612 = vadd.f32 0.0, %v5611
        %v5613 = vpop.f32.mrb[0].mxu0
        %5614 = vmatprep.mubr.f32.mxu0 0.0
        %5615 = vmatmul.mubr.f32.gmra.mrb[0].mxu0 %v5409
        %v5616 = vpop.f32.mrb[0].mxu0
        %v5617 = vadd.f32 0.0, %v5616
        %v5618 = vpop.f32.mrb[0].mxu0
        %5619 = vmatprep.mubr.f32.mxu0 0.0
        %5620 = vmatmul.mubr.f32.gmra.mrb[0].mxu0 %v5412
        %v5621 = vpop.f32.mrb[0].mxu0
        %v5622 = vadd.f32 0.0, %v5621
        %v5623 = vpop.f32.mrb[0].mxu0
        %5624 = vmatprep.mubr.f32.mxu0 0.0
        %5625 = vmatmul.mubr.f32.gmra.mrb[0].mxu0 %v5415
        %v5626 = vpop.f32.mrb[0].mxu0
        %v5627 = vadd.f32 0.0, %v5626
        %v5628 = vpop.f32.mrb[0].mxu0
        %5629 = vmatprep.mubr.f32.mxu0 0.0
        %5630 = vmatmul.mubr.f32.gmra.mrb[0].mxu0 %v5418
        %v5631 = vpop.f32.mrb[0].mxu0
        %v5632 = vadd.f32 0.0, %v5631
        %v5633 = vpop.f32.mrb[0].mxu0
        %5634 = vmatprep.mubr.f32.mxu0 0.0
        %5635 = vmatmul.mubr.f32.gmra.mrb[0].mxu0 %v5421
        %v5636 = vpop.f32.mrb[0].mxu0
        %v5637 = vadd.f32 0.0, %v5636
        %v5638 = vpop.f32.mrb[0].mxu0
        %5639 = vmatprep.mubr.f32.mxu0 0.0
        %5640 = vmatmul.mubr.f32.gmra.mrb[0].mxu0 %v5424
        %v5641 = vpop.f32.mrb[0].mxu0
        %v5642 = vadd.f32 0.0, %v5641
        %v5643 = vpop.f32.mrb[0].mxu0
        %5644 = vmatprep.mubr.f32.mxu0 0.0
        %5645 = vmatmul.mubr.f32.gmra.mrb[0].mxu0 %v5427
        %v5646 = vpop.f32.mrb[0].mxu0
        %v5647 = vadd.f32 0.0, %v5646
        %v5648 = vpop.f32.mrb[0].mxu0
        %5649 = vmatprep.mubr.f32.mxu0 0.0
        %5650 = vmatmul.mubr.f32.gmra.mrb[0].mxu0 %v5430
        %v5651 = vpop.f32.mrb[0].mxu0
        %v5652 = vadd.f32 0.0, %v5651
        %v5653 = vpop.f32.mrb[0].mxu0
        %5654 = vmatprep.mubr.f32.mxu0 0.0
        %5655 = vmatmul.mubr.f32.gmra.mrb[0].mxu0 %v5433
        %v5656 = vpop.f32.mrb[0].mxu0
        %v5657 = vadd.f32 0.0, %v5656
        %v5658 = vpop.f32.mrb[0].mxu0
        %5659 = vdwg.mxu0
        %v5660 = vmul.f32 %v4937, %v5502
        %v5661 = vmul.f32 %v4939, %v5507
        %v5662 = vmul.f32 %v4941, %v5512
        %v5663 = vmul.f32 %v4943, %v5517
        %v5664 = vmul.f32 %v4945, %v5522
        %v5665 = vmul.f32 %v4947, %v5527
        %v5666 = vmul.f32 %v4949, %v5532
        %v5667 = vmul.f32 %v4951, %v5537
        %v5668 = vmul.f32 %v4953, %v5542
        %v5669 = vmul.f32 %v4955, %v5547
        %v5670 = vmul.f32 %v4957, %v5552
        %v5671 = vmul.f32 %v4959, %v5557
        %v5672 = vmul.f32 %v4961, %v5562
        %v5673 = vmul.f32 %v4963, %v5567
        %v5674 = vmul.f32 %v4965, %v5572
        %v5675 = vmul.f32 %v4967, %v5577
        %v5676 = vmul.f32 %v4969, %v5582
        %v5677 = vmul.f32 %v4971, %v5587
        %v5678 = vmul.f32 %v4973, %v5592
        %v5679 = vmul.f32 %v4975, %v5597
        %v5680 = vmul.f32 %v4977, %v5602
        %v5681 = vmul.f32 %v4979, %v5607
        %v5682 = vmul.f32 %v4981, %v5612
        %v5683 = vmul.f32 %v4983, %v5617
        %v5684 = vmul.f32 %v4985, %v5622
        %v5685 = vmul.f32 %v4987, %v5627
        %v5686 = vmul.f32 %v4989, %v5632
        %v5687 = vmul.f32 %v4991, %v5637
        %v5688 = vmul.f32 %v4993, %v5642
        %v5689 = vmul.f32 %v4995, %v5647
        %v5690 = vmul.f32 %v4997, %v5652
        %v5691 = vmul.f32 %v4999, %v5657
        %5692 = vst [vmem:[%s308] sm:$0xff] %v5660
        %5693 = vst [vmem:[%s308 + $0x8] sm:$0xff] %v5661
        %5694 = vst [vmem:[%s308 + $0x10] sm:$0xff] %v5662
        %5695 = vst [vmem:[%s308 + $0x18] sm:$0xff] %v5663
        %5696 = vst [vmem:[%s308 + $0x20] sm:$0xff] %v5664
        %5697 = vst [vmem:[%s308 + $0x28] sm:$0xff] %v5665
        %5698 = vst [vmem:[%s308 + $0x30] sm:$0xff] %v5666
        %5699 = vst [vmem:[%s308 + $0x38] sm:$0xff] %v5667
        %5700 = vst [vmem:[%s308 + $0x40] sm:$0xff] %v5668
        %5701 = vst [vmem:[%s308 + $0x48] sm:$0xff] %v5669
        %5702 = vst [vmem:[%s308 + $0x50] sm:$0xff] %v5670
        %5703 = vst [vmem:[%s308 + $0x58] sm:$0xff] %v5671
        %5704 = vst [vmem:[%s308 + $0x60] sm:$0xff] %v5672
        %5705 = vst [vmem:[%s308 + $0x68] sm:$0xff] %v5673
        %5706 = vst [vmem:[%s308 + $0x70] sm:$0xff] %v5674
        %5707 = vst [vmem:[%s308 + $0x78] sm:$0xff] %v5675
        %5708 = vst [vmem:[%s308 + $0x80] sm:$0xff] %v5676
        %5709 = vst [vmem:[%s308 + $0x88] sm:$0xff] %v5677
        %5710 = vst [vmem:[%s308 + $0x90] sm:$0xff] %v5678
        %5711 = vst [vmem:[%s308 + $0x98] sm:$0xff] %v5679
        %5712 = vst [vmem:[%s308 + $0xa0] sm:$0xff] %v5680
        %5713 = vst [vmem:[%s308 + $0xa8] sm:$0xff] %v5681
        %5714 = vst [vmem:[%s308 + $0xb0] sm:$0xff] %v5682
        %5715 = vst [vmem:[%s308 + $0xb8] sm:$0xff] %v5683
        %5716 = vst [vmem:[%s308 + $0xc0] sm:$0xff] %v5684
        %5717 = vst [vmem:[%s308 + $0xc8] sm:$0xff] %v5685
        %5718 = vst [vmem:[%s308 + $0xd0] sm:$0xff] %v5686
        %5719 = vst [vmem:[%s308 + $0xd8] sm:$0xff] %v5687
        %5720 = vst [vmem:[%s308 + $0xe0] sm:$0xff] %v5688
        %5721 = vst [vmem:[%s308 + $0xe8] sm:$0xff] %v5689
        %5722 = vst [vmem:[%s308 + $0xf0] sm:$0xff] %v5690
        %5723 = vst [vmem:[%s308 + $0xf8] sm:$0xff] %v5691
        %5740 = vrot.lane.b32.xlu0 %v3320, 64
        %v5741 = vpop.permute.xlu0 %5740
        %5742 = vrot.lane.b32.xlu0 %v3321, 64
        %v5743 = vpop.permute.xlu0 %5742
        %5744 = vrot.lane.b32.xlu0 %v3322, 64
        %v5745 = vpop.permute.xlu0 %5744
        %5746 = vrot.lane.b32.xlu0 %v3323, 64
        %v5747 = vpop.permute.xlu0 %5746
        %5748 = vrot.lane.b32.xlu0 %v3324, 64
        %v5749 = vpop.permute.xlu0 %5748
        %5750 = vrot.lane.b32.xlu0 %v3325, 64
        %v5751 = vpop.permute.xlu0 %5750
        %5752 = vrot.lane.b32.xlu0 %v3326, 64
        %v5753 = vpop.permute.xlu0 %5752
        %5754 = vrot.lane.b32.xlu0 %v3327, 64
        %v5755 = vpop.permute.xlu0 %5754
        %5756 = vrot.lane.b32.xlu0 %v3328, 64
        %v5757 = vpop.permute.xlu0 %5756
        %5758 = vrot.lane.b32.xlu0 %v3329, 64
        %v5759 = vpop.permute.xlu0 %5758
        %5760 = vrot.lane.b32.xlu0 %v3330, 64
        %v5761 = vpop.permute.xlu0 %5760
        %5762 = vrot.lane.b32.xlu0 %v3331, 64
        %v5763 = vpop.permute.xlu0 %5762
        %5764 = vrot.lane.b32.xlu0 %v3332, 64
        %v5765 = vpop.permute.xlu0 %5764
        %5766 = vrot.lane.b32.xlu0 %v3333, 64
        %v5767 = vpop.permute.xlu0 %5766
        %5768 = vrot.lane.b32.xlu0 %v3334, 64
        %v5769 = vpop.permute.xlu0 %5768
        %5770 = vrot.lane.b32.xlu0 %v3335, 64
        %v5771 = vpop.permute.xlu0 %5770
        %5788 = vmatprep.subr.mxu0 0.0
        %5789 = vmatpush1.msra.mxu0 %v5741
        %5790 = vmatprep.subr.mxu0 0.0
        %5791 = vmatpush1.msra.mxu0 %v5743
        %5792 = vmatprep.subr.mxu0 0.0
        %5793 = vmatpush1.msra.mxu0 %v5745
        %5794 = vmatprep.subr.mxu0 0.0
        %5795 = vmatpush1.msra.mxu0 %v5747
        %5796 = vmatprep.subr.mxu0 0.0
        %5797 = vmatpush1.msra.mxu0 %v5749
        %5798 = vmatprep.subr.mxu0 0.0
        %5799 = vmatpush1.msra.mxu0 %v5751
        %5800 = vmatprep.subr.mxu0 0.0
        %5801 = vmatpush1.msra.mxu0 %v5753
        %5802 = vmatprep.subr.mxu0 0.0
        %5803 = vmatpush1.msra.mxu0 %v5755
        %5804 = vmatprep.subr.mxu0 0.0
        %5805 = vmatpush1.msra.mxu0 %v5757
        %5806 = vmatprep.subr.mxu0 0.0
        %5807 = vmatpush1.msra.mxu0 %v5759
        %5808 = vmatprep.subr.mxu0 0.0
        %5809 = vmatpush1.msra.mxu0 %v5761
        %5810 = vmatprep.subr.mxu0 0.0
        %5811 = vmatpush1.msra.mxu0 %v5763
        %5812 = vmatprep.subr.mxu0 0.0
        %5813 = vmatpush1.msra.mxu0 %v5765
        %5814 = vmatprep.subr.mxu0 0.0
        %5815 = vmatpush1.msra.mxu0 %v5767
        %5816 = vmatprep.subr.mxu0 0.0
        %5817 = vmatpush1.msra.mxu0 %v5769
        %5818 = vmatprep.subr.mxu0 0.0
        %5819 = vmatpush1.msra.mxu0 %v5771
        %5820 = vmatprep.subr.mxu0 0.0
        %5821 = vmatpush1.msra.mxu0 0.0
        %5822 = vmatprep.subr.mxu0 0.0
        %5823 = vmatpush1.msra.mxu0 0.0
        %5824 = vmatprep.subr.mxu0 0.0
        %5825 = vmatpush1.msra.mxu0 0.0
        %5826 = vmatprep.subr.mxu0 0.0
        %5827 = vmatpush1.msra.mxu0 0.0
        %5828 = vmatprep.subr.mxu0 0.0
        %5829 = vmatpush1.msra.mxu0 0.0
        %5830 = vmatprep.subr.mxu0 0.0
        %5831 = vmatpush1.msra.mxu0 0.0
        %5832 = vmatprep.subr.mxu0 0.0
        %5833 = vmatpush1.msra.mxu0 0.0
        %5834 = vmatprep.subr.mxu0 0.0
        %5835 = vmatpush1.msra.mxu0 0.0
        %5836 = vmatprep.subr.mxu0 0.0
        %5837 = vmatpush1.msra.mxu0 0.0
        %5838 = vmatprep.subr.mxu0 0.0
        %5839 = vmatpush1.msra.mxu0 0.0
        %5840 = vmatprep.subr.mxu0 0.0
        %5841 = vmatpush1.msra.mxu0 0.0
        %5842 = vmatprep.subr.mxu0 0.0
        %5843 = vmatpush1.msra.mxu0 0.0
        %5844 = vmatprep.subr.mxu0 0.0
        %5845 = vmatpush1.msra.mxu0 0.0
        %5846 = vmatprep.subr.mxu0 0.0
        %5847 = vmatpush1.msra.mxu0 0.0
        %5848 = vmatprep.subr.mxu0 0.0
        %5849 = vmatpush1.msra.mxu0 0.0
        %5850 = vmatprep.subr.mxu0 0.0
        %5851 = vmatpush1.msra.mxu0 0.0
        %5852 = vmatprep.mubr.f32.mxu0 0.0
        %5853 = vmatmul.mubr.f32.gmra.mrb[0].mxu0 %v5660
        %v5854 = vpop.f32.mrb[0].mxu0
        %v5855 = vadd.f32 0.0, %v5854
        %v5856 = vpop.f32.mrb[0].mxu0
        %5857 = vmatprep.mubr.f32.mxu0 0.0
        %5858 = vmatmul.mubr.f32.gmra.mrb[0].mxu0 %v5661
        %v5859 = vpop.f32.mrb[0].mxu0
        %v5860 = vadd.f32 0.0, %v5859
        %v5861 = vpop.f32.mrb[0].mxu0
        %5862 = vdwg.mxu0
        %5879 = vrot.lane.b32.xlu0 %v3336, 64
        %v5880 = vpop.permute.xlu0 %5879
        %5881 = vrot.lane.b32.xlu0 %v3337, 64
        %v5882 = vpop.permute.xlu0 %5881
        %5883 = vrot.lane.b32.xlu0 %v3338, 64
        %v5884 = vpop.permute.xlu0 %5883
        %5885 = vrot.lane.b32.xlu0 %v3339, 64
        %v5886 = vpop.permute.xlu0 %5885
        %5887 = vrot.lane.b32.xlu0 %v3340, 64
        %v5888 = vpop.permute.xlu0 %5887
        %5889 = vrot.lane.b32.xlu0 %v3341, 64
        %v5890 = vpop.permute.xlu0 %5889
        %5891 = vrot.lane.b32.xlu0 %v3342, 64
        %v5892 = vpop.permute.xlu0 %5891
        %5893 = vrot.lane.b32.xlu0 %v3343, 64
        %v5894 = vpop.permute.xlu0 %5893
        %5895 = vrot.lane.b32.xlu0 %v3344, 64
        %v5896 = vpop.permute.xlu0 %5895
        %5897 = vrot.lane.b32.xlu0 %v3345, 64
        %v5898 = vpop.permute.xlu0 %5897
        %5899 = vrot.lane.b32.xlu0 %v3346, 64
        %v5900 = vpop.permute.xlu0 %5899
        %5901 = vrot.lane.b32.xlu0 %v3347, 64
        %v5902 = vpop.permute.xlu0 %5901
        %5903 = vrot.lane.b32.xlu0 %v3348, 64
        %v5904 = vpop.permute.xlu0 %5903
        %5905 = vrot.lane.b32.xlu0 %v3349, 64
        %v5906 = vpop.permute.xlu0 %5905
        %5907 = vrot.lane.b32.xlu0 %v3350, 64
        %v5908 = vpop.permute.xlu0 %5907
        %5909 = vrot.lane.b32.xlu0 %v3351, 64
        %v5910 = vpop.permute.xlu0 %5909
        %5927 = vmatprep.subr.mxu0 0.0
        %5928 = vmatpush1.msra.mxu0 %v5880
        %5929 = vmatprep.subr.mxu0 0.0
        %5930 = vmatpush1.msra.mxu0 %v5882
        %5931 = vmatprep.subr.mxu0 0.0
        %5932 = vmatpush1.msra.mxu0 %v5884
        %5933 = vmatprep.subr.mxu0 0.0
        %5934 = vmatpush1.msra.mxu0 %v5886
        %5935 = vmatprep.subr.mxu0 0.0
        %5936 = vmatpush1.msra.mxu0 %v5888
        %5937 = vmatprep.subr.mxu0 0.0
        %5938 = vmatpush1.msra.mxu0 %v5890
        %5939 = vmatprep.subr.mxu0 0.0
        %5940 = vmatpush1.msra.mxu0 %v5892
        %5941 = vmatprep.subr.mxu0 0.0
        %5942 = vmatpush1.msra.mxu0 %v5894
        %5943 = vmatprep.subr.mxu0 0.0
        %5944 = vmatpush1.msra.mxu0 %v5896
        %5945 = vmatprep.subr.mxu0 0.0
        %5946 = vmatpush1.msra.mxu0 %v5898
        %5947 = vmatprep.subr.mxu0 0.0
        %5948 = vmatpush1.msra.mxu0 %v5900
        %5949 = vmatprep.subr.mxu0 0.0
        %5950 = vmatpush1.msra.mxu0 %v5902
        %5951 = vmatprep.subr.mxu0 0.0
        %5952 = vmatpush1.msra.mxu0 %v5904
        %5953 = vmatprep.subr.mxu0 0.0
        %5954 = vmatpush1.msra.mxu0 %v5906
        %5955 = vmatprep.subr.mxu0 0.0
        %5956 = vmatpush1.msra.mxu0 %v5908
        %5957 = vmatprep.subr.mxu0 0.0
        %5958 = vmatpush1.msra.mxu0 %v5910
        %5959 = vmatprep.subr.mxu0 0.0
        %5960 = vmatpush1.msra.mxu0 0.0
        %5961 = vmatprep.subr.mxu0 0.0
        %5962 = vmatpush1.msra.mxu0 0.0
        %5963 = vmatprep.subr.mxu0 0.0
        %5964 = vmatpush1.msra.mxu0 0.0
        %5965 = vmatprep.subr.mxu0 0.0
        %5966 = vmatpush1.msra.mxu0 0.0
        %5967 = vmatprep.subr.mxu0 0.0
        %5968 = vmatpush1.msra.mxu0 0.0
        %5969 = vmatprep.subr.mxu0 0.0
        %5970 = vmatpush1.msra.mxu0 0.0
        %5971 = vmatprep.subr.mxu0 0.0
        %5972 = vmatpush1.msra.mxu0 0.0
        %5973 = vmatprep.subr.mxu0 0.0
        %5974 = vmatpush1.msra.mxu0 0.0
        %5975 = vmatprep.subr.mxu0 0.0
        %5976 = vmatpush1.msra.mxu0 0.0
        %5977 = vmatprep.subr.mxu0 0.0
        %5978 = vmatpush1.msra.mxu0 0.0
        %5979 = vmatprep.subr.mxu0 0.0
        %5980 = vmatpush1.msra.mxu0 0.0
        %5981 = vmatprep.subr.mxu0 0.0
        %5982 = vmatpush1.msra.mxu0 0.0
        %5983 = vmatprep.subr.mxu0 0.0
        %5984 = vmatpush1.msra.mxu0 0.0
        %5985 = vmatprep.subr.mxu0 0.0
        %5986 = vmatpush1.msra.mxu0 0.0
        %5987 = vmatprep.subr.mxu0 0.0
        %5988 = vmatpush1.msra.mxu0 0.0
        %5989 = vmatprep.subr.mxu0 0.0
        %5990 = vmatpush1.msra.mxu0 0.0
        %5991 = vmatprep.mubr.f32.mxu0 0.0
        %5992 = vmatmul.mubr.f32.gmra.mrb[0].mxu0 %v5662
        %v5993 = vpop.f32.mrb[0].mxu0
        %v5994 = vadd.f32 0.0, %v5993
        %v5995 = vpop.f32.mrb[0].mxu0
        %5996 = vmatprep.mubr.f32.mxu0 0.0
        %5997 = vmatmul.mubr.f32.gmra.mrb[0].mxu0 %v5663
        %v5998 = vpop.f32.mrb[0].mxu0
        %v5999 = vadd.f32 0.0, %v5998
        %v6000 = vpop.f32.mrb[0].mxu0
        %6001 = vdwg.mxu0
        %6018 = vrot.lane.b32.xlu0 %v3352, 64
        %v6019 = vpop.permute.xlu0 %6018
        %6020 = vrot.lane.b32.xlu0 %v3353, 64
        %v6021 = vpop.permute.xlu0 %6020
        %6022 = vrot.lane.b32.xlu0 %v3354, 64
        %v6023 = vpop.permute.xlu0 %6022
        %6024 = vrot.lane.b32.xlu0 %v3355, 64
        %v6025 = vpop.permute.xlu0 %6024
        %6026 = vrot.lane.b32.xlu0 %v3356, 64
        %v6027 = vpop.permute.xlu0 %6026
        %6028 = vrot.lane.b32.xlu0 %v3357, 64
        %v6029 = vpop.permute.xlu0 %6028
        %6030 = vrot.lane.b32.xlu0 %v3358, 64
        %v6031 = vpop.permute.xlu0 %6030
        %6032 = vrot.lane.b32.xlu0 %v3359, 64
        %v6033 = vpop.permute.xlu0 %6032
        %6034 = vrot.lane.b32.xlu0 %v3360, 64
        %v6035 = vpop.permute.xlu0 %6034
        %6036 = vrot.lane.b32.xlu0 %v3361, 64
        %v6037 = vpop.permute.xlu0 %6036
        %6038 = vrot.lane.b32.xlu0 %v3362, 64
        %v6039 = vpop.permute.xlu0 %6038
        %6040 = vrot.lane.b32.xlu0 %v3363, 64
        %v6041 = vpop.permute.xlu0 %6040
        %6042 = vrot.lane.b32.xlu0 %v3364, 64
        %v6043 = vpop.permute.xlu0 %6042
        %6044 = vrot.lane.b32.xlu0 %v3365, 64
        %v6045 = vpop.permute.xlu0 %6044
        %6046 = vrot.lane.b32.xlu0 %v3366, 64
        %v6047 = vpop.permute.xlu0 %6046
        %6048 = vrot.lane.b32.xlu0 %v3367, 64
        %v6049 = vpop.permute.xlu0 %6048
        %6066 = vmatprep.subr.mxu0 0.0
        %6067 = vmatpush1.msra.mxu0 %v6019
        %6068 = vmatprep.subr.mxu0 0.0
        %6069 = vmatpush1.msra.mxu0 %v6021
        %6070 = vmatprep.subr.mxu0 0.0
        %6071 = vmatpush1.msra.mxu0 %v6023
        %6072 = vmatprep.subr.mxu0 0.0
        %6073 = vmatpush1.msra.mxu0 %v6025
        %6074 = vmatprep.subr.mxu0 0.0
        %6075 = vmatpush1.msra.mxu0 %v6027
        %6076 = vmatprep.subr.mxu0 0.0
        %6077 = vmatpush1.msra.mxu0 %v6029
        %6078 = vmatprep.subr.mxu0 0.0
        %6079 = vmatpush1.msra.mxu0 %v6031
        %6080 = vmatprep.subr.mxu0 0.0
        %6081 = vmatpush1.msra.mxu0 %v6033
        %6082 = vmatprep.subr.mxu0 0.0
        %6083 = vmatpush1.msra.mxu0 %v6035
        %6084 = vmatprep.subr.mxu0 0.0
        %6085 = vmatpush1.msra.mxu0 %v6037
        %6086 = vmatprep.subr.mxu0 0.0
        %6087 = vmatpush1.msra.mxu0 %v6039
        %6088 = vmatprep.subr.mxu0 0.0
        %6089 = vmatpush1.msra.mxu0 %v6041
        %6090 = vmatprep.subr.mxu0 0.0
        %6091 = vmatpush1.msra.mxu0 %v6043
        %6092 = vmatprep.subr.mxu0 0.0
        %6093 = vmatpush1.msra.mxu0 %v6045
        %6094 = vmatprep.subr.mxu0 0.0
        %6095 = vmatpush1.msra.mxu0 %v6047
        %6096 = vmatprep.subr.mxu0 0.0
        %6097 = vmatpush1.msra.mxu0 %v6049
        %6098 = vmatprep.subr.mxu0 0.0
        %6099 = vmatpush1.msra.mxu0 0.0
        %6100 = vmatprep.subr.mxu0 0.0
        %6101 = vmatpush1.msra.mxu0 0.0
        %6102 = vmatprep.subr.mxu0 0.0
        %6103 = vmatpush1.msra.mxu0 0.0
        %6104 = vmatprep.subr.mxu0 0.0
        %6105 = vmatpush1.msra.mxu0 0.0
        %6106 = vmatprep.subr.mxu0 0.0
        %6107 = vmatpush1.msra.mxu0 0.0
        %6108 = vmatprep.subr.mxu0 0.0
        %6109 = vmatpush1.msra.mxu0 0.0
        %6110 = vmatprep.subr.mxu0 0.0
        %6111 = vmatpush1.msra.mxu0 0.0
        %6112 = vmatprep.subr.mxu0 0.0
        %6113 = vmatpush1.msra.mxu0 0.0
        %6114 = vmatprep.subr.mxu0 0.0
        %6115 = vmatpush1.msra.mxu0 0.0
        %6116 = vmatprep.subr.mxu0 0.0
        %6117 = vmatpush1.msra.mxu0 0.0
        %6118 = vmatprep.subr.mxu0 0.0
        %6119 = vmatpush1.msra.mxu0 0.0
        %6120 = vmatprep.subr.mxu0 0.0
        %6121 = vmatpush1.msra.mxu0 0.0
        %6122 = vmatprep.subr.mxu0 0.0
        %6123 = vmatpush1.msra.mxu0 0.0
        %6124 = vmatprep.subr.mxu0 0.0
        %6125 = vmatpush1.msra.mxu0 0.0
        %6126 = vmatprep.subr.mxu0 0.0
        %6127 = vmatpush1.msra.mxu0 0.0
        %6128 = vmatprep.subr.mxu0 0.0
        %6129 = vmatpush1.msra.mxu0 0.0
        %6130 = vmatprep.mubr.f32.mxu0 0.0
        %6131 = vmatmul.mubr.f32.gmra.mrb[0].mxu0 %v5664
        %v6132 = vpop.f32.mrb[0].mxu0
        %v6133 = vadd.f32 0.0, %v6132
        %v6134 = vpop.f32.mrb[0].mxu0
        %6135 = vmatprep.mubr.f32.mxu0 0.0
        %6136 = vmatmul.mubr.f32.gmra.mrb[0].mxu0 %v5665
        %v6137 = vpop.f32.mrb[0].mxu0
        %v6138 = vadd.f32 0.0, %v6137
        %v6139 = vpop.f32.mrb[0].mxu0
        %6140 = vdwg.mxu0
        %6157 = vrot.lane.b32.xlu0 %v3368, 64
        %v6158 = vpop.permute.xlu0 %6157
        %6159 = vrot.lane.b32.xlu0 %v3369, 64
        %v6160 = vpop.permute.xlu0 %6159
        %6161 = vrot.lane.b32.xlu0 %v3370, 64
        %v6162 = vpop.permute.xlu0 %6161
        %6163 = vrot.lane.b32.xlu0 %v3371, 64
        %v6164 = vpop.permute.xlu0 %6163
        %6165 = vrot.lane.b32.xlu0 %v3372, 64
        %v6166 = vpop.permute.xlu0 %6165
        %6167 = vrot.lane.b32.xlu0 %v3373, 64
        %v6168 = vpop.permute.xlu0 %6167
        %6169 = vrot.lane.b32.xlu0 %v3374, 64
        %v6170 = vpop.permute.xlu0 %6169
        %6171 = vrot.lane.b32.xlu0 %v3375, 64
        %v6172 = vpop.permute.xlu0 %6171
        %6173 = vrot.lane.b32.xlu0 %v3376, 64
        %v6174 = vpop.permute.xlu0 %6173
        %6175 = vrot.lane.b32.xlu0 %v3377, 64
        %v6176 = vpop.permute.xlu0 %6175
        %6177 = vrot.lane.b32.xlu0 %v3378, 64
        %v6178 = vpop.permute.xlu0 %6177
        %6179 = vrot.lane.b32.xlu0 %v3379, 64
        %v6180 = vpop.permute.xlu0 %6179
        %6181 = vrot.lane.b32.xlu0 %v3380, 64
        %v6182 = vpop.permute.xlu0 %6181
        %6183 = vrot.lane.b32.xlu0 %v3381, 64
        %v6184 = vpop.permute.xlu0 %6183
        %6185 = vrot.lane.b32.xlu0 %v3382, 64
        %v6186 = vpop.permute.xlu0 %6185
        %6187 = vrot.lane.b32.xlu0 %v3383, 64
        %v6188 = vpop.permute.xlu0 %6187
        %6205 = vmatprep.subr.mxu0 0.0
        %6206 = vmatpush1.msra.mxu0 %v6158
        %6207 = vmatprep.subr.mxu0 0.0
        %6208 = vmatpush1.msra.mxu0 %v6160
        %6209 = vmatprep.subr.mxu0 0.0
        %6210 = vmatpush1.msra.mxu0 %v6162
        %6211 = vmatprep.subr.mxu0 0.0
        %6212 = vmatpush1.msra.mxu0 %v6164
        %6213 = vmatprep.subr.mxu0 0.0
        %6214 = vmatpush1.msra.mxu0 %v6166
        %6215 = vmatprep.subr.mxu0 0.0
        %6216 = vmatpush1.msra.mxu0 %v6168
        %6217 = vmatprep.subr.mxu0 0.0
        %6218 = vmatpush1.msra.mxu0 %v6170
        %6219 = vmatprep.subr.mxu0 0.0
        %6220 = vmatpush1.msra.mxu0 %v6172
        %6221 = vmatprep.subr.mxu0 0.0
        %6222 = vmatpush1.msra.mxu0 %v6174
        %6223 = vmatprep.subr.mxu0 0.0
        %6224 = vmatpush1.msra.mxu0 %v6176
        %6225 = vmatprep.subr.mxu0 0.0
        %6226 = vmatpush1.msra.mxu0 %v6178
        %6227 = vmatprep.subr.mxu0 0.0
        %6228 = vmatpush1.msra.mxu0 %v6180
        %6229 = vmatprep.subr.mxu0 0.0
        %6230 = vmatpush1.msra.mxu0 %v6182
        %6231 = vmatprep.subr.mxu0 0.0
        %6232 = vmatpush1.msra.mxu0 %v6184
        %6233 = vmatprep.subr.mxu0 0.0
        %6234 = vmatpush1.msra.mxu0 %v6186
        %6235 = vmatprep.subr.mxu0 0.0
        %6236 = vmatpush1.msra.mxu0 %v6188
        %6237 = vmatprep.subr.mxu0 0.0
        %6238 = vmatpush1.msra.mxu0 0.0
        %6239 = vmatprep.subr.mxu0 0.0
        %6240 = vmatpush1.msra.mxu0 0.0
        %6241 = vmatprep.subr.mxu0 0.0
        %6242 = vmatpush1.msra.mxu0 0.0
        %6243 = vmatprep.subr.mxu0 0.0
        %6244 = vmatpush1.msra.mxu0 0.0
        %6245 = vmatprep.subr.mxu0 0.0
        %6246 = vmatpush1.msra.mxu0 0.0
        %6247 = vmatprep.subr.mxu0 0.0
        %6248 = vmatpush1.msra.mxu0 0.0
        %6249 = vmatprep.subr.mxu0 0.0
        %6250 = vmatpush1.msra.mxu0 0.0
        %6251 = vmatprep.subr.mxu0 0.0
        %6252 = vmatpush1.msra.mxu0 0.0
        %6253 = vmatprep.subr.mxu0 0.0
        %6254 = vmatpush1.msra.mxu0 0.0
        %6255 = vmatprep.subr.mxu0 0.0
        %6256 = vmatpush1.msra.mxu0 0.0
        %6257 = vmatprep.subr.mxu0 0.0
        %6258 = vmatpush1.msra.mxu0 0.0
        %6259 = vmatprep.subr.mxu0 0.0
        %6260 = vmatpush1.msra.mxu0 0.0
        %6261 = vmatprep.subr.mxu0 0.0
        %6262 = vmatpush1.msra.mxu0 0.0
        %6263 = vmatprep.subr.mxu0 0.0
        %6264 = vmatpush1.msra.mxu0 0.0
        %6265 = vmatprep.subr.mxu0 0.0
        %6266 = vmatpush1.msra.mxu0 0.0
        %6267 = vmatprep.subr.mxu0 0.0
        %6268 = vmatpush1.msra.mxu0 0.0
        %6269 = vmatprep.mubr.f32.mxu0 0.0
        %6270 = vmatmul.mubr.f32.gmra.mrb[0].mxu0 %v5666
        %v6271 = vpop.f32.mrb[0].mxu0
        %v6272 = vadd.f32 0.0, %v6271
        %v6273 = vpop.f32.mrb[0].mxu0
        %6274 = vmatprep.mubr.f32.mxu0 0.0
        %6275 = vmatmul.mubr.f32.gmra.mrb[0].mxu0 %v5667
        %v6276 = vpop.f32.mrb[0].mxu0
        %v6277 = vadd.f32 0.0, %v6276
        %v6278 = vpop.f32.mrb[0].mxu0
        %6279 = vdwg.mxu0
        %6296 = vrot.lane.b32.xlu0 %v3384, 64
        %v6297 = vpop.permute.xlu0 %6296
        %6298 = vrot.lane.b32.xlu0 %v3385, 64
        %v6299 = vpop.permute.xlu0 %6298
        %6300 = vrot.lane.b32.xlu0 %v3386, 64
        %v6301 = vpop.permute.xlu0 %6300
        %6302 = vrot.lane.b32.xlu0 %v3387, 64
        %v6303 = vpop.permute.xlu0 %6302
        %6304 = vrot.lane.b32.xlu0 %v3388, 64
        %v6305 = vpop.permute.xlu0 %6304
        %6306 = vrot.lane.b32.xlu0 %v3389, 64
        %v6307 = vpop.permute.xlu0 %6306
        %6308 = vrot.lane.b32.xlu0 %v3390, 64
        %v6309 = vpop.permute.xlu0 %6308
        %6310 = vrot.lane.b32.xlu0 %v3391, 64
        %v6311 = vpop.permute.xlu0 %6310
        %6312 = vrot.lane.b32.xlu0 %v3392, 64
        %v6313 = vpop.permute.xlu0 %6312
        %6314 = vrot.lane.b32.xlu0 %v3393, 64
        %v6315 = vpop.permute.xlu0 %6314
        %6316 = vrot.lane.b32.xlu0 %v3394, 64
        %v6317 = vpop.permute.xlu0 %6316
        %6318 = vrot.lane.b32.xlu0 %v3395, 64
        %v6319 = vpop.permute.xlu0 %6318
        %6320 = vrot.lane.b32.xlu0 %v3396, 64
        %v6321 = vpop.permute.xlu0 %6320
        %6322 = vrot.lane.b32.xlu0 %v3397, 64
        %v6323 = vpop.permute.xlu0 %6322
        %6324 = vrot.lane.b32.xlu0 %v3398, 64
        %v6325 = vpop.permute.xlu0 %6324
        %6326 = vrot.lane.b32.xlu0 %v3399, 64
        %v6327 = vpop.permute.xlu0 %6326
        %6344 = vmatprep.subr.mxu0 0.0
        %6345 = vmatpush1.msra.mxu0 %v6297
        %6346 = vmatprep.subr.mxu0 0.0
        %6347 = vmatpush1.msra.mxu0 %v6299
        %6348 = vmatprep.subr.mxu0 0.0
        %6349 = vmatpush1.msra.mxu0 %v6301
        %6350 = vmatprep.subr.mxu0 0.0
        %6351 = vmatpush1.msra.mxu0 %v6303
        %6352 = vmatprep.subr.mxu0 0.0
        %6353 = vmatpush1.msra.mxu0 %v6305
        %6354 = vmatprep.subr.mxu0 0.0
        %6355 = vmatpush1.msra.mxu0 %v6307
        %6356 = vmatprep.subr.mxu0 0.0
        %6357 = vmatpush1.msra.mxu0 %v6309
        %6358 = vmatprep.subr.mxu0 0.0
        %6359 = vmatpush1.msra.mxu0 %v6311
        %6360 = vmatprep.subr.mxu0 0.0
        %6361 = vmatpush1.msra.mxu0 %v6313
        %6362 = vmatprep.subr.mxu0 0.0
        %6363 = vmatpush1.msra.mxu0 %v6315
        %6364 = vmatprep.subr.mxu0 0.0
        %6365 = vmatpush1.msra.mxu0 %v6317
        %6366 = vmatprep.subr.mxu0 0.0
        %6367 = vmatpush1.msra.mxu0 %v6319
        %6368 = vmatprep.subr.mxu0 0.0
        %6369 = vmatpush1.msra.mxu0 %v6321
        %6370 = vmatprep.subr.mxu0 0.0
        %6371 = vmatpush1.msra.mxu0 %v6323
        %6372 = vmatprep.subr.mxu0 0.0
        %6373 = vmatpush1.msra.mxu0 %v6325
        %6374 = vmatprep.subr.mxu0 0.0
        %6375 = vmatpush1.msra.mxu0 %v6327
        %6376 = vmatprep.subr.mxu0 0.0
        %6377 = vmatpush1.msra.mxu0 0.0
        %6378 = vmatprep.subr.mxu0 0.0
        %6379 = vmatpush1.msra.mxu0 0.0
        %6380 = vmatprep.subr.mxu0 0.0
        %6381 = vmatpush1.msra.mxu0 0.0
        %6382 = vmatprep.subr.mxu0 0.0
        %6383 = vmatpush1.msra.mxu0 0.0
        %6384 = vmatprep.subr.mxu0 0.0
        %6385 = vmatpush1.msra.mxu0 0.0
        %6386 = vmatprep.subr.mxu0 0.0
        %6387 = vmatpush1.msra.mxu0 0.0
        %6388 = vmatprep.subr.mxu0 0.0
        %6389 = vmatpush1.msra.mxu0 0.0
        %6390 = vmatprep.subr.mxu0 0.0
        %6391 = vmatpush1.msra.mxu0 0.0
        %6392 = vmatprep.subr.mxu0 0.0
        %6393 = vmatpush1.msra.mxu0 0.0
        %6394 = vmatprep.subr.mxu0 0.0
        %6395 = vmatpush1.msra.mxu0 0.0
        %6396 = vmatprep.subr.mxu0 0.0
        %6397 = vmatpush1.msra.mxu0 0.0
        %6398 = vmatprep.subr.mxu0 0.0
        %6399 = vmatpush1.msra.mxu0 0.0
        %6400 = vmatprep.subr.mxu0 0.0
        %6401 = vmatpush1.msra.mxu0 0.0
        %6402 = vmatprep.subr.mxu0 0.0
        %6403 = vmatpush1.msra.mxu0 0.0
        %6404 = vmatprep.subr.mxu0 0.0
        %6405 = vmatpush1.msra.mxu0 0.0
        %6406 = vmatprep.subr.mxu0 0.0
        %6407 = vmatpush1.msra.mxu0 0.0
        %6408 = vmatprep.mubr.f32.mxu0 0.0
        %6409 = vmatmul.mubr.f32.gmra.mrb[0].mxu0 %v5668
        %v6410 = vpop.f32.mrb[0].mxu0
        %v6411 = vadd.f32 0.0, %v6410
        %v6412 = vpop.f32.mrb[0].mxu0
        %6413 = vmatprep.mubr.f32.mxu0 0.0
        %6414 = vmatmul.mubr.f32.gmra.mrb[0].mxu0 %v5669
        %v6415 = vpop.f32.mrb[0].mxu0
        %v6416 = vadd.f32 0.0, %v6415
        %v6417 = vpop.f32.mrb[0].mxu0
        %6418 = vdwg.mxu0
        %6435 = vrot.lane.b32.xlu0 %v3400, 64
        %v6436 = vpop.permute.xlu0 %6435
        %6437 = vrot.lane.b32.xlu0 %v3401, 64
        %v6438 = vpop.permute.xlu0 %6437
        %6439 = vrot.lane.b32.xlu0 %v3402, 64
        %v6440 = vpop.permute.xlu0 %6439
        %6441 = vrot.lane.b32.xlu0 %v3403, 64
        %v6442 = vpop.permute.xlu0 %6441
        %6443 = vrot.lane.b32.xlu0 %v3404, 64
        %v6444 = vpop.permute.xlu0 %6443
        %6445 = vrot.lane.b32.xlu0 %v3405, 64
        %v6446 = vpop.permute.xlu0 %6445
        %6447 = vrot.lane.b32.xlu0 %v3406, 64
        %v6448 = vpop.permute.xlu0 %6447
        %6449 = vrot.lane.b32.xlu0 %v3407, 64
        %v6450 = vpop.permute.xlu0 %6449
        %6451 = vrot.lane.b32.xlu0 %v3408, 64
        %v6452 = vpop.permute.xlu0 %6451
        %6453 = vrot.lane.b32.xlu0 %v3409, 64
        %v6454 = vpop.permute.xlu0 %6453
        %6455 = vrot.lane.b32.xlu0 %v3410, 64
        %v6456 = vpop.permute.xlu0 %6455
        %6457 = vrot.lane.b32.xlu0 %v3411, 64
        %v6458 = vpop.permute.xlu0 %6457
        %6459 = vrot.lane.b32.xlu0 %v3412, 64
        %v6460 = vpop.permute.xlu0 %6459
        %6461 = vrot.lane.b32.xlu0 %v3413, 64
        %v6462 = vpop.permute.xlu0 %6461
        %6463 = vrot.lane.b32.xlu0 %v3414, 64
        %v6464 = vpop.permute.xlu0 %6463
        %6465 = vrot.lane.b32.xlu0 %v3415, 64
        %v6466 = vpop.permute.xlu0 %6465
        %6483 = vmatprep.subr.mxu0 0.0
        %6484 = vmatpush1.msra.mxu0 %v6436
        %6485 = vmatprep.subr.mxu0 0.0
        %6486 = vmatpush1.msra.mxu0 %v6438
        %6487 = vmatprep.subr.mxu0 0.0
        %6488 = vmatpush1.msra.mxu0 %v6440
        %6489 = vmatprep.subr.mxu0 0.0
        %6490 = vmatpush1.msra.mxu0 %v6442
        %6491 = vmatprep.subr.mxu0 0.0
        %6492 = vmatpush1.msra.mxu0 %v6444
        %6493 = vmatprep.subr.mxu0 0.0
        %6494 = vmatpush1.msra.mxu0 %v6446
        %6495 = vmatprep.subr.mxu0 0.0
        %6496 = vmatpush1.msra.mxu0 %v6448
        %6497 = vmatprep.subr.mxu0 0.0
        %6498 = vmatpush1.msra.mxu0 %v6450
        %6499 = vmatprep.subr.mxu0 0.0
        %6500 = vmatpush1.msra.mxu0 %v6452
        %6501 = vmatprep.subr.mxu0 0.0
        %6502 = vmatpush1.msra.mxu0 %v6454
        %6503 = vmatprep.subr.mxu0 0.0
        %6504 = vmatpush1.msra.mxu0 %v6456
        %6505 = vmatprep.subr.mxu0 0.0
        %6506 = vmatpush1.msra.mxu0 %v6458
        %6507 = vmatprep.subr.mxu0 0.0
        %6508 = vmatpush1.msra.mxu0 %v6460
        %6509 = vmatprep.subr.mxu0 0.0
        %6510 = vmatpush1.msra.mxu0 %v6462
        %6511 = vmatprep.subr.mxu0 0.0
        %6512 = vmatpush1.msra.mxu0 %v6464
        %6513 = vmatprep.subr.mxu0 0.0
        %6514 = vmatpush1.msra.mxu0 %v6466
        %6515 = vmatprep.subr.mxu0 0.0
        %6516 = vmatpush1.msra.mxu0 0.0
        %6517 = vmatprep.subr.mxu0 0.0
        %6518 = vmatpush1.msra.mxu0 0.0
        %6519 = vmatprep.subr.mxu0 0.0
        %6520 = vmatpush1.msra.mxu0 0.0
        %6521 = vmatprep.subr.mxu0 0.0
        %6522 = vmatpush1.msra.mxu0 0.0
        %6523 = vmatprep.subr.mxu0 0.0
        %6524 = vmatpush1.msra.mxu0 0.0
        %6525 = vmatprep.subr.mxu0 0.0
        %6526 = vmatpush1.msra.mxu0 0.0
        %6527 = vmatprep.subr.mxu0 0.0
        %6528 = vmatpush1.msra.mxu0 0.0
        %6529 = vmatprep.subr.mxu0 0.0
        %6530 = vmatpush1.msra.mxu0 0.0
        %6531 = vmatprep.subr.mxu0 0.0
        %6532 = vmatpush1.msra.mxu0 0.0
        %6533 = vmatprep.subr.mxu0 0.0
        %6534 = vmatpush1.msra.mxu0 0.0
        %6535 = vmatprep.subr.mxu0 0.0
        %6536 = vmatpush1.msra.mxu0 0.0
        %6537 = vmatprep.subr.mxu0 0.0
        %6538 = vmatpush1.msra.mxu0 0.0
        %6539 = vmatprep.subr.mxu0 0.0
        %6540 = vmatpush1.msra.mxu0 0.0
        %6541 = vmatprep.subr.mxu0 0.0
        %6542 = vmatpush1.msra.mxu0 0.0
        %6543 = vmatprep.subr.mxu0 0.0
        %6544 = vmatpush1.msra.mxu0 0.0
        %6545 = vmatprep.subr.mxu0 0.0
        %6546 = vmatpush1.msra.mxu0 0.0
        %6547 = vmatprep.mubr.f32.mxu0 0.0
        %6548 = vmatmul.mubr.f32.gmra.mrb[0].mxu0 %v5670
        %v6549 = vpop.f32.mrb[0].mxu0
        %v6550 = vadd.f32 0.0, %v6549
        %v6551 = vpop.f32.mrb[0].mxu0
        %6552 = vmatprep.mubr.f32.mxu0 0.0
        %6553 = vmatmul.mubr.f32.gmra.mrb[0].mxu0 %v5671
        %v6554 = vpop.f32.mrb[0].mxu0
        %v6555 = vadd.f32 0.0, %v6554
        %v6556 = vpop.f32.mrb[0].mxu0
        %6557 = vdwg.mxu0
        %6574 = vrot.lane.b32.xlu0 %v3416, 64
        %v6575 = vpop.permute.xlu0 %6574
        %6576 = vrot.lane.b32.xlu0 %v3417, 64
        %v6577 = vpop.permute.xlu0 %6576
        %6578 = vrot.lane.b32.xlu0 %v3418, 64
        %v6579 = vpop.permute.xlu0 %6578
        %6580 = vrot.lane.b32.xlu0 %v3419, 64
        %v6581 = vpop.permute.xlu0 %6580
        %6582 = vrot.lane.b32.xlu0 %v3420, 64
        %v6583 = vpop.permute.xlu0 %6582
        %6584 = vrot.lane.b32.xlu0 %v3421, 64
        %v6585 = vpop.permute.xlu0 %6584
        %6586 = vrot.lane.b32.xlu0 %v3422, 64
        %v6587 = vpop.permute.xlu0 %6586
        %6588 = vrot.lane.b32.xlu0 %v3423, 64
        %v6589 = vpop.permute.xlu0 %6588
        %6590 = vrot.lane.b32.xlu0 %v3424, 64
        %v6591 = vpop.permute.xlu0 %6590
        %6592 = vrot.lane.b32.xlu0 %v3425, 64
        %v6593 = vpop.permute.xlu0 %6592
        %6594 = vrot.lane.b32.xlu0 %v3426, 64
        %v6595 = vpop.permute.xlu0 %6594
        %6596 = vrot.lane.b32.xlu0 %v3427, 64
        %v6597 = vpop.permute.xlu0 %6596
        %6598 = vrot.lane.b32.xlu0 %v3428, 64
        %v6599 = vpop.permute.xlu0 %6598
        %6600 = vrot.lane.b32.xlu0 %v3429, 64
        %v6601 = vpop.permute.xlu0 %6600
        %6602 = vrot.lane.b32.xlu0 %v3430, 64
        %v6603 = vpop.permute.xlu0 %6602
        %6604 = vrot.lane.b32.xlu0 %v3431, 64
        %v6605 = vpop.permute.xlu0 %6604
        %6622 = vmatprep.subr.mxu0 0.0
        %6623 = vmatpush1.msra.mxu0 %v6575
        %6624 = vmatprep.subr.mxu0 0.0
        %6625 = vmatpush1.msra.mxu0 %v6577
        %6626 = vmatprep.subr.mxu0 0.0
        %6627 = vmatpush1.msra.mxu0 %v6579
        %6628 = vmatprep.subr.mxu0 0.0
        %6629 = vmatpush1.msra.mxu0 %v6581
        %6630 = vmatprep.subr.mxu0 0.0
        %6631 = vmatpush1.msra.mxu0 %v6583
        %6632 = vmatprep.subr.mxu0 0.0
        %6633 = vmatpush1.msra.mxu0 %v6585
        %6634 = vmatprep.subr.mxu0 0.0
        %6635 = vmatpush1.msra.mxu0 %v6587
        %6636 = vmatprep.subr.mxu0 0.0
        %6637 = vmatpush1.msra.mxu0 %v6589
        %6638 = vmatprep.subr.mxu0 0.0
        %6639 = vmatpush1.msra.mxu0 %v6591
        %6640 = vmatprep.subr.mxu0 0.0
        %6641 = vmatpush1.msra.mxu0 %v6593
        %6642 = vmatprep.subr.mxu0 0.0
        %6643 = vmatpush1.msra.mxu0 %v6595
        %6644 = vmatprep.subr.mxu0 0.0
        %6645 = vmatpush1.msra.mxu0 %v6597
        %6646 = vmatprep.subr.mxu0 0.0
        %6647 = vmatpush1.msra.mxu0 %v6599
        %6648 = vmatprep.subr.mxu0 0.0
        %6649 = vmatpush1.msra.mxu0 %v6601
        %6650 = vmatprep.subr.mxu0 0.0
        %6651 = vmatpush1.msra.mxu0 %v6603
        %6652 = vmatprep.subr.mxu0 0.0
        %6653 = vmatpush1.msra.mxu0 %v6605
        %6654 = vmatprep.subr.mxu0 0.0
        %6655 = vmatpush1.msra.mxu0 0.0
        %6656 = vmatprep.subr.mxu0 0.0
        %6657 = vmatpush1.msra.mxu0 0.0
        %6658 = vmatprep.subr.mxu0 0.0
        %6659 = vmatpush1.msra.mxu0 0.0
        %6660 = vmatprep.subr.mxu0 0.0
        %6661 = vmatpush1.msra.mxu0 0.0
        %6662 = vmatprep.subr.mxu0 0.0
        %6663 = vmatpush1.msra.mxu0 0.0
        %6664 = vmatprep.subr.mxu0 0.0
        %6665 = vmatpush1.msra.mxu0 0.0
        %6666 = vmatprep.subr.mxu0 0.0
        %6667 = vmatpush1.msra.mxu0 0.0
        %6668 = vmatprep.subr.mxu0 0.0
        %6669 = vmatpush1.msra.mxu0 0.0
        %6670 = vmatprep.subr.mxu0 0.0
        %6671 = vmatpush1.msra.mxu0 0.0
        %6672 = vmatprep.subr.mxu0 0.0
        %6673 = vmatpush1.msra.mxu0 0.0
        %6674 = vmatprep.subr.mxu0 0.0
        %6675 = vmatpush1.msra.mxu0 0.0
        %6676 = vmatprep.subr.mxu0 0.0
        %6677 = vmatpush1.msra.mxu0 0.0
        %6678 = vmatprep.subr.mxu0 0.0
        %6679 = vmatpush1.msra.mxu0 0.0
        %6680 = vmatprep.subr.mxu0 0.0
        %6681 = vmatpush1.msra.mxu0 0.0
        %6682 = vmatprep.subr.mxu0 0.0
        %6683 = vmatpush1.msra.mxu0 0.0
        %6684 = vmatprep.subr.mxu0 0.0
        %6685 = vmatpush1.msra.mxu0 0.0
        %6686 = vmatprep.mubr.f32.mxu0 0.0
        %6687 = vmatmul.mubr.f32.gmra.mrb[0].mxu0 %v5672
        %v6688 = vpop.f32.mrb[0].mxu0
        %v6689 = vadd.f32 0.0, %v6688
        %v6690 = vpop.f32.mrb[0].mxu0
        %6691 = vmatprep.mubr.f32.mxu0 0.0
        %6692 = vmatmul.mubr.f32.gmra.mrb[0].mxu0 %v5673
        %v6693 = vpop.f32.mrb[0].mxu0
        %v6694 = vadd.f32 0.0, %v6693
        %v6695 = vpop.f32.mrb[0].mxu0
        %6696 = vdwg.mxu0
        %6713 = vrot.lane.b32.xlu0 %v3432, 64
        %v6714 = vpop.permute.xlu0 %6713
        %6715 = vrot.lane.b32.xlu0 %v3433, 64
        %v6716 = vpop.permute.xlu0 %6715
        %6717 = vrot.lane.b32.xlu0 %v3434, 64
        %v6718 = vpop.permute.xlu0 %6717
        %6719 = vrot.lane.b32.xlu0 %v3435, 64
        %v6720 = vpop.permute.xlu0 %6719
        %6721 = vrot.lane.b32.xlu0 %v3436, 64
        %v6722 = vpop.permute.xlu0 %6721
        %6723 = vrot.lane.b32.xlu0 %v3437, 64
        %v6724 = vpop.permute.xlu0 %6723
        %6725 = vrot.lane.b32.xlu0 %v3438, 64
        %v6726 = vpop.permute.xlu0 %6725
        %6727 = vrot.lane.b32.xlu0 %v3439, 64
        %v6728 = vpop.permute.xlu0 %6727
        %6729 = vrot.lane.b32.xlu0 %v3440, 64
        %v6730 = vpop.permute.xlu0 %6729
        %6731 = vrot.lane.b32.xlu0 %v3441, 64
        %v6732 = vpop.permute.xlu0 %6731
        %6733 = vrot.lane.b32.xlu0 %v3442, 64
        %v6734 = vpop.permute.xlu0 %6733
        %6735 = vrot.lane.b32.xlu0 %v3443, 64
        %v6736 = vpop.permute.xlu0 %6735
        %6737 = vrot.lane.b32.xlu0 %v3444, 64
        %v6738 = vpop.permute.xlu0 %6737
        %6739 = vrot.lane.b32.xlu0 %v3445, 64
        %v6740 = vpop.permute.xlu0 %6739
        %6741 = vrot.lane.b32.xlu0 %v3446, 64
        %v6742 = vpop.permute.xlu0 %6741
        %6743 = vrot.lane.b32.xlu0 %v3447, 64
        %v6744 = vpop.permute.xlu0 %6743
        %6761 = vmatprep.subr.mxu0 0.0
        %6762 = vmatpush1.msra.mxu0 %v6714
        %6763 = vmatprep.subr.mxu0 0.0
        %6764 = vmatpush1.msra.mxu0 %v6716
        %6765 = vmatprep.subr.mxu0 0.0
        %6766 = vmatpush1.msra.mxu0 %v6718
        %6767 = vmatprep.subr.mxu0 0.0
        %6768 = vmatpush1.msra.mxu0 %v6720
        %6769 = vmatprep.subr.mxu0 0.0
        %6770 = vmatpush1.msra.mxu0 %v6722
        %6771 = vmatprep.subr.mxu0 0.0
        %6772 = vmatpush1.msra.mxu0 %v6724
        %6773 = vmatprep.subr.mxu0 0.0
        %6774 = vmatpush1.msra.mxu0 %v6726
        %6775 = vmatprep.subr.mxu0 0.0
        %6776 = vmatpush1.msra.mxu0 %v6728
        %6777 = vmatprep.subr.mxu0 0.0
        %6778 = vmatpush1.msra.mxu0 %v6730
        %6779 = vmatprep.subr.mxu0 0.0
        %6780 = vmatpush1.msra.mxu0 %v6732
        %6781 = vmatprep.subr.mxu0 0.0
        %6782 = vmatpush1.msra.mxu0 %v6734
        %6783 = vmatprep.subr.mxu0 0.0
        %6784 = vmatpush1.msra.mxu0 %v6736
        %6785 = vmatprep.subr.mxu0 0.0
        %6786 = vmatpush1.msra.mxu0 %v6738
        %6787 = vmatprep.subr.mxu0 0.0
        %6788 = vmatpush1.msra.mxu0 %v6740
        %6789 = vmatprep.subr.mxu0 0.0
        %6790 = vmatpush1.msra.mxu0 %v6742
        %6791 = vmatprep.subr.mxu0 0.0
        %6792 = vmatpush1.msra.mxu0 %v6744
        %6793 = vmatprep.subr.mxu0 0.0
        %6794 = vmatpush1.msra.mxu0 0.0
        %6795 = vmatprep.subr.mxu0 0.0
        %6796 = vmatpush1.msra.mxu0 0.0
        %6797 = vmatprep.subr.mxu0 0.0
        %6798 = vmatpush1.msra.mxu0 0.0
        %6799 = vmatprep.subr.mxu0 0.0
        %6800 = vmatpush1.msra.mxu0 0.0
        %6801 = vmatprep.subr.mxu0 0.0
        %6802 = vmatpush1.msra.mxu0 0.0
        %6803 = vmatprep.subr.mxu0 0.0
        %6804 = vmatpush1.msra.mxu0 0.0
        %6805 = vmatprep.subr.mxu0 0.0
        %6806 = vmatpush1.msra.mxu0 0.0
        %6807 = vmatprep.subr.mxu0 0.0
        %6808 = vmatpush1.msra.mxu0 0.0
        %6809 = vmatprep.subr.mxu0 0.0
        %6810 = vmatpush1.msra.mxu0 0.0
        %6811 = vmatprep.subr.mxu0 0.0
        %6812 = vmatpush1.msra.mxu0 0.0
        %6813 = vmatprep.subr.mxu0 0.0
        %6814 = vmatpush1.msra.mxu0 0.0
        %6815 = vmatprep.subr.mxu0 0.0
        %6816 = vmatpush1.msra.mxu0 0.0
        %6817 = vmatprep.subr.mxu0 0.0
        %6818 = vmatpush1.msra.mxu0 0.0
        %6819 = vmatprep.subr.mxu0 0.0
        %6820 = vmatpush1.msra.mxu0 0.0
        %6821 = vmatprep.subr.mxu0 0.0
        %6822 = vmatpush1.msra.mxu0 0.0
        %6823 = vmatprep.subr.mxu0 0.0
        %6824 = vmatpush1.msra.mxu0 0.0
        %6825 = vmatprep.mubr.f32.mxu0 0.0
        %6826 = vmatmul.mubr.f32.gmra.mrb[0].mxu0 %v5674
        %v6827 = vpop.f32.mrb[0].mxu0
        %v6828 = vadd.f32 0.0, %v6827
        %v6829 = vpop.f32.mrb[0].mxu0
        %6830 = vmatprep.mubr.f32.mxu0 0.0
        %6831 = vmatmul.mubr.f32.gmra.mrb[0].mxu0 %v5675
        %v6832 = vpop.f32.mrb[0].mxu0
        %v6833 = vadd.f32 0.0, %v6832
        %v6834 = vpop.f32.mrb[0].mxu0
        %6835 = vdwg.mxu0
        %6852 = vrot.lane.b32.xlu0 %v3448, 64
        %v6853 = vpop.permute.xlu0 %6852
        %6854 = vrot.lane.b32.xlu0 %v3449, 64
        %v6855 = vpop.permute.xlu0 %6854
        %6856 = vrot.lane.b32.xlu0 %v3450, 64
        %v6857 = vpop.permute.xlu0 %6856
        %6858 = vrot.lane.b32.xlu0 %v3451, 64
        %v6859 = vpop.permute.xlu0 %6858
        %6860 = vrot.lane.b32.xlu0 %v3452, 64
        %v6861 = vpop.permute.xlu0 %6860
        %6862 = vrot.lane.b32.xlu0 %v3453, 64
        %v6863 = vpop.permute.xlu0 %6862
        %6864 = vrot.lane.b32.xlu0 %v3454, 64
        %v6865 = vpop.permute.xlu0 %6864
        %6866 = vrot.lane.b32.xlu0 %v3455, 64
        %v6867 = vpop.permute.xlu0 %6866
        %6868 = vrot.lane.b32.xlu0 %v3456, 64
        %v6869 = vpop.permute.xlu0 %6868
        %6870 = vrot.lane.b32.xlu0 %v3457, 64
        %v6871 = vpop.permute.xlu0 %6870
        %6872 = vrot.lane.b32.xlu0 %v3458, 64
        %v6873 = vpop.permute.xlu0 %6872
        %6874 = vrot.lane.b32.xlu0 %v3459, 64
        %v6875 = vpop.permute.xlu0 %6874
        %6876 = vrot.lane.b32.xlu0 %v3460, 64
        %v6877 = vpop.permute.xlu0 %6876
        %6878 = vrot.lane.b32.xlu0 %v3461, 64
        %v6879 = vpop.permute.xlu0 %6878
        %6880 = vrot.lane.b32.xlu0 %v3462, 64
        %v6881 = vpop.permute.xlu0 %6880
        %6882 = vrot.lane.b32.xlu0 %v3463, 64
        %v6883 = vpop.permute.xlu0 %6882
        %6900 = vmatprep.subr.mxu0 0.0
        %6901 = vmatpush1.msra.mxu0 %v6853
        %6902 = vmatprep.subr.mxu0 0.0
        %6903 = vmatpush1.msra.mxu0 %v6855
        %6904 = vmatprep.subr.mxu0 0.0
        %6905 = vmatpush1.msra.mxu0 %v6857
        %6906 = vmatprep.subr.mxu0 0.0
        %6907 = vmatpush1.msra.mxu0 %v6859
        %6908 = vmatprep.subr.mxu0 0.0
        %6909 = vmatpush1.msra.mxu0 %v6861
        %6910 = vmatprep.subr.mxu0 0.0
        %6911 = vmatpush1.msra.mxu0 %v6863
        %6912 = vmatprep.subr.mxu0 0.0
        %6913 = vmatpush1.msra.mxu0 %v6865
        %6914 = vmatprep.subr.mxu0 0.0
        %6915 = vmatpush1.msra.mxu0 %v6867
        %6916 = vmatprep.subr.mxu0 0.0
        %6917 = vmatpush1.msra.mxu0 %v6869
        %6918 = vmatprep.subr.mxu0 0.0
        %6919 = vmatpush1.msra.mxu0 %v6871
        %6920 = vmatprep.subr.mxu0 0.0
        %6921 = vmatpush1.msra.mxu0 %v6873
        %6922 = vmatprep.subr.mxu0 0.0
        %6923 = vmatpush1.msra.mxu0 %v6875
        %6924 = vmatprep.subr.mxu0 0.0
        %6925 = vmatpush1.msra.mxu0 %v6877
        %6926 = vmatprep.subr.mxu0 0.0
        %6927 = vmatpush1.msra.mxu0 %v6879
        %6928 = vmatprep.subr.mxu0 0.0
        %6929 = vmatpush1.msra.mxu0 %v6881
        %6930 = vmatprep.subr.mxu0 0.0
        %6931 = vmatpush1.msra.mxu0 %v6883
        %6932 = vmatprep.subr.mxu0 0.0
        %6933 = vmatpush1.msra.mxu0 0.0
        %6934 = vmatprep.subr.mxu0 0.0
        %6935 = vmatpush1.msra.mxu0 0.0
        %6936 = vmatprep.subr.mxu0 0.0
        %6937 = vmatpush1.msra.mxu0 0.0
        %6938 = vmatprep.subr.mxu0 0.0
        %6939 = vmatpush1.msra.mxu0 0.0
        %6940 = vmatprep.subr.mxu0 0.0
        %6941 = vmatpush1.msra.mxu0 0.0
        %6942 = vmatprep.subr.mxu0 0.0
        %6943 = vmatpush1.msra.mxu0 0.0
        %6944 = vmatprep.subr.mxu0 0.0
        %6945 = vmatpush1.msra.mxu0 0.0
        %6946 = vmatprep.subr.mxu0 0.0
        %6947 = vmatpush1.msra.mxu0 0.0
        %6948 = vmatprep.subr.mxu0 0.0
        %6949 = vmatpush1.msra.mxu0 0.0
        %6950 = vmatprep.subr.mxu0 0.0
        %6951 = vmatpush1.msra.mxu0 0.0
        %6952 = vmatprep.subr.mxu0 0.0
        %6953 = vmatpush1.msra.mxu0 0.0
        %6954 = vmatprep.subr.mxu0 0.0
        %6955 = vmatpush1.msra.mxu0 0.0
        %6956 = vmatprep.subr.mxu0 0.0
        %6957 = vmatpush1.msra.mxu0 0.0
        %6958 = vmatprep.subr.mxu0 0.0
        %6959 = vmatpush1.msra.mxu0 0.0
        %6960 = vmatprep.subr.mxu0 0.0
        %6961 = vmatpush1.msra.mxu0 0.0
        %6962 = vmatprep.subr.mxu0 0.0
        %6963 = vmatpush1.msra.mxu0 0.0
        %6964 = vmatprep.mubr.f32.mxu0 0.0
        %6965 = vmatmul.mubr.f32.gmra.mrb[0].mxu0 %v5676
        %v6966 = vpop.f32.mrb[0].mxu0
        %v6967 = vadd.f32 0.0, %v6966
        %v6968 = vpop.f32.mrb[0].mxu0
        %6969 = vmatprep.mubr.f32.mxu0 0.0
        %6970 = vmatmul.mubr.f32.gmra.mrb[0].mxu0 %v5677
        %v6971 = vpop.f32.mrb[0].mxu0
        %v6972 = vadd.f32 0.0, %v6971
        %v6973 = vpop.f32.mrb[0].mxu0
        %6974 = vdwg.mxu0
        %6991 = vrot.lane.b32.xlu0 %v3464, 64
        %v6992 = vpop.permute.xlu0 %6991
        %6993 = vrot.lane.b32.xlu0 %v3465, 64
        %v6994 = vpop.permute.xlu0 %6993
        %6995 = vrot.lane.b32.xlu0 %v3466, 64
        %v6996 = vpop.permute.xlu0 %6995
        %6997 = vrot.lane.b32.xlu0 %v3467, 64
        %v6998 = vpop.permute.xlu0 %6997
        %6999 = vrot.lane.b32.xlu0 %v3468, 64
        %v7000 = vpop.permute.xlu0 %6999
        %7001 = vrot.lane.b32.xlu0 %v3469, 64
        %v7002 = vpop.permute.xlu0 %7001
        %7003 = vrot.lane.b32.xlu0 %v3470, 64
        %v7004 = vpop.permute.xlu0 %7003
        %7005 = vrot.lane.b32.xlu0 %v3471, 64
        %v7006 = vpop.permute.xlu0 %7005
        %7007 = vrot.lane.b32.xlu0 %v3472, 64
        %v7008 = vpop.permute.xlu0 %7007
        %7009 = vrot.lane.b32.xlu0 %v3473, 64
        %v7010 = vpop.permute.xlu0 %7009
        %7011 = vrot.lane.b32.xlu0 %v3474, 64
        %v7012 = vpop.permute.xlu0 %7011
        %7013 = vrot.lane.b32.xlu0 %v3475, 64
        %v7014 = vpop.permute.xlu0 %7013
        %7015 = vrot.lane.b32.xlu0 %v3476, 64
        %v7016 = vpop.permute.xlu0 %7015
        %7017 = vrot.lane.b32.xlu0 %v3477, 64
        %v7018 = vpop.permute.xlu0 %7017
        %7019 = vrot.lane.b32.xlu0 %v3478, 64
        %v7020 = vpop.permute.xlu0 %7019
        %7021 = vrot.lane.b32.xlu0 %v3479, 64
        %v7022 = vpop.permute.xlu0 %7021
        %7039 = vmatprep.subr.mxu0 0.0
        %7040 = vmatpush1.msra.mxu0 %v6992
        %7041 = vmatprep.subr.mxu0 0.0
        %7042 = vmatpush1.msra.mxu0 %v6994
        %7043 = vmatprep.subr.mxu0 0.0
        %7044 = vmatpush1.msra.mxu0 %v6996
        %7045 = vmatprep.subr.mxu0 0.0
        %7046 = vmatpush1.msra.mxu0 %v6998
        %7047 = vmatprep.subr.mxu0 0.0
        %7048 = vmatpush1.msra.mxu0 %v7000
        %7049 = vmatprep.subr.mxu0 0.0
        %7050 = vmatpush1.msra.mxu0 %v7002
        %7051 = vmatprep.subr.mxu0 0.0
        %7052 = vmatpush1.msra.mxu0 %v7004
        %7053 = vmatprep.subr.mxu0 0.0
        %7054 = vmatpush1.msra.mxu0 %v7006
        %7055 = vmatprep.subr.mxu0 0.0
        %7056 = vmatpush1.msra.mxu0 %v7008
        %7057 = vmatprep.subr.mxu0 0.0
        %7058 = vmatpush1.msra.mxu0 %v7010
        %7059 = vmatprep.subr.mxu0 0.0
        %7060 = vmatpush1.msra.mxu0 %v7012
        %7061 = vmatprep.subr.mxu0 0.0
        %7062 = vmatpush1.msra.mxu0 %v7014
        %7063 = vmatprep.subr.mxu0 0.0
        %7064 = vmatpush1.msra.mxu0 %v7016
        %7065 = vmatprep.subr.mxu0 0.0
        %7066 = vmatpush1.msra.mxu0 %v7018
        %7067 = vmatprep.subr.mxu0 0.0
        %7068 = vmatpush1.msra.mxu0 %v7020
        %7069 = vmatprep.subr.mxu0 0.0
        %7070 = vmatpush1.msra.mxu0 %v7022
        %7071 = vmatprep.subr.mxu0 0.0
        %7072 = vmatpush1.msra.mxu0 0.0
        %7073 = vmatprep.subr.mxu0 0.0
        %7074 = vmatpush1.msra.mxu0 0.0
        %7075 = vmatprep.subr.mxu0 0.0
        %7076 = vmatpush1.msra.mxu0 0.0
        %7077 = vmatprep.subr.mxu0 0.0
        %7078 = vmatpush1.msra.mxu0 0.0
        %7079 = vmatprep.subr.mxu0 0.0
        %7080 = vmatpush1.msra.mxu0 0.0
        %7081 = vmatprep.subr.mxu0 0.0
        %7082 = vmatpush1.msra.mxu0 0.0
        %7083 = vmatprep.subr.mxu0 0.0
        %7084 = vmatpush1.msra.mxu0 0.0
        %7085 = vmatprep.subr.mxu0 0.0
        %7086 = vmatpush1.msra.mxu0 0.0
        %7087 = vmatprep.subr.mxu0 0.0
        %7088 = vmatpush1.msra.mxu0 0.0
        %7089 = vmatprep.subr.mxu0 0.0
        %7090 = vmatpush1.msra.mxu0 0.0
        %7091 = vmatprep.subr.mxu0 0.0
        %7092 = vmatpush1.msra.mxu0 0.0
        %7093 = vmatprep.subr.mxu0 0.0
        %7094 = vmatpush1.msra.mxu0 0.0
        %7095 = vmatprep.subr.mxu0 0.0
        %7096 = vmatpush1.msra.mxu0 0.0
        %7097 = vmatprep.subr.mxu0 0.0
        %7098 = vmatpush1.msra.mxu0 0.0
        %7099 = vmatprep.subr.mxu0 0.0
        %7100 = vmatpush1.msra.mxu0 0.0
        %7101 = vmatprep.subr.mxu0 0.0
        %7102 = vmatpush1.msra.mxu0 0.0
        %7103 = vmatprep.mubr.f32.mxu0 0.0
        %7104 = vmatmul.mubr.f32.gmra.mrb[0].mxu0 %v5678
        %v7105 = vpop.f32.mrb[0].mxu0
        %v7106 = vadd.f32 0.0, %v7105
        %v7107 = vpop.f32.mrb[0].mxu0
        %7108 = vmatprep.mubr.f32.mxu0 0.0
        %7109 = vmatmul.mubr.f32.gmra.mrb[0].mxu0 %v5679
        %v7110 = vpop.f32.mrb[0].mxu0
        %v7111 = vadd.f32 0.0, %v7110
        %v7112 = vpop.f32.mrb[0].mxu0
        %7113 = vdwg.mxu0
        %7130 = vrot.lane.b32.xlu0 %v3480, 64
        %v7131 = vpop.permute.xlu0 %7130
        %7132 = vrot.lane.b32.xlu0 %v3481, 64
        %v7133 = vpop.permute.xlu0 %7132
        %7134 = vrot.lane.b32.xlu0 %v3482, 64
        %v7135 = vpop.permute.xlu0 %7134
        %7136 = vrot.lane.b32.xlu0 %v3483, 64
        %v7137 = vpop.permute.xlu0 %7136
        %7138 = vrot.lane.b32.xlu0 %v3484, 64
        %v7139 = vpop.permute.xlu0 %7138
        %7140 = vrot.lane.b32.xlu0 %v3485, 64
        %v7141 = vpop.permute.xlu0 %7140
        %7142 = vrot.lane.b32.xlu0 %v3486, 64
        %v7143 = vpop.permute.xlu0 %7142
        %7144 = vrot.lane.b32.xlu0 %v3487, 64
        %v7145 = vpop.permute.xlu0 %7144
        %7146 = vrot.lane.b32.xlu0 %v3488, 64
        %v7147 = vpop.permute.xlu0 %7146
        %7148 = vrot.lane.b32.xlu0 %v3489, 64
        %v7149 = vpop.permute.xlu0 %7148
        %7150 = vrot.lane.b32.xlu0 %v3490, 64
        %v7151 = vpop.permute.xlu0 %7150
        %7152 = vrot.lane.b32.xlu0 %v3491, 64
        %v7153 = vpop.permute.xlu0 %7152
        %7154 = vrot.lane.b32.xlu0 %v3492, 64
        %v7155 = vpop.permute.xlu0 %7154
        %7156 = vrot.lane.b32.xlu0 %v3493, 64
        %v7157 = vpop.permute.xlu0 %7156
        %7158 = vrot.lane.b32.xlu0 %v3494, 64
        %v7159 = vpop.permute.xlu0 %7158
        %7160 = vrot.lane.b32.xlu0 %v3495, 64
        %v7161 = vpop.permute.xlu0 %7160
        %7178 = vmatprep.subr.mxu0 0.0
        %7179 = vmatpush1.msra.mxu0 %v7131
        %7180 = vmatprep.subr.mxu0 0.0
        %7181 = vmatpush1.msra.mxu0 %v7133
        %7182 = vmatprep.subr.mxu0 0.0
        %7183 = vmatpush1.msra.mxu0 %v7135
        %7184 = vmatprep.subr.mxu0 0.0
        %7185 = vmatpush1.msra.mxu0 %v7137
        %7186 = vmatprep.subr.mxu0 0.0
        %7187 = vmatpush1.msra.mxu0 %v7139
        %7188 = vmatprep.subr.mxu0 0.0
        %7189 = vmatpush1.msra.mxu0 %v7141
        %7190 = vmatprep.subr.mxu0 0.0
        %7191 = vmatpush1.msra.mxu0 %v7143
        %7192 = vmatprep.subr.mxu0 0.0
        %7193 = vmatpush1.msra.mxu0 %v7145
        %7194 = vmatprep.subr.mxu0 0.0
        %7195 = vmatpush1.msra.mxu0 %v7147
        %7196 = vmatprep.subr.mxu0 0.0
        %7197 = vmatpush1.msra.mxu0 %v7149
        %7198 = vmatprep.subr.mxu0 0.0
        %7199 = vmatpush1.msra.mxu0 %v7151
        %7200 = vmatprep.subr.mxu0 0.0
        %7201 = vmatpush1.msra.mxu0 %v7153
        %7202 = vmatprep.subr.mxu0 0.0
        %7203 = vmatpush1.msra.mxu0 %v7155
        %7204 = vmatprep.subr.mxu0 0.0
        %7205 = vmatpush1.msra.mxu0 %v7157
        %7206 = vmatprep.subr.mxu0 0.0
        %7207 = vmatpush1.msra.mxu0 %v7159
        %7208 = vmatprep.subr.mxu0 0.0
        %7209 = vmatpush1.msra.mxu0 %v7161
        %7210 = vmatprep.subr.mxu0 0.0
        %7211 = vmatpush1.msra.mxu0 0.0
        %7212 = vmatprep.subr.mxu0 0.0
        %7213 = vmatpush1.msra.mxu0 0.0
        %7214 = vmatprep.subr.mxu0 0.0
        %7215 = vmatpush1.msra.mxu0 0.0
        %7216 = vmatprep.subr.mxu0 0.0
        %7217 = vmatpush1.msra.mxu0 0.0
        %7218 = vmatprep.subr.mxu0 0.0
        %7219 = vmatpush1.msra.mxu0 0.0
        %7220 = vmatprep.subr.mxu0 0.0
        %7221 = vmatpush1.msra.mxu0 0.0
        %7222 = vmatprep.subr.mxu0 0.0
        %7223 = vmatpush1.msra.mxu0 0.0
        %7224 = vmatprep.subr.mxu0 0.0
        %7225 = vmatpush1.msra.mxu0 0.0
        %7226 = vmatprep.subr.mxu0 0.0
        %7227 = vmatpush1.msra.mxu0 0.0
        %7228 = vmatprep.subr.mxu0 0.0
        %7229 = vmatpush1.msra.mxu0 0.0
        %7230 = vmatprep.subr.mxu0 0.0
        %7231 = vmatpush1.msra.mxu0 0.0
        %7232 = vmatprep.subr.mxu0 0.0
        %7233 = vmatpush1.msra.mxu0 0.0
        %7234 = vmatprep.subr.mxu0 0.0
        %7235 = vmatpush1.msra.mxu0 0.0
        %7236 = vmatprep.subr.mxu0 0.0
        %7237 = vmatpush1.msra.mxu0 0.0
        %7238 = vmatprep.subr.mxu0 0.0
        %7239 = vmatpush1.msra.mxu0 0.0
        %7240 = vmatprep.subr.mxu0 0.0
        %7241 = vmatpush1.msra.mxu0 0.0
        %7242 = vmatprep.mubr.f32.mxu0 0.0
        %7243 = vmatmul.mubr.f32.gmra.mrb[0].mxu0 %v5680
        %v7244 = vpop.f32.mrb[0].mxu0
        %v7245 = vadd.f32 0.0, %v7244
        %v7246 = vpop.f32.mrb[0].mxu0
        %7247 = vmatprep.mubr.f32.mxu0 0.0
        %7248 = vmatmul.mubr.f32.gmra.mrb[0].mxu0 %v5681
        %v7249 = vpop.f32.mrb[0].mxu0
        %v7250 = vadd.f32 0.0, %v7249
        %v7251 = vpop.f32.mrb[0].mxu0
        %7252 = vdwg.mxu0
        %7269 = vrot.lane.b32.xlu0 %v3496, 64
        %v7270 = vpop.permute.xlu0 %7269
        %7271 = vrot.lane.b32.xlu0 %v3497, 64
        %v7272 = vpop.permute.xlu0 %7271
        %7273 = vrot.lane.b32.xlu0 %v3498, 64
        %v7274 = vpop.permute.xlu0 %7273
        %7275 = vrot.lane.b32.xlu0 %v3499, 64
        %v7276 = vpop.permute.xlu0 %7275
        %7277 = vrot.lane.b32.xlu0 %v3500, 64
        %v7278 = vpop.permute.xlu0 %7277
        %7279 = vrot.lane.b32.xlu0 %v3501, 64
        %v7280 = vpop.permute.xlu0 %7279
        %7281 = vrot.lane.b32.xlu0 %v3502, 64
        %v7282 = vpop.permute.xlu0 %7281
        %7283 = vrot.lane.b32.xlu0 %v3503, 64
        %v7284 = vpop.permute.xlu0 %7283
        %7285 = vrot.lane.b32.xlu0 %v3504, 64
        %v7286 = vpop.permute.xlu0 %7285
        %7287 = vrot.lane.b32.xlu0 %v3505, 64
        %v7288 = vpop.permute.xlu0 %7287
        %7289 = vrot.lane.b32.xlu0 %v3506, 64
        %v7290 = vpop.permute.xlu0 %7289
        %7291 = vrot.lane.b32.xlu0 %v3507, 64
        %v7292 = vpop.permute.xlu0 %7291
        %7293 = vrot.lane.b32.xlu0 %v3508, 64
        %v7294 = vpop.permute.xlu0 %7293
        %7295 = vrot.lane.b32.xlu0 %v3509, 64
        %v7296 = vpop.permute.xlu0 %7295
        %7297 = vrot.lane.b32.xlu0 %v3510, 64
        %v7298 = vpop.permute.xlu0 %7297
        %7299 = vrot.lane.b32.xlu0 %v3511, 64
        %v7300 = vpop.permute.xlu0 %7299
        %7317 = vmatprep.subr.mxu0 0.0
        %7318 = vmatpush1.msra.mxu0 %v7270
        %7319 = vmatprep.subr.mxu0 0.0
        %7320 = vmatpush1.msra.mxu0 %v7272
        %7321 = vmatprep.subr.mxu0 0.0
        %7322 = vmatpush1.msra.mxu0 %v7274
        %7323 = vmatprep.subr.mxu0 0.0
        %7324 = vmatpush1.msra.mxu0 %v7276
        %7325 = vmatprep.subr.mxu0 0.0
        %7326 = vmatpush1.msra.mxu0 %v7278
        %7327 = vmatprep.subr.mxu0 0.0
        %7328 = vmatpush1.msra.mxu0 %v7280
        %7329 = vmatprep.subr.mxu0 0.0
        %7330 = vmatpush1.msra.mxu0 %v7282
        %7331 = vmatprep.subr.mxu0 0.0
        %7332 = vmatpush1.msra.mxu0 %v7284
        %7333 = vmatprep.subr.mxu0 0.0
        %7334 = vmatpush1.msra.mxu0 %v7286
        %7335 = vmatprep.subr.mxu0 0.0
        %7336 = vmatpush1.msra.mxu0 %v7288
        %7337 = vmatprep.subr.mxu0 0.0
        %7338 = vmatpush1.msra.mxu0 %v7290
        %7339 = vmatprep.subr.mxu0 0.0
        %7340 = vmatpush1.msra.mxu0 %v7292
        %7341 = vmatprep.subr.mxu0 0.0
        %7342 = vmatpush1.msra.mxu0 %v7294
        %7343 = vmatprep.subr.mxu0 0.0
        %7344 = vmatpush1.msra.mxu0 %v7296
        %7345 = vmatprep.subr.mxu0 0.0
        %7346 = vmatpush1.msra.mxu0 %v7298
        %7347 = vmatprep.subr.mxu0 0.0
        %7348 = vmatpush1.msra.mxu0 %v7300
        %7349 = vmatprep.subr.mxu0 0.0
        %7350 = vmatpush1.msra.mxu0 0.0
        %7351 = vmatprep.subr.mxu0 0.0
        %7352 = vmatpush1.msra.mxu0 0.0
        %7353 = vmatprep.subr.mxu0 0.0
        %7354 = vmatpush1.msra.mxu0 0.0
        %7355 = vmatprep.subr.mxu0 0.0
        %7356 = vmatpush1.msra.mxu0 0.0
        %7357 = vmatprep.subr.mxu0 0.0
        %7358 = vmatpush1.msra.mxu0 0.0
        %7359 = vmatprep.subr.mxu0 0.0
        %7360 = vmatpush1.msra.mxu0 0.0
        %7361 = vmatprep.subr.mxu0 0.0
        %7362 = vmatpush1.msra.mxu0 0.0
        %7363 = vmatprep.subr.mxu0 0.0
        %7364 = vmatpush1.msra.mxu0 0.0
        %7365 = vmatprep.subr.mxu0 0.0
        %7366 = vmatpush1.msra.mxu0 0.0
        %7367 = vmatprep.subr.mxu0 0.0
        %7368 = vmatpush1.msra.mxu0 0.0
        %7369 = vmatprep.subr.mxu0 0.0
        %7370 = vmatpush1.msra.mxu0 0.0
        %7371 = vmatprep.subr.mxu0 0.0
        %7372 = vmatpush1.msra.mxu0 0.0
        %7373 = vmatprep.subr.mxu0 0.0
        %7374 = vmatpush1.msra.mxu0 0.0
        %7375 = vmatprep.subr.mxu0 0.0
        %7376 = vmatpush1.msra.mxu0 0.0
        %7377 = vmatprep.subr.mxu0 0.0
        %7378 = vmatpush1.msra.mxu0 0.0
        %7379 = vmatprep.subr.mxu0 0.0
        %7380 = vmatpush1.msra.mxu0 0.0
        %7381 = vmatprep.mubr.f32.mxu0 0.0
        %7382 = vmatmul.mubr.f32.gmra.mrb[0].mxu0 %v5682
        %v7383 = vpop.f32.mrb[0].mxu0
        %v7384 = vadd.f32 0.0, %v7383
        %v7385 = vpop.f32.mrb[0].mxu0
        %7386 = vmatprep.mubr.f32.mxu0 0.0
        %7387 = vmatmul.mubr.f32.gmra.mrb[0].mxu0 %v5683
        %v7388 = vpop.f32.mrb[0].mxu0
        %v7389 = vadd.f32 0.0, %v7388
        %v7390 = vpop.f32.mrb[0].mxu0
        %7391 = vdwg.mxu0
        %7408 = vrot.lane.b32.xlu0 %v3512, 64
        %v7409 = vpop.permute.xlu0 %7408
        %7410 = vrot.lane.b32.xlu0 %v3513, 64
        %v7411 = vpop.permute.xlu0 %7410
        %7412 = vrot.lane.b32.xlu0 %v3514, 64
        %v7413 = vpop.permute.xlu0 %7412
        %7414 = vrot.lane.b32.xlu0 %v3515, 64
        %v7415 = vpop.permute.xlu0 %7414
        %7416 = vrot.lane.b32.xlu0 %v3516, 64
        %v7417 = vpop.permute.xlu0 %7416
        %7418 = vrot.lane.b32.xlu0 %v3517, 64
        %v7419 = vpop.permute.xlu0 %7418
        %7420 = vrot.lane.b32.xlu0 %v3518, 64
        %v7421 = vpop.permute.xlu0 %7420
        %7422 = vrot.lane.b32.xlu0 %v3519, 64
        %v7423 = vpop.permute.xlu0 %7422
        %7424 = vrot.lane.b32.xlu0 %v3520, 64
        %v7425 = vpop.permute.xlu0 %7424
        %7426 = vrot.lane.b32.xlu0 %v3521, 64
        %v7427 = vpop.permute.xlu0 %7426
        %7428 = vrot.lane.b32.xlu0 %v3522, 64
        %v7429 = vpop.permute.xlu0 %7428
        %7430 = vrot.lane.b32.xlu0 %v3523, 64
        %v7431 = vpop.permute.xlu0 %7430
        %7432 = vrot.lane.b32.xlu0 %v3524, 64
        %v7433 = vpop.permute.xlu0 %7432
        %7434 = vrot.lane.b32.xlu0 %v3525, 64
        %v7435 = vpop.permute.xlu0 %7434
        %7436 = vrot.lane.b32.xlu0 %v3526, 64
        %v7437 = vpop.permute.xlu0 %7436
        %7438 = vrot.lane.b32.xlu0 %v3527, 64
        %v7439 = vpop.permute.xlu0 %7438
        %7456 = vmatprep.subr.mxu0 0.0
        %7457 = vmatpush1.msra.mxu0 %v7409
        %7458 = vmatprep.subr.mxu0 0.0
        %7459 = vmatpush1.msra.mxu0 %v7411
        %7460 = vmatprep.subr.mxu0 0.0
        %7461 = vmatpush1.msra.mxu0 %v7413
        %7462 = vmatprep.subr.mxu0 0.0
        %7463 = vmatpush1.msra.mxu0 %v7415
        %7464 = vmatprep.subr.mxu0 0.0
        %7465 = vmatpush1.msra.mxu0 %v7417
        %7466 = vmatprep.subr.mxu0 0.0
        %7467 = vmatpush1.msra.mxu0 %v7419
        %7468 = vmatprep.subr.mxu0 0.0
        %7469 = vmatpush1.msra.mxu0 %v7421
        %7470 = vmatprep.subr.mxu0 0.0
        %7471 = vmatpush1.msra.mxu0 %v7423
        %7472 = vmatprep.subr.mxu0 0.0
        %7473 = vmatpush1.msra.mxu0 %v7425
        %7474 = vmatprep.subr.mxu0 0.0
        %7475 = vmatpush1.msra.mxu0 %v7427
        %7476 = vmatprep.subr.mxu0 0.0
        %7477 = vmatpush1.msra.mxu0 %v7429
        %7478 = vmatprep.subr.mxu0 0.0
        %7479 = vmatpush1.msra.mxu0 %v7431
        %7480 = vmatprep.subr.mxu0 0.0
        %7481 = vmatpush1.msra.mxu0 %v7433
        %7482 = vmatprep.subr.mxu0 0.0
        %7483 = vmatpush1.msra.mxu0 %v7435
        %7484 = vmatprep.subr.mxu0 0.0
        %7485 = vmatpush1.msra.mxu0 %v7437
        %7486 = vmatprep.subr.mxu0 0.0
        %7487 = vmatpush1.msra.mxu0 %v7439
        %7488 = vmatprep.subr.mxu0 0.0
        %7489 = vmatpush1.msra.mxu0 0.0
        %7490 = vmatprep.subr.mxu0 0.0
        %7491 = vmatpush1.msra.mxu0 0.0
        %7492 = vmatprep.subr.mxu0 0.0
        %7493 = vmatpush1.msra.mxu0 0.0
        %7494 = vmatprep.subr.mxu0 0.0
        %7495 = vmatpush1.msra.mxu0 0.0
        %7496 = vmatprep.subr.mxu0 0.0
        %7497 = vmatpush1.msra.mxu0 0.0
        %7498 = vmatprep.subr.mxu0 0.0
        %7499 = vmatpush1.msra.mxu0 0.0
        %7500 = vmatprep.subr.mxu0 0.0
        %7501 = vmatpush1.msra.mxu0 0.0
        %7502 = vmatprep.subr.mxu0 0.0
        %7503 = vmatpush1.msra.mxu0 0.0
        %7504 = vmatprep.subr.mxu0 0.0
        %7505 = vmatpush1.msra.mxu0 0.0
        %7506 = vmatprep.subr.mxu0 0.0
        %7507 = vmatpush1.msra.mxu0 0.0
        %7508 = vmatprep.subr.mxu0 0.0
        %7509 = vmatpush1.msra.mxu0 0.0
        %7510 = vmatprep.subr.mxu0 0.0
        %7511 = vmatpush1.msra.mxu0 0.0
        %7512 = vmatprep.subr.mxu0 0.0
        %7513 = vmatpush1.msra.mxu0 0.0
        %7514 = vmatprep.subr.mxu0 0.0
        %7515 = vmatpush1.msra.mxu0 0.0
        %7516 = vmatprep.subr.mxu0 0.0
        %7517 = vmatpush1.msra.mxu0 0.0
        %7518 = vmatprep.subr.mxu0 0.0
        %7519 = vmatpush1.msra.mxu0 0.0
        %7520 = vmatprep.mubr.f32.mxu0 0.0
        %7521 = vmatmul.mubr.f32.gmra.mrb[0].mxu0 %v5684
        %v7522 = vpop.f32.mrb[0].mxu0
        %v7523 = vadd.f32 0.0, %v7522
        %v7524 = vpop.f32.mrb[0].mxu0
        %7525 = vmatprep.mubr.f32.mxu0 0.0
        %7526 = vmatmul.mubr.f32.gmra.mrb[0].mxu0 %v5685
        %v7527 = vpop.f32.mrb[0].mxu0
        %v7528 = vadd.f32 0.0, %v7527
        %v7529 = vpop.f32.mrb[0].mxu0
        %7530 = vdwg.mxu0
        %7547 = vrot.lane.b32.xlu0 %v3528, 64
        %v7548 = vpop.permute.xlu0 %7547
        %7549 = vrot.lane.b32.xlu0 %v3529, 64
        %v7550 = vpop.permute.xlu0 %7549
        %7551 = vrot.lane.b32.xlu0 %v3530, 64
        %v7552 = vpop.permute.xlu0 %7551
        %7553 = vrot.lane.b32.xlu0 %v3531, 64
        %v7554 = vpop.permute.xlu0 %7553
        %7555 = vrot.lane.b32.xlu0 %v3532, 64
        %v7556 = vpop.permute.xlu0 %7555
        %7557 = vrot.lane.b32.xlu0 %v3533, 64
        %v7558 = vpop.permute.xlu0 %7557
        %7559 = vrot.lane.b32.xlu0 %v3534, 64
        %v7560 = vpop.permute.xlu0 %7559
        %7561 = vrot.lane.b32.xlu0 %v3535, 64
        %v7562 = vpop.permute.xlu0 %7561
        %7563 = vrot.lane.b32.xlu0 %v3536, 64
        %v7564 = vpop.permute.xlu0 %7563
        %7565 = vrot.lane.b32.xlu0 %v3537, 64
        %v7566 = vpop.permute.xlu0 %7565
        %7567 = vrot.lane.b32.xlu0 %v3538, 64
        %v7568 = vpop.permute.xlu0 %7567
        %7569 = vrot.lane.b32.xlu0 %v3539, 64
        %v7570 = vpop.permute.xlu0 %7569
        %7571 = vrot.lane.b32.xlu0 %v3540, 64
        %v7572 = vpop.permute.xlu0 %7571
        %7573 = vrot.lane.b32.xlu0 %v3541, 64
        %v7574 = vpop.permute.xlu0 %7573
        %7575 = vrot.lane.b32.xlu0 %v3542, 64
        %v7576 = vpop.permute.xlu0 %7575
        %7577 = vrot.lane.b32.xlu0 %v3543, 64
        %v7578 = vpop.permute.xlu0 %7577
        %7595 = vmatprep.subr.mxu0 0.0
        %7596 = vmatpush1.msra.mxu0 %v7548
        %7597 = vmatprep.subr.mxu0 0.0
        %7598 = vmatpush1.msra.mxu0 %v7550
        %7599 = vmatprep.subr.mxu0 0.0
        %7600 = vmatpush1.msra.mxu0 %v7552
        %7601 = vmatprep.subr.mxu0 0.0
        %7602 = vmatpush1.msra.mxu0 %v7554
        %7603 = vmatprep.subr.mxu0 0.0
        %7604 = vmatpush1.msra.mxu0 %v7556
        %7605 = vmatprep.subr.mxu0 0.0
        %7606 = vmatpush1.msra.mxu0 %v7558
        %7607 = vmatprep.subr.mxu0 0.0
        %7608 = vmatpush1.msra.mxu0 %v7560
        %7609 = vmatprep.subr.mxu0 0.0
        %7610 = vmatpush1.msra.mxu0 %v7562
        %7611 = vmatprep.subr.mxu0 0.0
        %7612 = vmatpush1.msra.mxu0 %v7564
        %7613 = vmatprep.subr.mxu0 0.0
        %7614 = vmatpush1.msra.mxu0 %v7566
        %7615 = vmatprep.subr.mxu0 0.0
        %7616 = vmatpush1.msra.mxu0 %v7568
        %7617 = vmatprep.subr.mxu0 0.0
        %7618 = vmatpush1.msra.mxu0 %v7570
        %7619 = vmatprep.subr.mxu0 0.0
        %7620 = vmatpush1.msra.mxu0 %v7572
        %7621 = vmatprep.subr.mxu0 0.0
        %7622 = vmatpush1.msra.mxu0 %v7574
        %7623 = vmatprep.subr.mxu0 0.0
        %7624 = vmatpush1.msra.mxu0 %v7576
        %7625 = vmatprep.subr.mxu0 0.0
        %7626 = vmatpush1.msra.mxu0 %v7578
        %7627 = vmatprep.subr.mxu0 0.0
        %7628 = vmatpush1.msra.mxu0 0.0
        %7629 = vmatprep.subr.mxu0 0.0
        %7630 = vmatpush1.msra.mxu0 0.0
        %7631 = vmatprep.subr.mxu0 0.0
        %7632 = vmatpush1.msra.mxu0 0.0
        %7633 = vmatprep.subr.mxu0 0.0
        %7634 = vmatpush1.msra.mxu0 0.0
        %7635 = vmatprep.subr.mxu0 0.0
        %7636 = vmatpush1.msra.mxu0 0.0
        %7637 = vmatprep.subr.mxu0 0.0
        %7638 = vmatpush1.msra.mxu0 0.0
        %7639 = vmatprep.subr.mxu0 0.0
        %7640 = vmatpush1.msra.mxu0 0.0
        %7641 = vmatprep.subr.mxu0 0.0
        %7642 = vmatpush1.msra.mxu0 0.0
        %7643 = vmatprep.subr.mxu0 0.0
        %7644 = vmatpush1.msra.mxu0 0.0
        %7645 = vmatprep.subr.mxu0 0.0
        %7646 = vmatpush1.msra.mxu0 0.0
        %7647 = vmatprep.subr.mxu0 0.0
        %7648 = vmatpush1.msra.mxu0 0.0
        %7649 = vmatprep.subr.mxu0 0.0
        %7650 = vmatpush1.msra.mxu0 0.0
        %7651 = vmatprep.subr.mxu0 0.0
        %7652 = vmatpush1.msra.mxu0 0.0
        %7653 = vmatprep.subr.mxu0 0.0
        %7654 = vmatpush1.msra.mxu0 0.0
        %7655 = vmatprep.subr.mxu0 0.0
        %7656 = vmatpush1.msra.mxu0 0.0
        %7657 = vmatprep.subr.mxu0 0.0
        %7658 = vmatpush1.msra.mxu0 0.0
        %7659 = vmatprep.mubr.f32.mxu0 0.0
        %7660 = vmatmul.mubr.f32.gmra.mrb[0].mxu0 %v5686
        %v7661 = vpop.f32.mrb[0].mxu0
        %v7662 = vadd.f32 0.0, %v7661
        %v7663 = vpop.f32.mrb[0].mxu0
        %7664 = vmatprep.mubr.f32.mxu0 0.0
        %7665 = vmatmul.mubr.f32.gmra.mrb[0].mxu0 %v5687
        %v7666 = vpop.f32.mrb[0].mxu0
        %v7667 = vadd.f32 0.0, %v7666
        %v7668 = vpop.f32.mrb[0].mxu0
        %7669 = vdwg.mxu0
        %7686 = vrot.lane.b32.xlu0 %v3544, 64
        %v7687 = vpop.permute.xlu0 %7686
        %7688 = vrot.lane.b32.xlu0 %v3545, 64
        %v7689 = vpop.permute.xlu0 %7688
        %7690 = vrot.lane.b32.xlu0 %v3546, 64
        %v7691 = vpop.permute.xlu0 %7690
        %7692 = vrot.lane.b32.xlu0 %v3547, 64
        %v7693 = vpop.permute.xlu0 %7692
        %7694 = vrot.lane.b32.xlu0 %v3548, 64
        %v7695 = vpop.permute.xlu0 %7694
        %7696 = vrot.lane.b32.xlu0 %v3549, 64
        %v7697 = vpop.permute.xlu0 %7696
        %7698 = vrot.lane.b32.xlu0 %v3550, 64
        %v7699 = vpop.permute.xlu0 %7698
        %7700 = vrot.lane.b32.xlu0 %v3551, 64
        %v7701 = vpop.permute.xlu0 %7700
        %7702 = vrot.lane.b32.xlu0 %v3552, 64
        %v7703 = vpop.permute.xlu0 %7702
        %7704 = vrot.lane.b32.xlu0 %v3553, 64
        %v7705 = vpop.permute.xlu0 %7704
        %7706 = vrot.lane.b32.xlu0 %v3554, 64
        %v7707 = vpop.permute.xlu0 %7706
        %7708 = vrot.lane.b32.xlu0 %v3555, 64
        %v7709 = vpop.permute.xlu0 %7708
        %7710 = vrot.lane.b32.xlu0 %v3556, 64
        %v7711 = vpop.permute.xlu0 %7710
        %7712 = vrot.lane.b32.xlu0 %v3557, 64
        %v7713 = vpop.permute.xlu0 %7712
        %7714 = vrot.lane.b32.xlu0 %v3558, 64
        %v7715 = vpop.permute.xlu0 %7714
        %7716 = vrot.lane.b32.xlu0 %v3559, 64
        %v7717 = vpop.permute.xlu0 %7716
        %7734 = vmatprep.subr.mxu0 0.0
        %7735 = vmatpush1.msra.mxu0 %v7687
        %7736 = vmatprep.subr.mxu0 0.0
        %7737 = vmatpush1.msra.mxu0 %v7689
        %7738 = vmatprep.subr.mxu0 0.0
        %7739 = vmatpush1.msra.mxu0 %v7691
        %7740 = vmatprep.subr.mxu0 0.0
        %7741 = vmatpush1.msra.mxu0 %v7693
        %7742 = vmatprep.subr.mxu0 0.0
        %7743 = vmatpush1.msra.mxu0 %v7695
        %7744 = vmatprep.subr.mxu0 0.0
        %7745 = vmatpush1.msra.mxu0 %v7697
        %7746 = vmatprep.subr.mxu0 0.0
        %7747 = vmatpush1.msra.mxu0 %v7699
        %7748 = vmatprep.subr.mxu0 0.0
        %7749 = vmatpush1.msra.mxu0 %v7701
        %7750 = vmatprep.subr.mxu0 0.0
        %7751 = vmatpush1.msra.mxu0 %v7703
        %7752 = vmatprep.subr.mxu0 0.0
        %7753 = vmatpush1.msra.mxu0 %v7705
        %7754 = vmatprep.subr.mxu0 0.0
        %7755 = vmatpush1.msra.mxu0 %v7707
        %7756 = vmatprep.subr.mxu0 0.0
        %7757 = vmatpush1.msra.mxu0 %v7709
        %7758 = vmatprep.subr.mxu0 0.0
        %7759 = vmatpush1.msra.mxu0 %v7711
        %7760 = vmatprep.subr.mxu0 0.0
        %7761 = vmatpush1.msra.mxu0 %v7713
        %7762 = vmatprep.subr.mxu0 0.0
        %7763 = vmatpush1.msra.mxu0 %v7715
        %7764 = vmatprep.subr.mxu0 0.0
        %7765 = vmatpush1.msra.mxu0 %v7717
        %7766 = vmatprep.subr.mxu0 0.0
        %7767 = vmatpush1.msra.mxu0 0.0
        %7768 = vmatprep.subr.mxu0 0.0
        %7769 = vmatpush1.msra.mxu0 0.0
        %7770 = vmatprep.subr.mxu0 0.0
        %7771 = vmatpush1.msra.mxu0 0.0
        %7772 = vmatprep.subr.mxu0 0.0
        %7773 = vmatpush1.msra.mxu0 0.0
        %7774 = vmatprep.subr.mxu0 0.0
        %7775 = vmatpush1.msra.mxu0 0.0
        %7776 = vmatprep.subr.mxu0 0.0
        %7777 = vmatpush1.msra.mxu0 0.0
        %7778 = vmatprep.subr.mxu0 0.0
        %7779 = vmatpush1.msra.mxu0 0.0
        %7780 = vmatprep.subr.mxu0 0.0
        %7781 = vmatpush1.msra.mxu0 0.0
        %7782 = vmatprep.subr.mxu0 0.0
        %7783 = vmatpush1.msra.mxu0 0.0
        %7784 = vmatprep.subr.mxu0 0.0
        %7785 = vmatpush1.msra.mxu0 0.0
        %7786 = vmatprep.subr.mxu0 0.0
        %7787 = vmatpush1.msra.mxu0 0.0
        %7788 = vmatprep.subr.mxu0 0.0
        %7789 = vmatpush1.msra.mxu0 0.0
        %7790 = vmatprep.subr.mxu0 0.0
        %7791 = vmatpush1.msra.mxu0 0.0
        %7792 = vmatprep.subr.mxu0 0.0
        %7793 = vmatpush1.msra.mxu0 0.0
        %7794 = vmatprep.subr.mxu0 0.0
        %7795 = vmatpush1.msra.mxu0 0.0
        %7796 = vmatprep.subr.mxu0 0.0
        %7797 = vmatpush1.msra.mxu0 0.0
        %7798 = vmatprep.mubr.f32.mxu0 0.0
        %7799 = vmatmul.mubr.f32.gmra.mrb[0].mxu0 %v5688
        %v7800 = vpop.f32.mrb[0].mxu0
        %v7801 = vadd.f32 0.0, %v7800
        %v7802 = vpop.f32.mrb[0].mxu0
        %7803 = vmatprep.mubr.f32.mxu0 0.0
        %7804 = vmatmul.mubr.f32.gmra.mrb[0].mxu0 %v5689
        %v7805 = vpop.f32.mrb[0].mxu0
        %v7806 = vadd.f32 0.0, %v7805
        %v7807 = vpop.f32.mrb[0].mxu0
        %7808 = vdwg.mxu0
        %7825 = vrot.lane.b32.xlu0 %v3560, 64
        %v7826 = vpop.permute.xlu0 %7825
        %7827 = vrot.lane.b32.xlu0 %v3561, 64
        %v7828 = vpop.permute.xlu0 %7827
        %7829 = vrot.lane.b32.xlu0 %v3562, 64
        %v7830 = vpop.permute.xlu0 %7829
        %7831 = vrot.lane.b32.xlu0 %v3563, 64
        %v7832 = vpop.permute.xlu0 %7831
        %7833 = vrot.lane.b32.xlu0 %v3564, 64
        %v7834 = vpop.permute.xlu0 %7833
        %7835 = vrot.lane.b32.xlu0 %v3565, 64
        %v7836 = vpop.permute.xlu0 %7835
        %7837 = vrot.lane.b32.xlu0 %v3566, 64
        %v7838 = vpop.permute.xlu0 %7837
        %7839 = vrot.lane.b32.xlu0 %v3567, 64
        %v7840 = vpop.permute.xlu0 %7839
        %7841 = vrot.lane.b32.xlu0 %v3568, 64
        %v7842 = vpop.permute.xlu0 %7841
        %7843 = vrot.lane.b32.xlu0 %v3569, 64
        %v7844 = vpop.permute.xlu0 %7843
        %7845 = vrot.lane.b32.xlu0 %v3570, 64
        %v7846 = vpop.permute.xlu0 %7845
        %7847 = vrot.lane.b32.xlu0 %v3571, 64
        %v7848 = vpop.permute.xlu0 %7847
        %7849 = vrot.lane.b32.xlu0 %v3572, 64
        %v7850 = vpop.permute.xlu0 %7849
        %7851 = vrot.lane.b32.xlu0 %v3573, 64
        %v7852 = vpop.permute.xlu0 %7851
        %7853 = vrot.lane.b32.xlu0 %v3574, 64
        %v7854 = vpop.permute.xlu0 %7853
        %7855 = vrot.lane.b32.xlu0 %v3575, 64
        %v7856 = vpop.permute.xlu0 %7855
        %7873 = vmatprep.subr.mxu0 0.0
        %7874 = vmatpush1.msra.mxu0 %v7826
        %7875 = vmatprep.subr.mxu0 0.0
        %7876 = vmatpush1.msra.mxu0 %v7828
        %7877 = vmatprep.subr.mxu0 0.0
        %7878 = vmatpush1.msra.mxu0 %v7830
        %7879 = vmatprep.subr.mxu0 0.0
        %7880 = vmatpush1.msra.mxu0 %v7832
        %7881 = vmatprep.subr.mxu0 0.0
        %7882 = vmatpush1.msra.mxu0 %v7834
        %7883 = vmatprep.subr.mxu0 0.0
        %7884 = vmatpush1.msra.mxu0 %v7836
        %7885 = vmatprep.subr.mxu0 0.0
        %7886 = vmatpush1.msra.mxu0 %v7838
        %7887 = vmatprep.subr.mxu0 0.0
        %7888 = vmatpush1.msra.mxu0 %v7840
        %7889 = vmatprep.subr.mxu0 0.0
        %7890 = vmatpush1.msra.mxu0 %v7842
        %7891 = vmatprep.subr.mxu0 0.0
        %7892 = vmatpush1.msra.mxu0 %v7844
        %7893 = vmatprep.subr.mxu0 0.0
        %7894 = vmatpush1.msra.mxu0 %v7846
        %7895 = vmatprep.subr.mxu0 0.0
        %7896 = vmatpush1.msra.mxu0 %v7848
        %7897 = vmatprep.subr.mxu0 0.0
        %7898 = vmatpush1.msra.mxu0 %v7850
        %7899 = vmatprep.subr.mxu0 0.0
        %7900 = vmatpush1.msra.mxu0 %v7852
        %7901 = vmatprep.subr.mxu0 0.0
        %7902 = vmatpush1.msra.mxu0 %v7854
        %7903 = vmatprep.subr.mxu0 0.0
        %7904 = vmatpush1.msra.mxu0 %v7856
        %7905 = vmatprep.subr.mxu0 0.0
        %7906 = vmatpush1.msra.mxu0 0.0
        %7907 = vmatprep.subr.mxu0 0.0
        %7908 = vmatpush1.msra.mxu0 0.0
        %7909 = vmatprep.subr.mxu0 0.0
        %7910 = vmatpush1.msra.mxu0 0.0
        %7911 = vmatprep.subr.mxu0 0.0
        %7912 = vmatpush1.msra.mxu0 0.0
        %7913 = vmatprep.subr.mxu0 0.0
        %7914 = vmatpush1.msra.mxu0 0.0
        %7915 = vmatprep.subr.mxu0 0.0
        %7916 = vmatpush1.msra.mxu0 0.0
        %7917 = vmatprep.subr.mxu0 0.0
        %7918 = vmatpush1.msra.mxu0 0.0
        %7919 = vmatprep.subr.mxu0 0.0
        %7920 = vmatpush1.msra.mxu0 0.0
        %7921 = vmatprep.subr.mxu0 0.0
        %7922 = vmatpush1.msra.mxu0 0.0
        %7923 = vmatprep.subr.mxu0 0.0
        %7924 = vmatpush1.msra.mxu0 0.0
        %7925 = vmatprep.subr.mxu0 0.0
        %7926 = vmatpush1.msra.mxu0 0.0
        %7927 = vmatprep.subr.mxu0 0.0
        %7928 = vmatpush1.msra.mxu0 0.0
        %7929 = vmatprep.subr.mxu0 0.0
        %7930 = vmatpush1.msra.mxu0 0.0
        %7931 = vmatprep.subr.mxu0 0.0
        %7932 = vmatpush1.msra.mxu0 0.0
        %7933 = vmatprep.subr.mxu0 0.0
        %7934 = vmatpush1.msra.mxu0 0.0
        %7935 = vmatprep.subr.mxu0 0.0
        %7936 = vmatpush1.msra.mxu0 0.0
        %7937 = vmatprep.mubr.f32.mxu0 0.0
        %7938 = vmatmul.mubr.f32.gmra.mrb[0].mxu0 %v5690
        %v7939 = vpop.f32.mrb[0].mxu0
        %v7940 = vadd.f32 0.0, %v7939
        %v7941 = vpop.f32.mrb[0].mxu0
        %7942 = vmatprep.mubr.f32.mxu0 0.0
        %7943 = vmatmul.mubr.f32.gmra.mrb[0].mxu0 %v5691
        %v7944 = vpop.f32.mrb[0].mxu0
        %v7945 = vadd.f32 0.0, %v7944
        %v7946 = vpop.f32.mrb[0].mxu0
        %7947 = vdwg.mxu0
        %7948 = vst.msk [vmem:[%s301] sm:$0xff] %vm348, %v5855
        %7949 = vst.msk [vmem:[%s301 + $0x8] sm:$0xff] %vm348, %v5860
        %7950 = vst.msk [vmem:[%s301 + $0x10] sm:$0xff] %vm348, %v5994
        %7951 = vst.msk [vmem:[%s301 + $0x18] sm:$0xff] %vm348, %v5999
        %7952 = vst.msk [vmem:[%s301 + $0x20] sm:$0xff] %vm348, %v6133
        %7953 = vst.msk [vmem:[%s301 + $0x28] sm:$0xff] %vm348, %v6138
        %7954 = vst.msk [vmem:[%s301 + $0x30] sm:$0xff] %vm348, %v6272
        %7955 = vst.msk [vmem:[%s301 + $0x38] sm:$0xff] %vm348, %v6277
        %7956 = vst.msk [vmem:[%s301 + $0x40] sm:$0xff] %vm348, %v6411
        %7957 = vst.msk [vmem:[%s301 + $0x48] sm:$0xff] %vm348, %v6416
        %7958 = vst.msk [vmem:[%s301 + $0x50] sm:$0xff] %vm348, %v6550
        %7959 = vst.msk [vmem:[%s301 + $0x58] sm:$0xff] %vm348, %v6555
        %7960 = vst.msk [vmem:[%s301 + $0x60] sm:$0xff] %vm348, %v6689
        %7961 = vst.msk [vmem:[%s301 + $0x68] sm:$0xff] %vm348, %v6694
        %7962 = vst.msk [vmem:[%s301 + $0x70] sm:$0xff] %vm348, %v6828
        %7963 = vst.msk [vmem:[%s301 + $0x78] sm:$0xff] %vm348, %v6833
        %7964 = vst.msk [vmem:[%s301 + $0x80] sm:$0xff] %vm348, %v6967
        %7965 = vst.msk [vmem:[%s301 + $0x88] sm:$0xff] %vm348, %v6972
        %7966 = vst.msk [vmem:[%s301 + $0x90] sm:$0xff] %vm348, %v7106
        %7967 = vst.msk [vmem:[%s301 + $0x98] sm:$0xff] %vm348, %v7111
        %7968 = vst.msk [vmem:[%s301 + $0xa0] sm:$0xff] %vm348, %v7245
        %7969 = vst.msk [vmem:[%s301 + $0xa8] sm:$0xff] %vm348, %v7250
        %7970 = vst.msk [vmem:[%s301 + $0xb0] sm:$0xff] %vm348, %v7384
        %7971 = vst.msk [vmem:[%s301 + $0xb8] sm:$0xff] %vm348, %v7389
        %7972 = vst.msk [vmem:[%s301 + $0xc0] sm:$0xff] %vm348, %v7523
        %7973 = vst.msk [vmem:[%s301 + $0xc8] sm:$0xff] %vm348, %v7528
        %7974 = vst.msk [vmem:[%s301 + $0xd0] sm:$0xff] %vm348, %v7662
        %7975 = vst.msk [vmem:[%s301 + $0xd8] sm:$0xff] %vm348, %v7667
        %7976 = vst.msk [vmem:[%s301 + $0xe0] sm:$0xff] %vm348, %v7801
        %7977 = vst.msk [vmem:[%s301 + $0xe8] sm:$0xff] %vm348, %v7806
        %7978 = vst.msk [vmem:[%s301 + $0xf0] sm:$0xff] %vm348, %v7940
        %7979 = vst.msk [vmem:[%s301 + $0xf8] sm:$0xff] %vm348, %v7945
        %s7980 = sand.u32 %s167, 1
        %s7981 = scalar_lea.sflag [#allocation4], %s7980
        %s7982 = sand.u32 %s167, 1
        %s7983 = smul.addr %s7982, 256
        %s7984 = scalar_lea.vmem [#allocation5], %s7983
        %s7985 = sand.u32 %s193, 1
        %s7986 = scalar_lea.sflag [#allocation7], %s7985
        %s7987 = sand.u32 %s193, 1
        %s7988 = smul.addr %s7987, 256
        %s7989 = scalar_lea.vmem [#allocation6], %s7988
        // Predicated region
        $region49: #{tpu_custom_call.1} parent=43 // pred_check
          %p7990 = pneg %p177
        $region50: #{tpu_custom_call.1} parent=43 // pred_check_branch
          %7992 = sbr.rel (%p7990) target = $region52
        $region51: #{tpu_custom_call.1} parent=43 // pred_region
          %s7993 = smul.u32 16, %s28
          %s7995 = ssub.s32 4096, 4096
          %7996 = vsyncadd %s7981, %s7995
          %s7997 = smul.addr %s7993, 2
          %s7998 = smul.addr %s7997, 128
          %s7999 = scalar_lea.hbm %s6, %s7998
          %s8000 = sshll.u32 %s7984, 4
          %s8001 = int_to_ptr.vmem [resolvable:$true] %s8000
          %8006 = dma.vmem_to_hbm [thread:$0]  %s8001, 4096, %s7999, %s7981, 128, 128, 8
        $region52: #{tpu_custom_call.1} parent=43 // pred_fallthru
          _
        // Predicated region
        $region53: #{tpu_custom_call.1} parent=43 // pred_check
          %p8007 = pneg %p203
        $region54: #{tpu_custom_call.1} parent=43 // pred_check_branch
          %8009 = sbr.rel (%p8007) target = $region56
        $region55: #{tpu_custom_call.1} parent=43 // pred_region
          %s8010 = smul.u32 16, %s28
          %s8012 = ssub.s32 4096, 4096
          %8013 = vsyncadd %s7986, %s8012
          %s8014 = smul.addr %s8010, 2
          %s8015 = smul.addr %s8014, 128
          %s8016 = scalar_lea.hbm %s7, %s8015
          %s8017 = sshll.u32 %s7989, 4
          %s8018 = int_to_ptr.vmem [resolvable:$true] %s8017
          %8023 = dma.vmem_to_hbm [thread:$0]  %s8018, 4096, %s8016, %s7986, 128, 128, 8
        $region56: #{tpu_custom_call.1} parent=43 // pred_fallthru
          _
      $region44: #{tpu_custom_call.1} parent=5 // pred_fallthru
        _
      %p8024 = scmp.le.s32.totalorder 2, %s23
      // Predicated region
      $region57: #{tpu_custom_call.1} parent=5 // pred_check
        %p8025 = pneg %p8024
      $region58: #{tpu_custom_call.1} parent=5 // pred_check_branch
        %8027 = sbr.rel (%p8025) target = $region60
      $region59: #{tpu_custom_call.1} parent=5 // pred_region
        %s8028 = ssub.s32 %s23, 2
        // Predicated region
        $region61: #{tpu_custom_call.1} parent=59 // pred_check
          %p8029 = pneg %p183
        $region62: #{tpu_custom_call.1} parent=59 // pred_check_branch
          %8031 = sbr.rel (%p8029) target = $region64
        $region63: #{tpu_custom_call.1} parent=59 // pred_region
          %s8032 = sand.u32 %s168, 1
          %s8033 = scalar_lea.sflag [#allocation4], %s8032
          %s8034 = sand.u32 %s168, 1
          %s8035 = smul.addr %s8034, 256
          %s8036 = scalar_lea.vmem [#allocation5], %s8035
          %8037 = dma.done %s8033, 4096
        $region64: #{tpu_custom_call.1} parent=59 // pred_fallthru
          _
        // Predicated region
        $region65: #{tpu_custom_call.1} parent=59 // pred_check
          %p8038 = pneg %p209
        $region66: #{tpu_custom_call.1} parent=59 // pred_check_branch
          %8040 = sbr.rel (%p8038) target = $region68
        $region67: #{tpu_custom_call.1} parent=59 // pred_region
          %s8041 = sand.u32 %s194, 1
          %s8042 = scalar_lea.sflag [#allocation7], %s8041
          %s8043 = sand.u32 %s194, 1
          %s8044 = smul.addr %s8043, 256
          %s8045 = scalar_lea.vmem [#allocation6], %s8044
          %8046 = dma.done %s8042, 4096
        $region68: #{tpu_custom_call.1} parent=59 // pred_fallthru
          _
      $region60: #{tpu_custom_call.1} parent=5 // pred_fallthru
        _
    $region6: #{tpu_custom_call.1} parent=1 // loop_footer
      %s27 = sadd.s32 1, %s23
    $region7: #{tpu_custom_call.1} parent=1 // loop_footer_branch
      %22 = sbr.rel target = $region3
    $region8: #{tpu_custom_call.1} parent=1 // loop_exit
      _
    %8047 = vsyncpa [#allocation3], 1
    %s8048 = scalar_lea.sflag [#allocation3], 1
    %8049 = vsyncpa %s8048, 1
    %8050 = vsyncpa [#allocation4], 1
    %s8051 = scalar_lea.sflag [#allocation4], 1
    %8052 = vsyncpa %s8051, 1
    %8053 = vsyncpa [#allocation7], 1
    %s8054 = scalar_lea.sflag [#allocation7], 1
    %8055 = vsyncpa %s8054, 1

</llo_original>
